<compile_context>
chip_gen: v7x
topology: tpu7x:2x2x1
jax: 0.10.0
libtpu: 0.0.40
codegen_flags: <defaults>
</compile_context>

<pallas_src>
import functools
import math

import jax
import jax.numpy as jnp
from jax import lax
from jax.experimental import pallas as pl
from jax.experimental.pallas import tpu as pltpu

_LN_EPS = 1e-5


def _ln(v, g, b, eps=_LN_EPS):
    mean = jnp.mean(v, axis=-1, keepdims=True)
    c = v - mean
    var = jnp.mean(c * c, axis=-1, keepdims=True)
    return c * lax.rsqrt(var + eps) * g + b


def _gelu(v):
    # exact (erf) GELU, matching nn.GELU() default
    return 0.5 * v * (1.0 + lax.erf(v * (1.0 / math.sqrt(2.0))))


# ---------------------------------------------------------------------------
# Single fused kernel: embeddings (layer 0) + whole cross-encoder stack.
# grid = (L,), activations resident in VMEM scratch across the layer axis.
# ---------------------------------------------------------------------------
def _vilbert_kernel(bow_ref, tokpos_ref, bx_ref, by_ref,
                    sw_ref, sb_ref, sg_ref, sbb_ref, eg_ref, eb_ref,
                    wqkv_ref, bqkv_ref, wo_ref, bo_ref,
                    wd_ref, bd_ref, ln1g_ref, ln1b_ref,
                    wint_ref, bint_ref, wout_ref, bout_ref,
                    ln2g_ref, ln2b_ref,
                    xout_ref, yout_ref,
                    x_sc, y_sc, *, nhead):
    layer = pl.program_id(0)
    B, Sx, D = x_sc.shape
    Sy = y_sc.shape[1]
    hd = D // nhead
    scale = 1.0 / math.sqrt(hd)

    # ---- layer 0: fused embeddings -> VMEM-resident activations ----
    @pl.when(layer == 0)
    def _():
        bow = bow_ref[...].reshape(B * Sx, bow_ref.shape[-1])
        xs = jnp.dot(bow, sw_ref[...], preferred_element_type=jnp.float32) + sb_ref[...]
        x_sc[...] = _ln(xs, sg_ref[...], sbb_ref[...]).reshape(B, Sx, D)
        ys = tokpos_ref[...].reshape(B * Sy, D)
        y_sc[...] = _ln(ys, eg_ref[...], eb_ref[...]).reshape(B, Sy, D)

    x = x_sc[...].reshape(B * Sx, D)            # (B*Sx, D)
    y = y_sc[...].reshape(B * Sy, D)            # (B*Sy, D)
    bias_x = bx_ref[...]                        # (B, 1, Sx) additive key-padding bias
    bias_y = by_ref[...]                        # (B, 1, Sy)

    # Fused QKV: one [B*S, D] x [D, 3D] matmul per stream.
    #   stream 0 (x): cols [0:D]=q(x->y), [D:2D]=k(y->x), [2D:3D]=v(y->x)
    #   stream 1 (y): cols [0:D]=q(y->x), [D:2D]=k(x->y), [2D:3D]=v(x->y)
    qkv_x = jnp.dot(x, wqkv_ref[0], preferred_element_type=jnp.float32) + bqkv_ref[0]
    qkv_y = jnp.dot(y, wqkv_ref[1], preferred_element_type=jnp.float32) + bqkv_ref[1]

    # Per-head lane masks over the D columns (built once, reused by both
    # streams and all batches) -- avoids 16-lane slicing relayouts entirely.
    lane = lax.broadcasted_iota(jnp.int32, (1, D), 1)
    head_masks = [((lane >= h * hd) & (lane < (h + 1) * hd)).astype(jnp.float32)
                  for h in range(nhead)]

    def attend(qkv_q, qkv_kv, Sq, Sk, key_bias, wo, bo):
        ctx_rows = []
        for b in range(B):                       # static unroll (B small)
            q_b = qkv_q[b * Sq:(b + 1) * Sq, 0:D]            # 128-aligned lane slices
            k_b = qkv_kv[b * Sk:(b + 1) * Sk, D:2 * D]
            v_b = qkv_kv[b * Sk:(b + 1) * Sk, 2 * D:3 * D]
            bias_b = key_bias[b]                              # (1, Sk)
            ctx = jnp.zeros((Sq, D), jnp.float32)
            for h in range(nhead):                            # static unroll
                m = head_masks[h]
                # scores via full-width contraction on masked K (no k.T, no slicing)
                s = lax.dot_general(q_b, k_b * m, (((1,), (1,)), ((), ())),
                                    preferred_element_type=jnp.float32)
                s = s * scale + bias_b
                s = s - jnp.max(s, axis=-1, keepdims=True)
                p = jnp.exp(s)
                p = p * pl.reciprocal(jnp.sum(p, axis=-1, keepdims=True), approx=True)
                # context lands directly in this head's columns of the full tile
                ctx = ctx + jnp.dot(p, v_b * m, preferred_element_type=jnp.float32)
            ctx_rows.append(ctx)
        ctx_all = jnp.concatenate(ctx_rows, axis=0) if B > 1 else ctx_rows[0]
        # single K=128 output projection over all batches / heads
        return jnp.dot(ctx_all, wo, preferred_element_type=jnp.float32) + bo

    mha_x = attend(qkv_x, qkv_y, Sx, Sy, bias_y, wo_ref[0], bo_ref[0])
    mha_y = attend(qkv_y, qkv_x, Sy, Sx, bias_x, wo_ref[1], bo_ref[1])

    def stream(si, own, mha):
        attn = _ln(own
                   + jnp.dot(mha, wd_ref[si], preferred_element_type=jnp.float32)
                   + bd_ref[si],
                   ln1g_ref[si], ln1b_ref[si])
        inter = _gelu(jnp.dot(attn, wint_ref[si], preferred_element_type=jnp.float32)
                      + bint_ref[si])
        return _ln(attn
                   + jnp.dot(inter, wout_ref[si], preferred_element_type=jnp.float32)
                   + bout_ref[si],
                   ln2g_ref[si], ln2b_ref[si])

    new_x = stream(0, x, mha_x)
    new_y = stream(1, y, mha_y)

    x_sc[...] = new_x.reshape(B, Sx, D)
    y_sc[...] = new_y.reshape(B, Sy, D)

    @pl.when(layer == pl.num_programs(0) - 1)
    def _():
        xout_ref[...] = new_x.reshape(B, Sx, D).astype(xout_ref.dtype)
        yout_ref[...] = new_y.reshape(B, Sy, D).astype(yout_ref.dtype)


def vilbert_encoder_pallas(bow, tokpos, bias_x, bias_y, embed_consts, packed, nhead):
    B, Sxp, K = bow.shape
    Syp, D = tokpos.shape[1], tokpos.shape[2]
    L = packed[0].shape[0]

    c3 = lambda shape: pl.BlockSpec(shape, lambda l: (0, 0, 0))
    c2 = lambda shape: pl.BlockSpec(shape, lambda l: (0, 0))
    w_spec = lambda arr: pl.BlockSpec((None,) + tuple(arr.shape[1:]),
                                      lambda l: (l, 0, 0, 0))

    in_specs = ([c3((B, Sxp, K)), c3((B, Syp, D)),
                 c3((B, 1, Sxp)), c3((B, 1, Syp)),
                 c2((K, D)), c2((1, D)), c2((1, D)), c2((1, D)),
                 c2((1, D)), c2((1, D))]
                + [w_spec(a) for a in packed])

    return pl.pallas_call(
        functools.partial(_vilbert_kernel, nhead=nhead),
        out_shape=(jax.ShapeDtypeStruct((B, Sxp, D), jnp.float32),
                   jax.ShapeDtypeStruct((B, Syp, D), jnp.float32)),
        grid=(L,),
        in_specs=in_specs,
        out_specs=[c3((B, Sxp, D)), c3((B, Syp, D))],
        scratch_shapes=[pltpu.VMEM((B, Sxp, D), jnp.float32),
                        pltpu.VMEM((B, Syp, D), jnp.float32)],
        compiler_params=pltpu.CompilerParams(dimension_semantics=("arbitrary",)),
    )(bow, tokpos, bias_x, bias_y, *embed_consts, *packed)


# ---------------------------------------------------------------------------
# One-time parameter preparation (hoisted out of the per-call critical path):
# stack per-layer weights on the layer axis, pack x/y stream variants.
# ---------------------------------------------------------------------------
def pack_encoder_params(layer_params):
    def per_layer(lp):
        xy, yx = lp["mha_x_to_y"], lp["mha_y_to_x"]
        w_qkv = jnp.stack([
            jnp.concatenate([xy["wq"], yx["wk"], yx["wv"]], axis=1),
            jnp.concatenate([yx["wq"], xy["wk"], xy["wv"]], axis=1)], axis=0)
        b_qkv = jnp.stack([
            jnp.concatenate([xy["bq"], yx["bk"], yx["bv"]])[None, :],
            jnp.concatenate([yx["bq"], xy["bk"], xy["bv"]])[None, :]], axis=0)
        w_o = jnp.stack([xy["wo"], yx["wo"]], axis=0)
        b_o = jnp.stack([xy["bo"][None, :], yx["bo"][None, :]], axis=0)
        w_d = jnp.stack([lp["dxy_w"], lp["dyx_w"]], axis=0)
        b_d = jnp.stack([lp["dxy_b"][None, :], lp["dyx_b"][None, :]], axis=0)
        ln1_g = jnp.stack([lp["dxy_ln_g"][None, :], lp["dyx_ln_g"][None, :]], axis=0)
        ln1_b = jnp.stack([lp["dxy_ln_b"][None, :], lp["dyx_ln_b"][None, :]], axis=0)
        w_int = jnp.stack([lp["int1_w"], lp["int2_w"]], axis=0)
        b_int = jnp.stack([lp["int1_b"][None, :], lp["int2_b"][None, :]], axis=0)
        w_out = jnp.stack([lp["out1_w"], lp["out2_w"]], axis=0)
        b_out = jnp.stack([lp["out1_b"][None, :], lp["out2_b"][None, :]], axis=0)
        ln2_g = jnp.stack([lp["out1_ln_g"][None, :], lp["out2_ln_g"][None, :]], axis=0)
        ln2_b = jnp.stack([lp["out1_ln_b"][None, :], lp["out2_ln_b"][None, :]], axis=0)
        return (w_qkv, b_qkv, w_o, b_o, w_d, b_d, ln1_g, ln1_b,
                w_int, b_int, w_out, b_out, ln2_g, ln2_b)

    per = [per_layer(lp) for lp in layer_params]
    return tuple(jnp.stack([p[i] for p in per], axis=0) for i in range(14))


def prepare_params(params):
    """Call ONCE at parameter-load time (outside the jitted forward)."""
    D = params["state_w"].shape[1]
    return dict(
        bow_emb=params["bow_emb"],
        tok_emb=params["tok_emb"],
        pos_emb=params["pos_emb"],
        embed_consts=(params["state_w"],
                      params["state_b"].reshape(1, D),
                      params["state_ln_g"].reshape(1, D),
                      params["state_ln_b"].reshape(1, D),
                      params["emb_ln_g"].reshape(1, D),
                      params["emb_ln_b"].reshape(1, D)),
        packed=pack_encoder_params(params["layers"]),
    )


# ---------------------------------------------------------------------------
# Full forward (host glue: embedding gathers, mask -> bias, padding, transposes)
# ---------------------------------------------------------------------------
def vilbert_forward(prep, state, instruction, nhead,
                    state_key_padding_mask=None, instruction_key_padding_mask=None):
    B, Sx, nc = state.shape
    Sy = instruction.shape[1]
    D = prep["embed_consts"][0].shape[1]

    # --- embedding-table gathers (XLA glue) ---
    # TODO(synk): no clean Pallas equivalent for these tiny table gathers.
    offsets = (jnp.arange(nc, dtype=jnp.int32) * 64)[None, None, :]
    bow = jnp.take(prep["bow_emb"], state + offsets, axis=0).reshape(B, Sx, nc * D)
    tok = jnp.take(prep["tok_emb"], instruction, axis=0)
    pos_ids = jnp.cumsum(jnp.ones_like(instruction), axis=-1) - 1
    pos = jnp.take(prep["pos_emb"], pos_ids, axis=0)
    tokpos = tok + pos

    x_kpm = (jnp.zeros((B, Sx), jnp.bool_)
             if state_key_padding_mask is None else state_key_padding_mask)
    y_kpm = (jnp.zeros((B, Sy), jnp.bool_)
             if instruction_key_padding_mask is None else instruction_key_padding_mask)

    # pad sequence dims to sublane multiples of 8; padded rows are masked out
    # as attention keys and sliced off after the kernel.
    Sxp = -(-Sx // 8) * 8
    Syp = -(-Sy // 8) * 8
    bow = jnp.pad(bow, ((0, 0), (0, Sxp - Sx), (0, 0)))
    tokpos = jnp.pad(tokpos, ((0, 0), (0, Syp - Sy), (0, 0)))
    x_kpm_p = jnp.pad(x_kpm, ((0, 0), (0, Sxp - Sx)), constant_values=True)
    y_kpm_p = jnp.pad(y_kpm, ((0, 0), (0, Syp - Sy)), constant_values=True)
    # NOTE: fully-masked key rows give a uniform softmax here, whereas PyTorch
    # would return NaN — degenerate-case divergence only.
    bias_x = jnp.where(x_kpm_p, jnp.float32(-1e30), jnp.float32(0.0))[:, None, :]
    bias_y = jnp.where(y_kpm_p, jnp.float32(-1e30), jnp.float32(0.0))[:, None, :]

    # --- single fused Pallas kernel: embeddings + whole encoder stack ---
    x_last, y_last = vilbert_encoder_pallas(
        bow, tokpos, bias_x, bias_y, prep["embed_consts"], prep["packed"], nhead)

    x_last = x_last[:, :Sx, :]
    y_last = y_last[:, :Sy, :]
    encoded = jnp.concatenate(
        [jnp.transpose(x_last, (1, 0, 2)), jnp.transpose(y_last, (1, 0, 2))], axis=0)
    encoding_mask = jnp.concatenate([x_kpm, y_kpm], axis=-1)
    return encoded, encoding_mask


# ---------------------------------------------------------------------------
# Pure-JAX reference (mirrors the PyTorch module) for correctness checking
# ---------------------------------------------------------------------------
def _reference_forward(params, state, instruction, nhead,
                       x_kpm=None, y_kpm=None):
    hi = lax.Precision.HIGHEST
    B, Sx, nc = state.shape
    Sy = instruction.shape[1]
    D = params["state_w"].shape[1]
    hd = D // nhead

    def ln(v, g, b, eps=_LN_EPS):
        m = jnp.mean(v, -1, keepdims=True)
        c = v - m
        var = jnp.mean(c * c, -1, keepdims=True)
        return c / jnp.sqrt(var + eps) * g + b

    def gelu(v):
        return 0.5 * v * (1.0 + lax.erf(v / math.sqrt(2.0)))

    offsets = (jnp.arange(nc, dtype=jnp.int32) * 64)[None, None, :]
    bow = jnp.take(params["bow_emb"], state + offsets, axis=0).reshape(B, Sx, nc * D)
    x = ln(jnp.einsum("bsk,kd->bsd", bow, params["state_w"], precision=hi)
           + params["state_b"], params["state_ln_g"], params["state_ln_b"])
    tok = jnp.take(params["tok_emb"], instruction, axis=0)
    pos_ids = jnp.cumsum(jnp.ones_like(instruction), axis=-1) - 1
    pos = jnp.take(params["pos_emb"], pos_ids, axis=0)
    y = ln(tok + pos, params["emb_ln_g"], params["emb_ln_b"])

    x_kpm = jnp.zeros((B, Sx), jnp.bool_) if x_kpm is None else x_kpm
    y_kpm = jnp.zeros((B, Sy), jnp.bool_) if y_kpm is None else y_kpm

    def mha(q_in, kv_in, kpm, p):
        q = jnp.einsum("bsd,de->bse", q_in, p["wq"], precision=hi) + p["bq"]
        k = jnp.einsum("bsd,de->bse", kv_in, p["wk"], precision=hi) + p["bk"]
        v = jnp.einsum("bsd,de->bse", kv_in, p["wv"], precision=hi) + p["bv"]
        Sq, Sk = q.shape[1], k.shape[1]
        q = q.reshape(B, Sq, nhead, hd)
        k = k.reshape(B, Sk, nhead, hd)
        v = v.reshape(B, Sk, nhead, hd)
        s = jnp.einsum("bqhe,bkhe->bhqk", q, k, precision=hi) / math.sqrt(hd)
        s = s + jnp.where(kpm, jnp.float32(-1e30), jnp.float32(0.0))[:, None, None, :]
        p_attn = jax.nn.softmax(s, axis=-1)
        ctx = jnp.einsum("bhqk,bkhe->bqhe", p_attn, v, precision=hi).reshape(B, Sq, D)
        return jnp.einsum("bsd,de->bse", ctx, p["wo"], precision=hi) + p["bo"]

    for lp in params["layers"]:
        mx = mha(x, y, y_kpm, lp["mha_x_to_y"])
        my = mha(y, x, x_kpm, lp["mha_y_to_x"])
        ax = ln(x + jnp.einsum("bsd,de->bse", mx, lp["dxy_w"], precision=hi) + lp["dxy_b"],
                lp["dxy_ln_g"], lp["dxy_ln_b"])
        ay = ln(y + jnp.einsum("bsd,de->bse", my, lp["dyx_w"], precision=hi) + lp["dyx_b"],
                lp["dyx_ln_g"], lp["dyx_ln_b"])
        ix = gelu(jnp.einsum("bsd,df->bsf", ax, lp["int1_w"], precision=hi) + lp["int1_b"])
        iy = gelu(jnp.einsum("bsd,df->bsf", ay, lp["int2_w"], precision=hi) + lp["int2_b"])
        x = ln(ax + jnp.einsum("bsf,fd->bsd", ix, lp["out1_w"], precision=hi) + lp["out1_b"],
               lp["out1_ln_g"], lp["out1_ln_b"])
        y = ln(ay + jnp.einsum("bsf,fd->bsd", iy, lp["out2_w"], precision=hi) + lp["out2_b"],
               lp["out2_ln_g"], lp["out2_ln_b"])

    encoded = jnp.concatenate(
        [jnp.transpose(x, (1, 0, 2)), jnp.transpose(y, (1, 0, 2))], axis=0)
    return encoded, jnp.concatenate([x_kpm, y_kpm], axis=-1)


# ---------------------------------------------------------------------------
# Deterministic parameter initialization (synthetic, not a checkpoint)
# ---------------------------------------------------------------------------
def init_params(key, *, n_components, vocab_size, num_positions, embed_dim, nlayers):
    D = embed_dim
    F = 2 * D
    keys = iter(jax.random.split(key, 1024))

    def w(shape, scale=0.02):
        return (scale * jax.random.normal(next(keys), shape)).astype(jnp.float32)

    def zeros(shape):
        return jnp.zeros(shape, jnp.float32)

    def ones(shape):
        return jnp.ones(shape, jnp.float32)

    def mha_params():
        return dict(
            wq=w((D, D)), bq=zeros((D,)),
            wk=w((D, D)), bk=zeros((D,)),
            wv=w((D, D)), bv=zeros((D,)),
            wo=w((D, D)), bo=zeros((D,)),
        )

    layers = []
    for _ in range(nlayers):
        layers.append(dict(
            mha_x_to_y=mha_params(), mha_y_to_x=mha_params(),
            dxy_w=w((D, D)), dxy_b=zeros((D,)), dxy_ln_g=ones((D,)), dxy_ln_b=zeros((D,)),
            dyx_w=w((D, D)), dyx_b=zeros((D,)), dyx_ln_g=ones((D,)), dyx_ln_b=zeros((D,)),
            int1_w=w((D, F)), int1_b=zeros((F,)),
            int2_w=w((D, F)), int2_b=zeros((F,)),
            out1_w=w((F, D)), out1_b=zeros((D,)), out1_ln_g=ones((D,)), out1_ln_b=zeros((D,)),
            out2_w=w((F, D)), out2_b=zeros((D,)), out2_ln_g=ones((D,)), out2_ln_b=zeros((D,)),
        ))

    return dict(
        bow_emb=w((n_components * 64, D)),
        state_w=w((n_components * D, D)), state_b=zeros((D,)),
        state_ln_g=ones((D,)), state_ln_b=zeros((D,)),
        tok_emb=w((vocab_size, D)), pos_emb=w((num_positions, D)),
        emb_ln_g=ones((D,)), emb_ln_b=zeros((D,)),
        layers=layers,
    )


# ---------------------------------------------------------------------------
if __name__ == "__main__":
    cfg = dict(
        n_components=3,      # len(state_component_sizes)
        vocab_size=32,
        num_positions=16,
        embed_dim=128,       # module default -> lane-dense (last dim = 128)
        nlayers=2,
        nhead=8,
    )
    B, Sx, Sy = 2, 6, 8

    root = jax.random.PRNGKey(0)
    k_param, k_state, k_instr = jax.random.split(root, 3)

    params = init_params(
        k_param,
        n_components=cfg["n_components"],
        vocab_size=cfg["vocab_size"],
        num_positions=cfg["num_positions"],
        embed_dim=cfg["embed_dim"],
        nlayers=cfg["nlayers"],
    )

    # one-time packing, OUTSIDE the jitted forward / per-call critical path
    prep = prepare_params(params)
    prep = jax.tree_util.tree_map(jax.block_until_ready, prep)

    state = jax.random.randint(k_state, (B, Sx, cfg["n_components"]), 0, 64, jnp.int32)
    instruction = jax.random.randint(k_instr, (B, Sy), 0, cfg["vocab_size"], jnp.int32)

    fwd = jax.jit(functools.partial(vilbert_forward, nhead=cfg["nhead"]))
    encoded, encoding_mask = fwd(prep, state, instruction)
    jax.block_until_ready(encoded)
    jax.block_until_ready(encoding_mask)

    assert encoded.shape == (Sx + Sy, B, cfg["embed_dim"])
    assert encoding_mask.shape == (B, Sx + Sy)
    assert bool(jnp.all(jnp.isfinite(encoded)))

    # correctness vs a pure-JAX reference (loose tolerance: approx reciprocal
    # in the softmax + EUP transcendentals vs XLA)
    ref_encoded, ref_mask = _reference_forward(params, state, instruction, cfg["nhead"])
    max_err = float(jnp.max(jnp.abs(encoded - ref_encoded)))
    assert max_err < 5e-2, f"max abs error vs reference: {max_err}"
    assert bool(jnp.all(encoding_mask == ref_mask))

    print("KERNEL_OK")
</pallas_src>

<mosaic_0001>
module attributes {stable_mosaic.version = 11 : i64} {
  func.func @_vilbert_kernel(%arg0: i32, %arg1: memref<2x8x384xf32, #tpu.memory_space<vmem>>, %arg2: memref<2x8x128xf32, #tpu.memory_space<vmem>>, %arg3: memref<2x1x8xf32, #tpu.memory_space<vmem>>, %arg4: memref<2x1x8xf32, #tpu.memory_space<vmem>>, %arg5: memref<384x128xf32, #tpu.memory_space<vmem>>, %arg6: memref<1x128xf32, #tpu.memory_space<vmem>>, %arg7: memref<1x128xf32, #tpu.memory_space<vmem>>, %arg8: memref<1x128xf32, #tpu.memory_space<vmem>>, %arg9: memref<1x128xf32, #tpu.memory_space<vmem>>, %arg10: memref<1x128xf32, #tpu.memory_space<vmem>>, %arg11: memref<1x2x128x384xf32, #tpu.memory_space<vmem>>, %arg12: memref<1x2x1x384xf32, #tpu.memory_space<vmem>>, %arg13: memref<1x2x128x128xf32, #tpu.memory_space<vmem>>, %arg14: memref<1x2x1x128xf32, #tpu.memory_space<vmem>>, %arg15: memref<1x2x128x128xf32, #tpu.memory_space<vmem>>, %arg16: memref<1x2x1x128xf32, #tpu.memory_space<vmem>>, %arg17: memref<1x2x1x128xf32, #tpu.memory_space<vmem>>, %arg18: memref<1x2x1x128xf32, #tpu.memory_space<vmem>>, %arg19: memref<1x2x128x256xf32, #tpu.memory_space<vmem>>, %arg20: memref<1x2x1x256xf32, #tpu.memory_space<vmem>>, %arg21: memref<1x2x256x128xf32, #tpu.memory_space<vmem>>, %arg22: memref<1x2x1x128xf32, #tpu.memory_space<vmem>>, %arg23: memref<1x2x1x128xf32, #tpu.memory_space<vmem>>, %arg24: memref<1x2x1x128xf32, #tpu.memory_space<vmem>>, %arg25: memref<2x8x128xf32, #tpu.memory_space<vmem>>, %arg26: memref<2x8x128xf32, #tpu.memory_space<vmem>>, %arg27: memref<2x8x128xf32, #tpu.memory_space<vmem>>, %arg28: memref<2x8x128xf32, #tpu.memory_space<vmem>>) attributes {dimension_semantics = [#tpu.dimension_semantics<arbitrary>], iteration_bounds = array<i64: 2>, scalar_prefetch = 0 : i64, scratch_operands = 2 : i64, tpu.core_type = #tpu.core_type<tc>, window_params = [{pipeline_mode = #tpu.pipeline_mode<synchronous>, transform_indices = @transform_0, window_bounds = array<i64: 2, 8, 384>}, {pipeline_mode = #tpu.pipeline_mode<synchronous>, transform_indices = @transform_1, window_bounds = array<i64: 2, 8, 128>}, {pipeline_mode = #tpu.pipeline_mode<synchronous>, transform_indices = @transform_2, window_bounds = array<i64: 2, 1, 8>}, {pipeline_mode = #tpu.pipeline_mode<synchronous>, transform_indices = @transform_3, window_bounds = array<i64: 2, 1, 8>}, {pipeline_mode = #tpu.pipeline_mode<synchronous>, transform_indices = @transform_4, window_bounds = array<i64: 384, 128>}, {pipeline_mode = #tpu.pipeline_mode<synchronous>, transform_indices = @transform_5, window_bounds = array<i64: 1, 128>}, {pipeline_mode = #tpu.pipeline_mode<synchronous>, transform_indices = @transform_6, window_bounds = array<i64: 1, 128>}, {pipeline_mode = #tpu.pipeline_mode<synchronous>, transform_indices = @transform_7, window_bounds = array<i64: 1, 128>}, {pipeline_mode = #tpu.pipeline_mode<synchronous>, transform_indices = @transform_8, window_bounds = array<i64: 1, 128>}, {pipeline_mode = #tpu.pipeline_mode<synchronous>, transform_indices = @transform_9, window_bounds = array<i64: 1, 128>}, {transform_indices = @transform_10, window_bounds = array<i64: 1, 2, 128, 384>}, {transform_indices = @transform_11, window_bounds = array<i64: 1, 2, 1, 384>}, {transform_indices = @transform_12, window_bounds = array<i64: 1, 2, 128, 128>}, {transform_indices = @transform_13, window_bounds = array<i64: 1, 2, 1, 128>}, {transform_indices = @transform_14, window_bounds = array<i64: 1, 2, 128, 128>}, {transform_indices = @transform_15, window_bounds = array<i64: 1, 2, 1, 128>}, {transform_indices = @transform_16, window_bounds = array<i64: 1, 2, 1, 128>}, {transform_indices = @transform_17, window_bounds = array<i64: 1, 2, 1, 128>}, {transform_indices = @transform_18, window_bounds = array<i64: 1, 2, 128, 256>}, {transform_indices = @transform_19, window_bounds = array<i64: 1, 2, 1, 256>}, {transform_indices = @transform_20, window_bounds = array<i64: 1, 2, 256, 128>}, {transform_indices = @transform_21, window_bounds = array<i64: 1, 2, 1, 128>}, {transform_indices = @transform_22, window_bounds = array<i64: 1, 2, 1, 128>}, {transform_indices = @transform_23, window_bounds = array<i64: 1, 2, 1, 128>}, {pipeline_mode = #tpu.pipeline_mode<synchronous>, transform_indices = @transform_24, window_bounds = array<i64: 2, 8, 128>}, {pipeline_mode = #tpu.pipeline_mode<synchronous>, transform_indices = @transform_25, window_bounds = array<i64: 2, 8, 128>}]} {
    %c0_i32 = arith.constant 0 : i32
    %0 = arith.cmpi eq, %arg0, %c0_i32 : i32
    %1 = arith.extui %0 : i1 to i32
    %c0_i32_0 = arith.constant 0 : i32
    %2 = arith.cmpi ne, %1, %c0_i32_0 : i32
    scf.if %2 {
      %c0_337 = arith.constant 0 : index
      %c0_338 = arith.constant 0 : index
      %c0_339 = arith.constant 0 : index
      %957 = vector.load %arg1[%c0_337, %c0_338, %c0_339] : memref<2x8x384xf32, #tpu.memory_space<vmem>>, vector<2x8x384xf32>
      %958 = vector.shape_cast %957 : vector<2x8x384xf32> to vector<16x384xf32>
      %c0_340 = arith.constant 0 : index
      %c0_341 = arith.constant 0 : index
      %959 = vector.load %arg5[%c0_340, %c0_341] : memref<384x128xf32, #tpu.memory_space<vmem>>, vector<384x128xf32>
      %cst_342 = arith.constant dense<0.000000e+00> : vector<16x128xf32>
      %960 = tpu.matmul %958, %959, %cst_342 {dimension_numbers = #tpu.dot_dimension_numbers<[1], [0], [0], [1], [0, 0, 1, 1], [], []>} : vector<16x384xf32>, vector<384x128xf32>, vector<16x128xf32> -> vector<16x128xf32>
      %c0_343 = arith.constant 0 : index
      %c0_344 = arith.constant 0 : index
      %961 = vector.load %arg6[%c0_343, %c0_344] : memref<1x128xf32, #tpu.memory_space<vmem>>, vector<1x128xf32>
      %962 = vector.broadcast %961 : vector<1x128xf32> to vector<16x128xf32>
      %963 = arith.addf %960, %962 : vector<16x128xf32>
      %c0_345 = arith.constant 0 : index
      %c0_346 = arith.constant 0 : index
      %964 = vector.load %arg7[%c0_345, %c0_346] : memref<1x128xf32, #tpu.memory_space<vmem>>, vector<1x128xf32>
      %c0_347 = arith.constant 0 : index
      %c0_348 = arith.constant 0 : index
      %965 = vector.load %arg8[%c0_347, %c0_348] : memref<1x128xf32, #tpu.memory_space<vmem>>, vector<1x128xf32>
      %cst_349 = arith.constant dense<0.000000e+00> : vector<16xf32>
      %966 = vector.multi_reduction <add>, %963, %cst_349 [1] : vector<16x128xf32> to vector<16xf32>
      %967 = vector.shape_cast %966 : vector<16xf32> to vector<16x1xf32>
      %cst_350 = arith.constant 1.280000e+02 : f32
      %968 = vector.broadcast %cst_350 : f32 to vector<16x1xf32>
      %969 = arith.divf %967, %968 : vector<16x1xf32>
      %970 = vector.broadcast %969 : vector<16x1xf32> to vector<16x128xf32>
      %971 = arith.subf %963, %970 : vector<16x128xf32>
      %972 = arith.mulf %971, %971 : vector<16x128xf32>
      %cst_351 = arith.constant dense<0.000000e+00> : vector<16xf32>
      %973 = vector.multi_reduction <add>, %972, %cst_351 [1] : vector<16x128xf32> to vector<16xf32>
      %974 = vector.shape_cast %973 : vector<16xf32> to vector<16x1xf32>
      %cst_352 = arith.constant 1.280000e+02 : f32
      %975 = vector.broadcast %cst_352 : f32 to vector<16x1xf32>
      %976 = arith.divf %974, %975 : vector<16x1xf32>
      %cst_353 = arith.constant 9.99999974E-6 : f32
      %977 = vector.broadcast %cst_353 : f32 to vector<16x1xf32>
      %978 = arith.addf %976, %977 : vector<16x1xf32>
      %979 = math.rsqrt %978 : vector<16x1xf32>
      %980 = vector.broadcast %979 : vector<16x1xf32> to vector<16x128xf32>
      %981 = arith.mulf %971, %980 : vector<16x128xf32>
      %982 = vector.broadcast %964 : vector<1x128xf32> to vector<16x128xf32>
      %983 = arith.mulf %981, %982 : vector<16x128xf32>
      %984 = vector.broadcast %965 : vector<1x128xf32> to vector<16x128xf32>
      %985 = arith.addf %983, %984 : vector<16x128xf32>
      %986 = vector.shape_cast %985 : vector<16x128xf32> to vector<2x8x128xf32>
      %c0_354 = arith.constant 0 : index
      %c0_355 = arith.constant 0 : index
      %c0_356 = arith.constant 0 : index
      %987 = vector.load %arg27[%c0_354, %c0_355, %c0_356] : memref<2x8x128xf32, #tpu.memory_space<vmem>>, vector<2x8x128xf32>
      tpu.vector_store %arg27[%c0_354, %c0_355, %c0_356], %986 {strides = array<i32>} : memref<2x8x128xf32, #tpu.memory_space<vmem>>, vector<2x8x128xf32>,
      %c0_357 = arith.constant 0 : index
      %c0_358 = arith.constant 0 : index
      %c0_359 = arith.constant 0 : index
      %988 = vector.load %arg2[%c0_357, %c0_358, %c0_359] : memref<2x8x128xf32, #tpu.memory_space<vmem>>, vector<2x8x128xf32>
      %989 = vector.shape_cast %988 : vector<2x8x128xf32> to vector<16x128xf32>
      %c0_360 = arith.constant 0 : index
      %c0_361 = arith.constant 0 : index
      %990 = vector.load %arg9[%c0_360, %c0_361] : memref<1x128xf32, #tpu.memory_space<vmem>>, vector<1x128xf32>
      %c0_362 = arith.constant 0 : index
      %c0_363 = arith.constant 0 : index
      %991 = vector.load %arg10[%c0_362, %c0_363] : memref<1x128xf32, #tpu.memory_space<vmem>>, vector<1x128xf32>
      %cst_364 = arith.constant dense<0.000000e+00> : vector<16xf32>
      %992 = vector.multi_reduction <add>, %989, %cst_364 [1] : vector<16x128xf32> to vector<16xf32>
      %993 = vector.shape_cast %992 : vector<16xf32> to vector<16x1xf32>
      %cst_365 = arith.constant 1.280000e+02 : f32
      %994 = vector.broadcast %cst_365 : f32 to vector<16x1xf32>
      %995 = arith.divf %993, %994 : vector<16x1xf32>
      %996 = vector.broadcast %995 : vector<16x1xf32> to vector<16x128xf32>
      %997 = arith.subf %989, %996 : vector<16x128xf32>
      %998 = arith.mulf %997, %997 : vector<16x128xf32>
      %cst_366 = arith.constant dense<0.000000e+00> : vector<16xf32>
      %999 = vector.multi_reduction <add>, %998, %cst_366 [1] : vector<16x128xf32> to vector<16xf32>
      %1000 = vector.shape_cast %999 : vector<16xf32> to vector<16x1xf32>
      %cst_367 = arith.constant 1.280000e+02 : f32
      %1001 = vector.broadcast %cst_367 : f32 to vector<16x1xf32>
      %1002 = arith.divf %1000, %1001 : vector<16x1xf32>
      %cst_368 = arith.constant 9.99999974E-6 : f32
      %1003 = vector.broadcast %cst_368 : f32 to vector<16x1xf32>
      %1004 = arith.addf %1002, %1003 : vector<16x1xf32>
      %1005 = math.rsqrt %1004 : vector<16x1xf32>
      %1006 = vector.broadcast %1005 : vector<16x1xf32> to vector<16x128xf32>
      %1007 = arith.mulf %997, %1006 : vector<16x128xf32>
      %1008 = vector.broadcast %990 : vector<1x128xf32> to vector<16x128xf32>
      %1009 = arith.mulf %1007, %1008 : vector<16x128xf32>
      %1010 = vector.broadcast %991 : vector<1x128xf32> to vector<16x128xf32>
      %1011 = arith.addf %1009, %1010 : vector<16x128xf32>
      %1012 = vector.shape_cast %1011 : vector<16x128xf32> to vector<2x8x128xf32>
      %c0_369 = arith.constant 0 : index
      %c0_370 = arith.constant 0 : index
      %c0_371 = arith.constant 0 : index
      %1013 = vector.load %arg28[%c0_369, %c0_370, %c0_371] : memref<2x8x128xf32, #tpu.memory_space<vmem>>, vector<2x8x128xf32>
      tpu.vector_store %arg28[%c0_369, %c0_370, %c0_371], %1012 {strides = array<i32>} : memref<2x8x128xf32, #tpu.memory_space<vmem>>, vector<2x8x128xf32>,
    } else {
    }
    %c0 = arith.constant 0 : index
    %c0_1 = arith.constant 0 : index
    %c0_2 = arith.constant 0 : index
    %3 = vector.load %arg27[%c0, %c0_1, %c0_2] : memref<2x8x128xf32, #tpu.memory_space<vmem>>, vector<2x8x128xf32>
    %4 = vector.shape_cast %3 : vector<2x8x128xf32> to vector<16x128xf32>
    %c0_3 = arith.constant 0 : index
    %c0_4 = arith.constant 0 : index
    %c0_5 = arith.constant 0 : index
    %5 = vector.load %arg28[%c0_3, %c0_4, %c0_5] : memref<2x8x128xf32, #tpu.memory_space<vmem>>, vector<2x8x128xf32>
    %6 = vector.shape_cast %5 : vector<2x8x128xf32> to vector<16x128xf32>
    %c0_6 = arith.constant 0 : index
    %c0_7 = arith.constant 0 : index
    %c0_8 = arith.constant 0 : index
    %7 = vector.load %arg3[%c0_6, %c0_7, %c0_8] : memref<2x1x8xf32, #tpu.memory_space<vmem>>, vector<2x1x8xf32>
    %c0_9 = arith.constant 0 : index
    %c0_10 = arith.constant 0 : index
    %c0_11 = arith.constant 0 : index
    %8 = vector.load %arg4[%c0_9, %c0_10, %c0_11] : memref<2x1x8xf32, #tpu.memory_space<vmem>>, vector<2x1x8xf32>
    %c0_12 = arith.constant 0 : index
    %c0_13 = arith.constant 0 : index
    %c0_14 = arith.constant 0 : index
    %c0_15 = arith.constant 0 : index
    %9 = vector.load %arg11[%c0_12, %c0_13, %c0_14, %c0_15] : memref<1x2x128x384xf32, #tpu.memory_space<vmem>>, vector<1x1x128x384xf32>
    %10 = vector.shape_cast %9 : vector<1x1x128x384xf32> to vector<128x384xf32>
    %cst = arith.constant dense<0.000000e+00> : vector<16x384xf32>
    %11 = tpu.matmul %4, %10, %cst {dimension_numbers = #tpu.dot_dimension_numbers<[1], [0], [0], [1], [0, 0, 1, 1], [], []>} : vector<16x128xf32>, vector<128x384xf32>, vector<16x384xf32> -> vector<16x384xf32>
    %c0_16 = arith.constant 0 : index
    %c0_17 = arith.constant 0 : index
    %c0_18 = arith.constant 0 : index
    %c0_19 = arith.constant 0 : index
    %12 = vector.load %arg12[%c0_16, %c0_17, %c0_18, %c0_19] : memref<1x2x1x384xf32, #tpu.memory_space<vmem>>, vector<1x1x1x384xf32>
    %13 = vector.shape_cast %12 : vector<1x1x1x384xf32> to vector<1x384xf32>
    %14 = vector.broadcast %13 : vector<1x384xf32> to vector<16x384xf32>
    %15 = arith.addf %11, %14 : vector<16x384xf32>
    %c0_20 = arith.constant 0 : index
    %c1 = arith.constant 1 : index
    %c0_21 = arith.constant 0 : index
    %c0_22 = arith.constant 0 : index
    %16 = vector.load %arg11[%c0_20, %c1, %c0_21, %c0_22] : memref<1x2x128x384xf32, #tpu.memory_space<vmem>>, vector<1x1x128x384xf32>
    %17 = vector.shape_cast %16 : vector<1x1x128x384xf32> to vector<128x384xf32>
    %cst_23 = arith.constant dense<0.000000e+00> : vector<16x384xf32>
    %18 = tpu.matmul %6, %17, %cst_23 {dimension_numbers = #tpu.dot_dimension_numbers<[1], [0], [0], [1], [0, 0, 1, 1], [], []>} : vector<16x128xf32>, vector<128x384xf32>, vector<16x384xf32> -> vector<16x384xf32>
    %c0_24 = arith.constant 0 : index
    %c1_25 = arith.constant 1 : index
    %c0_26 = arith.constant 0 : index
    %c0_27 = arith.constant 0 : index
    %19 = vector.load %arg12[%c0_24, %c1_25, %c0_26, %c0_27] : memref<1x2x1x384xf32, #tpu.memory_space<vmem>>, vector<1x1x1x384xf32>
    %20 = vector.shape_cast %19 : vector<1x1x1x384xf32> to vector<1x384xf32>
    %21 = vector.broadcast %20 : vector<1x384xf32> to vector<16x384xf32>
    %22 = arith.addf %18, %21 : vector<16x384xf32>
    %23 = tpu.iota {dimensions = array<i32: 1>} : vector<1x128xi32>
    %c0_i32_28 = arith.constant 0 : i32
    %24 = vector.broadcast %c0_i32_28 : i32 to vector<1x128xi32>
    %25 = arith.cmpi sge, %23, %24 : vector<1x128xi32>
    %c16_i32 = arith.constant 16 : i32
    %26 = vector.broadcast %c16_i32 : i32 to vector<1x128xi32>
    %27 = arith.cmpi slt, %23, %26 : vector<1x128xi32>
    %28 = arith.andi %25, %27 : vector<1x128xi1>
    %29 = arith.extui %28 : vector<1x128xi1> to vector<1x128xi32>
    %30 = arith.sitofp %29 : vector<1x128xi32> to vector<1x128xf32>
    %c16_i32_29 = arith.constant 16 : i32
    %31 = vector.broadcast %c16_i32_29 : i32 to vector<1x128xi32>
    %32 = arith.cmpi sge, %23, %31 : vector<1x128xi32>
    %c32_i32 = arith.constant 32 : i32
    %33 = vector.broadcast %c32_i32 : i32 to vector<1x128xi32>
    %34 = arith.cmpi slt, %23, %33 : vector<1x128xi32>
    %35 = arith.andi %32, %34 : vector<1x128xi1>
    %36 = arith.extui %35 : vector<1x128xi1> to vector<1x128xi32>
    %37 = arith.sitofp %36 : vector<1x128xi32> to vector<1x128xf32>
    %c32_i32_30 = arith.constant 32 : i32
    %38 = vector.broadcast %c32_i32_30 : i32 to vector<1x128xi32>
    %39 = arith.cmpi sge, %23, %38 : vector<1x128xi32>
    %c48_i32 = arith.constant 48 : i32
    %40 = vector.broadcast %c48_i32 : i32 to vector<1x128xi32>
    %41 = arith.cmpi slt, %23, %40 : vector<1x128xi32>
    %42 = arith.andi %39, %41 : vector<1x128xi1>
    %43 = arith.extui %42 : vector<1x128xi1> to vector<1x128xi32>
    %44 = arith.sitofp %43 : vector<1x128xi32> to vector<1x128xf32>
    %c48_i32_31 = arith.constant 48 : i32
    %45 = vector.broadcast %c48_i32_31 : i32 to vector<1x128xi32>
    %46 = arith.cmpi sge, %23, %45 : vector<1x128xi32>
    %c64_i32 = arith.constant 64 : i32
    %47 = vector.broadcast %c64_i32 : i32 to vector<1x128xi32>
    %48 = arith.cmpi slt, %23, %47 : vector<1x128xi32>
    %49 = arith.andi %46, %48 : vector<1x128xi1>
    %50 = arith.extui %49 : vector<1x128xi1> to vector<1x128xi32>
    %51 = arith.sitofp %50 : vector<1x128xi32> to vector<1x128xf32>
    %c64_i32_32 = arith.constant 64 : i32
    %52 = vector.broadcast %c64_i32_32 : i32 to vector<1x128xi32>
    %53 = arith.cmpi sge, %23, %52 : vector<1x128xi32>
    %c80_i32 = arith.constant 80 : i32
    %54 = vector.broadcast %c80_i32 : i32 to vector<1x128xi32>
    %55 = arith.cmpi slt, %23, %54 : vector<1x128xi32>
    %56 = arith.andi %53, %55 : vector<1x128xi1>
    %57 = arith.extui %56 : vector<1x128xi1> to vector<1x128xi32>
    %58 = arith.sitofp %57 : vector<1x128xi32> to vector<1x128xf32>
    %c80_i32_33 = arith.constant 80 : i32
    %59 = vector.broadcast %c80_i32_33 : i32 to vector<1x128xi32>
    %60 = arith.cmpi sge, %23, %59 : vector<1x128xi32>
    %c96_i32 = arith.constant 96 : i32
    %61 = vector.broadcast %c96_i32 : i32 to vector<1x128xi32>
    %62 = arith.cmpi slt, %23, %61 : vector<1x128xi32>
    %63 = arith.andi %60, %62 : vector<1x128xi1>
    %64 = arith.extui %63 : vector<1x128xi1> to vector<1x128xi32>
    %65 = arith.sitofp %64 : vector<1x128xi32> to vector<1x128xf32>
    %c96_i32_34 = arith.constant 96 : i32
    %66 = vector.broadcast %c96_i32_34 : i32 to vector<1x128xi32>
    %67 = arith.cmpi sge, %23, %66 : vector<1x128xi32>
    %c112_i32 = arith.constant 112 : i32
    %68 = vector.broadcast %c112_i32 : i32 to vector<1x128xi32>
    %69 = arith.cmpi slt, %23, %68 : vector<1x128xi32>
    %70 = arith.andi %67, %69 : vector<1x128xi1>
    %71 = arith.extui %70 : vector<1x128xi1> to vector<1x128xi32>
    %72 = arith.sitofp %71 : vector<1x128xi32> to vector<1x128xf32>
    %c112_i32_35 = arith.constant 112 : i32
    %73 = vector.broadcast %c112_i32_35 : i32 to vector<1x128xi32>
    %74 = arith.cmpi sge, %23, %73 : vector<1x128xi32>
    %c128_i32 = arith.constant 128 : i32
    %75 = vector.broadcast %c128_i32 : i32 to vector<1x128xi32>
    %76 = arith.cmpi slt, %23, %75 : vector<1x128xi32>
    %77 = arith.andi %74, %76 : vector<1x128xi1>
    %78 = arith.extui %77 : vector<1x128xi1> to vector<1x128xi32>
    %79 = arith.sitofp %78 : vector<1x128xi32> to vector<1x128xf32>
    %c0_36 = arith.constant 0 : index
    %c0_37 = arith.constant 0 : index
    %c0_38 = arith.constant 0 : index
    %c0_39 = arith.constant 0 : index
    %80 = vector.load %arg13[%c0_36, %c0_37, %c0_38, %c0_39] : memref<1x2x128x128xf32, #tpu.memory_space<vmem>>, vector<1x1x128x128xf32>
    %81 = vector.shape_cast %80 : vector<1x1x128x128xf32> to vector<128x128xf32>
    %c0_40 = arith.constant 0 : index
    %c0_41 = arith.constant 0 : index
    %c0_42 = arith.constant 0 : index
    %c0_43 = arith.constant 0 : index
    %82 = vector.load %arg14[%c0_40, %c0_41, %c0_42, %c0_43] : memref<1x2x1x128xf32, #tpu.memory_space<vmem>>, vector<1x1x1x128xf32>
    %83 = vector.shape_cast %82 : vector<1x1x1x128xf32> to vector<1x128xf32>
    %84 = vector.extract_strided_slice %15 {offsets = [0, 0], sizes = [8, 128], strides = [1, 1]} : vector<16x384xf32> to vector<8x128xf32>
    %85 = vector.extract_strided_slice %22 {offsets = [0, 128], sizes = [8, 128], strides = [1, 1]} : vector<16x384xf32> to vector<8x128xf32>
    %86 = vector.extract_strided_slice %22 {offsets = [0, 256], sizes = [8, 128], strides = [1, 1]} : vector<16x384xf32> to vector<8x128xf32>
    %87 = vector.extract_strided_slice %8 {offsets = [0, 0, 0], sizes = [1, 1, 8], strides = [1, 1, 1]} : vector<2x1x8xf32> to vector<1x1x8xf32>
    %88 = vector.shape_cast %87 : vector<1x1x8xf32> to vector<1x8xf32>
    %cst_44 = arith.constant 0.000000e+00 : f32
    %89 = vector.broadcast %cst_44 : f32 to vector<8x128xf32>
    %90 = vector.broadcast %30 : vector<1x128xf32> to vector<8x128xf32>
    %91 = arith.mulf %85, %90 : vector<8x128xf32>
    %cst_45 = arith.constant dense<0.000000e+00> : vector<8x8xf32>
    %92 = tpu.matmul %84, %91, %cst_45 {dimension_numbers = #tpu.dot_dimension_numbers<[1], [1], [0], [0], [0, 0, 1, 0], [], []>} : vector<8x128xf32>, vector<8x128xf32>, vector<8x8xf32> -> vector<8x8xf32>
    %cst_46 = arith.constant 2.500000e-01 : f32
    %93 = vector.broadcast %cst_46 : f32 to vector<8x8xf32>
    %94 = arith.mulf %92, %93 : vector<8x8xf32>
    %95 = vector.broadcast %88 : vector<1x8xf32> to vector<8x8xf32>
    %96 = arith.addf %94, %95 : vector<8x8xf32>
    %cst_47 = arith.constant dense<0xFF800000> : vector<8xf32>
    %97 = vector.multi_reduction <maximumf>, %96, %cst_47 [1] : vector<8x8xf32> to vector<8xf32>
    %98 = vector.shape_cast %97 : vector<8xf32> to vector<8x1xf32>
    %99 = vector.broadcast %98 : vector<8x1xf32> to vector<8x8xf32>
    %100 = arith.subf %96, %99 : vector<8x8xf32>
    %101 = math.exp %100 : vector<8x8xf32>
    %cst_48 = arith.constant dense<0.000000e+00> : vector<8xf32>
    %102 = vector.multi_reduction <add>, %101, %cst_48 [1] : vector<8x8xf32> to vector<8xf32>
    %103 = vector.shape_cast %102 : vector<8xf32> to vector<8x1xf32>
    %104 = tpu.reciprocal %103 {approx = true} : vector<8x1xf32> -> vector<8x1xf32>
    %105 = vector.broadcast %104 : vector<8x1xf32> to vector<8x8xf32>
    %106 = arith.mulf %101, %105 : vector<8x8xf32>
    %107 = vector.broadcast %30 : vector<1x128xf32> to vector<8x128xf32>
    %108 = arith.mulf %86, %107 : vector<8x128xf32>
    %cst_49 = arith.constant dense<0.000000e+00> : vector<8x128xf32>
    %109 = tpu.matmul %106, %108, %cst_49 {dimension_numbers = #tpu.dot_dimension_numbers<[1], [0], [0], [1], [0, 0, 1, 1], [], []>} : vector<8x8xf32>, vector<8x128xf32>, vector<8x128xf32> -> vector<8x128xf32>
    %110 = arith.addf %89, %109 : vector<8x128xf32>
    %111 = vector.broadcast %37 : vector<1x128xf32> to vector<8x128xf32>
    %112 = arith.mulf %85, %111 : vector<8x128xf32>
    %cst_50 = arith.constant dense<0.000000e+00> : vector<8x8xf32>
    %113 = tpu.matmul %84, %112, %cst_50 {dimension_numbers = #tpu.dot_dimension_numbers<[1], [1], [0], [0], [0, 0, 1, 0], [], []>} : vector<8x128xf32>, vector<8x128xf32>, vector<8x8xf32> -> vector<8x8xf32>
    %cst_51 = arith.constant 2.500000e-01 : f32
    %114 = vector.broadcast %cst_51 : f32 to vector<8x8xf32>
    %115 = arith.mulf %113, %114 : vector<8x8xf32>
    %116 = vector.broadcast %88 : vector<1x8xf32> to vector<8x8xf32>
    %117 = arith.addf %115, %116 : vector<8x8xf32>
    %cst_52 = arith.constant dense<0xFF800000> : vector<8xf32>
    %118 = vector.multi_reduction <maximumf>, %117, %cst_52 [1] : vector<8x8xf32> to vector<8xf32>
    %119 = vector.shape_cast %118 : vector<8xf32> to vector<8x1xf32>
    %120 = vector.broadcast %119 : vector<8x1xf32> to vector<8x8xf32>
    %121 = arith.subf %117, %120 : vector<8x8xf32>
    %122 = math.exp %121 : vector<8x8xf32>
    %cst_53 = arith.constant dense<0.000000e+00> : vector<8xf32>
    %123 = vector.multi_reduction <add>, %122, %cst_53 [1] : vector<8x8xf32> to vector<8xf32>
    %124 = vector.shape_cast %123 : vector<8xf32> to vector<8x1xf32>
    %125 = tpu.reciprocal %124 {approx = true} : vector<8x1xf32> -> vector<8x1xf32>
    %126 = vector.broadcast %125 : vector<8x1xf32> to vector<8x8xf32>
    %127 = arith.mulf %122, %126 : vector<8x8xf32>
    %128 = vector.broadcast %37 : vector<1x128xf32> to vector<8x128xf32>
    %129 = arith.mulf %86, %128 : vector<8x128xf32>
    %cst_54 = arith.constant dense<0.000000e+00> : vector<8x128xf32>
    %130 = tpu.matmul %127, %129, %cst_54 {dimension_numbers = #tpu.dot_dimension_numbers<[1], [0], [0], [1], [0, 0, 1, 1], [], []>} : vector<8x8xf32>, vector<8x128xf32>, vector<8x128xf32> -> vector<8x128xf32>
    %131 = arith.addf %110, %130 : vector<8x128xf32>
    %132 = vector.broadcast %44 : vector<1x128xf32> to vector<8x128xf32>
    %133 = arith.mulf %85, %132 : vector<8x128xf32>
    %cst_55 = arith.constant dense<0.000000e+00> : vector<8x8xf32>
    %134 = tpu.matmul %84, %133, %cst_55 {dimension_numbers = #tpu.dot_dimension_numbers<[1], [1], [0], [0], [0, 0, 1, 0], [], []>} : vector<8x128xf32>, vector<8x128xf32>, vector<8x8xf32> -> vector<8x8xf32>
    %cst_56 = arith.constant 2.500000e-01 : f32
    %135 = vector.broadcast %cst_56 : f32 to vector<8x8xf32>
    %136 = arith.mulf %134, %135 : vector<8x8xf32>
    %137 = vector.broadcast %88 : vector<1x8xf32> to vector<8x8xf32>
    %138 = arith.addf %136, %137 : vector<8x8xf32>
    %cst_57 = arith.constant dense<0xFF800000> : vector<8xf32>
    %139 = vector.multi_reduction <maximumf>, %138, %cst_57 [1] : vector<8x8xf32> to vector<8xf32>
    %140 = vector.shape_cast %139 : vector<8xf32> to vector<8x1xf32>
    %141 = vector.broadcast %140 : vector<8x1xf32> to vector<8x8xf32>
    %142 = arith.subf %138, %141 : vector<8x8xf32>
    %143 = math.exp %142 : vector<8x8xf32>
    %cst_58 = arith.constant dense<0.000000e+00> : vector<8xf32>
    %144 = vector.multi_reduction <add>, %143, %cst_58 [1] : vector<8x8xf32> to vector<8xf32>
    %145 = vector.shape_cast %144 : vector<8xf32> to vector<8x1xf32>
    %146 = tpu.reciprocal %145 {approx = true} : vector<8x1xf32> -> vector<8x1xf32>
    %147 = vector.broadcast %146 : vector<8x1xf32> to vector<8x8xf32>
    %148 = arith.mulf %143, %147 : vector<8x8xf32>
    %149 = vector.broadcast %44 : vector<1x128xf32> to vector<8x128xf32>
    %150 = arith.mulf %86, %149 : vector<8x128xf32>
    %cst_59 = arith.constant dense<0.000000e+00> : vector<8x128xf32>
    %151 = tpu.matmul %148, %150, %cst_59 {dimension_numbers = #tpu.dot_dimension_numbers<[1], [0], [0], [1], [0, 0, 1, 1], [], []>} : vector<8x8xf32>, vector<8x128xf32>, vector<8x128xf32> -> vector<8x128xf32>
    %152 = arith.addf %131, %151 : vector<8x128xf32>
    %153 = vector.broadcast %51 : vector<1x128xf32> to vector<8x128xf32>
    %154 = arith.mulf %85, %153 : vector<8x128xf32>
    %cst_60 = arith.constant dense<0.000000e+00> : vector<8x8xf32>
    %155 = tpu.matmul %84, %154, %cst_60 {dimension_numbers = #tpu.dot_dimension_numbers<[1], [1], [0], [0], [0, 0, 1, 0], [], []>} : vector<8x128xf32>, vector<8x128xf32>, vector<8x8xf32> -> vector<8x8xf32>
    %cst_61 = arith.constant 2.500000e-01 : f32
    %156 = vector.broadcast %cst_61 : f32 to vector<8x8xf32>
    %157 = arith.mulf %155, %156 : vector<8x8xf32>
    %158 = vector.broadcast %88 : vector<1x8xf32> to vector<8x8xf32>
    %159 = arith.addf %157, %158 : vector<8x8xf32>
    %cst_62 = arith.constant dense<0xFF800000> : vector<8xf32>
    %160 = vector.multi_reduction <maximumf>, %159, %cst_62 [1] : vector<8x8xf32> to vector<8xf32>
    %161 = vector.shape_cast %160 : vector<8xf32> to vector<8x1xf32>
    %162 = vector.broadcast %161 : vector<8x1xf32> to vector<8x8xf32>
    %163 = arith.subf %159, %162 : vector<8x8xf32>
    %164 = math.exp %163 : vector<8x8xf32>
    %cst_63 = arith.constant dense<0.000000e+00> : vector<8xf32>
    %165 = vector.multi_reduction <add>, %164, %cst_63 [1] : vector<8x8xf32> to vector<8xf32>
    %166 = vector.shape_cast %165 : vector<8xf32> to vector<8x1xf32>
    %167 = tpu.reciprocal %166 {approx = true} : vector<8x1xf32> -> vector<8x1xf32>
    %168 = vector.broadcast %167 : vector<8x1xf32> to vector<8x8xf32>
    %169 = arith.mulf %164, %168 : vector<8x8xf32>
    %170 = vector.broadcast %51 : vector<1x128xf32> to vector<8x128xf32>
    %171 = arith.mulf %86, %170 : vector<8x128xf32>
    %cst_64 = arith.constant dense<0.000000e+00> : vector<8x128xf32>
    %172 = tpu.matmul %169, %171, %cst_64 {dimension_numbers = #tpu.dot_dimension_numbers<[1], [0], [0], [1], [0, 0, 1, 1], [], []>} : vector<8x8xf32>, vector<8x128xf32>, vector<8x128xf32> -> vector<8x128xf32>
    %173 = arith.addf %152, %172 : vector<8x128xf32>
    %174 = vector.broadcast %58 : vector<1x128xf32> to vector<8x128xf32>
    %175 = arith.mulf %85, %174 : vector<8x128xf32>
    %cst_65 = arith.constant dense<0.000000e+00> : vector<8x8xf32>
    %176 = tpu.matmul %84, %175, %cst_65 {dimension_numbers = #tpu.dot_dimension_numbers<[1], [1], [0], [0], [0, 0, 1, 0], [], []>} : vector<8x128xf32>, vector<8x128xf32>, vector<8x8xf32> -> vector<8x8xf32>
    %cst_66 = arith.constant 2.500000e-01 : f32
    %177 = vector.broadcast %cst_66 : f32 to vector<8x8xf32>
    %178 = arith.mulf %176, %177 : vector<8x8xf32>
    %179 = vector.broadcast %88 : vector<1x8xf32> to vector<8x8xf32>
    %180 = arith.addf %178, %179 : vector<8x8xf32>
    %cst_67 = arith.constant dense<0xFF800000> : vector<8xf32>
    %181 = vector.multi_reduction <maximumf>, %180, %cst_67 [1] : vector<8x8xf32> to vector<8xf32>
    %182 = vector.shape_cast %181 : vector<8xf32> to vector<8x1xf32>
    %183 = vector.broadcast %182 : vector<8x1xf32> to vector<8x8xf32>
    %184 = arith.subf %180, %183 : vector<8x8xf32>
    %185 = math.exp %184 : vector<8x8xf32>
    %cst_68 = arith.constant dense<0.000000e+00> : vector<8xf32>
    %186 = vector.multi_reduction <add>, %185, %cst_68 [1] : vector<8x8xf32> to vector<8xf32>
    %187 = vector.shape_cast %186 : vector<8xf32> to vector<8x1xf32>
    %188 = tpu.reciprocal %187 {approx = true} : vector<8x1xf32> -> vector<8x1xf32>
    %189 = vector.broadcast %188 : vector<8x1xf32> to vector<8x8xf32>
    %190 = arith.mulf %185, %189 : vector<8x8xf32>
    %191 = vector.broadcast %58 : vector<1x128xf32> to vector<8x128xf32>
    %192 = arith.mulf %86, %191 : vector<8x128xf32>
    %cst_69 = arith.constant dense<0.000000e+00> : vector<8x128xf32>
    %193 = tpu.matmul %190, %192, %cst_69 {dimension_numbers = #tpu.dot_dimension_numbers<[1], [0], [0], [1], [0, 0, 1, 1], [], []>} : vector<8x8xf32>, vector<8x128xf32>, vector<8x128xf32> -> vector<8x128xf32>
    %194 = arith.addf %173, %193 : vector<8x128xf32>
    %195 = vector.broadcast %65 : vector<1x128xf32> to vector<8x128xf32>
    %196 = arith.mulf %85, %195 : vector<8x128xf32>
    %cst_70 = arith.constant dense<0.000000e+00> : vector<8x8xf32>
    %197 = tpu.matmul %84, %196, %cst_70 {dimension_numbers = #tpu.dot_dimension_numbers<[1], [1], [0], [0], [0, 0, 1, 0], [], []>} : vector<8x128xf32>, vector<8x128xf32>, vector<8x8xf32> -> vector<8x8xf32>
    %cst_71 = arith.constant 2.500000e-01 : f32
    %198 = vector.broadcast %cst_71 : f32 to vector<8x8xf32>
    %199 = arith.mulf %197, %198 : vector<8x8xf32>
    %200 = vector.broadcast %88 : vector<1x8xf32> to vector<8x8xf32>
    %201 = arith.addf %199, %200 : vector<8x8xf32>
    %cst_72 = arith.constant dense<0xFF800000> : vector<8xf32>
    %202 = vector.multi_reduction <maximumf>, %201, %cst_72 [1] : vector<8x8xf32> to vector<8xf32>
    %203 = vector.shape_cast %202 : vector<8xf32> to vector<8x1xf32>
    %204 = vector.broadcast %203 : vector<8x1xf32> to vector<8x8xf32>
    %205 = arith.subf %201, %204 : vector<8x8xf32>
    %206 = math.exp %205 : vector<8x8xf32>
    %cst_73 = arith.constant dense<0.000000e+00> : vector<8xf32>
    %207 = vector.multi_reduction <add>, %206, %cst_73 [1] : vector<8x8xf32> to vector<8xf32>
    %208 = vector.shape_cast %207 : vector<8xf32> to vector<8x1xf32>
    %209 = tpu.reciprocal %208 {approx = true} : vector<8x1xf32> -> vector<8x1xf32>
    %210 = vector.broadcast %209 : vector<8x1xf32> to vector<8x8xf32>
    %211 = arith.mulf %206, %210 : vector<8x8xf32>
    %212 = vector.broadcast %65 : vector<1x128xf32> to vector<8x128xf32>
    %213 = arith.mulf %86, %212 : vector<8x128xf32>
    %cst_74 = arith.constant dense<0.000000e+00> : vector<8x128xf32>
    %214 = tpu.matmul %211, %213, %cst_74 {dimension_numbers = #tpu.dot_dimension_numbers<[1], [0], [0], [1], [0, 0, 1, 1], [], []>} : vector<8x8xf32>, vector<8x128xf32>, vector<8x128xf32> -> vector<8x128xf32>
    %215 = arith.addf %194, %214 : vector<8x128xf32>
    %216 = vector.broadcast %72 : vector<1x128xf32> to vector<8x128xf32>
    %217 = arith.mulf %85, %216 : vector<8x128xf32>
    %cst_75 = arith.constant dense<0.000000e+00> : vector<8x8xf32>
    %218 = tpu.matmul %84, %217, %cst_75 {dimension_numbers = #tpu.dot_dimension_numbers<[1], [1], [0], [0], [0, 0, 1, 0], [], []>} : vector<8x128xf32>, vector<8x128xf32>, vector<8x8xf32> -> vector<8x8xf32>
    %cst_76 = arith.constant 2.500000e-01 : f32
    %219 = vector.broadcast %cst_76 : f32 to vector<8x8xf32>
    %220 = arith.mulf %218, %219 : vector<8x8xf32>
    %221 = vector.broadcast %88 : vector<1x8xf32> to vector<8x8xf32>
    %222 = arith.addf %220, %221 : vector<8x8xf32>
    %cst_77 = arith.constant dense<0xFF800000> : vector<8xf32>
    %223 = vector.multi_reduction <maximumf>, %222, %cst_77 [1] : vector<8x8xf32> to vector<8xf32>
    %224 = vector.shape_cast %223 : vector<8xf32> to vector<8x1xf32>
    %225 = vector.broadcast %224 : vector<8x1xf32> to vector<8x8xf32>
    %226 = arith.subf %222, %225 : vector<8x8xf32>
    %227 = math.exp %226 : vector<8x8xf32>
    %cst_78 = arith.constant dense<0.000000e+00> : vector<8xf32>
    %228 = vector.multi_reduction <add>, %227, %cst_78 [1] : vector<8x8xf32> to vector<8xf32>
    %229 = vector.shape_cast %228 : vector<8xf32> to vector<8x1xf32>
    %230 = tpu.reciprocal %229 {approx = true} : vector<8x1xf32> -> vector<8x1xf32>
    %231 = vector.broadcast %230 : vector<8x1xf32> to vector<8x8xf32>
    %232 = arith.mulf %227, %231 : vector<8x8xf32>
    %233 = vector.broadcast %72 : vector<1x128xf32> to vector<8x128xf32>
    %234 = arith.mulf %86, %233 : vector<8x128xf32>
    %cst_79 = arith.constant dense<0.000000e+00> : vector<8x128xf32>
    %235 = tpu.matmul %232, %234, %cst_79 {dimension_numbers = #tpu.dot_dimension_numbers<[1], [0], [0], [1], [0, 0, 1, 1], [], []>} : vector<8x8xf32>, vector<8x128xf32>, vector<8x128xf32> -> vector<8x128xf32>
    %236 = arith.addf %215, %235 : vector<8x128xf32>
    %237 = vector.broadcast %79 : vector<1x128xf32> to vector<8x128xf32>
    %238 = arith.mulf %85, %237 : vector<8x128xf32>
    %cst_80 = arith.constant dense<0.000000e+00> : vector<8x8xf32>
    %239 = tpu.matmul %84, %238, %cst_80 {dimension_numbers = #tpu.dot_dimension_numbers<[1], [1], [0], [0], [0, 0, 1, 0], [], []>} : vector<8x128xf32>, vector<8x128xf32>, vector<8x8xf32> -> vector<8x8xf32>
    %cst_81 = arith.constant 2.500000e-01 : f32
    %240 = vector.broadcast %cst_81 : f32 to vector<8x8xf32>
    %241 = arith.mulf %239, %240 : vector<8x8xf32>
    %242 = vector.broadcast %88 : vector<1x8xf32> to vector<8x8xf32>
    %243 = arith.addf %241, %242 : vector<8x8xf32>
    %cst_82 = arith.constant dense<0xFF800000> : vector<8xf32>
    %244 = vector.multi_reduction <maximumf>, %243, %cst_82 [1] : vector<8x8xf32> to vector<8xf32>
    %245 = vector.shape_cast %244 : vector<8xf32> to vector<8x1xf32>
    %246 = vector.broadcast %245 : vector<8x1xf32> to vector<8x8xf32>
    %247 = arith.subf %243, %246 : vector<8x8xf32>
    %248 = math.exp %247 : vector<8x8xf32>
    %cst_83 = arith.constant dense<0.000000e+00> : vector<8xf32>
    %249 = vector.multi_reduction <add>, %248, %cst_83 [1] : vector<8x8xf32> to vector<8xf32>
    %250 = vector.shape_cast %249 : vector<8xf32> to vector<8x1xf32>
    %251 = tpu.reciprocal %250 {approx = true} : vector<8x1xf32> -> vector<8x1xf32>
    %252 = vector.broadcast %251 : vector<8x1xf32> to vector<8x8xf32>
    %253 = arith.mulf %248, %252 : vector<8x8xf32>
    %254 = vector.broadcast %79 : vector<1x128xf32> to vector<8x128xf32>
    %255 = arith.mulf %86, %254 : vector<8x128xf32>
    %cst_84 = arith.constant dense<0.000000e+00> : vector<8x128xf32>
    %256 = tpu.matmul %253, %255, %cst_84 {dimension_numbers = #tpu.dot_dimension_numbers<[1], [0], [0], [1], [0, 0, 1, 1], [], []>} : vector<8x8xf32>, vector<8x128xf32>, vector<8x128xf32> -> vector<8x128xf32>
    %257 = arith.addf %236, %256 : vector<8x128xf32>
    %258 = vector.extract_strided_slice %15 {offsets = [8, 0], sizes = [8, 128], strides = [1, 1]} : vector<16x384xf32> to vector<8x128xf32>
    %259 = vector.extract_strided_slice %22 {offsets = [8, 128], sizes = [8, 128], strides = [1, 1]} : vector<16x384xf32> to vector<8x128xf32>
    %260 = vector.extract_strided_slice %22 {offsets = [8, 256], sizes = [8, 128], strides = [1, 1]} : vector<16x384xf32> to vector<8x128xf32>
    %261 = vector.extract_strided_slice %8 {offsets = [1, 0, 0], sizes = [1, 1, 8], strides = [1, 1, 1]} : vector<2x1x8xf32> to vector<1x1x8xf32>
    %262 = vector.shape_cast %261 : vector<1x1x8xf32> to vector<1x8xf32>
    %cst_85 = arith.constant 0.000000e+00 : f32
    %263 = vector.broadcast %cst_85 : f32 to vector<8x128xf32>
    %264 = vector.broadcast %30 : vector<1x128xf32> to vector<8x128xf32>
    %265 = arith.mulf %259, %264 : vector<8x128xf32>
    %cst_86 = arith.constant dense<0.000000e+00> : vector<8x8xf32>
    %266 = tpu.matmul %258, %265, %cst_86 {dimension_numbers = #tpu.dot_dimension_numbers<[1], [1], [0], [0], [0, 0, 1, 0], [], []>} : vector<8x128xf32>, vector<8x128xf32>, vector<8x8xf32> -> vector<8x8xf32>
    %cst_87 = arith.constant 2.500000e-01 : f32
    %267 = vector.broadcast %cst_87 : f32 to vector<8x8xf32>
    %268 = arith.mulf %266, %267 : vector<8x8xf32>
    %269 = vector.broadcast %262 : vector<1x8xf32> to vector<8x8xf32>
    %270 = arith.addf %268, %269 : vector<8x8xf32>
    %cst_88 = arith.constant dense<0xFF800000> : vector<8xf32>
    %271 = vector.multi_reduction <maximumf>, %270, %cst_88 [1] : vector<8x8xf32> to vector<8xf32>
    %272 = vector.shape_cast %271 : vector<8xf32> to vector<8x1xf32>
    %273 = vector.broadcast %272 : vector<8x1xf32> to vector<8x8xf32>
    %274 = arith.subf %270, %273 : vector<8x8xf32>
    %275 = math.exp %274 : vector<8x8xf32>
    %cst_89 = arith.constant dense<0.000000e+00> : vector<8xf32>
    %276 = vector.multi_reduction <add>, %275, %cst_89 [1] : vector<8x8xf32> to vector<8xf32>
    %277 = vector.shape_cast %276 : vector<8xf32> to vector<8x1xf32>
    %278 = tpu.reciprocal %277 {approx = true} : vector<8x1xf32> -> vector<8x1xf32>
    %279 = vector.broadcast %278 : vector<8x1xf32> to vector<8x8xf32>
    %280 = arith.mulf %275, %279 : vector<8x8xf32>
    %281 = vector.broadcast %30 : vector<1x128xf32> to vector<8x128xf32>
    %282 = arith.mulf %260, %281 : vector<8x128xf32>
    %cst_90 = arith.constant dense<0.000000e+00> : vector<8x128xf32>
    %283 = tpu.matmul %280, %282, %cst_90 {dimension_numbers = #tpu.dot_dimension_numbers<[1], [0], [0], [1], [0, 0, 1, 1], [], []>} : vector<8x8xf32>, vector<8x128xf32>, vector<8x128xf32> -> vector<8x128xf32>
    %284 = arith.addf %263, %283 : vector<8x128xf32>
    %285 = vector.broadcast %37 : vector<1x128xf32> to vector<8x128xf32>
    %286 = arith.mulf %259, %285 : vector<8x128xf32>
    %cst_91 = arith.constant dense<0.000000e+00> : vector<8x8xf32>
    %287 = tpu.matmul %258, %286, %cst_91 {dimension_numbers = #tpu.dot_dimension_numbers<[1], [1], [0], [0], [0, 0, 1, 0], [], []>} : vector<8x128xf32>, vector<8x128xf32>, vector<8x8xf32> -> vector<8x8xf32>
    %cst_92 = arith.constant 2.500000e-01 : f32
    %288 = vector.broadcast %cst_92 : f32 to vector<8x8xf32>
    %289 = arith.mulf %287, %288 : vector<8x8xf32>
    %290 = vector.broadcast %262 : vector<1x8xf32> to vector<8x8xf32>
    %291 = arith.addf %289, %290 : vector<8x8xf32>
    %cst_93 = arith.constant dense<0xFF800000> : vector<8xf32>
    %292 = vector.multi_reduction <maximumf>, %291, %cst_93 [1] : vector<8x8xf32> to vector<8xf32>
    %293 = vector.shape_cast %292 : vector<8xf32> to vector<8x1xf32>
    %294 = vector.broadcast %293 : vector<8x1xf32> to vector<8x8xf32>
    %295 = arith.subf %291, %294 : vector<8x8xf32>
    %296 = math.exp %295 : vector<8x8xf32>
    %cst_94 = arith.constant dense<0.000000e+00> : vector<8xf32>
    %297 = vector.multi_reduction <add>, %296, %cst_94 [1] : vector<8x8xf32> to vector<8xf32>
    %298 = vector.shape_cast %297 : vector<8xf32> to vector<8x1xf32>
    %299 = tpu.reciprocal %298 {approx = true} : vector<8x1xf32> -> vector<8x1xf32>
    %300 = vector.broadcast %299 : vector<8x1xf32> to vector<8x8xf32>
    %301 = arith.mulf %296, %300 : vector<8x8xf32>
    %302 = vector.broadcast %37 : vector<1x128xf32> to vector<8x128xf32>
    %303 = arith.mulf %260, %302 : vector<8x128xf32>
    %cst_95 = arith.constant dense<0.000000e+00> : vector<8x128xf32>
    %304 = tpu.matmul %301, %303, %cst_95 {dimension_numbers = #tpu.dot_dimension_numbers<[1], [0], [0], [1], [0, 0, 1, 1], [], []>} : vector<8x8xf32>, vector<8x128xf32>, vector<8x128xf32> -> vector<8x128xf32>
    %305 = arith.addf %284, %304 : vector<8x128xf32>
    %306 = vector.broadcast %44 : vector<1x128xf32> to vector<8x128xf32>
    %307 = arith.mulf %259, %306 : vector<8x128xf32>
    %cst_96 = arith.constant dense<0.000000e+00> : vector<8x8xf32>
    %308 = tpu.matmul %258, %307, %cst_96 {dimension_numbers = #tpu.dot_dimension_numbers<[1], [1], [0], [0], [0, 0, 1, 0], [], []>} : vector<8x128xf32>, vector<8x128xf32>, vector<8x8xf32> -> vector<8x8xf32>
    %cst_97 = arith.constant 2.500000e-01 : f32
    %309 = vector.broadcast %cst_97 : f32 to vector<8x8xf32>
    %310 = arith.mulf %308, %309 : vector<8x8xf32>
    %311 = vector.broadcast %262 : vector<1x8xf32> to vector<8x8xf32>
    %312 = arith.addf %310, %311 : vector<8x8xf32>
    %cst_98 = arith.constant dense<0xFF800000> : vector<8xf32>
    %313 = vector.multi_reduction <maximumf>, %312, %cst_98 [1] : vector<8x8xf32> to vector<8xf32>
    %314 = vector.shape_cast %313 : vector<8xf32> to vector<8x1xf32>
    %315 = vector.broadcast %314 : vector<8x1xf32> to vector<8x8xf32>
    %316 = arith.subf %312, %315 : vector<8x8xf32>
    %317 = math.exp %316 : vector<8x8xf32>
    %cst_99 = arith.constant dense<0.000000e+00> : vector<8xf32>
    %318 = vector.multi_reduction <add>, %317, %cst_99 [1] : vector<8x8xf32> to vector<8xf32>
    %319 = vector.shape_cast %318 : vector<8xf32> to vector<8x1xf32>
    %320 = tpu.reciprocal %319 {approx = true} : vector<8x1xf32> -> vector<8x1xf32>
    %321 = vector.broadcast %320 : vector<8x1xf32> to vector<8x8xf32>
    %322 = arith.mulf %317, %321 : vector<8x8xf32>
    %323 = vector.broadcast %44 : vector<1x128xf32> to vector<8x128xf32>
    %324 = arith.mulf %260, %323 : vector<8x128xf32>
    %cst_100 = arith.constant dense<0.000000e+00> : vector<8x128xf32>
    %325 = tpu.matmul %322, %324, %cst_100 {dimension_numbers = #tpu.dot_dimension_numbers<[1], [0], [0], [1], [0, 0, 1, 1], [], []>} : vector<8x8xf32>, vector<8x128xf32>, vector<8x128xf32> -> vector<8x128xf32>
    %326 = arith.addf %305, %325 : vector<8x128xf32>
    %327 = vector.broadcast %51 : vector<1x128xf32> to vector<8x128xf32>
    %328 = arith.mulf %259, %327 : vector<8x128xf32>
    %cst_101 = arith.constant dense<0.000000e+00> : vector<8x8xf32>
    %329 = tpu.matmul %258, %328, %cst_101 {dimension_numbers = #tpu.dot_dimension_numbers<[1], [1], [0], [0], [0, 0, 1, 0], [], []>} : vector<8x128xf32>, vector<8x128xf32>, vector<8x8xf32> -> vector<8x8xf32>
    %cst_102 = arith.constant 2.500000e-01 : f32
    %330 = vector.broadcast %cst_102 : f32 to vector<8x8xf32>
    %331 = arith.mulf %329, %330 : vector<8x8xf32>
    %332 = vector.broadcast %262 : vector<1x8xf32> to vector<8x8xf32>
    %333 = arith.addf %331, %332 : vector<8x8xf32>
    %cst_103 = arith.constant dense<0xFF800000> : vector<8xf32>
    %334 = vector.multi_reduction <maximumf>, %333, %cst_103 [1] : vector<8x8xf32> to vector<8xf32>
    %335 = vector.shape_cast %334 : vector<8xf32> to vector<8x1xf32>
    %336 = vector.broadcast %335 : vector<8x1xf32> to vector<8x8xf32>
    %337 = arith.subf %333, %336 : vector<8x8xf32>
    %338 = math.exp %337 : vector<8x8xf32>
    %cst_104 = arith.constant dense<0.000000e+00> : vector<8xf32>
    %339 = vector.multi_reduction <add>, %338, %cst_104 [1] : vector<8x8xf32> to vector<8xf32>
    %340 = vector.shape_cast %339 : vector<8xf32> to vector<8x1xf32>
    %341 = tpu.reciprocal %340 {approx = true} : vector<8x1xf32> -> vector<8x1xf32>
    %342 = vector.broadcast %341 : vector<8x1xf32> to vector<8x8xf32>
    %343 = arith.mulf %338, %342 : vector<8x8xf32>
    %344 = vector.broadcast %51 : vector<1x128xf32> to vector<8x128xf32>
    %345 = arith.mulf %260, %344 : vector<8x128xf32>
    %cst_105 = arith.constant dense<0.000000e+00> : vector<8x128xf32>
    %346 = tpu.matmul %343, %345, %cst_105 {dimension_numbers = #tpu.dot_dimension_numbers<[1], [0], [0], [1], [0, 0, 1, 1], [], []>} : vector<8x8xf32>, vector<8x128xf32>, vector<8x128xf32> -> vector<8x128xf32>
    %347 = arith.addf %326, %346 : vector<8x128xf32>
    %348 = vector.broadcast %58 : vector<1x128xf32> to vector<8x128xf32>
    %349 = arith.mulf %259, %348 : vector<8x128xf32>
    %cst_106 = arith.constant dense<0.000000e+00> : vector<8x8xf32>
    %350 = tpu.matmul %258, %349, %cst_106 {dimension_numbers = #tpu.dot_dimension_numbers<[1], [1], [0], [0], [0, 0, 1, 0], [], []>} : vector<8x128xf32>, vector<8x128xf32>, vector<8x8xf32> -> vector<8x8xf32>
    %cst_107 = arith.constant 2.500000e-01 : f32
    %351 = vector.broadcast %cst_107 : f32 to vector<8x8xf32>
    %352 = arith.mulf %350, %351 : vector<8x8xf32>
    %353 = vector.broadcast %262 : vector<1x8xf32> to vector<8x8xf32>
    %354 = arith.addf %352, %353 : vector<8x8xf32>
    %cst_108 = arith.constant dense<0xFF800000> : vector<8xf32>
    %355 = vector.multi_reduction <maximumf>, %354, %cst_108 [1] : vector<8x8xf32> to vector<8xf32>
    %356 = vector.shape_cast %355 : vector<8xf32> to vector<8x1xf32>
    %357 = vector.broadcast %356 : vector<8x1xf32> to vector<8x8xf32>
    %358 = arith.subf %354, %357 : vector<8x8xf32>
    %359 = math.exp %358 : vector<8x8xf32>
    %cst_109 = arith.constant dense<0.000000e+00> : vector<8xf32>
    %360 = vector.multi_reduction <add>, %359, %cst_109 [1] : vector<8x8xf32> to vector<8xf32>
    %361 = vector.shape_cast %360 : vector<8xf32> to vector<8x1xf32>
    %362 = tpu.reciprocal %361 {approx = true} : vector<8x1xf32> -> vector<8x1xf32>
    %363 = vector.broadcast %362 : vector<8x1xf32> to vector<8x8xf32>
    %364 = arith.mulf %359, %363 : vector<8x8xf32>
    %365 = vector.broadcast %58 : vector<1x128xf32> to vector<8x128xf32>
    %366 = arith.mulf %260, %365 : vector<8x128xf32>
    %cst_110 = arith.constant dense<0.000000e+00> : vector<8x128xf32>
    %367 = tpu.matmul %364, %366, %cst_110 {dimension_numbers = #tpu.dot_dimension_numbers<[1], [0], [0], [1], [0, 0, 1, 1], [], []>} : vector<8x8xf32>, vector<8x128xf32>, vector<8x128xf32> -> vector<8x128xf32>
    %368 = arith.addf %347, %367 : vector<8x128xf32>
    %369 = vector.broadcast %65 : vector<1x128xf32> to vector<8x128xf32>
    %370 = arith.mulf %259, %369 : vector<8x128xf32>
    %cst_111 = arith.constant dense<0.000000e+00> : vector<8x8xf32>
    %371 = tpu.matmul %258, %370, %cst_111 {dimension_numbers = #tpu.dot_dimension_numbers<[1], [1], [0], [0], [0, 0, 1, 0], [], []>} : vector<8x128xf32>, vector<8x128xf32>, vector<8x8xf32> -> vector<8x8xf32>
    %cst_112 = arith.constant 2.500000e-01 : f32
    %372 = vector.broadcast %cst_112 : f32 to vector<8x8xf32>
    %373 = arith.mulf %371, %372 : vector<8x8xf32>
    %374 = vector.broadcast %262 : vector<1x8xf32> to vector<8x8xf32>
    %375 = arith.addf %373, %374 : vector<8x8xf32>
    %cst_113 = arith.constant dense<0xFF800000> : vector<8xf32>
    %376 = vector.multi_reduction <maximumf>, %375, %cst_113 [1] : vector<8x8xf32> to vector<8xf32>
    %377 = vector.shape_cast %376 : vector<8xf32> to vector<8x1xf32>
    %378 = vector.broadcast %377 : vector<8x1xf32> to vector<8x8xf32>
    %379 = arith.subf %375, %378 : vector<8x8xf32>
    %380 = math.exp %379 : vector<8x8xf32>
    %cst_114 = arith.constant dense<0.000000e+00> : vector<8xf32>
    %381 = vector.multi_reduction <add>, %380, %cst_114 [1] : vector<8x8xf32> to vector<8xf32>
    %382 = vector.shape_cast %381 : vector<8xf32> to vector<8x1xf32>
    %383 = tpu.reciprocal %382 {approx = true} : vector<8x1xf32> -> vector<8x1xf32>
    %384 = vector.broadcast %383 : vector<8x1xf32> to vector<8x8xf32>
    %385 = arith.mulf %380, %384 : vector<8x8xf32>
    %386 = vector.broadcast %65 : vector<1x128xf32> to vector<8x128xf32>
    %387 = arith.mulf %260, %386 : vector<8x128xf32>
    %cst_115 = arith.constant dense<0.000000e+00> : vector<8x128xf32>
    %388 = tpu.matmul %385, %387, %cst_115 {dimension_numbers = #tpu.dot_dimension_numbers<[1], [0], [0], [1], [0, 0, 1, 1], [], []>} : vector<8x8xf32>, vector<8x128xf32>, vector<8x128xf32> -> vector<8x128xf32>
    %389 = arith.addf %368, %388 : vector<8x128xf32>
    %390 = vector.broadcast %72 : vector<1x128xf32> to vector<8x128xf32>
    %391 = arith.mulf %259, %390 : vector<8x128xf32>
    %cst_116 = arith.constant dense<0.000000e+00> : vector<8x8xf32>
    %392 = tpu.matmul %258, %391, %cst_116 {dimension_numbers = #tpu.dot_dimension_numbers<[1], [1], [0], [0], [0, 0, 1, 0], [], []>} : vector<8x128xf32>, vector<8x128xf32>, vector<8x8xf32> -> vector<8x8xf32>
    %cst_117 = arith.constant 2.500000e-01 : f32
    %393 = vector.broadcast %cst_117 : f32 to vector<8x8xf32>
    %394 = arith.mulf %392, %393 : vector<8x8xf32>
    %395 = vector.broadcast %262 : vector<1x8xf32> to vector<8x8xf32>
    %396 = arith.addf %394, %395 : vector<8x8xf32>
    %cst_118 = arith.constant dense<0xFF800000> : vector<8xf32>
    %397 = vector.multi_reduction <maximumf>, %396, %cst_118 [1] : vector<8x8xf32> to vector<8xf32>
    %398 = vector.shape_cast %397 : vector<8xf32> to vector<8x1xf32>
    %399 = vector.broadcast %398 : vector<8x1xf32> to vector<8x8xf32>
    %400 = arith.subf %396, %399 : vector<8x8xf32>
    %401 = math.exp %400 : vector<8x8xf32>
    %cst_119 = arith.constant dense<0.000000e+00> : vector<8xf32>
    %402 = vector.multi_reduction <add>, %401, %cst_119 [1] : vector<8x8xf32> to vector<8xf32>
    %403 = vector.shape_cast %402 : vector<8xf32> to vector<8x1xf32>
    %404 = tpu.reciprocal %403 {approx = true} : vector<8x1xf32> -> vector<8x1xf32>
    %405 = vector.broadcast %404 : vector<8x1xf32> to vector<8x8xf32>
    %406 = arith.mulf %401, %405 : vector<8x8xf32>
    %407 = vector.broadcast %72 : vector<1x128xf32> to vector<8x128xf32>
    %408 = arith.mulf %260, %407 : vector<8x128xf32>
    %cst_120 = arith.constant dense<0.000000e+00> : vector<8x128xf32>
    %409 = tpu.matmul %406, %408, %cst_120 {dimension_numbers = #tpu.dot_dimension_numbers<[1], [0], [0], [1], [0, 0, 1, 1], [], []>} : vector<8x8xf32>, vector<8x128xf32>, vector<8x128xf32> -> vector<8x128xf32>
    %410 = arith.addf %389, %409 : vector<8x128xf32>
    %411 = vector.broadcast %79 : vector<1x128xf32> to vector<8x128xf32>
    %412 = arith.mulf %259, %411 : vector<8x128xf32>
    %cst_121 = arith.constant dense<0.000000e+00> : vector<8x8xf32>
    %413 = tpu.matmul %258, %412, %cst_121 {dimension_numbers = #tpu.dot_dimension_numbers<[1], [1], [0], [0], [0, 0, 1, 0], [], []>} : vector<8x128xf32>, vector<8x128xf32>, vector<8x8xf32> -> vector<8x8xf32>
    %cst_122 = arith.constant 2.500000e-01 : f32
    %414 = vector.broadcast %cst_122 : f32 to vector<8x8xf32>
    %415 = arith.mulf %413, %414 : vector<8x8xf32>
    %416 = vector.broadcast %262 : vector<1x8xf32> to vector<8x8xf32>
    %417 = arith.addf %415, %416 : vector<8x8xf32>
    %cst_123 = arith.constant dense<0xFF800000> : vector<8xf32>
    %418 = vector.multi_reduction <maximumf>, %417, %cst_123 [1] : vector<8x8xf32> to vector<8xf32>
    %419 = vector.shape_cast %418 : vector<8xf32> to vector<8x1xf32>
    %420 = vector.broadcast %419 : vector<8x1xf32> to vector<8x8xf32>
    %421 = arith.subf %417, %420 : vector<8x8xf32>
    %422 = math.exp %421 : vector<8x8xf32>
    %cst_124 = arith.constant dense<0.000000e+00> : vector<8xf32>
    %423 = vector.multi_reduction <add>, %422, %cst_124 [1] : vector<8x8xf32> to vector<8xf32>
    %424 = vector.shape_cast %423 : vector<8xf32> to vector<8x1xf32>
    %425 = tpu.reciprocal %424 {approx = true} : vector<8x1xf32> -> vector<8x1xf32>
    %426 = vector.broadcast %425 : vector<8x1xf32> to vector<8x8xf32>
    %427 = arith.mulf %422, %426 : vector<8x8xf32>
    %428 = vector.broadcast %79 : vector<1x128xf32> to vector<8x128xf32>
    %429 = arith.mulf %260, %428 : vector<8x128xf32>
    %cst_125 = arith.constant dense<0.000000e+00> : vector<8x128xf32>
    %430 = tpu.matmul %427, %429, %cst_125 {dimension_numbers = #tpu.dot_dimension_numbers<[1], [0], [0], [1], [0, 0, 1, 1], [], []>} : vector<8x8xf32>, vector<8x128xf32>, vector<8x128xf32> -> vector<8x128xf32>
    %431 = arith.addf %410, %430 : vector<8x128xf32>
    %432 = tpu.concatenate %257, %431 in 0 : vector<8x128xf32>, vector<8x128xf32> -> vector<16x128xf32>
    %cst_126 = arith.constant dense<0.000000e+00> : vector<16x128xf32>
    %433 = tpu.matmul %432, %81, %cst_126 {dimension_numbers = #tpu.dot_dimension_numbers<[1], [0], [0], [1], [0, 0, 1, 1], [], []>} : vector<16x128xf32>, vector<128x128xf32>, vector<16x128xf32> -> vector<16x128xf32>
    %434 = vector.broadcast %83 : vector<1x128xf32> to vector<16x128xf32>
    %435 = arith.addf %433, %434 : vector<16x128xf32>
    %c0_127 = arith.constant 0 : index
    %c1_128 = arith.constant 1 : index
    %c0_129 = arith.constant 0 : index
    %c0_130 = arith.constant 0 : index
    %436 = vector.load %arg13[%c0_127, %c1_128, %c0_129, %c0_130] : memref<1x2x128x128xf32, #tpu.memory_space<vmem>>, vector<1x1x128x128xf32>
    %437 = vector.shape_cast %436 : vector<1x1x128x128xf32> to vector<128x128xf32>
    %c0_131 = arith.constant 0 : index
    %c1_132 = arith.constant 1 : index
    %c0_133 = arith.constant 0 : index
    %c0_134 = arith.constant 0 : index
    %438 = vector.load %arg14[%c0_131, %c1_132, %c0_133, %c0_134] : memref<1x2x1x128xf32, #tpu.memory_space<vmem>>, vector<1x1x1x128xf32>
    %439 = vector.shape_cast %438 : vector<1x1x1x128xf32> to vector<1x128xf32>
    %440 = vector.extract_strided_slice %22 {offsets = [0, 0], sizes = [8, 128], strides = [1, 1]} : vector<16x384xf32> to vector<8x128xf32>
    %441 = vector.extract_strided_slice %15 {offsets = [0, 128], sizes = [8, 128], strides = [1, 1]} : vector<16x384xf32> to vector<8x128xf32>
    %442 = vector.extract_strided_slice %15 {offsets = [0, 256], sizes = [8, 128], strides = [1, 1]} : vector<16x384xf32> to vector<8x128xf32>
    %443 = vector.extract_strided_slice %7 {offsets = [0, 0, 0], sizes = [1, 1, 8], strides = [1, 1, 1]} : vector<2x1x8xf32> to vector<1x1x8xf32>
    %444 = vector.shape_cast %443 : vector<1x1x8xf32> to vector<1x8xf32>
    %cst_135 = arith.constant 0.000000e+00 : f32
    %445 = vector.broadcast %cst_135 : f32 to vector<8x128xf32>
    %446 = vector.broadcast %30 : vector<1x128xf32> to vector<8x128xf32>
    %447 = arith.mulf %441, %446 : vector<8x128xf32>
    %cst_136 = arith.constant dense<0.000000e+00> : vector<8x8xf32>
    %448 = tpu.matmul %440, %447, %cst_136 {dimension_numbers = #tpu.dot_dimension_numbers<[1], [1], [0], [0], [0, 0, 1, 0], [], []>} : vector<8x128xf32>, vector<8x128xf32>, vector<8x8xf32> -> vector<8x8xf32>
    %cst_137 = arith.constant 2.500000e-01 : f32
    %449 = vector.broadcast %cst_137 : f32 to vector<8x8xf32>
    %450 = arith.mulf %448, %449 : vector<8x8xf32>
    %451 = vector.broadcast %444 : vector<1x8xf32> to vector<8x8xf32>
    %452 = arith.addf %450, %451 : vector<8x8xf32>
    %cst_138 = arith.constant dense<0xFF800000> : vector<8xf32>
    %453 = vector.multi_reduction <maximumf>, %452, %cst_138 [1] : vector<8x8xf32> to vector<8xf32>
    %454 = vector.shape_cast %453 : vector<8xf32> to vector<8x1xf32>
    %455 = vector.broadcast %454 : vector<8x1xf32> to vector<8x8xf32>
    %456 = arith.subf %452, %455 : vector<8x8xf32>
    %457 = math.exp %456 : vector<8x8xf32>
    %cst_139 = arith.constant dense<0.000000e+00> : vector<8xf32>
    %458 = vector.multi_reduction <add>, %457, %cst_139 [1] : vector<8x8xf32> to vector<8xf32>
    %459 = vector.shape_cast %458 : vector<8xf32> to vector<8x1xf32>
    %460 = tpu.reciprocal %459 {approx = true} : vector<8x1xf32> -> vector<8x1xf32>
    %461 = vector.broadcast %460 : vector<8x1xf32> to vector<8x8xf32>
    %462 = arith.mulf %457, %461 : vector<8x8xf32>
    %463 = vector.broadcast %30 : vector<1x128xf32> to vector<8x128xf32>
    %464 = arith.mulf %442, %463 : vector<8x128xf32>
    %cst_140 = arith.constant dense<0.000000e+00> : vector<8x128xf32>
    %465 = tpu.matmul %462, %464, %cst_140 {dimension_numbers = #tpu.dot_dimension_numbers<[1], [0], [0], [1], [0, 0, 1, 1], [], []>} : vector<8x8xf32>, vector<8x128xf32>, vector<8x128xf32> -> vector<8x128xf32>
    %466 = arith.addf %445, %465 : vector<8x128xf32>
    %467 = vector.broadcast %37 : vector<1x128xf32> to vector<8x128xf32>
    %468 = arith.mulf %441, %467 : vector<8x128xf32>
    %cst_141 = arith.constant dense<0.000000e+00> : vector<8x8xf32>
    %469 = tpu.matmul %440, %468, %cst_141 {dimension_numbers = #tpu.dot_dimension_numbers<[1], [1], [0], [0], [0, 0, 1, 0], [], []>} : vector<8x128xf32>, vector<8x128xf32>, vector<8x8xf32> -> vector<8x8xf32>
    %cst_142 = arith.constant 2.500000e-01 : f32
    %470 = vector.broadcast %cst_142 : f32 to vector<8x8xf32>
    %471 = arith.mulf %469, %470 : vector<8x8xf32>
    %472 = vector.broadcast %444 : vector<1x8xf32> to vector<8x8xf32>
    %473 = arith.addf %471, %472 : vector<8x8xf32>
    %cst_143 = arith.constant dense<0xFF800000> : vector<8xf32>
    %474 = vector.multi_reduction <maximumf>, %473, %cst_143 [1] : vector<8x8xf32> to vector<8xf32>
    %475 = vector.shape_cast %474 : vector<8xf32> to vector<8x1xf32>
    %476 = vector.broadcast %475 : vector<8x1xf32> to vector<8x8xf32>
    %477 = arith.subf %473, %476 : vector<8x8xf32>
    %478 = math.exp %477 : vector<8x8xf32>
    %cst_144 = arith.constant dense<0.000000e+00> : vector<8xf32>
    %479 = vector.multi_reduction <add>, %478, %cst_144 [1] : vector<8x8xf32> to vector<8xf32>
    %480 = vector.shape_cast %479 : vector<8xf32> to vector<8x1xf32>
    %481 = tpu.reciprocal %480 {approx = true} : vector<8x1xf32> -> vector<8x1xf32>
    %482 = vector.broadcast %481 : vector<8x1xf32> to vector<8x8xf32>
    %483 = arith.mulf %478, %482 : vector<8x8xf32>
    %484 = vector.broadcast %37 : vector<1x128xf32> to vector<8x128xf32>
    %485 = arith.mulf %442, %484 : vector<8x128xf32>
    %cst_145 = arith.constant dense<0.000000e+00> : vector<8x128xf32>
    %486 = tpu.matmul %483, %485, %cst_145 {dimension_numbers = #tpu.dot_dimension_numbers<[1], [0], [0], [1], [0, 0, 1, 1], [], []>} : vector<8x8xf32>, vector<8x128xf32>, vector<8x128xf32> -> vector<8x128xf32>
    %487 = arith.addf %466, %486 : vector<8x128xf32>
    %488 = vector.broadcast %44 : vector<1x128xf32> to vector<8x128xf32>
    %489 = arith.mulf %441, %488 : vector<8x128xf32>
    %cst_146 = arith.constant dense<0.000000e+00> : vector<8x8xf32>
    %490 = tpu.matmul %440, %489, %cst_146 {dimension_numbers = #tpu.dot_dimension_numbers<[1], [1], [0], [0], [0, 0, 1, 0], [], []>} : vector<8x128xf32>, vector<8x128xf32>, vector<8x8xf32> -> vector<8x8xf32>
    %cst_147 = arith.constant 2.500000e-01 : f32
    %491 = vector.broadcast %cst_147 : f32 to vector<8x8xf32>
    %492 = arith.mulf %490, %491 : vector<8x8xf32>
    %493 = vector.broadcast %444 : vector<1x8xf32> to vector<8x8xf32>
    %494 = arith.addf %492, %493 : vector<8x8xf32>
    %cst_148 = arith.constant dense<0xFF800000> : vector<8xf32>
    %495 = vector.multi_reduction <maximumf>, %494, %cst_148 [1] : vector<8x8xf32> to vector<8xf32>
    %496 = vector.shape_cast %495 : vector<8xf32> to vector<8x1xf32>
    %497 = vector.broadcast %496 : vector<8x1xf32> to vector<8x8xf32>
    %498 = arith.subf %494, %497 : vector<8x8xf32>
    %499 = math.exp %498 : vector<8x8xf32>
    %cst_149 = arith.constant dense<0.000000e+00> : vector<8xf32>
    %500 = vector.multi_reduction <add>, %499, %cst_149 [1] : vector<8x8xf32> to vector<8xf32>
    %501 = vector.shape_cast %500 : vector<8xf32> to vector<8x1xf32>
    %502 = tpu.reciprocal %501 {approx = true} : vector<8x1xf32> -> vector<8x1xf32>
    %503 = vector.broadcast %502 : vector<8x1xf32> to vector<8x8xf32>
    %504 = arith.mulf %499, %503 : vector<8x8xf32>
    %505 = vector.broadcast %44 : vector<1x128xf32> to vector<8x128xf32>
    %506 = arith.mulf %442, %505 : vector<8x128xf32>
    %cst_150 = arith.constant dense<0.000000e+00> : vector<8x128xf32>
    %507 = tpu.matmul %504, %506, %cst_150 {dimension_numbers = #tpu.dot_dimension_numbers<[1], [0], [0], [1], [0, 0, 1, 1], [], []>} : vector<8x8xf32>, vector<8x128xf32>, vector<8x128xf32> -> vector<8x128xf32>
    %508 = arith.addf %487, %507 : vector<8x128xf32>
    %509 = vector.broadcast %51 : vector<1x128xf32> to vector<8x128xf32>
    %510 = arith.mulf %441, %509 : vector<8x128xf32>
    %cst_151 = arith.constant dense<0.000000e+00> : vector<8x8xf32>
    %511 = tpu.matmul %440, %510, %cst_151 {dimension_numbers = #tpu.dot_dimension_numbers<[1], [1], [0], [0], [0, 0, 1, 0], [], []>} : vector<8x128xf32>, vector<8x128xf32>, vector<8x8xf32> -> vector<8x8xf32>
    %cst_152 = arith.constant 2.500000e-01 : f32
    %512 = vector.broadcast %cst_152 : f32 to vector<8x8xf32>
    %513 = arith.mulf %511, %512 : vector<8x8xf32>
    %514 = vector.broadcast %444 : vector<1x8xf32> to vector<8x8xf32>
    %515 = arith.addf %513, %514 : vector<8x8xf32>
    %cst_153 = arith.constant dense<0xFF800000> : vector<8xf32>
    %516 = vector.multi_reduction <maximumf>, %515, %cst_153 [1] : vector<8x8xf32> to vector<8xf32>
    %517 = vector.shape_cast %516 : vector<8xf32> to vector<8x1xf32>
    %518 = vector.broadcast %517 : vector<8x1xf32> to vector<8x8xf32>
    %519 = arith.subf %515, %518 : vector<8x8xf32>
    %520 = math.exp %519 : vector<8x8xf32>
    %cst_154 = arith.constant dense<0.000000e+00> : vector<8xf32>
    %521 = vector.multi_reduction <add>, %520, %cst_154 [1] : vector<8x8xf32> to vector<8xf32>
    %522 = vector.shape_cast %521 : vector<8xf32> to vector<8x1xf32>
    %523 = tpu.reciprocal %522 {approx = true} : vector<8x1xf32> -> vector<8x1xf32>
    %524 = vector.broadcast %523 : vector<8x1xf32> to vector<8x8xf32>
    %525 = arith.mulf %520, %524 : vector<8x8xf32>
    %526 = vector.broadcast %51 : vector<1x128xf32> to vector<8x128xf32>
    %527 = arith.mulf %442, %526 : vector<8x128xf32>
    %cst_155 = arith.constant dense<0.000000e+00> : vector<8x128xf32>
    %528 = tpu.matmul %525, %527, %cst_155 {dimension_numbers = #tpu.dot_dimension_numbers<[1], [0], [0], [1], [0, 0, 1, 1], [], []>} : vector<8x8xf32>, vector<8x128xf32>, vector<8x128xf32> -> vector<8x128xf32>
    %529 = arith.addf %508, %528 : vector<8x128xf32>
    %530 = vector.broadcast %58 : vector<1x128xf32> to vector<8x128xf32>
    %531 = arith.mulf %441, %530 : vector<8x128xf32>
    %cst_156 = arith.constant dense<0.000000e+00> : vector<8x8xf32>
    %532 = tpu.matmul %440, %531, %cst_156 {dimension_numbers = #tpu.dot_dimension_numbers<[1], [1], [0], [0], [0, 0, 1, 0], [], []>} : vector<8x128xf32>, vector<8x128xf32>, vector<8x8xf32> -> vector<8x8xf32>
    %cst_157 = arith.constant 2.500000e-01 : f32
    %533 = vector.broadcast %cst_157 : f32 to vector<8x8xf32>
    %534 = arith.mulf %532, %533 : vector<8x8xf32>
    %535 = vector.broadcast %444 : vector<1x8xf32> to vector<8x8xf32>
    %536 = arith.addf %534, %535 : vector<8x8xf32>
    %cst_158 = arith.constant dense<0xFF800000> : vector<8xf32>
    %537 = vector.multi_reduction <maximumf>, %536, %cst_158 [1] : vector<8x8xf32> to vector<8xf32>
    %538 = vector.shape_cast %537 : vector<8xf32> to vector<8x1xf32>
    %539 = vector.broadcast %538 : vector<8x1xf32> to vector<8x8xf32>
    %540 = arith.subf %536, %539 : vector<8x8xf32>
    %541 = math.exp %540 : vector<8x8xf32>
    %cst_159 = arith.constant dense<0.000000e+00> : vector<8xf32>
    %542 = vector.multi_reduction <add>, %541, %cst_159 [1] : vector<8x8xf32> to vector<8xf32>
    %543 = vector.shape_cast %542 : vector<8xf32> to vector<8x1xf32>
    %544 = tpu.reciprocal %543 {approx = true} : vector<8x1xf32> -> vector<8x1xf32>
    %545 = vector.broadcast %544 : vector<8x1xf32> to vector<8x8xf32>
    %546 = arith.mulf %541, %545 : vector<8x8xf32>
    %547 = vector.broadcast %58 : vector<1x128xf32> to vector<8x128xf32>
    %548 = arith.mulf %442, %547 : vector<8x128xf32>
    %cst_160 = arith.constant dense<0.000000e+00> : vector<8x128xf32>
    %549 = tpu.matmul %546, %548, %cst_160 {dimension_numbers = #tpu.dot_dimension_numbers<[1], [0], [0], [1], [0, 0, 1, 1], [], []>} : vector<8x8xf32>, vector<8x128xf32>, vector<8x128xf32> -> vector<8x128xf32>
    %550 = arith.addf %529, %549 : vector<8x128xf32>
    %551 = vector.broadcast %65 : vector<1x128xf32> to vector<8x128xf32>
    %552 = arith.mulf %441, %551 : vector<8x128xf32>
    %cst_161 = arith.constant dense<0.000000e+00> : vector<8x8xf32>
    %553 = tpu.matmul %440, %552, %cst_161 {dimension_numbers = #tpu.dot_dimension_numbers<[1], [1], [0], [0], [0, 0, 1, 0], [], []>} : vector<8x128xf32>, vector<8x128xf32>, vector<8x8xf32> -> vector<8x8xf32>
    %cst_162 = arith.constant 2.500000e-01 : f32
    %554 = vector.broadcast %cst_162 : f32 to vector<8x8xf32>
    %555 = arith.mulf %553, %554 : vector<8x8xf32>
    %556 = vector.broadcast %444 : vector<1x8xf32> to vector<8x8xf32>
    %557 = arith.addf %555, %556 : vector<8x8xf32>
    %cst_163 = arith.constant dense<0xFF800000> : vector<8xf32>
    %558 = vector.multi_reduction <maximumf>, %557, %cst_163 [1] : vector<8x8xf32> to vector<8xf32>
    %559 = vector.shape_cast %558 : vector<8xf32> to vector<8x1xf32>
    %560 = vector.broadcast %559 : vector<8x1xf32> to vector<8x8xf32>
    %561 = arith.subf %557, %560 : vector<8x8xf32>
    %562 = math.exp %561 : vector<8x8xf32>
    %cst_164 = arith.constant dense<0.000000e+00> : vector<8xf32>
    %563 = vector.multi_reduction <add>, %562, %cst_164 [1] : vector<8x8xf32> to vector<8xf32>
    %564 = vector.shape_cast %563 : vector<8xf32> to vector<8x1xf32>
    %565 = tpu.reciprocal %564 {approx = true} : vector<8x1xf32> -> vector<8x1xf32>
    %566 = vector.broadcast %565 : vector<8x1xf32> to vector<8x8xf32>
    %567 = arith.mulf %562, %566 : vector<8x8xf32>
    %568 = vector.broadcast %65 : vector<1x128xf32> to vector<8x128xf32>
    %569 = arith.mulf %442, %568 : vector<8x128xf32>
    %cst_165 = arith.constant dense<0.000000e+00> : vector<8x128xf32>
    %570 = tpu.matmul %567, %569, %cst_165 {dimension_numbers = #tpu.dot_dimension_numbers<[1], [0], [0], [1], [0, 0, 1, 1], [], []>} : vector<8x8xf32>, vector<8x128xf32>, vector<8x128xf32> -> vector<8x128xf32>
    %571 = arith.addf %550, %570 : vector<8x128xf32>
    %572 = vector.broadcast %72 : vector<1x128xf32> to vector<8x128xf32>
    %573 = arith.mulf %441, %572 : vector<8x128xf32>
    %cst_166 = arith.constant dense<0.000000e+00> : vector<8x8xf32>
    %574 = tpu.matmul %440, %573, %cst_166 {dimension_numbers = #tpu.dot_dimension_numbers<[1], [1], [0], [0], [0, 0, 1, 0], [], []>} : vector<8x128xf32>, vector<8x128xf32>, vector<8x8xf32> -> vector<8x8xf32>
    %cst_167 = arith.constant 2.500000e-01 : f32
    %575 = vector.broadcast %cst_167 : f32 to vector<8x8xf32>
    %576 = arith.mulf %574, %575 : vector<8x8xf32>
    %577 = vector.broadcast %444 : vector<1x8xf32> to vector<8x8xf32>
    %578 = arith.addf %576, %577 : vector<8x8xf32>
    %cst_168 = arith.constant dense<0xFF800000> : vector<8xf32>
    %579 = vector.multi_reduction <maximumf>, %578, %cst_168 [1] : vector<8x8xf32> to vector<8xf32>
    %580 = vector.shape_cast %579 : vector<8xf32> to vector<8x1xf32>
    %581 = vector.broadcast %580 : vector<8x1xf32> to vector<8x8xf32>
    %582 = arith.subf %578, %581 : vector<8x8xf32>
    %583 = math.exp %582 : vector<8x8xf32>
    %cst_169 = arith.constant dense<0.000000e+00> : vector<8xf32>
    %584 = vector.multi_reduction <add>, %583, %cst_169 [1] : vector<8x8xf32> to vector<8xf32>
    %585 = vector.shape_cast %584 : vector<8xf32> to vector<8x1xf32>
    %586 = tpu.reciprocal %585 {approx = true} : vector<8x1xf32> -> vector<8x1xf32>
    %587 = vector.broadcast %586 : vector<8x1xf32> to vector<8x8xf32>
    %588 = arith.mulf %583, %587 : vector<8x8xf32>
    %589 = vector.broadcast %72 : vector<1x128xf32> to vector<8x128xf32>
    %590 = arith.mulf %442, %589 : vector<8x128xf32>
    %cst_170 = arith.constant dense<0.000000e+00> : vector<8x128xf32>
    %591 = tpu.matmul %588, %590, %cst_170 {dimension_numbers = #tpu.dot_dimension_numbers<[1], [0], [0], [1], [0, 0, 1, 1], [], []>} : vector<8x8xf32>, vector<8x128xf32>, vector<8x128xf32> -> vector<8x128xf32>
    %592 = arith.addf %571, %591 : vector<8x128xf32>
    %593 = vector.broadcast %79 : vector<1x128xf32> to vector<8x128xf32>
    %594 = arith.mulf %441, %593 : vector<8x128xf32>
    %cst_171 = arith.constant dense<0.000000e+00> : vector<8x8xf32>
    %595 = tpu.matmul %440, %594, %cst_171 {dimension_numbers = #tpu.dot_dimension_numbers<[1], [1], [0], [0], [0, 0, 1, 0], [], []>} : vector<8x128xf32>, vector<8x128xf32>, vector<8x8xf32> -> vector<8x8xf32>
    %cst_172 = arith.constant 2.500000e-01 : f32
    %596 = vector.broadcast %cst_172 : f32 to vector<8x8xf32>
    %597 = arith.mulf %595, %596 : vector<8x8xf32>
    %598 = vector.broadcast %444 : vector<1x8xf32> to vector<8x8xf32>
    %599 = arith.addf %597, %598 : vector<8x8xf32>
    %cst_173 = arith.constant dense<0xFF800000> : vector<8xf32>
    %600 = vector.multi_reduction <maximumf>, %599, %cst_173 [1] : vector<8x8xf32> to vector<8xf32>
    %601 = vector.shape_cast %600 : vector<8xf32> to vector<8x1xf32>
    %602 = vector.broadcast %601 : vector<8x1xf32> to vector<8x8xf32>
    %603 = arith.subf %599, %602 : vector<8x8xf32>
    %604 = math.exp %603 : vector<8x8xf32>
    %cst_174 = arith.constant dense<0.000000e+00> : vector<8xf32>
    %605 = vector.multi_reduction <add>, %604, %cst_174 [1] : vector<8x8xf32> to vector<8xf32>
    %606 = vector.shape_cast %605 : vector<8xf32> to vector<8x1xf32>
    %607 = tpu.reciprocal %606 {approx = true} : vector<8x1xf32> -> vector<8x1xf32>
    %608 = vector.broadcast %607 : vector<8x1xf32> to vector<8x8xf32>
    %609 = arith.mulf %604, %608 : vector<8x8xf32>
    %610 = vector.broadcast %79 : vector<1x128xf32> to vector<8x128xf32>
    %611 = arith.mulf %442, %610 : vector<8x128xf32>
    %cst_175 = arith.constant dense<0.000000e+00> : vector<8x128xf32>
    %612 = tpu.matmul %609, %611, %cst_175 {dimension_numbers = #tpu.dot_dimension_numbers<[1], [0], [0], [1], [0, 0, 1, 1], [], []>} : vector<8x8xf32>, vector<8x128xf32>, vector<8x128xf32> -> vector<8x128xf32>
    %613 = arith.addf %592, %612 : vector<8x128xf32>
    %614 = vector.extract_strided_slice %22 {offsets = [8, 0], sizes = [8, 128], strides = [1, 1]} : vector<16x384xf32> to vector<8x128xf32>
    %615 = vector.extract_strided_slice %15 {offsets = [8, 128], sizes = [8, 128], strides = [1, 1]} : vector<16x384xf32> to vector<8x128xf32>
    %616 = vector.extract_strided_slice %15 {offsets = [8, 256], sizes = [8, 128], strides = [1, 1]} : vector<16x384xf32> to vector<8x128xf32>
    %617 = vector.extract_strided_slice %7 {offsets = [1, 0, 0], sizes = [1, 1, 8], strides = [1, 1, 1]} : vector<2x1x8xf32> to vector<1x1x8xf32>
    %618 = vector.shape_cast %617 : vector<1x1x8xf32> to vector<1x8xf32>
    %cst_176 = arith.constant 0.000000e+00 : f32
    %619 = vector.broadcast %cst_176 : f32 to vector<8x128xf32>
    %620 = vector.broadcast %30 : vector<1x128xf32> to vector<8x128xf32>
    %621 = arith.mulf %615, %620 : vector<8x128xf32>
    %cst_177 = arith.constant dense<0.000000e+00> : vector<8x8xf32>
    %622 = tpu.matmul %614, %621, %cst_177 {dimension_numbers = #tpu.dot_dimension_numbers<[1], [1], [0], [0], [0, 0, 1, 0], [], []>} : vector<8x128xf32>, vector<8x128xf32>, vector<8x8xf32> -> vector<8x8xf32>
    %cst_178 = arith.constant 2.500000e-01 : f32
    %623 = vector.broadcast %cst_178 : f32 to vector<8x8xf32>
    %624 = arith.mulf %622, %623 : vector<8x8xf32>
    %625 = vector.broadcast %618 : vector<1x8xf32> to vector<8x8xf32>
    %626 = arith.addf %624, %625 : vector<8x8xf32>
    %cst_179 = arith.constant dense<0xFF800000> : vector<8xf32>
    %627 = vector.multi_reduction <maximumf>, %626, %cst_179 [1] : vector<8x8xf32> to vector<8xf32>
    %628 = vector.shape_cast %627 : vector<8xf32> to vector<8x1xf32>
    %629 = vector.broadcast %628 : vector<8x1xf32> to vector<8x8xf32>
    %630 = arith.subf %626, %629 : vector<8x8xf32>
    %631 = math.exp %630 : vector<8x8xf32>
    %cst_180 = arith.constant dense<0.000000e+00> : vector<8xf32>
    %632 = vector.multi_reduction <add>, %631, %cst_180 [1] : vector<8x8xf32> to vector<8xf32>
    %633 = vector.shape_cast %632 : vector<8xf32> to vector<8x1xf32>
    %634 = tpu.reciprocal %633 {approx = true} : vector<8x1xf32> -> vector<8x1xf32>
    %635 = vector.broadcast %634 : vector<8x1xf32> to vector<8x8xf32>
    %636 = arith.mulf %631, %635 : vector<8x8xf32>
    %637 = vector.broadcast %30 : vector<1x128xf32> to vector<8x128xf32>
    %638 = arith.mulf %616, %637 : vector<8x128xf32>
    %cst_181 = arith.constant dense<0.000000e+00> : vector<8x128xf32>
    %639 = tpu.matmul %636, %638, %cst_181 {dimension_numbers = #tpu.dot_dimension_numbers<[1], [0], [0], [1], [0, 0, 1, 1], [], []>} : vector<8x8xf32>, vector<8x128xf32>, vector<8x128xf32> -> vector<8x128xf32>
    %640 = arith.addf %619, %639 : vector<8x128xf32>
    %641 = vector.broadcast %37 : vector<1x128xf32> to vector<8x128xf32>
    %642 = arith.mulf %615, %641 : vector<8x128xf32>
    %cst_182 = arith.constant dense<0.000000e+00> : vector<8x8xf32>
    %643 = tpu.matmul %614, %642, %cst_182 {dimension_numbers = #tpu.dot_dimension_numbers<[1], [1], [0], [0], [0, 0, 1, 0], [], []>} : vector<8x128xf32>, vector<8x128xf32>, vector<8x8xf32> -> vector<8x8xf32>
    %cst_183 = arith.constant 2.500000e-01 : f32
    %644 = vector.broadcast %cst_183 : f32 to vector<8x8xf32>
    %645 = arith.mulf %643, %644 : vector<8x8xf32>
    %646 = vector.broadcast %618 : vector<1x8xf32> to vector<8x8xf32>
    %647 = arith.addf %645, %646 : vector<8x8xf32>
    %cst_184 = arith.constant dense<0xFF800000> : vector<8xf32>
    %648 = vector.multi_reduction <maximumf>, %647, %cst_184 [1] : vector<8x8xf32> to vector<8xf32>
    %649 = vector.shape_cast %648 : vector<8xf32> to vector<8x1xf32>
    %650 = vector.broadcast %649 : vector<8x1xf32> to vector<8x8xf32>
    %651 = arith.subf %647, %650 : vector<8x8xf32>
    %652 = math.exp %651 : vector<8x8xf32>
    %cst_185 = arith.constant dense<0.000000e+00> : vector<8xf32>
    %653 = vector.multi_reduction <add>, %652, %cst_185 [1] : vector<8x8xf32> to vector<8xf32>
    %654 = vector.shape_cast %653 : vector<8xf32> to vector<8x1xf32>
    %655 = tpu.reciprocal %654 {approx = true} : vector<8x1xf32> -> vector<8x1xf32>
    %656 = vector.broadcast %655 : vector<8x1xf32> to vector<8x8xf32>
    %657 = arith.mulf %652, %656 : vector<8x8xf32>
    %658 = vector.broadcast %37 : vector<1x128xf32> to vector<8x128xf32>
    %659 = arith.mulf %616, %658 : vector<8x128xf32>
    %cst_186 = arith.constant dense<0.000000e+00> : vector<8x128xf32>
    %660 = tpu.matmul %657, %659, %cst_186 {dimension_numbers = #tpu.dot_dimension_numbers<[1], [0], [0], [1], [0, 0, 1, 1], [], []>} : vector<8x8xf32>, vector<8x128xf32>, vector<8x128xf32> -> vector<8x128xf32>
    %661 = arith.addf %640, %660 : vector<8x128xf32>
    %662 = vector.broadcast %44 : vector<1x128xf32> to vector<8x128xf32>
    %663 = arith.mulf %615, %662 : vector<8x128xf32>
    %cst_187 = arith.constant dense<0.000000e+00> : vector<8x8xf32>
    %664 = tpu.matmul %614, %663, %cst_187 {dimension_numbers = #tpu.dot_dimension_numbers<[1], [1], [0], [0], [0, 0, 1, 0], [], []>} : vector<8x128xf32>, vector<8x128xf32>, vector<8x8xf32> -> vector<8x8xf32>
    %cst_188 = arith.constant 2.500000e-01 : f32
    %665 = vector.broadcast %cst_188 : f32 to vector<8x8xf32>
    %666 = arith.mulf %664, %665 : vector<8x8xf32>
    %667 = vector.broadcast %618 : vector<1x8xf32> to vector<8x8xf32>
    %668 = arith.addf %666, %667 : vector<8x8xf32>
    %cst_189 = arith.constant dense<0xFF800000> : vector<8xf32>
    %669 = vector.multi_reduction <maximumf>, %668, %cst_189 [1] : vector<8x8xf32> to vector<8xf32>
    %670 = vector.shape_cast %669 : vector<8xf32> to vector<8x1xf32>
    %671 = vector.broadcast %670 : vector<8x1xf32> to vector<8x8xf32>
    %672 = arith.subf %668, %671 : vector<8x8xf32>
    %673 = math.exp %672 : vector<8x8xf32>
    %cst_190 = arith.constant dense<0.000000e+00> : vector<8xf32>
    %674 = vector.multi_reduction <add>, %673, %cst_190 [1] : vector<8x8xf32> to vector<8xf32>
    %675 = vector.shape_cast %674 : vector<8xf32> to vector<8x1xf32>
    %676 = tpu.reciprocal %675 {approx = true} : vector<8x1xf32> -> vector<8x1xf32>
    %677 = vector.broadcast %676 : vector<8x1xf32> to vector<8x8xf32>
    %678 = arith.mulf %673, %677 : vector<8x8xf32>
    %679 = vector.broadcast %44 : vector<1x128xf32> to vector<8x128xf32>
    %680 = arith.mulf %616, %679 : vector<8x128xf32>
    %cst_191 = arith.constant dense<0.000000e+00> : vector<8x128xf32>
    %681 = tpu.matmul %678, %680, %cst_191 {dimension_numbers = #tpu.dot_dimension_numbers<[1], [0], [0], [1], [0, 0, 1, 1], [], []>} : vector<8x8xf32>, vector<8x128xf32>, vector<8x128xf32> -> vector<8x128xf32>
    %682 = arith.addf %661, %681 : vector<8x128xf32>
    %683 = vector.broadcast %51 : vector<1x128xf32> to vector<8x128xf32>
    %684 = arith.mulf %615, %683 : vector<8x128xf32>
    %cst_192 = arith.constant dense<0.000000e+00> : vector<8x8xf32>
    %685 = tpu.matmul %614, %684, %cst_192 {dimension_numbers = #tpu.dot_dimension_numbers<[1], [1], [0], [0], [0, 0, 1, 0], [], []>} : vector<8x128xf32>, vector<8x128xf32>, vector<8x8xf32> -> vector<8x8xf32>
    %cst_193 = arith.constant 2.500000e-01 : f32
    %686 = vector.broadcast %cst_193 : f32 to vector<8x8xf32>
    %687 = arith.mulf %685, %686 : vector<8x8xf32>
    %688 = vector.broadcast %618 : vector<1x8xf32> to vector<8x8xf32>
    %689 = arith.addf %687, %688 : vector<8x8xf32>
    %cst_194 = arith.constant dense<0xFF800000> : vector<8xf32>
    %690 = vector.multi_reduction <maximumf>, %689, %cst_194 [1] : vector<8x8xf32> to vector<8xf32>
    %691 = vector.shape_cast %690 : vector<8xf32> to vector<8x1xf32>
    %692 = vector.broadcast %691 : vector<8x1xf32> to vector<8x8xf32>
    %693 = arith.subf %689, %692 : vector<8x8xf32>
    %694 = math.exp %693 : vector<8x8xf32>
    %cst_195 = arith.constant dense<0.000000e+00> : vector<8xf32>
    %695 = vector.multi_reduction <add>, %694, %cst_195 [1] : vector<8x8xf32> to vector<8xf32>
    %696 = vector.shape_cast %695 : vector<8xf32> to vector<8x1xf32>
    %697 = tpu.reciprocal %696 {approx = true} : vector<8x1xf32> -> vector<8x1xf32>
    %698 = vector.broadcast %697 : vector<8x1xf32> to vector<8x8xf32>
    %699 = arith.mulf %694, %698 : vector<8x8xf32>
    %700 = vector.broadcast %51 : vector<1x128xf32> to vector<8x128xf32>
    %701 = arith.mulf %616, %700 : vector<8x128xf32>
    %cst_196 = arith.constant dense<0.000000e+00> : vector<8x128xf32>
    %702 = tpu.matmul %699, %701, %cst_196 {dimension_numbers = #tpu.dot_dimension_numbers<[1], [0], [0], [1], [0, 0, 1, 1], [], []>} : vector<8x8xf32>, vector<8x128xf32>, vector<8x128xf32> -> vector<8x128xf32>
    %703 = arith.addf %682, %702 : vector<8x128xf32>
    %704 = vector.broadcast %58 : vector<1x128xf32> to vector<8x128xf32>
    %705 = arith.mulf %615, %704 : vector<8x128xf32>
    %cst_197 = arith.constant dense<0.000000e+00> : vector<8x8xf32>
    %706 = tpu.matmul %614, %705, %cst_197 {dimension_numbers = #tpu.dot_dimension_numbers<[1], [1], [0], [0], [0, 0, 1, 0], [], []>} : vector<8x128xf32>, vector<8x128xf32>, vector<8x8xf32> -> vector<8x8xf32>
    %cst_198 = arith.constant 2.500000e-01 : f32
    %707 = vector.broadcast %cst_198 : f32 to vector<8x8xf32>
    %708 = arith.mulf %706, %707 : vector<8x8xf32>
    %709 = vector.broadcast %618 : vector<1x8xf32> to vector<8x8xf32>
    %710 = arith.addf %708, %709 : vector<8x8xf32>
    %cst_199 = arith.constant dense<0xFF800000> : vector<8xf32>
    %711 = vector.multi_reduction <maximumf>, %710, %cst_199 [1] : vector<8x8xf32> to vector<8xf32>
    %712 = vector.shape_cast %711 : vector<8xf32> to vector<8x1xf32>
    %713 = vector.broadcast %712 : vector<8x1xf32> to vector<8x8xf32>
    %714 = arith.subf %710, %713 : vector<8x8xf32>
    %715 = math.exp %714 : vector<8x8xf32>
    %cst_200 = arith.constant dense<0.000000e+00> : vector<8xf32>
    %716 = vector.multi_reduction <add>, %715, %cst_200 [1] : vector<8x8xf32> to vector<8xf32>
    %717 = vector.shape_cast %716 : vector<8xf32> to vector<8x1xf32>
    %718 = tpu.reciprocal %717 {approx = true} : vector<8x1xf32> -> vector<8x1xf32>
    %719 = vector.broadcast %718 : vector<8x1xf32> to vector<8x8xf32>
    %720 = arith.mulf %715, %719 : vector<8x8xf32>
    %721 = vector.broadcast %58 : vector<1x128xf32> to vector<8x128xf32>
    %722 = arith.mulf %616, %721 : vector<8x128xf32>
    %cst_201 = arith.constant dense<0.000000e+00> : vector<8x128xf32>
    %723 = tpu.matmul %720, %722, %cst_201 {dimension_numbers = #tpu.dot_dimension_numbers<[1], [0], [0], [1], [0, 0, 1, 1], [], []>} : vector<8x8xf32>, vector<8x128xf32>, vector<8x128xf32> -> vector<8x128xf32>
    %724 = arith.addf %703, %723 : vector<8x128xf32>
    %725 = vector.broadcast %65 : vector<1x128xf32> to vector<8x128xf32>
    %726 = arith.mulf %615, %725 : vector<8x128xf32>
    %cst_202 = arith.constant dense<0.000000e+00> : vector<8x8xf32>
    %727 = tpu.matmul %614, %726, %cst_202 {dimension_numbers = #tpu.dot_dimension_numbers<[1], [1], [0], [0], [0, 0, 1, 0], [], []>} : vector<8x128xf32>, vector<8x128xf32>, vector<8x8xf32> -> vector<8x8xf32>
    %cst_203 = arith.constant 2.500000e-01 : f32
    %728 = vector.broadcast %cst_203 : f32 to vector<8x8xf32>
    %729 = arith.mulf %727, %728 : vector<8x8xf32>
    %730 = vector.broadcast %618 : vector<1x8xf32> to vector<8x8xf32>
    %731 = arith.addf %729, %730 : vector<8x8xf32>
    %cst_204 = arith.constant dense<0xFF800000> : vector<8xf32>
    %732 = vector.multi_reduction <maximumf>, %731, %cst_204 [1] : vector<8x8xf32> to vector<8xf32>
    %733 = vector.shape_cast %732 : vector<8xf32> to vector<8x1xf32>
    %734 = vector.broadcast %733 : vector<8x1xf32> to vector<8x8xf32>
    %735 = arith.subf %731, %734 : vector<8x8xf32>
    %736 = math.exp %735 : vector<8x8xf32>
    %cst_205 = arith.constant dense<0.000000e+00> : vector<8xf32>
    %737 = vector.multi_reduction <add>, %736, %cst_205 [1] : vector<8x8xf32> to vector<8xf32>
    %738 = vector.shape_cast %737 : vector<8xf32> to vector<8x1xf32>
    %739 = tpu.reciprocal %738 {approx = true} : vector<8x1xf32> -> vector<8x1xf32>
    %740 = vector.broadcast %739 : vector<8x1xf32> to vector<8x8xf32>
    %741 = arith.mulf %736, %740 : vector<8x8xf32>
    %742 = vector.broadcast %65 : vector<1x128xf32> to vector<8x128xf32>
    %743 = arith.mulf %616, %742 : vector<8x128xf32>
    %cst_206 = arith.constant dense<0.000000e+00> : vector<8x128xf32>
    %744 = tpu.matmul %741, %743, %cst_206 {dimension_numbers = #tpu.dot_dimension_numbers<[1], [0], [0], [1], [0, 0, 1, 1], [], []>} : vector<8x8xf32>, vector<8x128xf32>, vector<8x128xf32> -> vector<8x128xf32>
    %745 = arith.addf %724, %744 : vector<8x128xf32>
    %746 = vector.broadcast %72 : vector<1x128xf32> to vector<8x128xf32>
    %747 = arith.mulf %615, %746 : vector<8x128xf32>
    %cst_207 = arith.constant dense<0.000000e+00> : vector<8x8xf32>
    %748 = tpu.matmul %614, %747, %cst_207 {dimension_numbers = #tpu.dot_dimension_numbers<[1], [1], [0], [0], [0, 0, 1, 0], [], []>} : vector<8x128xf32>, vector<8x128xf32>, vector<8x8xf32> -> vector<8x8xf32>
    %cst_208 = arith.constant 2.500000e-01 : f32
    %749 = vector.broadcast %cst_208 : f32 to vector<8x8xf32>
    %750 = arith.mulf %748, %749 : vector<8x8xf32>
    %751 = vector.broadcast %618 : vector<1x8xf32> to vector<8x8xf32>
    %752 = arith.addf %750, %751 : vector<8x8xf32>
    %cst_209 = arith.constant dense<0xFF800000> : vector<8xf32>
    %753 = vector.multi_reduction <maximumf>, %752, %cst_209 [1] : vector<8x8xf32> to vector<8xf32>
    %754 = vector.shape_cast %753 : vector<8xf32> to vector<8x1xf32>
    %755 = vector.broadcast %754 : vector<8x1xf32> to vector<8x8xf32>
    %756 = arith.subf %752, %755 : vector<8x8xf32>
    %757 = math.exp %756 : vector<8x8xf32>
    %cst_210 = arith.constant dense<0.000000e+00> : vector<8xf32>
    %758 = vector.multi_reduction <add>, %757, %cst_210 [1] : vector<8x8xf32> to vector<8xf32>
    %759 = vector.shape_cast %758 : vector<8xf32> to vector<8x1xf32>
    %760 = tpu.reciprocal %759 {approx = true} : vector<8x1xf32> -> vector<8x1xf32>
    %761 = vector.broadcast %760 : vector<8x1xf32> to vector<8x8xf32>
    %762 = arith.mulf %757, %761 : vector<8x8xf32>
    %763 = vector.broadcast %72 : vector<1x128xf32> to vector<8x128xf32>
    %764 = arith.mulf %616, %763 : vector<8x128xf32>
    %cst_211 = arith.constant dense<0.000000e+00> : vector<8x128xf32>
    %765 = tpu.matmul %762, %764, %cst_211 {dimension_numbers = #tpu.dot_dimension_numbers<[1], [0], [0], [1], [0, 0, 1, 1], [], []>} : vector<8x8xf32>, vector<8x128xf32>, vector<8x128xf32> -> vector<8x128xf32>
    %766 = arith.addf %745, %765 : vector<8x128xf32>
    %767 = vector.broadcast %79 : vector<1x128xf32> to vector<8x128xf32>
    %768 = arith.mulf %615, %767 : vector<8x128xf32>
    %cst_212 = arith.constant dense<0.000000e+00> : vector<8x8xf32>
    %769 = tpu.matmul %614, %768, %cst_212 {dimension_numbers = #tpu.dot_dimension_numbers<[1], [1], [0], [0], [0, 0, 1, 0], [], []>} : vector<8x128xf32>, vector<8x128xf32>, vector<8x8xf32> -> vector<8x8xf32>
    %cst_213 = arith.constant 2.500000e-01 : f32
    %770 = vector.broadcast %cst_213 : f32 to vector<8x8xf32>
    %771 = arith.mulf %769, %770 : vector<8x8xf32>
    %772 = vector.broadcast %618 : vector<1x8xf32> to vector<8x8xf32>
    %773 = arith.addf %771, %772 : vector<8x8xf32>
    %cst_214 = arith.constant dense<0xFF800000> : vector<8xf32>
    %774 = vector.multi_reduction <maximumf>, %773, %cst_214 [1] : vector<8x8xf32> to vector<8xf32>
    %775 = vector.shape_cast %774 : vector<8xf32> to vector<8x1xf32>
    %776 = vector.broadcast %775 : vector<8x1xf32> to vector<8x8xf32>
    %777 = arith.subf %773, %776 : vector<8x8xf32>
    %778 = math.exp %777 : vector<8x8xf32>
    %cst_215 = arith.constant dense<0.000000e+00> : vector<8xf32>
    %779 = vector.multi_reduction <add>, %778, %cst_215 [1] : vector<8x8xf32> to vector<8xf32>
    %780 = vector.shape_cast %779 : vector<8xf32> to vector<8x1xf32>
    %781 = tpu.reciprocal %780 {approx = true} : vector<8x1xf32> -> vector<8x1xf32>
    %782 = vector.broadcast %781 : vector<8x1xf32> to vector<8x8xf32>
    %783 = arith.mulf %778, %782 : vector<8x8xf32>
    %784 = vector.broadcast %79 : vector<1x128xf32> to vector<8x128xf32>
    %785 = arith.mulf %616, %784 : vector<8x128xf32>
    %cst_216 = arith.constant dense<0.000000e+00> : vector<8x128xf32>
    %786 = tpu.matmul %783, %785, %cst_216 {dimension_numbers = #tpu.dot_dimension_numbers<[1], [0], [0], [1], [0, 0, 1, 1], [], []>} : vector<8x8xf32>, vector<8x128xf32>, vector<8x128xf32> -> vector<8x128xf32>
    %787 = arith.addf %766, %786 : vector<8x128xf32>
    %788 = tpu.concatenate %613, %787 in 0 : vector<8x128xf32>, vector<8x128xf32> -> vector<16x128xf32>
    %cst_217 = arith.constant dense<0.000000e+00> : vector<16x128xf32>
    %789 = tpu.matmul %788, %437, %cst_217 {dimension_numbers = #tpu.dot_dimension_numbers<[1], [0], [0], [1], [0, 0, 1, 1], [], []>} : vector<16x128xf32>, vector<128x128xf32>, vector<16x128xf32> -> vector<16x128xf32>
    %790 = vector.broadcast %439 : vector<1x128xf32> to vector<16x128xf32>
    %791 = arith.addf %789, %790 : vector<16x128xf32>
    %c0_218 = arith.constant 0 : index
    %c0_219 = arith.constant 0 : index
    %c0_220 = arith.constant 0 : index
    %c0_221 = arith.constant 0 : index
    %792 = vector.load %arg15[%c0_218, %c0_219, %c0_220, %c0_221] : memref<1x2x128x128xf32, #tpu.memory_space<vmem>>, vector<1x1x128x128xf32>
    %793 = vector.shape_cast %792 : vector<1x1x128x128xf32> to vector<128x128xf32>
    %cst_222 = arith.constant dense<0.000000e+00> : vector<16x128xf32>
    %794 = tpu.matmul %435, %793, %cst_222 {dimension_numbers = #tpu.dot_dimension_numbers<[1], [0], [0], [1], [0, 0, 1, 1], [], []>} : vector<16x128xf32>, vector<128x128xf32>, vector<16x128xf32> -> vector<16x128xf32>
    %795 = arith.addf %4, %794 : vector<16x128xf32>
    %c0_223 = arith.constant 0 : index
    %c0_224 = arith.constant 0 : index
    %c0_225 = arith.constant 0 : index
    %c0_226 = arith.constant 0 : index
    %796 = vector.load %arg16[%c0_223, %c0_224, %c0_225, %c0_226] : memref<1x2x1x128xf32, #tpu.memory_space<vmem>>, vector<1x1x1x128xf32>
    %797 = vector.shape_cast %796 : vector<1x1x1x128xf32> to vector<1x128xf32>
    %798 = vector.broadcast %797 : vector<1x128xf32> to vector<16x128xf32>
    %799 = arith.addf %795, %798 : vector<16x128xf32>
    %c0_227 = arith.constant 0 : index
    %c0_228 = arith.constant 0 : index
    %c0_229 = arith.constant 0 : index
    %c0_230 = arith.constant 0 : index
    %800 = vector.load %arg17[%c0_227, %c0_228, %c0_229, %c0_230] : memref<1x2x1x128xf32, #tpu.memory_space<vmem>>, vector<1x1x1x128xf32>
    %801 = vector.shape_cast %800 : vector<1x1x1x128xf32> to vector<1x128xf32>
    %c0_231 = arith.constant 0 : index
    %c0_232 = arith.constant 0 : index
    %c0_233 = arith.constant 0 : index
    %c0_234 = arith.constant 0 : index
    %802 = vector.load %arg18[%c0_231, %c0_232, %c0_233, %c0_234] : memref<1x2x1x128xf32, #tpu.memory_space<vmem>>, vector<1x1x1x128xf32>
    %803 = vector.shape_cast %802 : vector<1x1x1x128xf32> to vector<1x128xf32>
    %cst_235 = arith.constant dense<0.000000e+00> : vector<16xf32>
    %804 = vector.multi_reduction <add>, %799, %cst_235 [1] : vector<16x128xf32> to vector<16xf32>
    %805 = vector.shape_cast %804 : vector<16xf32> to vector<16x1xf32>
    %cst_236 = arith.constant 1.280000e+02 : f32
    %806 = vector.broadcast %cst_236 : f32 to vector<16x1xf32>
    %807 = arith.divf %805, %806 : vector<16x1xf32>
    %808 = vector.broadcast %807 : vector<16x1xf32> to vector<16x128xf32>
    %809 = arith.subf %799, %808 : vector<16x128xf32>
    %810 = arith.mulf %809, %809 : vector<16x128xf32>
    %cst_237 = arith.constant dense<0.000000e+00> : vector<16xf32>
    %811 = vector.multi_reduction <add>, %810, %cst_237 [1] : vector<16x128xf32> to vector<16xf32>
    %812 = vector.shape_cast %811 : vector<16xf32> to vector<16x1xf32>
    %cst_238 = arith.constant 1.280000e+02 : f32
    %813 = vector.broadcast %cst_238 : f32 to vector<16x1xf32>
    %814 = arith.divf %812, %813 : vector<16x1xf32>
    %cst_239 = arith.constant 9.99999974E-6 : f32
    %815 = vector.broadcast %cst_239 : f32 to vector<16x1xf32>
    %816 = arith.addf %814, %815 : vector<16x1xf32>
    %817 = math.rsqrt %816 : vector<16x1xf32>
    %818 = vector.broadcast %817 : vector<16x1xf32> to vector<16x128xf32>
    %819 = arith.mulf %809, %818 : vector<16x128xf32>
    %820 = vector.broadcast %801 : vector<1x128xf32> to vector<16x128xf32>
    %821 = arith.mulf %819, %820 : vector<16x128xf32>
    %822 = vector.broadcast %803 : vector<1x128xf32> to vector<16x128xf32>
    %823 = arith.addf %821, %822 : vector<16x128xf32>
    %c0_240 = arith.constant 0 : index
    %c0_241 = arith.constant 0 : index
    %c0_242 = arith.constant 0 : index
    %c0_243 = arith.constant 0 : index
    %824 = vector.load %arg19[%c0_240, %c0_241, %c0_242, %c0_243] : memref<1x2x128x256xf32, #tpu.memory_space<vmem>>, vector<1x1x128x256xf32>
    %825 = vector.shape_cast %824 : vector<1x1x128x256xf32> to vector<128x256xf32>
    %cst_244 = arith.constant dense<0.000000e+00> : vector<16x256xf32>
    %826 = tpu.matmul %823, %825, %cst_244 {dimension_numbers = #tpu.dot_dimension_numbers<[1], [0], [0], [1], [0, 0, 1, 1], [], []>} : vector<16x128xf32>, vector<128x256xf32>, vector<16x256xf32> -> vector<16x256xf32>
    %c0_245 = arith.constant 0 : index
    %c0_246 = arith.constant 0 : index
    %c0_247 = arith.constant 0 : index
    %c0_248 = arith.constant 0 : index
    %827 = vector.load %arg20[%c0_245, %c0_246, %c0_247, %c0_248] : memref<1x2x1x256xf32, #tpu.memory_space<vmem>>, vector<1x1x1x256xf32>
    %828 = vector.shape_cast %827 : vector<1x1x1x256xf32> to vector<1x256xf32>
    %829 = vector.broadcast %828 : vector<1x256xf32> to vector<16x256xf32>
    %830 = arith.addf %826, %829 : vector<16x256xf32>
    %cst_249 = arith.constant 5.000000e-01 : f32
    %831 = vector.broadcast %cst_249 : f32 to vector<16x256xf32>
    %832 = arith.mulf %831, %830 : vector<16x256xf32>
    %cst_250 = arith.constant 0.707106769 : f32
    %833 = vector.broadcast %cst_250 : f32 to vector<16x256xf32>
    %834 = arith.mulf %830, %833 : vector<16x256xf32>
    %835 = math.erf %834 : vector<16x256xf32>
    %cst_251 = arith.constant 1.000000e+00 : f32
    %836 = vector.broadcast %cst_251 : f32 to vector<16x256xf32>
    %837 = arith.addf %836, %835 : vector<16x256xf32>
    %838 = arith.mulf %832, %837 : vector<16x256xf32>
    %c0_252 = arith.constant 0 : index
    %c0_253 = arith.constant 0 : index
    %c0_254 = arith.constant 0 : index
    %c0_255 = arith.constant 0 : index
    %839 = vector.load %arg21[%c0_252, %c0_253, %c0_254, %c0_255] : memref<1x2x256x128xf32, #tpu.memory_space<vmem>>, vector<1x1x256x128xf32>
    %840 = vector.shape_cast %839 : vector<1x1x256x128xf32> to vector<256x128xf32>
    %cst_256 = arith.constant dense<0.000000e+00> : vector<16x128xf32>
    %841 = tpu.matmul %838, %840, %cst_256 {dimension_numbers = #tpu.dot_dimension_numbers<[1], [0], [0], [1], [0, 0, 1, 1], [], []>} : vector<16x256xf32>, vector<256x128xf32>, vector<16x128xf32> -> vector<16x128xf32>
    %842 = arith.addf %823, %841 : vector<16x128xf32>
    %c0_257 = arith.constant 0 : index
    %c0_258 = arith.constant 0 : index
    %c0_259 = arith.constant 0 : index
    %c0_260 = arith.constant 0 : index
    %843 = vector.load %arg22[%c0_257, %c0_258, %c0_259, %c0_260] : memref<1x2x1x128xf32, #tpu.memory_space<vmem>>, vector<1x1x1x128xf32>
    %844 = vector.shape_cast %843 : vector<1x1x1x128xf32> to vector<1x128xf32>
    %845 = vector.broadcast %844 : vector<1x128xf32> to vector<16x128xf32>
    %846 = arith.addf %842, %845 : vector<16x128xf32>
    %c0_261 = arith.constant 0 : index
    %c0_262 = arith.constant 0 : index
    %c0_263 = arith.constant 0 : index
    %c0_264 = arith.constant 0 : index
    %847 = vector.load %arg23[%c0_261, %c0_262, %c0_263, %c0_264] : memref<1x2x1x128xf32, #tpu.memory_space<vmem>>, vector<1x1x1x128xf32>
    %848 = vector.shape_cast %847 : vector<1x1x1x128xf32> to vector<1x128xf32>
    %c0_265 = arith.constant 0 : index
    %c0_266 = arith.constant 0 : index
    %c0_267 = arith.constant 0 : index
    %c0_268 = arith.constant 0 : index
    %849 = vector.load %arg24[%c0_265, %c0_266, %c0_267, %c0_268] : memref<1x2x1x128xf32, #tpu.memory_space<vmem>>, vector<1x1x1x128xf32>
    %850 = vector.shape_cast %849 : vector<1x1x1x128xf32> to vector<1x128xf32>
    %cst_269 = arith.constant dense<0.000000e+00> : vector<16xf32>
    %851 = vector.multi_reduction <add>, %846, %cst_269 [1] : vector<16x128xf32> to vector<16xf32>
    %852 = vector.shape_cast %851 : vector<16xf32> to vector<16x1xf32>
    %cst_270 = arith.constant 1.280000e+02 : f32
    %853 = vector.broadcast %cst_270 : f32 to vector<16x1xf32>
    %854 = arith.divf %852, %853 : vector<16x1xf32>
    %855 = vector.broadcast %854 : vector<16x1xf32> to vector<16x128xf32>
    %856 = arith.subf %846, %855 : vector<16x128xf32>
    %857 = arith.mulf %856, %856 : vector<16x128xf32>
    %cst_271 = arith.constant dense<0.000000e+00> : vector<16xf32>
    %858 = vector.multi_reduction <add>, %857, %cst_271 [1] : vector<16x128xf32> to vector<16xf32>
    %859 = vector.shape_cast %858 : vector<16xf32> to vector<16x1xf32>
    %cst_272 = arith.constant 1.280000e+02 : f32
    %860 = vector.broadcast %cst_272 : f32 to vector<16x1xf32>
    %861 = arith.divf %859, %860 : vector<16x1xf32>
    %cst_273 = arith.constant 9.99999974E-6 : f32
    %862 = vector.broadcast %cst_273 : f32 to vector<16x1xf32>
    %863 = arith.addf %861, %862 : vector<16x1xf32>
    %864 = math.rsqrt %863 : vector<16x1xf32>
    %865 = vector.broadcast %864 : vector<16x1xf32> to vector<16x128xf32>
    %866 = arith.mulf %856, %865 : vector<16x128xf32>
    %867 = vector.broadcast %848 : vector<1x128xf32> to vector<16x128xf32>
    %868 = arith.mulf %866, %867 : vector<16x128xf32>
    %869 = vector.broadcast %850 : vector<1x128xf32> to vector<16x128xf32>
    %870 = arith.addf %868, %869 : vector<16x128xf32>
    %c0_274 = arith.constant 0 : index
    %c1_275 = arith.constant 1 : index
    %c0_276 = arith.constant 0 : index
    %c0_277 = arith.constant 0 : index
    %871 = vector.load %arg15[%c0_274, %c1_275, %c0_276, %c0_277] : memref<1x2x128x128xf32, #tpu.memory_space<vmem>>, vector<1x1x128x128xf32>
    %872 = vector.shape_cast %871 : vector<1x1x128x128xf32> to vector<128x128xf32>
    %cst_278 = arith.constant dense<0.000000e+00> : vector<16x128xf32>
    %873 = tpu.matmul %791, %872, %cst_278 {dimension_numbers = #tpu.dot_dimension_numbers<[1], [0], [0], [1], [0, 0, 1, 1], [], []>} : vector<16x128xf32>, vector<128x128xf32>, vector<16x128xf32> -> vector<16x128xf32>
    %874 = arith.addf %6, %873 : vector<16x128xf32>
    %c0_279 = arith.constant 0 : index
    %c1_280 = arith.constant 1 : index
    %c0_281 = arith.constant 0 : index
    %c0_282 = arith.constant 0 : index
    %875 = vector.load %arg16[%c0_279, %c1_280, %c0_281, %c0_282] : memref<1x2x1x128xf32, #tpu.memory_space<vmem>>, vector<1x1x1x128xf32>
    %876 = vector.shape_cast %875 : vector<1x1x1x128xf32> to vector<1x128xf32>
    %877 = vector.broadcast %876 : vector<1x128xf32> to vector<16x128xf32>
    %878 = arith.addf %874, %877 : vector<16x128xf32>
    %c0_283 = arith.constant 0 : index
    %c1_284 = arith.constant 1 : index
    %c0_285 = arith.constant 0 : index
    %c0_286 = arith.constant 0 : index
    %879 = vector.load %arg17[%c0_283, %c1_284, %c0_285, %c0_286] : memref<1x2x1x128xf32, #tpu.memory_space<vmem>>, vector<1x1x1x128xf32>
    %880 = vector.shape_cast %879 : vector<1x1x1x128xf32> to vector<1x128xf32>
    %c0_287 = arith.constant 0 : index
    %c1_288 = arith.constant 1 : index
    %c0_289 = arith.constant 0 : index
    %c0_290 = arith.constant 0 : index
    %881 = vector.load %arg18[%c0_287, %c1_288, %c0_289, %c0_290] : memref<1x2x1x128xf32, #tpu.memory_space<vmem>>, vector<1x1x1x128xf32>
    %882 = vector.shape_cast %881 : vector<1x1x1x128xf32> to vector<1x128xf32>
    %cst_291 = arith.constant dense<0.000000e+00> : vector<16xf32>
    %883 = vector.multi_reduction <add>, %878, %cst_291 [1] : vector<16x128xf32> to vector<16xf32>
    %884 = vector.shape_cast %883 : vector<16xf32> to vector<16x1xf32>
    %cst_292 = arith.constant 1.280000e+02 : f32
    %885 = vector.broadcast %cst_292 : f32 to vector<16x1xf32>
    %886 = arith.divf %884, %885 : vector<16x1xf32>
    %887 = vector.broadcast %886 : vector<16x1xf32> to vector<16x128xf32>
    %888 = arith.subf %878, %887 : vector<16x128xf32>
    %889 = arith.mulf %888, %888 : vector<16x128xf32>
    %cst_293 = arith.constant dense<0.000000e+00> : vector<16xf32>
    %890 = vector.multi_reduction <add>, %889, %cst_293 [1] : vector<16x128xf32> to vector<16xf32>
    %891 = vector.shape_cast %890 : vector<16xf32> to vector<16x1xf32>
    %cst_294 = arith.constant 1.280000e+02 : f32
    %892 = vector.broadcast %cst_294 : f32 to vector<16x1xf32>
    %893 = arith.divf %891, %892 : vector<16x1xf32>
    %cst_295 = arith.constant 9.99999974E-6 : f32
    %894 = vector.broadcast %cst_295 : f32 to vector<16x1xf32>
    %895 = arith.addf %893, %894 : vector<16x1xf32>
    %896 = math.rsqrt %895 : vector<16x1xf32>
    %897 = vector.broadcast %896 : vector<16x1xf32> to vector<16x128xf32>
    %898 = arith.mulf %888, %897 : vector<16x128xf32>
    %899 = vector.broadcast %880 : vector<1x128xf32> to vector<16x128xf32>
    %900 = arith.mulf %898, %899 : vector<16x128xf32>
    %901 = vector.broadcast %882 : vector<1x128xf32> to vector<16x128xf32>
    %902 = arith.addf %900, %901 : vector<16x128xf32>
    %c0_296 = arith.constant 0 : index
    %c1_297 = arith.constant 1 : index
    %c0_298 = arith.constant 0 : index
    %c0_299 = arith.constant 0 : index
    %903 = vector.load %arg19[%c0_296, %c1_297, %c0_298, %c0_299] : memref<1x2x128x256xf32, #tpu.memory_space<vmem>>, vector<1x1x128x256xf32>
    %904 = vector.shape_cast %903 : vector<1x1x128x256xf32> to vector<128x256xf32>
    %cst_300 = arith.constant dense<0.000000e+00> : vector<16x256xf32>
    %905 = tpu.matmul %902, %904, %cst_300 {dimension_numbers = #tpu.dot_dimension_numbers<[1], [0], [0], [1], [0, 0, 1, 1], [], []>} : vector<16x128xf32>, vector<128x256xf32>, vector<16x256xf32> -> vector<16x256xf32>
    %c0_301 = arith.constant 0 : index
    %c1_302 = arith.constant 1 : index
    %c0_303 = arith.constant 0 : index
    %c0_304 = arith.constant 0 : index
    %906 = vector.load %arg20[%c0_301, %c1_302, %c0_303, %c0_304] : memref<1x2x1x256xf32, #tpu.memory_space<vmem>>, vector<1x1x1x256xf32>
    %907 = vector.shape_cast %906 : vector<1x1x1x256xf32> to vector<1x256xf32>
    %908 = vector.broadcast %907 : vector<1x256xf32> to vector<16x256xf32>
    %909 = arith.addf %905, %908 : vector<16x256xf32>
    %cst_305 = arith.constant 5.000000e-01 : f32
    %910 = vector.broadcast %cst_305 : f32 to vector<16x256xf32>
    %911 = arith.mulf %910, %909 : vector<16x256xf32>
    %cst_306 = arith.constant 0.707106769 : f32
    %912 = vector.broadcast %cst_306 : f32 to vector<16x256xf32>
    %913 = arith.mulf %909, %912 : vector<16x256xf32>
    %914 = math.erf %913 : vector<16x256xf32>
    %cst_307 = arith.constant 1.000000e+00 : f32
    %915 = vector.broadcast %cst_307 : f32 to vector<16x256xf32>
    %916 = arith.addf %915, %914 : vector<16x256xf32>
    %917 = arith.mulf %911, %916 : vector<16x256xf32>
    %c0_308 = arith.constant 0 : index
    %c1_309 = arith.constant 1 : index
    %c0_310 = arith.constant 0 : index
    %c0_311 = arith.constant 0 : index
    %918 = vector.load %arg21[%c0_308, %c1_309, %c0_310, %c0_311] : memref<1x2x256x128xf32, #tpu.memory_space<vmem>>, vector<1x1x256x128xf32>
    %919 = vector.shape_cast %918 : vector<1x1x256x128xf32> to vector<256x128xf32>
    %cst_312 = arith.constant dense<0.000000e+00> : vector<16x128xf32>
    %920 = tpu.matmul %917, %919, %cst_312 {dimension_numbers = #tpu.dot_dimension_numbers<[1], [0], [0], [1], [0, 0, 1, 1], [], []>} : vector<16x256xf32>, vector<256x128xf32>, vector<16x128xf32> -> vector<16x128xf32>
    %921 = arith.addf %902, %920 : vector<16x128xf32>
    %c0_313 = arith.constant 0 : index
    %c1_314 = arith.constant 1 : index
    %c0_315 = arith.constant 0 : index
    %c0_316 = arith.constant 0 : index
    %922 = vector.load %arg22[%c0_313, %c1_314, %c0_315, %c0_316] : memref<1x2x1x128xf32, #tpu.memory_space<vmem>>, vector<1x1x1x128xf32>
    %923 = vector.shape_cast %922 : vector<1x1x1x128xf32> to vector<1x128xf32>
    %924 = vector.broadcast %923 : vector<1x128xf32> to vector<16x128xf32>
    %925 = arith.addf %921, %924 : vector<16x128xf32>
    %c0_317 = arith.constant 0 : index
    %c1_318 = arith.constant 1 : index
    %c0_319 = arith.constant 0 : index
    %c0_320 = arith.constant 0 : index
    %926 = vector.load %arg23[%c0_317, %c1_318, %c0_319, %c0_320] : memref<1x2x1x128xf32, #tpu.memory_space<vmem>>, vector<1x1x1x128xf32>
    %927 = vector.shape_cast %926 : vector<1x1x1x128xf32> to vector<1x128xf32>
    %c0_321 = arith.constant 0 : index
    %c1_322 = arith.constant 1 : index
    %c0_323 = arith.constant 0 : index
    %c0_324 = arith.constant 0 : index
    %928 = vector.load %arg24[%c0_321, %c1_322, %c0_323, %c0_324] : memref<1x2x1x128xf32, #tpu.memory_space<vmem>>, vector<1x1x1x128xf32>
    %929 = vector.shape_cast %928 : vector<1x1x1x128xf32> to vector<1x128xf32>
    %cst_325 = arith.constant dense<0.000000e+00> : vector<16xf32>
    %930 = vector.multi_reduction <add>, %925, %cst_325 [1] : vector<16x128xf32> to vector<16xf32>
    %931 = vector.shape_cast %930 : vector<16xf32> to vector<16x1xf32>
    %cst_326 = arith.constant 1.280000e+02 : f32
    %932 = vector.broadcast %cst_326 : f32 to vector<16x1xf32>
    %933 = arith.divf %931, %932 : vector<16x1xf32>
    %934 = vector.broadcast %933 : vector<16x1xf32> to vector<16x128xf32>
    %935 = arith.subf %925, %934 : vector<16x128xf32>
    %936 = arith.mulf %935, %935 : vector<16x128xf32>
    %cst_327 = arith.constant dense<0.000000e+00> : vector<16xf32>
    %937 = vector.multi_reduction <add>, %936, %cst_327 [1] : vector<16x128xf32> to vector<16xf32>
    %938 = vector.shape_cast %937 : vector<16xf32> to vector<16x1xf32>
    %cst_328 = arith.constant 1.280000e+02 : f32
    %939 = vector.broadcast %cst_328 : f32 to vector<16x1xf32>
    %940 = arith.divf %938, %939 : vector<16x1xf32>
    %cst_329 = arith.constant 9.99999974E-6 : f32
    %941 = vector.broadcast %cst_329 : f32 to vector<16x1xf32>
    %942 = arith.addf %940, %941 : vector<16x1xf32>
    %943 = math.rsqrt %942 : vector<16x1xf32>
    %944 = vector.broadcast %943 : vector<16x1xf32> to vector<16x128xf32>
    %945 = arith.mulf %935, %944 : vector<16x128xf32>
    %946 = vector.broadcast %927 : vector<1x128xf32> to vector<16x128xf32>
    %947 = arith.mulf %945, %946 : vector<16x128xf32>
    %948 = vector.broadcast %929 : vector<1x128xf32> to vector<16x128xf32>
    %949 = arith.addf %947, %948 : vector<16x128xf32>
    %950 = vector.shape_cast %870 : vector<16x128xf32> to vector<2x8x128xf32>
    %c0_330 = arith.constant 0 : index
    %c0_331 = arith.constant 0 : index
    %c0_332 = arith.constant 0 : index
    %951 = vector.load %arg27[%c0_330, %c0_331, %c0_332] : memref<2x8x128xf32, #tpu.memory_space<vmem>>, vector<2x8x128xf32>
    tpu.vector_store %arg27[%c0_330, %c0_331, %c0_332], %950 {strides = array<i32>} : memref<2x8x128xf32, #tpu.memory_space<vmem>>, vector<2x8x128xf32>,
    %952 = vector.shape_cast %949 : vector<16x128xf32> to vector<2x8x128xf32>
    %c0_333 = arith.constant 0 : index
    %c0_334 = arith.constant 0 : index
    %c0_335 = arith.constant 0 : index
    %953 = vector.load %arg28[%c0_333, %c0_334, %c0_335] : memref<2x8x128xf32, #tpu.memory_space<vmem>>, vector<2x8x128xf32>
    tpu.vector_store %arg28[%c0_333, %c0_334, %c0_335], %952 {strides = array<i32>} : memref<2x8x128xf32, #tpu.memory_space<vmem>>, vector<2x8x128xf32>,
    %c1_i32 = arith.constant 1 : i32
    %954 = arith.cmpi eq, %arg0, %c1_i32 : i32
    %955 = arith.extui %954 : i1 to i32
    %c0_i32_336 = arith.constant 0 : i32
    %956 = arith.cmpi ne, %955, %c0_i32_336 : i32
    scf.if %956 {
      %957 = vector.shape_cast %870 : vector<16x128xf32> to vector<2x8x128xf32>
      %c0_337 = arith.constant 0 : index
      %c0_338 = arith.constant 0 : index
      %c0_339 = arith.constant 0 : index
      %958 = vector.load %arg25[%c0_337, %c0_338, %c0_339] : memref<2x8x128xf32, #tpu.memory_space<vmem>>, vector<2x8x128xf32>
      tpu.vector_store %arg25[%c0_337, %c0_338, %c0_339], %957 {strides = array<i32>} : memref<2x8x128xf32, #tpu.memory_space<vmem>>, vector<2x8x128xf32>,
      %959 = vector.shape_cast %949 : vector<16x128xf32> to vector<2x8x128xf32>
      %c0_340 = arith.constant 0 : index
      %c0_341 = arith.constant 0 : index
      %c0_342 = arith.constant 0 : index
      %960 = vector.load %arg26[%c0_340, %c0_341, %c0_342] : memref<2x8x128xf32, #tpu.memory_space<vmem>>, vector<2x8x128xf32>
      tpu.vector_store %arg26[%c0_340, %c0_341, %c0_342], %959 {strides = array<i32>} : memref<2x8x128xf32, #tpu.memory_space<vmem>>, vector<2x8x128xf32>,
    } else {
    }
    return
  }
  func.func @transform_0(%arg0: i32) -> (i32, i32, i32) {
    %c0_i32 = arith.constant 0 : i32
    %c0_i32_0 = arith.constant 0 : i32
    %c0_i32_1 = arith.constant 0 : i32
    %c0_i32_2 = arith.constant 0 : i32
    return %c0_i32, %c0_i32_0, %c0_i32_1 : i32, i32, i32
  }
  func.func @transform_1(%arg0: i32) -> (i32, i32, i32) {
    %c0_i32 = arith.constant 0 : i32
    %c0_i32_0 = arith.constant 0 : i32
    %c0_i32_1 = arith.constant 0 : i32
    %c0_i32_2 = arith.constant 0 : i32
    return %c0_i32, %c0_i32_0, %c0_i32_1 : i32, i32, i32
  }
  func.func @transform_2(%arg0: i32) -> (i32, i32, i32) {
    %c0_i32 = arith.constant 0 : i32
    %c0_i32_0 = arith.constant 0 : i32
    %c0_i32_1 = arith.constant 0 : i32
    %c0_i32_2 = arith.constant 0 : i32
    return %c0_i32, %c0_i32_0, %c0_i32_1 : i32, i32, i32
  }
  func.func @transform_3(%arg0: i32) -> (i32, i32, i32) {
    %c0_i32 = arith.constant 0 : i32
    %c0_i32_0 = arith.constant 0 : i32
    %c0_i32_1 = arith.constant 0 : i32
    %c0_i32_2 = arith.constant 0 : i32
    return %c0_i32, %c0_i32_0, %c0_i32_1 : i32, i32, i32
  }
  func.func @transform_4(%arg0: i32) -> (i32, i32) {
    %c0_i32 = arith.constant 0 : i32
    %c0_i32_0 = arith.constant 0 : i32
    %c0_i32_1 = arith.constant 0 : i32
    return %c0_i32, %c0_i32_0 : i32, i32
  }
  func.func @transform_5(%arg0: i32) -> (i32, i32) {
    %c0_i32 = arith.constant 0 : i32
    %c0_i32_0 = arith.constant 0 : i32
    %c0_i32_1 = arith.constant 0 : i32
    return %c0_i32, %c0_i32_0 : i32, i32
  }
  func.func @transform_6(%arg0: i32) -> (i32, i32) {
    %c0_i32 = arith.constant 0 : i32
    %c0_i32_0 = arith.constant 0 : i32
    %c0_i32_1 = arith.constant 0 : i32
    return %c0_i32, %c0_i32_0 : i32, i32
  }
  func.func @transform_7(%arg0: i32) -> (i32, i32) {
    %c0_i32 = arith.constant 0 : i32
    %c0_i32_0 = arith.constant 0 : i32
    %c0_i32_1 = arith.constant 0 : i32
    return %c0_i32, %c0_i32_0 : i32, i32
  }
  func.func @transform_8(%arg0: i32) -> (i32, i32) {
    %c0_i32 = arith.constant 0 : i32
    %c0_i32_0 = arith.constant 0 : i32
    %c0_i32_1 = arith.constant 0 : i32
    return %c0_i32, %c0_i32_0 : i32, i32
  }
  func.func @transform_9(%arg0: i32) -> (i32, i32) {
    %c0_i32 = arith.constant 0 : i32
    %c0_i32_0 = arith.constant 0 : i32
    %c0_i32_1 = arith.constant 0 : i32
    return %c0_i32, %c0_i32_0 : i32, i32
  }
  func.func @transform_10(%arg0: i32) -> (i32, i32, i32, i32) {
    %c0_i32 = arith.constant 0 : i32
    %c0_i32_0 = arith.constant 0 : i32
    %c0_i32_1 = arith.constant 0 : i32
    %c0_i32_2 = arith.constant 0 : i32
    return %arg0, %c0_i32, %c0_i32_0, %c0_i32_1 : i32, i32, i32, i32
  }
  func.func @transform_11(%arg0: i32) -> (i32, i32, i32, i32) {
    %c0_i32 = arith.constant 0 : i32
    %c0_i32_0 = arith.constant 0 : i32
    %c0_i32_1 = arith.constant 0 : i32
    %c0_i32_2 = arith.constant 0 : i32
    return %arg0, %c0_i32, %c0_i32_0, %c0_i32_1 : i32, i32, i32, i32
  }
  func.func @transform_12(%arg0: i32) -> (i32, i32, i32, i32) {
    %c0_i32 = arith.constant 0 : i32
    %c0_i32_0 = arith.constant 0 : i32
    %c0_i32_1 = arith.constant 0 : i32
    %c0_i32_2 = arith.constant 0 : i32
    return %arg0, %c0_i32, %c0_i32_0, %c0_i32_1 : i32, i32, i32, i32
  }
  func.func @transform_13(%arg0: i32) -> (i32, i32, i32, i32) {
    %c0_i32 = arith.constant 0 : i32
    %c0_i32_0 = arith.constant 0 : i32
    %c0_i32_1 = arith.constant 0 : i32
    %c0_i32_2 = arith.constant 0 : i32
    return %arg0, %c0_i32, %c0_i32_0, %c0_i32_1 : i32, i32, i32, i32
  }
  func.func @transform_14(%arg0: i32) -> (i32, i32, i32, i32) {
    %c0_i32 = arith.constant 0 : i32
    %c0_i32_0 = arith.constant 0 : i32
    %c0_i32_1 = arith.constant 0 : i32
    %c0_i32_2 = arith.constant 0 : i32
    return %arg0, %c0_i32, %c0_i32_0, %c0_i32_1 : i32, i32, i32, i32
  }
  func.func @transform_15(%arg0: i32) -> (i32, i32, i32, i32) {
    %c0_i32 = arith.constant 0 : i32
    %c0_i32_0 = arith.constant 0 : i32
    %c0_i32_1 = arith.constant 0 : i32
    %c0_i32_2 = arith.constant 0 : i32
    return %arg0, %c0_i32, %c0_i32_0, %c0_i32_1 : i32, i32, i32, i32
  }
  func.func @transform_16(%arg0: i32) -> (i32, i32, i32, i32) {
    %c0_i32 = arith.constant 0 : i32
    %c0_i32_0 = arith.constant 0 : i32
    %c0_i32_1 = arith.constant 0 : i32
    %c0_i32_2 = arith.constant 0 : i32
    return %arg0, %c0_i32, %c0_i32_0, %c0_i32_1 : i32, i32, i32, i32
  }
  func.func @transform_17(%arg0: i32) -> (i32, i32, i32, i32) {
    %c0_i32 = arith.constant 0 : i32
    %c0_i32_0 = arith.constant 0 : i32
    %c0_i32_1 = arith.constant 0 : i32
    %c0_i32_2 = arith.constant 0 : i32
    return %arg0, %c0_i32, %c0_i32_0, %c0_i32_1 : i32, i32, i32, i32
  }
  func.func @transform_18(%arg0: i32) -> (i32, i32, i32, i32) {
    %c0_i32 = arith.constant 0 : i32
    %c0_i32_0 = arith.constant 0 : i32
    %c0_i32_1 = arith.constant 0 : i32
    %c0_i32_2 = arith.constant 0 : i32
    return %arg0, %c0_i32, %c0_i32_0, %c0_i32_1 : i32, i32, i32, i32
  }
  func.func @transform_19(%arg0: i32) -> (i32, i32, i32, i32) {
    %c0_i32 = arith.constant 0 : i32
    %c0_i32_0 = arith.constant 0 : i32
    %c0_i32_1 = arith.constant 0 : i32
    %c0_i32_2 = arith.constant 0 : i32
    return %arg0, %c0_i32, %c0_i32_0, %c0_i32_1 : i32, i32, i32, i32
  }
  func.func @transform_20(%arg0: i32) -> (i32, i32, i32, i32) {
    %c0_i32 = arith.constant 0 : i32
    %c0_i32_0 = arith.constant 0 : i32
    %c0_i32_1 = arith.constant 0 : i32
    %c0_i32_2 = arith.constant 0 : i32
    return %arg0, %c0_i32, %c0_i32_0, %c0_i32_1 : i32, i32, i32, i32
  }
  func.func @transform_21(%arg0: i32) -> (i32, i32, i32, i32) {
    %c0_i32 = arith.constant 0 : i32
    %c0_i32_0 = arith.constant 0 : i32
    %c0_i32_1 = arith.constant 0 : i32
    %c0_i32_2 = arith.constant 0 : i32
    return %arg0, %c0_i32, %c0_i32_0, %c0_i32_1 : i32, i32, i32, i32
  }
  func.func @transform_22(%arg0: i32) -> (i32, i32, i32, i32) {
    %c0_i32 = arith.constant 0 : i32
    %c0_i32_0 = arith.constant 0 : i32
    %c0_i32_1 = arith.constant 0 : i32
    %c0_i32_2 = arith.constant 0 : i32
    return %arg0, %c0_i32, %c0_i32_0, %c0_i32_1 : i32, i32, i32, i32
  }
  func.func @transform_23(%arg0: i32) -> (i32, i32, i32, i32) {
    %c0_i32 = arith.constant 0 : i32
    %c0_i32_0 = arith.constant 0 : i32
    %c0_i32_1 = arith.constant 0 : i32
    %c0_i32_2 = arith.constant 0 : i32
    return %arg0, %c0_i32, %c0_i32_0, %c0_i32_1 : i32, i32, i32, i32
  }
  func.func @transform_24(%arg0: i32) -> (i32, i32, i32) {
    %c0_i32 = arith.constant 0 : i32
    %c0_i32_0 = arith.constant 0 : i32
    %c0_i32_1 = arith.constant 0 : i32
    %c0_i32_2 = arith.constant 0 : i32
    return %c0_i32, %c0_i32_0, %c0_i32_1 : i32, i32, i32
  }
  func.func @transform_25(%arg0: i32) -> (i32, i32, i32) {
    %c0_i32 = arith.constant 0 : i32
    %c0_i32_0 = arith.constant 0 : i32
    %c0_i32_1 = arith.constant 0 : i32
    %c0_i32_2 = arith.constant 0 : i32
    return %c0_i32, %c0_i32_0, %c0_i32_1 : i32, i32, i32
  }
}

</mosaic_0001>

<llo_original>
// kernel: vilbert_forward.1
$region0: #{vilbert_forward.1}
  #allocation0 [shape = 'u32[]', space=smem, size = 0x4, offset = 0x4, fixed_abs, tag = 'smem constant byte address 0x4 - core index']
  #allocation1 [shape = 'u32[144,128]{1,0:T(1,128)}', space=vmem, size = 0x12000, scoped, tag = 'internal scratch']
  #allocation2 [shape = 'f32[2,8,128]{2,1,0:T(8,128)}', space=vmem, size = 0x2000, scoped, tag = 'scratch operand']
  #allocation3 [shape = 'f32[2,8,128]{2,1,0:T(8,128)}', space=vmem, size = 0x2000, scoped, tag = 'scratch operand']
  %s0 = inlined_call_operand.vmem [shape: f32[2,8,384], index: 0, kind: input, shape index: {}]
  %s1 = inlined_call_operand.vmem [shape: f32[2,8,128], index: 1, kind: input, shape index: {}]
  %s2 = inlined_call_operand.vmem [shape: f32[2,1,8], index: 2, kind: input, shape index: {}]
  %s3 = inlined_call_operand.vmem [shape: f32[2,1,8], index: 3, kind: input, shape index: {}]
  %s4 = inlined_call_operand.hbm [shape: f32[384,128], index: 4, kind: input, shape index: {}]
  %s5 = inlined_call_operand.vmem [shape: f32[1,128], index: 5, kind: input, shape index: {}]
  %s6 = inlined_call_operand.vmem [shape: f32[1,128], index: 6, kind: input, shape index: {}]
  %s7 = inlined_call_operand.vmem [shape: f32[1,128], index: 7, kind: input, shape index: {}]
  %s8 = inlined_call_operand.vmem [shape: f32[1,128], index: 8, kind: input, shape index: {}]
  %s9 = inlined_call_operand.vmem [shape: f32[1,128], index: 9, kind: input, shape index: {}]
  %s10 = inlined_call_operand.hbm [shape: f32[2,2,128,384], index: 10, kind: input, shape index: {}]
  %s11 = inlined_call_operand.vmem [shape: f32[2,2,1,384], index: 11, kind: input, shape index: {}]
  %s12 = inlined_call_operand.hbm [shape: f32[2,2,128,128], index: 12, kind: input, shape index: {}]
  %s13 = inlined_call_operand.vmem [shape: f32[2,2,1,128], index: 13, kind: input, shape index: {}]
  %s14 = inlined_call_operand.hbm [shape: f32[2,2,128,128], index: 14, kind: input, shape index: {}]
  %s15 = inlined_call_operand.vmem [shape: f32[2,2,1,128], index: 15, kind: input, shape index: {}]
  %s16 = inlined_call_operand.vmem [shape: f32[2,2,1,128], index: 16, kind: input, shape index: {}]
  %s17 = inlined_call_operand.vmem [shape: f32[2,2,1,128], index: 17, kind: input, shape index: {}]
  %s18 = inlined_call_operand.vmem [shape: f32[2,2,128,256], index: 18, kind: input, shape index: {}]
  %s19 = inlined_call_operand.vmem [shape: f32[2,2,1,256], index: 19, kind: input, shape index: {}]
  %s20 = inlined_call_operand.hbm [shape: f32[2,2,256,128], index: 20, kind: input, shape index: {}]
  %s21 = inlined_call_operand.vmem [shape: f32[2,2,1,128], index: 21, kind: input, shape index: {}]
  %s22 = inlined_call_operand.vmem [shape: f32[2,2,1,128], index: 22, kind: input, shape index: {}]
  %s23 = inlined_call_operand.vmem [shape: f32[2,2,1,128], index: 23, kind: input, shape index: {}]
  %s24 = inlined_call_operand.vmem [shape: f32[2,8,128], index: 24, kind: output, shape index: {0}]
  %s25 = inlined_call_operand.vmem [shape: f32[2,8,128], index: 25, kind: output, shape index: {1}]
  %26 = xla_tuple %s24, %s25
  %s27 = sld [smem:[#allocation0]]
  $region165: #{vilbert_forward.1} parent=0
    _
  %s29 = ssub.s32 1, %s27
  %s30 = scalar_select 0, %s29, %s27
  $region1: #{vilbert_forward.1} parent=0
    #allocation4 [shape = 'u8[196608]{0}', space=vmem, size = 0x30000, scoped, tag = 'input window, operand 4, single buffered']
    #allocation5 [shape = 's32[2]{0}', space=sflag, size = 0x8, scoped, tag = 'scoped memory for vilbert_forward.1']
    #allocation6 [shape = 'u8[786432]{0}', space=vmem, size = 0xc0000, scoped, tag = 'input window, operand 10']
    #allocation7 [shape = 's32[2]{0}', space=sflag, size = 0x8, scoped, tag = 'scoped memory for vilbert_forward.1']
    #allocation8 [shape = 'u8[262144]{0}', space=vmem, size = 0x40000, scoped, tag = 'input window, operand 12']
    #allocation9 [shape = 'u8[262144]{0}', space=vmem, size = 0x40000, scoped, tag = 'input window, operand 14']
    #allocation10 [shape = 's32[2]{0}', space=sflag, size = 0x8, scoped, tag = 'scoped memory for vilbert_forward.1']
    #allocation11 [shape = 'u8[524288]{0}', space=vmem, size = 0x80000, scoped, tag = 'input window, operand 20']
    %31 = vsyncpa [#allocation5], 0
    %32 = vsyncpa [#allocation7], 0
    %s33 = scalar_lea.sflag [#allocation7], 1
    %34 = vsyncpa %s33, 0
    %35 = vsyncpa [#allocation10], 0
    %s36 = scalar_lea.sflag [#allocation10], 1
    %37 = vsyncpa %s36, 0
    loop: start=0, step=1, limit=4
    $region2: #{vilbert_forward.1} parent=1 // loop_pre_header
      _
    $region3: #{vilbert_forward.1} parent=1 // loop_header
      %s39 = sphi 0, %s43
      %p40 = scmp.ge.s32.totalorder %s39, 4
      %s47 = sphi 0, %s47
      %s49 = sphi 0, %s47
      %s50 = sphi 0, %s49
      %s64 = sphi 0, %s50
      %s68 = sphi 0, %s68
      %s70 = sphi 0, %s68
      %s71 = sphi 0, %s70
      %s85 = sphi 0, %s71
      %s89 = sphi 0, %s89
      %s91 = sphi 0, %s89
      %s92 = sphi 0, %s91
      %s106 = sphi 0, %s92
      %s110 = sphi 0, %s110
      %s112 = sphi 0, %s110
      %s113 = sphi 0, %s112
      %s127 = sphi 0, %s113
      %s131 = sphi 0, %s131
      %s133 = sphi 0, %s131
      %s134 = sphi 0, %s133
      %s148 = sphi 0, %s134
      %s152 = sphi 0, %s152
      %s154 = sphi 0, %s152
      %s155 = sphi 0, %s154
      %s169 = sphi 0, %s155
      %s173 = sphi 0, %s173
      %s175 = sphi 0, %s173
      %s176 = sphi 0, %s175
      %s190 = sphi 0, %s176
      %s194 = sphi 0, %s194
      %s196 = sphi 0, %s194
      %s197 = sphi 0, %s196
      %s211 = sphi 0, %s197
      %s215 = sphi 0, %s215
      %s217 = sphi 0, %s215
      %s218 = sphi 0, %s217
      %s232 = sphi 0, %s218
      %s236 = sphi 0, %s236
      %s238 = sphi 0, %s236
      %s239 = sphi 0, %s238
      %s253 = sphi 0, %s239
      %s259 = sphi 0, %s261
      %s262 = sphi 0, %s259
      %s263 = sphi 0, %s262
      %s279 = sphi 0, %s263
      %s285 = sphi 0, %s287
      %s288 = sphi 0, %s285
      %s289 = sphi 0, %s288
      %s305 = sphi 0, %s289
      %s311 = sphi 0, %s313
      %s314 = sphi 0, %s311
      %s315 = sphi 0, %s314
      %s331 = sphi 0, %s315
      %s337 = sphi 0, %s339
      %s340 = sphi 0, %s337
      %s341 = sphi 0, %s340
      %s357 = sphi 0, %s341
      %s363 = sphi 0, %s365
      %s366 = sphi 0, %s363
      %s367 = sphi 0, %s366
      %s383 = sphi 0, %s367
      %s389 = sphi 0, %s391
      %s392 = sphi 0, %s389
      %s393 = sphi 0, %s392
      %s409 = sphi 0, %s393
      %s415 = sphi 0, %s417
      %s418 = sphi 0, %s415
      %s419 = sphi 0, %s418
      %s435 = sphi 0, %s419
      %s441 = sphi 0, %s443
      %s444 = sphi 0, %s441
      %s445 = sphi 0, %s444
      %s461 = sphi 0, %s445
      %s467 = sphi 0, %s469
      %s470 = sphi 0, %s467
      %s471 = sphi 0, %s470
      %s487 = sphi 0, %s471
      %s493 = sphi 0, %s495
      %s496 = sphi 0, %s493
      %s497 = sphi 0, %s496
      %s513 = sphi 0, %s497
      %s519 = sphi 0, %s521
      %s522 = sphi 0, %s519
      %s523 = sphi 0, %s522
      %s539 = sphi 0, %s523
      %s545 = sphi 0, %s547
      %s548 = sphi 0, %s545
      %s549 = sphi 0, %s548
      %s565 = sphi 0, %s549
      %s571 = sphi 0, %s573
      %s574 = sphi 0, %s571
      %s575 = sphi 0, %s574
      %s591 = sphi 0, %s575
      %s597 = sphi 0, %s599
      %s600 = sphi 0, %s597
      %s601 = sphi 0, %s600
      %s617 = sphi 0, %s601
      %s621 = sphi 0, %s621
      %s623 = sphi 0, %s621
      %s624 = sphi 0, %s623
      %s638 = sphi 0, %s624
      %s642 = sphi 0, %s642
      %s644 = sphi 0, %s642
      %s645 = sphi 0, %s644
      %s659 = sphi 0, %s645
    $region4: #{vilbert_forward.1} parent=1 // loop_header_branch
      %42 = sbr.rel (%p40) target = $region8
    $region5: #{vilbert_forward.1} parent=1 // loop_body
      %s44 = ssub.s32 %s39, 1
      %s45 = ssub.s32 %s39, 2
      %s46 = sadd.s32 %s39, 1
      %s48 = sadd.s32 %s47, 1
      %p51 = scmp.eq.s32.totalorder %s39, 1
      %p52 = scmp.ne.s32.totalorder %s47, %s49
      %p53 = scmp.eq.s32.totalorder %s39, 0
      %p54 = por %p52, %p53
      %p55 = scmp.ne.s32.totalorder %s47, %s49
      %p56 = scmp.eq.s32.totalorder %s44, 1
      %p57 = por %p55, %p56
      %p58 = scmp.ne.s32.totalorder %s49, %s50
      %p59 = scmp.eq.s32.totalorder %s44, 0
      %p60 = por %p58, %p59
      %p61 = scmp.ne.s32.totalorder %s49, %s50
      %p62 = scmp.eq.s32.totalorder %s45, 1
      %p63 = por %p61, %p62
      %p65 = scmp.ne.s32.totalorder %s50, %s64
      %p66 = scmp.eq.s32.totalorder %s45, 0
      %p67 = por %p65, %p66
      %s69 = sadd.s32 %s68, 1
      %p72 = scmp.eq.s32.totalorder %s39, 1
      %p73 = scmp.ne.s32.totalorder %s68, %s70
      %p74 = scmp.eq.s32.totalorder %s39, 0
      %p75 = por %p73, %p74
      %p76 = scmp.ne.s32.totalorder %s68, %s70
      %p77 = scmp.eq.s32.totalorder %s44, 1
      %p78 = por %p76, %p77
      %p79 = scmp.ne.s32.totalorder %s70, %s71
      %p80 = scmp.eq.s32.totalorder %s44, 0
      %p81 = por %p79, %p80
      %p82 = scmp.ne.s32.totalorder %s70, %s71
      %p83 = scmp.eq.s32.totalorder %s45, 1
      %p84 = por %p82, %p83
      %p86 = scmp.ne.s32.totalorder %s71, %s85
      %p87 = scmp.eq.s32.totalorder %s45, 0
      %p88 = por %p86, %p87
      %s90 = sadd.s32 %s89, 1
      %p93 = scmp.eq.s32.totalorder %s39, 1
      %p94 = scmp.ne.s32.totalorder %s89, %s91
      %p95 = scmp.eq.s32.totalorder %s39, 0
      %p96 = por %p94, %p95
      %p97 = scmp.ne.s32.totalorder %s89, %s91
      %p98 = scmp.eq.s32.totalorder %s44, 1
      %p99 = por %p97, %p98
      %p100 = scmp.ne.s32.totalorder %s91, %s92
      %p101 = scmp.eq.s32.totalorder %s44, 0
      %p102 = por %p100, %p101
      %p103 = scmp.ne.s32.totalorder %s91, %s92
      %p104 = scmp.eq.s32.totalorder %s45, 1
      %p105 = por %p103, %p104
      %p107 = scmp.ne.s32.totalorder %s92, %s106
      %p108 = scmp.eq.s32.totalorder %s45, 0
      %p109 = por %p107, %p108
      %s111 = sadd.s32 %s110, 1
      %p114 = scmp.eq.s32.totalorder %s39, 1
      %p115 = scmp.ne.s32.totalorder %s110, %s112
      %p116 = scmp.eq.s32.totalorder %s39, 0
      %p117 = por %p115, %p116
      %p118 = scmp.ne.s32.totalorder %s110, %s112
      %p119 = scmp.eq.s32.totalorder %s44, 1
      %p120 = por %p118, %p119
      %p121 = scmp.ne.s32.totalorder %s112, %s113
      %p122 = scmp.eq.s32.totalorder %s44, 0
      %p123 = por %p121, %p122
      %p124 = scmp.ne.s32.totalorder %s112, %s113
      %p125 = scmp.eq.s32.totalorder %s45, 1
      %p126 = por %p124, %p125
      %p128 = scmp.ne.s32.totalorder %s113, %s127
      %p129 = scmp.eq.s32.totalorder %s45, 0
      %p130 = por %p128, %p129
      %s132 = sadd.s32 %s131, 1
      %p135 = scmp.eq.s32.totalorder %s39, 1
      %p136 = scmp.ne.s32.totalorder %s131, %s133
      %p137 = scmp.eq.s32.totalorder %s39, 0
      %p138 = por %p136, %p137
      %p139 = scmp.ne.s32.totalorder %s131, %s133
      %p140 = scmp.eq.s32.totalorder %s44, 1
      %p141 = por %p139, %p140
      %p142 = scmp.ne.s32.totalorder %s133, %s134
      %p143 = scmp.eq.s32.totalorder %s44, 0
      %p144 = por %p142, %p143
      %p145 = scmp.ne.s32.totalorder %s133, %s134
      %p146 = scmp.eq.s32.totalorder %s45, 1
      %p147 = por %p145, %p146
      %p149 = scmp.ne.s32.totalorder %s134, %s148
      %p150 = scmp.eq.s32.totalorder %s45, 0
      %p151 = por %p149, %p150
      %s153 = sadd.s32 %s152, 1
      %p156 = scmp.eq.s32.totalorder %s39, 1
      %p157 = scmp.ne.s32.totalorder %s152, %s154
      %p158 = scmp.eq.s32.totalorder %s39, 0
      %p159 = por %p157, %p158
      %p160 = scmp.ne.s32.totalorder %s152, %s154
      %p161 = scmp.eq.s32.totalorder %s44, 1
      %p162 = por %p160, %p161
      %p163 = scmp.ne.s32.totalorder %s154, %s155
      %p164 = scmp.eq.s32.totalorder %s44, 0
      %p165 = por %p163, %p164
      %p166 = scmp.ne.s32.totalorder %s154, %s155
      %p167 = scmp.eq.s32.totalorder %s45, 1
      %p168 = por %p166, %p167
      %p170 = scmp.ne.s32.totalorder %s155, %s169
      %p171 = scmp.eq.s32.totalorder %s45, 0
      %p172 = por %p170, %p171
      %s174 = sadd.s32 %s173, 1
      %p177 = scmp.eq.s32.totalorder %s39, 1
      %p178 = scmp.ne.s32.totalorder %s173, %s175
      %p179 = scmp.eq.s32.totalorder %s39, 0
      %p180 = por %p178, %p179
      %p181 = scmp.ne.s32.totalorder %s173, %s175
      %p182 = scmp.eq.s32.totalorder %s44, 1
      %p183 = por %p181, %p182
      %p184 = scmp.ne.s32.totalorder %s175, %s176
      %p185 = scmp.eq.s32.totalorder %s44, 0
      %p186 = por %p184, %p185
      %p187 = scmp.ne.s32.totalorder %s175, %s176
      %p188 = scmp.eq.s32.totalorder %s45, 1
      %p189 = por %p187, %p188
      %p191 = scmp.ne.s32.totalorder %s176, %s190
      %p192 = scmp.eq.s32.totalorder %s45, 0
      %p193 = por %p191, %p192
      %s195 = sadd.s32 %s194, 1
      %p198 = scmp.eq.s32.totalorder %s39, 1
      %p199 = scmp.ne.s32.totalorder %s194, %s196
      %p200 = scmp.eq.s32.totalorder %s39, 0
      %p201 = por %p199, %p200
      %p202 = scmp.ne.s32.totalorder %s194, %s196
      %p203 = scmp.eq.s32.totalorder %s44, 1
      %p204 = por %p202, %p203
      %p205 = scmp.ne.s32.totalorder %s196, %s197
      %p206 = scmp.eq.s32.totalorder %s44, 0
      %p207 = por %p205, %p206
      %p208 = scmp.ne.s32.totalorder %s196, %s197
      %p209 = scmp.eq.s32.totalorder %s45, 1
      %p210 = por %p208, %p209
      %p212 = scmp.ne.s32.totalorder %s197, %s211
      %p213 = scmp.eq.s32.totalorder %s45, 0
      %p214 = por %p212, %p213
      %s216 = sadd.s32 %s215, 1
      %p219 = scmp.eq.s32.totalorder %s39, 1
      %p220 = scmp.ne.s32.totalorder %s215, %s217
      %p221 = scmp.eq.s32.totalorder %s39, 0
      %p222 = por %p220, %p221
      %p223 = scmp.ne.s32.totalorder %s215, %s217
      %p224 = scmp.eq.s32.totalorder %s44, 1
      %p225 = por %p223, %p224
      %p226 = scmp.ne.s32.totalorder %s217, %s218
      %p227 = scmp.eq.s32.totalorder %s44, 0
      %p228 = por %p226, %p227
      %p229 = scmp.ne.s32.totalorder %s217, %s218
      %p230 = scmp.eq.s32.totalorder %s45, 1
      %p231 = por %p229, %p230
      %p233 = scmp.ne.s32.totalorder %s218, %s232
      %p234 = scmp.eq.s32.totalorder %s45, 0
      %p235 = por %p233, %p234
      %s237 = sadd.s32 %s236, 1
      %p240 = scmp.eq.s32.totalorder %s39, 1
      %p241 = scmp.ne.s32.totalorder %s236, %s238
      %p242 = scmp.eq.s32.totalorder %s39, 0
      %p243 = por %p241, %p242
      %p244 = scmp.ne.s32.totalorder %s236, %s238
      %p245 = scmp.eq.s32.totalorder %s44, 1
      %p246 = por %p244, %p245
      %p247 = scmp.ne.s32.totalorder %s238, %s239
      %p248 = scmp.eq.s32.totalorder %s44, 0
      %p249 = por %p247, %p248
      %p250 = scmp.ne.s32.totalorder %s238, %s239
      %p251 = scmp.eq.s32.totalorder %s45, 1
      %p252 = por %p250, %p251
      %p254 = scmp.ne.s32.totalorder %s239, %s253
      %p255 = scmp.eq.s32.totalorder %s45, 0
      %p256 = por %p254, %p255
      %s257 = ssub.s32 %s39, %s46
      %p258 = scmp.eq.s32.totalorder %s257, 0
      %s260 = sadd.s32 %s259, 1
      %s261 = scalar_select %p258, %s259, %s260
      %p264 = pneg %p258
      %p265 = scmp.eq.s32.totalorder %s39, 1
      %p266 = por %p264, %p265
      %p267 = scmp.ne.s32.totalorder %s259, %s262
      %p268 = scmp.eq.s32.totalorder %s39, 0
      %p269 = por %p267, %p268
      %p270 = scmp.ne.s32.totalorder %s259, %s262
      %p271 = scmp.eq.s32.totalorder %s44, 1
      %p272 = por %p270, %p271
      %p273 = scmp.ne.s32.totalorder %s262, %s263
      %p274 = scmp.eq.s32.totalorder %s44, 0
      %p275 = por %p273, %p274
      %p276 = scmp.ne.s32.totalorder %s262, %s263
      %p277 = scmp.eq.s32.totalorder %s45, 1
      %p278 = por %p276, %p277
      %p280 = scmp.ne.s32.totalorder %s263, %s279
      %p281 = scmp.eq.s32.totalorder %s45, 0
      %p282 = por %p280, %p281
      %s283 = ssub.s32 %s39, %s46
      %p284 = scmp.eq.s32.totalorder %s283, 0
      %s286 = sadd.s32 %s285, 1
      %s287 = scalar_select %p284, %s285, %s286
      %p290 = pneg %p284
      %p291 = scmp.eq.s32.totalorder %s39, 1
      %p292 = por %p290, %p291
      %p293 = scmp.ne.s32.totalorder %s285, %s288
      %p294 = scmp.eq.s32.totalorder %s39, 0
      %p295 = por %p293, %p294
      %p296 = scmp.ne.s32.totalorder %s285, %s288
      %p297 = scmp.eq.s32.totalorder %s44, 1
      %p298 = por %p296, %p297
      %p299 = scmp.ne.s32.totalorder %s288, %s289
      %p300 = scmp.eq.s32.totalorder %s44, 0
      %p301 = por %p299, %p300
      %p302 = scmp.ne.s32.totalorder %s288, %s289
      %p303 = scmp.eq.s32.totalorder %s45, 1
      %p304 = por %p302, %p303
      %p306 = scmp.ne.s32.totalorder %s289, %s305
      %p307 = scmp.eq.s32.totalorder %s45, 0
      %p308 = por %p306, %p307
      %s309 = ssub.s32 %s39, %s46
      %p310 = scmp.eq.s32.totalorder %s309, 0
      %s312 = sadd.s32 %s311, 1
      %s313 = scalar_select %p310, %s311, %s312
      %p316 = pneg %p310
      %p317 = scmp.eq.s32.totalorder %s39, 1
      %p318 = por %p316, %p317
      %p319 = scmp.ne.s32.totalorder %s311, %s314
      %p320 = scmp.eq.s32.totalorder %s39, 0
      %p321 = por %p319, %p320
      %p322 = scmp.ne.s32.totalorder %s311, %s314
      %p323 = scmp.eq.s32.totalorder %s44, 1
      %p324 = por %p322, %p323
      %p325 = scmp.ne.s32.totalorder %s314, %s315
      %p326 = scmp.eq.s32.totalorder %s44, 0
      %p327 = por %p325, %p326
      %p328 = scmp.ne.s32.totalorder %s314, %s315
      %p329 = scmp.eq.s32.totalorder %s45, 1
      %p330 = por %p328, %p329
      %p332 = scmp.ne.s32.totalorder %s315, %s331
      %p333 = scmp.eq.s32.totalorder %s45, 0
      %p334 = por %p332, %p333
      %s335 = ssub.s32 %s39, %s46
      %p336 = scmp.eq.s32.totalorder %s335, 0
      %s338 = sadd.s32 %s337, 1
      %s339 = scalar_select %p336, %s337, %s338
      %p342 = pneg %p336
      %p343 = scmp.eq.s32.totalorder %s39, 1
      %p344 = por %p342, %p343
      %p345 = scmp.ne.s32.totalorder %s337, %s340
      %p346 = scmp.eq.s32.totalorder %s39, 0
      %p347 = por %p345, %p346
      %p348 = scmp.ne.s32.totalorder %s337, %s340
      %p349 = scmp.eq.s32.totalorder %s44, 1
      %p350 = por %p348, %p349
      %p351 = scmp.ne.s32.totalorder %s340, %s341
      %p352 = scmp.eq.s32.totalorder %s44, 0
      %p353 = por %p351, %p352
      %p354 = scmp.ne.s32.totalorder %s340, %s341
      %p355 = scmp.eq.s32.totalorder %s45, 1
      %p356 = por %p354, %p355
      %p358 = scmp.ne.s32.totalorder %s341, %s357
      %p359 = scmp.eq.s32.totalorder %s45, 0
      %p360 = por %p358, %p359
      %s361 = ssub.s32 %s39, %s46
      %p362 = scmp.eq.s32.totalorder %s361, 0
      %s364 = sadd.s32 %s363, 1
      %s365 = scalar_select %p362, %s363, %s364
      %p368 = pneg %p362
      %p369 = scmp.eq.s32.totalorder %s39, 1
      %p370 = por %p368, %p369
      %p371 = scmp.ne.s32.totalorder %s363, %s366
      %p372 = scmp.eq.s32.totalorder %s39, 0
      %p373 = por %p371, %p372
      %p374 = scmp.ne.s32.totalorder %s363, %s366
      %p375 = scmp.eq.s32.totalorder %s44, 1
      %p376 = por %p374, %p375
      %p377 = scmp.ne.s32.totalorder %s366, %s367
      %p378 = scmp.eq.s32.totalorder %s44, 0
      %p379 = por %p377, %p378
      %p380 = scmp.ne.s32.totalorder %s366, %s367
      %p381 = scmp.eq.s32.totalorder %s45, 1
      %p382 = por %p380, %p381
      %p384 = scmp.ne.s32.totalorder %s367, %s383
      %p385 = scmp.eq.s32.totalorder %s45, 0
      %p386 = por %p384, %p385
      %s387 = ssub.s32 %s39, %s46
      %p388 = scmp.eq.s32.totalorder %s387, 0
      %s390 = sadd.s32 %s389, 1
      %s391 = scalar_select %p388, %s389, %s390
      %p394 = pneg %p388
      %p395 = scmp.eq.s32.totalorder %s39, 1
      %p396 = por %p394, %p395
      %p397 = scmp.ne.s32.totalorder %s389, %s392
      %p398 = scmp.eq.s32.totalorder %s39, 0
      %p399 = por %p397, %p398
      %p400 = scmp.ne.s32.totalorder %s389, %s392
      %p401 = scmp.eq.s32.totalorder %s44, 1
      %p402 = por %p400, %p401
      %p403 = scmp.ne.s32.totalorder %s392, %s393
      %p404 = scmp.eq.s32.totalorder %s44, 0
      %p405 = por %p403, %p404
      %p406 = scmp.ne.s32.totalorder %s392, %s393
      %p407 = scmp.eq.s32.totalorder %s45, 1
      %p408 = por %p406, %p407
      %p410 = scmp.ne.s32.totalorder %s393, %s409
      %p411 = scmp.eq.s32.totalorder %s45, 0
      %p412 = por %p410, %p411
      %s413 = ssub.s32 %s39, %s46
      %p414 = scmp.eq.s32.totalorder %s413, 0
      %s416 = sadd.s32 %s415, 1
      %s417 = scalar_select %p414, %s415, %s416
      %p420 = pneg %p414
      %p421 = scmp.eq.s32.totalorder %s39, 1
      %p422 = por %p420, %p421
      %p423 = scmp.ne.s32.totalorder %s415, %s418
      %p424 = scmp.eq.s32.totalorder %s39, 0
      %p425 = por %p423, %p424
      %p426 = scmp.ne.s32.totalorder %s415, %s418
      %p427 = scmp.eq.s32.totalorder %s44, 1
      %p428 = por %p426, %p427
      %p429 = scmp.ne.s32.totalorder %s418, %s419
      %p430 = scmp.eq.s32.totalorder %s44, 0
      %p431 = por %p429, %p430
      %p432 = scmp.ne.s32.totalorder %s418, %s419
      %p433 = scmp.eq.s32.totalorder %s45, 1
      %p434 = por %p432, %p433
      %p436 = scmp.ne.s32.totalorder %s419, %s435
      %p437 = scmp.eq.s32.totalorder %s45, 0
      %p438 = por %p436, %p437
      %s439 = ssub.s32 %s39, %s46
      %p440 = scmp.eq.s32.totalorder %s439, 0
      %s442 = sadd.s32 %s441, 1
      %s443 = scalar_select %p440, %s441, %s442
      %p446 = pneg %p440
      %p447 = scmp.eq.s32.totalorder %s39, 1
      %p448 = por %p446, %p447
      %p449 = scmp.ne.s32.totalorder %s441, %s444
      %p450 = scmp.eq.s32.totalorder %s39, 0
      %p451 = por %p449, %p450
      %p452 = scmp.ne.s32.totalorder %s441, %s444
      %p453 = scmp.eq.s32.totalorder %s44, 1
      %p454 = por %p452, %p453
      %p455 = scmp.ne.s32.totalorder %s444, %s445
      %p456 = scmp.eq.s32.totalorder %s44, 0
      %p457 = por %p455, %p456
      %p458 = scmp.ne.s32.totalorder %s444, %s445
      %p459 = scmp.eq.s32.totalorder %s45, 1
      %p460 = por %p458, %p459
      %p462 = scmp.ne.s32.totalorder %s445, %s461
      %p463 = scmp.eq.s32.totalorder %s45, 0
      %p464 = por %p462, %p463
      %s465 = ssub.s32 %s39, %s46
      %p466 = scmp.eq.s32.totalorder %s465, 0
      %s468 = sadd.s32 %s467, 1
      %s469 = scalar_select %p466, %s467, %s468
      %p472 = pneg %p466
      %p473 = scmp.eq.s32.totalorder %s39, 1
      %p474 = por %p472, %p473
      %p475 = scmp.ne.s32.totalorder %s467, %s470
      %p476 = scmp.eq.s32.totalorder %s39, 0
      %p477 = por %p475, %p476
      %p478 = scmp.ne.s32.totalorder %s467, %s470
      %p479 = scmp.eq.s32.totalorder %s44, 1
      %p480 = por %p478, %p479
      %p481 = scmp.ne.s32.totalorder %s470, %s471
      %p482 = scmp.eq.s32.totalorder %s44, 0
      %p483 = por %p481, %p482
      %p484 = scmp.ne.s32.totalorder %s470, %s471
      %p485 = scmp.eq.s32.totalorder %s45, 1
      %p486 = por %p484, %p485
      %p488 = scmp.ne.s32.totalorder %s471, %s487
      %p489 = scmp.eq.s32.totalorder %s45, 0
      %p490 = por %p488, %p489
      %s491 = ssub.s32 %s39, %s46
      %p492 = scmp.eq.s32.totalorder %s491, 0
      %s494 = sadd.s32 %s493, 1
      %s495 = scalar_select %p492, %s493, %s494
      %p498 = pneg %p492
      %p499 = scmp.eq.s32.totalorder %s39, 1
      %p500 = por %p498, %p499
      %p501 = scmp.ne.s32.totalorder %s493, %s496
      %p502 = scmp.eq.s32.totalorder %s39, 0
      %p503 = por %p501, %p502
      %p504 = scmp.ne.s32.totalorder %s493, %s496
      %p505 = scmp.eq.s32.totalorder %s44, 1
      %p506 = por %p504, %p505
      %p507 = scmp.ne.s32.totalorder %s496, %s497
      %p508 = scmp.eq.s32.totalorder %s44, 0
      %p509 = por %p507, %p508
      %p510 = scmp.ne.s32.totalorder %s496, %s497
      %p511 = scmp.eq.s32.totalorder %s45, 1
      %p512 = por %p510, %p511
      %p514 = scmp.ne.s32.totalorder %s497, %s513
      %p515 = scmp.eq.s32.totalorder %s45, 0
      %p516 = por %p514, %p515
      %s517 = ssub.s32 %s39, %s46
      %p518 = scmp.eq.s32.totalorder %s517, 0
      %s520 = sadd.s32 %s519, 1
      %s521 = scalar_select %p518, %s519, %s520
      %p524 = pneg %p518
      %p525 = scmp.eq.s32.totalorder %s39, 1
      %p526 = por %p524, %p525
      %p527 = scmp.ne.s32.totalorder %s519, %s522
      %p528 = scmp.eq.s32.totalorder %s39, 0
      %p529 = por %p527, %p528
      %p530 = scmp.ne.s32.totalorder %s519, %s522
      %p531 = scmp.eq.s32.totalorder %s44, 1
      %p532 = por %p530, %p531
      %p533 = scmp.ne.s32.totalorder %s522, %s523
      %p534 = scmp.eq.s32.totalorder %s44, 0
      %p535 = por %p533, %p534
      %p536 = scmp.ne.s32.totalorder %s522, %s523
      %p537 = scmp.eq.s32.totalorder %s45, 1
      %p538 = por %p536, %p537
      %p540 = scmp.ne.s32.totalorder %s523, %s539
      %p541 = scmp.eq.s32.totalorder %s45, 0
      %p542 = por %p540, %p541
      %s543 = ssub.s32 %s39, %s46
      %p544 = scmp.eq.s32.totalorder %s543, 0
      %s546 = sadd.s32 %s545, 1
      %s547 = scalar_select %p544, %s545, %s546
      %p550 = pneg %p544
      %p551 = scmp.eq.s32.totalorder %s39, 1
      %p552 = por %p550, %p551
      %p553 = scmp.ne.s32.totalorder %s545, %s548
      %p554 = scmp.eq.s32.totalorder %s39, 0
      %p555 = por %p553, %p554
      %p556 = scmp.ne.s32.totalorder %s545, %s548
      %p557 = scmp.eq.s32.totalorder %s44, 1
      %p558 = por %p556, %p557
      %p559 = scmp.ne.s32.totalorder %s548, %s549
      %p560 = scmp.eq.s32.totalorder %s44, 0
      %p561 = por %p559, %p560
      %p562 = scmp.ne.s32.totalorder %s548, %s549
      %p563 = scmp.eq.s32.totalorder %s45, 1
      %p564 = por %p562, %p563
      %p566 = scmp.ne.s32.totalorder %s549, %s565
      %p567 = scmp.eq.s32.totalorder %s45, 0
      %p568 = por %p566, %p567
      %s569 = ssub.s32 %s39, %s46
      %p570 = scmp.eq.s32.totalorder %s569, 0
      %s572 = sadd.s32 %s571, 1
      %s573 = scalar_select %p570, %s571, %s572
      %p576 = pneg %p570
      %p577 = scmp.eq.s32.totalorder %s39, 1
      %p578 = por %p576, %p577
      %p579 = scmp.ne.s32.totalorder %s571, %s574
      %p580 = scmp.eq.s32.totalorder %s39, 0
      %p581 = por %p579, %p580
      %p582 = scmp.ne.s32.totalorder %s571, %s574
      %p583 = scmp.eq.s32.totalorder %s44, 1
      %p584 = por %p582, %p583
      %p585 = scmp.ne.s32.totalorder %s574, %s575
      %p586 = scmp.eq.s32.totalorder %s44, 0
      %p587 = por %p585, %p586
      %p588 = scmp.ne.s32.totalorder %s574, %s575
      %p589 = scmp.eq.s32.totalorder %s45, 1
      %p590 = por %p588, %p589
      %p592 = scmp.ne.s32.totalorder %s575, %s591
      %p593 = scmp.eq.s32.totalorder %s45, 0
      %p594 = por %p592, %p593
      %s595 = ssub.s32 %s39, %s46
      %p596 = scmp.eq.s32.totalorder %s595, 0
      %s598 = sadd.s32 %s597, 1
      %s599 = scalar_select %p596, %s597, %s598
      %p602 = pneg %p596
      %p603 = scmp.eq.s32.totalorder %s39, 1
      %p604 = por %p602, %p603
      %p605 = scmp.ne.s32.totalorder %s597, %s600
      %p606 = scmp.eq.s32.totalorder %s39, 0
      %p607 = por %p605, %p606
      %p608 = scmp.ne.s32.totalorder %s597, %s600
      %p609 = scmp.eq.s32.totalorder %s44, 1
      %p610 = por %p608, %p609
      %p611 = scmp.ne.s32.totalorder %s600, %s601
      %p612 = scmp.eq.s32.totalorder %s44, 0
      %p613 = por %p611, %p612
      %p614 = scmp.ne.s32.totalorder %s600, %s601
      %p615 = scmp.eq.s32.totalorder %s45, 1
      %p616 = por %p614, %p615
      %p618 = scmp.ne.s32.totalorder %s601, %s617
      %p619 = scmp.eq.s32.totalorder %s45, 0
      %p620 = por %p618, %p619
      %s622 = sadd.s32 %s621, 1
      %p625 = scmp.eq.s32.totalorder %s39, 1
      %p626 = scmp.ne.s32.totalorder %s621, %s623
      %p627 = scmp.eq.s32.totalorder %s39, 0
      %p628 = por %p626, %p627
      %p629 = scmp.ne.s32.totalorder %s621, %s623
      %p630 = scmp.eq.s32.totalorder %s44, 1
      %p631 = por %p629, %p630
      %p632 = scmp.ne.s32.totalorder %s623, %s624
      %p633 = scmp.eq.s32.totalorder %s44, 0
      %p634 = por %p632, %p633
      %p635 = scmp.ne.s32.totalorder %s623, %s624
      %p636 = scmp.eq.s32.totalorder %s45, 1
      %p637 = por %p635, %p636
      %p639 = scmp.ne.s32.totalorder %s624, %s638
      %p640 = scmp.eq.s32.totalorder %s45, 0
      %p641 = por %p639, %p640
      %s643 = sadd.s32 %s642, 1
      %p646 = scmp.eq.s32.totalorder %s39, 1
      %p647 = scmp.ne.s32.totalorder %s642, %s644
      %p648 = scmp.eq.s32.totalorder %s39, 0
      %p649 = por %p647, %p648
      %p650 = scmp.ne.s32.totalorder %s642, %s644
      %p651 = scmp.eq.s32.totalorder %s44, 1
      %p652 = por %p650, %p651
      %p653 = scmp.ne.s32.totalorder %s644, %s645
      %p654 = scmp.eq.s32.totalorder %s44, 0
      %p655 = por %p653, %p654
      %p656 = scmp.ne.s32.totalorder %s644, %s645
      %p657 = scmp.eq.s32.totalorder %s45, 1
      %p658 = por %p656, %p657
      %p660 = scmp.ne.s32.totalorder %s645, %s659
      %p661 = scmp.eq.s32.totalorder %s45, 0
      %p662 = por %p660, %p661
      %p663 = scmp.le.s32.totalorder 1, %s39
      %p664 = scmp.lt.s32.totalorder %s39, 3
      %p665 = pnand %p663, %p664
      %p666 = pneg %p665
      // Predicated region
      $region9: #{vilbert_forward.1} parent=5 // pred_check
        _
      $region10: #{vilbert_forward.1} parent=5 // pred_check_branch
        %668 = sbr.rel (%p665) target = $region12
      $region11: #{vilbert_forward.1} parent=5 // pred_region
        %s669 = ssub.s32 %s39, 1
        // Predicated region
        $region13: #{vilbert_forward.1} parent=11 // pred_check
          %p670 = pneg %p60
        $region14: #{vilbert_forward.1} parent=11 // pred_check_branch
          %672 = sbr.rel (%p670) target = $region16
        $region15: #{vilbert_forward.1} parent=11 // pred_region
          _
        $region16: #{vilbert_forward.1} parent=11 // pred_fallthru
          _
        // Predicated region
        $region17: #{vilbert_forward.1} parent=11 // pred_check
          %p673 = pneg %p81
        $region18: #{vilbert_forward.1} parent=11 // pred_check_branch
          %675 = sbr.rel (%p673) target = $region20
        $region19: #{vilbert_forward.1} parent=11 // pred_region
          _
        $region20: #{vilbert_forward.1} parent=11 // pred_fallthru
          _
        // Predicated region
        $region21: #{vilbert_forward.1} parent=11 // pred_check
          %p676 = pneg %p102
        $region22: #{vilbert_forward.1} parent=11 // pred_check_branch
          %678 = sbr.rel (%p676) target = $region24
        $region23: #{vilbert_forward.1} parent=11 // pred_region
          _
        $region24: #{vilbert_forward.1} parent=11 // pred_fallthru
          _
        // Predicated region
        $region25: #{vilbert_forward.1} parent=11 // pred_check
          %p679 = pneg %p123
        $region26: #{vilbert_forward.1} parent=11 // pred_check_branch
          %681 = sbr.rel (%p679) target = $region28
        $region27: #{vilbert_forward.1} parent=11 // pred_region
          _
        $region28: #{vilbert_forward.1} parent=11 // pred_fallthru
          _
        // Predicated region
        $region29: #{vilbert_forward.1} parent=11 // pred_check
          %p682 = pneg %p144
        $region30: #{vilbert_forward.1} parent=11 // pred_check_branch
          %684 = sbr.rel (%p682) target = $region32
        $region31: #{vilbert_forward.1} parent=11 // pred_region
          %s686 = ssub.s32 6144, 6144
          %687 = vsyncadd [#allocation5], %s686
          %s688 = sshll.u32 [#allocation4], 4
          %s689 = int_to_ptr.vmem [resolvable:$true] %s688
          %694 = dma.hbm_to_vmem [thread:$0]  %s4, 6144, %s689, [#allocation5], 128, 128, 8
        $region32: #{vilbert_forward.1} parent=11 // pred_fallthru
          _
        // Predicated region
        $region33: #{vilbert_forward.1} parent=11 // pred_check
          %p695 = pneg %p165
        $region34: #{vilbert_forward.1} parent=11 // pred_check_branch
          %697 = sbr.rel (%p695) target = $region36
        $region35: #{vilbert_forward.1} parent=11 // pred_region
          _
        $region36: #{vilbert_forward.1} parent=11 // pred_fallthru
          _
        // Predicated region
        $region37: #{vilbert_forward.1} parent=11 // pred_check
          %p698 = pneg %p186
        $region38: #{vilbert_forward.1} parent=11 // pred_check_branch
          %700 = sbr.rel (%p698) target = $region40
        $region39: #{vilbert_forward.1} parent=11 // pred_region
          _
        $region40: #{vilbert_forward.1} parent=11 // pred_fallthru
          _
        // Predicated region
        $region41: #{vilbert_forward.1} parent=11 // pred_check
          %p701 = pneg %p207
        $region42: #{vilbert_forward.1} parent=11 // pred_check_branch
          %703 = sbr.rel (%p701) target = $region44
        $region43: #{vilbert_forward.1} parent=11 // pred_region
          _
        $region44: #{vilbert_forward.1} parent=11 // pred_fallthru
          _
        // Predicated region
        $region45: #{vilbert_forward.1} parent=11 // pred_check
          %p704 = pneg %p228
        $region46: #{vilbert_forward.1} parent=11 // pred_check_branch
          %706 = sbr.rel (%p704) target = $region48
        $region47: #{vilbert_forward.1} parent=11 // pred_region
          _
        $region48: #{vilbert_forward.1} parent=11 // pred_fallthru
          _
        // Predicated region
        $region49: #{vilbert_forward.1} parent=11 // pred_check
          %p707 = pneg %p249
        $region50: #{vilbert_forward.1} parent=11 // pred_check_branch
          %709 = sbr.rel (%p707) target = $region52
        $region51: #{vilbert_forward.1} parent=11 // pred_region
          _
        $region52: #{vilbert_forward.1} parent=11 // pred_fallthru
          _
      $region12: #{vilbert_forward.1} parent=5 // pred_fallthru
        _
      %p710 = scmp.lt.s32.totalorder %s39, 2
      // Predicated region
      $region53: #{vilbert_forward.1} parent=5 // pred_check
        %p711 = pneg %p710
      $region54: #{vilbert_forward.1} parent=5 // pred_check_branch
        %713 = sbr.rel (%p711) target = $region56
      $region55: #{vilbert_forward.1} parent=5 // pred_region
        // Predicated region
        $region57: #{vilbert_forward.1} parent=55 // pred_check
          %p714 = pneg %p269
        $region58: #{vilbert_forward.1} parent=55 // pred_check_branch
          %716 = sbr.rel (%p714) target = $region60
        $region59: #{vilbert_forward.1} parent=55 // pred_region
          %s717 = sand.u32 %s39, 1
          %s718 = scalar_lea.sflag [#allocation7], %s717
          %s719 = sand.u32 %s259, 1
          %s720 = smul.addr %s719, 768
          %s721 = scalar_lea.vmem [#allocation6], %s720
          %s723 = ssub.s32 12288, 12288
          %724 = vsyncadd %s718, %s723
          %s725 = smul.addr %s39, 96
          %s726 = smul.addr %s725, 128
          %s727 = scalar_lea.hbm %s10, %s726
          %s728 = sshll.u32 %s721, 4
          %s729 = int_to_ptr.vmem [resolvable:$true] %s728
          %734 = dma.hbm_to_vmem [thread:$0]  %s727, 12288, %s729, %s718, 384, 384, 24
        $region60: #{vilbert_forward.1} parent=55 // pred_fallthru
          _
        // Predicated region
        $region61: #{vilbert_forward.1} parent=55 // pred_check
          %p735 = pneg %p295
        $region62: #{vilbert_forward.1} parent=55 // pred_check_branch
          %737 = sbr.rel (%p735) target = $region64
        $region63: #{vilbert_forward.1} parent=55 // pred_region
          %p738 = scmp.lt.s32.totalorder %s39, 1
          %s739 = scalar_select %p738, %s39, 1
          %s740 = smul.addr %s739, 6
          %s741 = scalar_lea.vmem %s11, %s740
        $region64: #{vilbert_forward.1} parent=55 // pred_fallthru
          _
        // Predicated region
        $region65: #{vilbert_forward.1} parent=55 // pred_check
          %p742 = pneg %p321
        $region66: #{vilbert_forward.1} parent=55 // pred_check_branch
          %744 = sbr.rel (%p742) target = $region68
        $region67: #{vilbert_forward.1} parent=55 // pred_region
          %s745 = sand.u32 %s39, 1
          %s746 = scalar_lea.sflag [#allocation7], %s745
          %s747 = sand.u32 %s311, 1
          %s748 = smul.addr %s747, 256
          %s749 = scalar_lea.vmem [#allocation8], %s748
          %s751 = ssub.s32 4096, 4096
          %752 = vsyncadd %s746, %s751
          %s753 = smul.addr %s39, 32
          %s754 = smul.addr %s753, 128
          %s755 = scalar_lea.hbm %s12, %s754
          %s756 = sshll.u32 %s749, 4
          %s757 = int_to_ptr.vmem [resolvable:$true] %s756
          %762 = dma.hbm_to_vmem [thread:$0]  %s755, 4096, %s757, %s746, 128, 128, 8
        $region68: #{vilbert_forward.1} parent=55 // pred_fallthru
          _
        // Predicated region
        $region69: #{vilbert_forward.1} parent=55 // pred_check
          %p763 = pneg %p347
        $region70: #{vilbert_forward.1} parent=55 // pred_check_branch
          %765 = sbr.rel (%p763) target = $region72
        $region71: #{vilbert_forward.1} parent=55 // pred_region
          %p766 = scmp.lt.s32.totalorder %s39, 1
          %s767 = scalar_select %p766, %s39, 1
          %s768 = smul.addr %s767, 2
          %s769 = scalar_lea.vmem %s13, %s768
        $region72: #{vilbert_forward.1} parent=55 // pred_fallthru
          _
        // Predicated region
        $region73: #{vilbert_forward.1} parent=55 // pred_check
          %p770 = pneg %p373
        $region74: #{vilbert_forward.1} parent=55 // pred_check_branch
          %772 = sbr.rel (%p770) target = $region76
        $region75: #{vilbert_forward.1} parent=55 // pred_region
          %s773 = sand.u32 %s39, 1
          %s774 = scalar_lea.sflag [#allocation10], %s773
          %s775 = sand.u32 %s363, 1
          %s776 = smul.addr %s775, 256
          %s777 = scalar_lea.vmem [#allocation9], %s776
          %s779 = ssub.s32 4096, 4096
          %780 = vsyncadd %s774, %s779
          %s781 = smul.addr %s39, 32
          %s782 = smul.addr %s781, 128
          %s783 = scalar_lea.hbm %s14, %s782
          %s784 = sshll.u32 %s777, 4
          %s785 = int_to_ptr.vmem [resolvable:$true] %s784
          %790 = dma.hbm_to_vmem [thread:$0]  %s783, 4096, %s785, %s774, 128, 128, 8
        $region76: #{vilbert_forward.1} parent=55 // pred_fallthru
          _
        // Predicated region
        $region77: #{vilbert_forward.1} parent=55 // pred_check
          %p791 = pneg %p399
        $region78: #{vilbert_forward.1} parent=55 // pred_check_branch
          %793 = sbr.rel (%p791) target = $region80
        $region79: #{vilbert_forward.1} parent=55 // pred_region
          %p794 = scmp.lt.s32.totalorder %s39, 1
          %s795 = scalar_select %p794, %s39, 1
          %s796 = smul.addr %s795, 2
          %s797 = scalar_lea.vmem %s15, %s796
        $region80: #{vilbert_forward.1} parent=55 // pred_fallthru
          _
        // Predicated region
        $region81: #{vilbert_forward.1} parent=55 // pred_check
          %p798 = pneg %p425
        $region82: #{vilbert_forward.1} parent=55 // pred_check_branch
          %800 = sbr.rel (%p798) target = $region84
        $region83: #{vilbert_forward.1} parent=55 // pred_region
          %p801 = scmp.lt.s32.totalorder %s39, 1
          %s802 = scalar_select %p801, %s39, 1
          %s803 = smul.addr %s802, 2
          %s804 = scalar_lea.vmem %s16, %s803
        $region84: #{vilbert_forward.1} parent=55 // pred_fallthru
          _
        // Predicated region
        $region85: #{vilbert_forward.1} parent=55 // pred_check
          %p805 = pneg %p451
        $region86: #{vilbert_forward.1} parent=55 // pred_check_branch
          %807 = sbr.rel (%p805) target = $region88
        $region87: #{vilbert_forward.1} parent=55 // pred_region
          %p808 = scmp.lt.s32.totalorder %s39, 1
          %s809 = scalar_select %p808, %s39, 1
          %s810 = smul.addr %s809, 2
          %s811 = scalar_lea.vmem %s17, %s810
        $region88: #{vilbert_forward.1} parent=55 // pred_fallthru
          _
        // Predicated region
        $region89: #{vilbert_forward.1} parent=55 // pred_check
          %p812 = pneg %p477
        $region90: #{vilbert_forward.1} parent=55 // pred_check_branch
          %814 = sbr.rel (%p812) target = $region92
        $region91: #{vilbert_forward.1} parent=55 // pred_region
          %p815 = scmp.lt.s32.totalorder %s39, 1
          %s816 = scalar_select %p815, %s39, 1
          %s817 = smul.addr %s816, 64
          %s818 = smul.addr %s817, 8
          %s819 = scalar_lea.vmem %s18, %s818
        $region92: #{vilbert_forward.1} parent=55 // pred_fallthru
          _
        // Predicated region
        $region93: #{vilbert_forward.1} parent=55 // pred_check
          %p820 = pneg %p503
        $region94: #{vilbert_forward.1} parent=55 // pred_check_branch
          %822 = sbr.rel (%p820) target = $region96
        $region95: #{vilbert_forward.1} parent=55 // pred_region
          %p823 = scmp.lt.s32.totalorder %s39, 1
          %s824 = scalar_select %p823, %s39, 1
          %s825 = smul.addr %s824, 4
          %s826 = scalar_lea.vmem %s19, %s825
        $region96: #{vilbert_forward.1} parent=55 // pred_fallthru
          _
        // Predicated region
        $region97: #{vilbert_forward.1} parent=55 // pred_check
          %p827 = pneg %p529
        $region98: #{vilbert_forward.1} parent=55 // pred_check_branch
          %829 = sbr.rel (%p827) target = $region100
        $region99: #{vilbert_forward.1} parent=55 // pred_region
          %s830 = sand.u32 %s39, 1
          %s831 = scalar_lea.sflag [#allocation10], %s830
          %s832 = sand.u32 %s519, 1
          %s833 = smul.addr %s832, 512
          %s834 = scalar_lea.vmem [#allocation11], %s833
          %s836 = ssub.s32 8192, 8192
          %837 = vsyncadd %s831, %s836
          %s838 = smul.addr %s39, 64
          %s839 = smul.addr %s838, 128
          %s840 = scalar_lea.hbm %s20, %s839
          %s841 = sshll.u32 %s834, 4
          %s842 = int_to_ptr.vmem [resolvable:$true] %s841
          %847 = dma.hbm_to_vmem [thread:$0]  %s840, 8192, %s842, %s831, 128, 128, 8
        $region100: #{vilbert_forward.1} parent=55 // pred_fallthru
          _
        // Predicated region
        $region101: #{vilbert_forward.1} parent=55 // pred_check
          %p848 = pneg %p555
        $region102: #{vilbert_forward.1} parent=55 // pred_check_branch
          %850 = sbr.rel (%p848) target = $region104
        $region103: #{vilbert_forward.1} parent=55 // pred_region
          %p851 = scmp.lt.s32.totalorder %s39, 1
          %s852 = scalar_select %p851, %s39, 1
          %s853 = smul.addr %s852, 2
          %s854 = scalar_lea.vmem %s21, %s853
        $region104: #{vilbert_forward.1} parent=55 // pred_fallthru
          _
        // Predicated region
        $region105: #{vilbert_forward.1} parent=55 // pred_check
          %p855 = pneg %p581
        $region106: #{vilbert_forward.1} parent=55 // pred_check_branch
          %857 = sbr.rel (%p855) target = $region108
        $region107: #{vilbert_forward.1} parent=55 // pred_region
          %p858 = scmp.lt.s32.totalorder %s39, 1
          %s859 = scalar_select %p858, %s39, 1
          %s860 = smul.addr %s859, 2
          %s861 = scalar_lea.vmem %s22, %s860
        $region108: #{vilbert_forward.1} parent=55 // pred_fallthru
          _
        // Predicated region
        $region109: #{vilbert_forward.1} parent=55 // pred_check
          %p862 = pneg %p607
        $region110: #{vilbert_forward.1} parent=55 // pred_check_branch
          %864 = sbr.rel (%p862) target = $region112
        $region111: #{vilbert_forward.1} parent=55 // pred_region
          %p865 = scmp.lt.s32.totalorder %s39, 1
          %s866 = scalar_select %p865, %s39, 1
          %s867 = smul.addr %s866, 2
          %s868 = scalar_lea.vmem %s23, %s867
        $region112: #{vilbert_forward.1} parent=55 // pred_fallthru
          _
      $region56: #{vilbert_forward.1} parent=5 // pred_fallthru
        _
      %p869 = scmp.le.s32.totalorder 1, %s39
      %p870 = scmp.lt.s32.totalorder %s39, 3
      %p871 = pnand %p869, %p870
      %p872 = pneg %p871
      // Predicated region
      $region113: #{vilbert_forward.1} parent=5 // pred_check
        _
      $region114: #{vilbert_forward.1} parent=5 // pred_check_branch
        %874 = sbr.rel (%p871) target = $region116
      $region115: #{vilbert_forward.1} parent=5 // pred_region
        %s875 = ssub.s32 %s39, 1
        // Predicated region
        $region117: #{vilbert_forward.1} parent=115 // pred_check
          %p876 = pneg %p144
        $region118: #{vilbert_forward.1} parent=115 // pred_check_branch
          %878 = sbr.rel (%p876) target = $region120
        $region119: #{vilbert_forward.1} parent=115 // pred_region
          %879 = dma.done [#allocation5], 6144
        $region120: #{vilbert_forward.1} parent=115 // pred_fallthru
          _
        %s880 = sand.u32 %s44, 1
        %s881 = scalar_lea.sflag [#allocation7], %s880
        %s882 = sand.u32 %s262, 1
        %s883 = smul.addr %s882, 768
        %s884 = scalar_lea.vmem [#allocation6], %s883
        // Predicated region
        $region121: #{vilbert_forward.1} parent=115 // pred_check
          %p885 = pneg %p275
        $region122: #{vilbert_forward.1} parent=115 // pred_check_branch
          %887 = sbr.rel (%p885) target = $region124
        $region123: #{vilbert_forward.1} parent=115 // pred_region
          %888 = dma.done %s881, 12288
        $region124: #{vilbert_forward.1} parent=115 // pred_fallthru
          _
        %s889 = sand.u32 %s44, 1
        %s890 = scalar_lea.sflag [#allocation7], %s889
        %s891 = sand.u32 %s314, 1
        %s892 = smul.addr %s891, 256
        %s893 = scalar_lea.vmem [#allocation8], %s892
        // Predicated region
        $region125: #{vilbert_forward.1} parent=115 // pred_check
          %p894 = pneg %p327
        $region126: #{vilbert_forward.1} parent=115 // pred_check_branch
          %896 = sbr.rel (%p894) target = $region128
        $region127: #{vilbert_forward.1} parent=115 // pred_region
          %897 = dma.done %s890, 4096
        $region128: #{vilbert_forward.1} parent=115 // pred_fallthru
          _
        %s898 = sand.u32 %s44, 1
        %s899 = scalar_lea.sflag [#allocation10], %s898
        %s900 = sand.u32 %s366, 1
        %s901 = smul.addr %s900, 256
        %s902 = scalar_lea.vmem [#allocation9], %s901
        // Predicated region
        $region129: #{vilbert_forward.1} parent=115 // pred_check
          %p903 = pneg %p379
        $region130: #{vilbert_forward.1} parent=115 // pred_check_branch
          %905 = sbr.rel (%p903) target = $region132
        $region131: #{vilbert_forward.1} parent=115 // pred_region
          %906 = dma.done %s899, 4096
        $region132: #{vilbert_forward.1} parent=115 // pred_fallthru
          _
        %s907 = sand.u32 %s44, 1
        %s908 = scalar_lea.sflag [#allocation10], %s907
        %s909 = sand.u32 %s522, 1
        %s910 = smul.addr %s909, 512
        %s911 = scalar_lea.vmem [#allocation11], %s910
        // Predicated region
        $region133: #{vilbert_forward.1} parent=115 // pred_check
          %p912 = pneg %p535
        $region134: #{vilbert_forward.1} parent=115 // pred_check_branch
          %914 = sbr.rel (%p912) target = $region136
        $region135: #{vilbert_forward.1} parent=115 // pred_region
          %915 = dma.done %s908, 8192
        $region136: #{vilbert_forward.1} parent=115 // pred_fallthru
          _
        %p916 = pneg %p60
        %p917 = pneg %p57
        %p918 = pneg %p81
        %p919 = pneg %p78
        %p920 = pneg %p102
        %p921 = pneg %p99
        %p922 = pneg %p123
        %p923 = pneg %p120
        %p924 = pneg %p144
        %p925 = pneg %p141
        %p926 = pneg %p165
        %p927 = pneg %p162
        %p928 = pneg %p186
        %p929 = pneg %p183
        %p930 = pneg %p207
        %p931 = pneg %p204
        %p932 = pneg %p228
        %p933 = pneg %p225
        %p934 = pneg %p249
        %p935 = pneg %p246
        %s936 = sand.u32 %s44, 1
        %s937 = scalar_lea.sflag [#allocation7], %s936
        %s938 = sand.u32 %s262, 1
        %s939 = smul.addr %s938, 768
        %s940 = scalar_lea.vmem [#allocation6], %s939
        %p941 = pneg %p275
        %p942 = pneg %p272
        %p943 = scmp.lt.s32.totalorder %s44, 1
        %s944 = scalar_select %p943, %s44, 1
        %s945 = smul.addr %s944, 6
        %s946 = scalar_lea.vmem %s11, %s945
        %p947 = pneg %p301
        %p948 = pneg %p298
        %s949 = sand.u32 %s44, 1
        %s950 = scalar_lea.sflag [#allocation7], %s949
        %s951 = sand.u32 %s314, 1
        %s952 = smul.addr %s951, 256
        %s953 = scalar_lea.vmem [#allocation8], %s952
        %p954 = pneg %p327
        %p955 = pneg %p324
        %p956 = scmp.lt.s32.totalorder %s44, 1
        %s957 = scalar_select %p956, %s44, 1
        %s958 = smul.addr %s957, 2
        %s959 = scalar_lea.vmem %s13, %s958
        %p960 = pneg %p353
        %p961 = pneg %p350
        %s962 = sand.u32 %s44, 1
        %s963 = scalar_lea.sflag [#allocation10], %s962
        %s964 = sand.u32 %s366, 1
        %s965 = smul.addr %s964, 256
        %s966 = scalar_lea.vmem [#allocation9], %s965
        %p967 = pneg %p379
        %p968 = pneg %p376
        %p969 = scmp.lt.s32.totalorder %s44, 1
        %s970 = scalar_select %p969, %s44, 1
        %s971 = smul.addr %s970, 2
        %s972 = scalar_lea.vmem %s15, %s971
        %p973 = pneg %p405
        %p974 = pneg %p402
        %p975 = scmp.lt.s32.totalorder %s44, 1
        %s976 = scalar_select %p975, %s44, 1
        %s977 = smul.addr %s976, 2
        %s978 = scalar_lea.vmem %s16, %s977
        %p979 = pneg %p431
        %p980 = pneg %p428
        %p981 = scmp.lt.s32.totalorder %s44, 1
        %s982 = scalar_select %p981, %s44, 1
        %s983 = smul.addr %s982, 2
        %s984 = scalar_lea.vmem %s17, %s983
        %p985 = pneg %p457
        %p986 = pneg %p454
        %p987 = scmp.lt.s32.totalorder %s44, 1
        %s988 = scalar_select %p987, %s44, 1
        %s989 = smul.addr %s988, 64
        %s990 = smul.addr %s989, 8
        %s991 = scalar_lea.vmem %s18, %s990
        %p992 = pneg %p483
        %p993 = pneg %p480
        %p994 = scmp.lt.s32.totalorder %s44, 1
        %s995 = scalar_select %p994, %s44, 1
        %s996 = smul.addr %s995, 4
        %s997 = scalar_lea.vmem %s19, %s996
        %p998 = pneg %p509
        %p999 = pneg %p506
        %s1000 = sand.u32 %s44, 1
        %s1001 = scalar_lea.sflag [#allocation10], %s1000
        %s1002 = sand.u32 %s522, 1
        %s1003 = smul.addr %s1002, 512
        %s1004 = scalar_lea.vmem [#allocation11], %s1003
        %p1005 = pneg %p535
        %p1006 = pneg %p532
        %p1007 = scmp.lt.s32.totalorder %s44, 1
        %s1008 = scalar_select %p1007, %s44, 1
        %s1009 = smul.addr %s1008, 2
        %s1010 = scalar_lea.vmem %s21, %s1009
        %p1011 = pneg %p561
        %p1012 = pneg %p558
        %p1013 = scmp.lt.s32.totalorder %s44, 1
        %s1014 = scalar_select %p1013, %s44, 1
        %s1015 = smul.addr %s1014, 2
        %s1016 = scalar_lea.vmem %s22, %s1015
        %p1017 = pneg %p587
        %p1018 = pneg %p584
        %p1019 = scmp.lt.s32.totalorder %s44, 1
        %s1020 = scalar_select %p1019, %s44, 1
        %s1021 = smul.addr %s1020, 2
        %s1022 = scalar_lea.vmem %s23, %s1021
        %p1023 = pneg %p613
        %p1024 = pneg %p610
        %p1025 = pneg %p634
        %p1026 = pneg %p631
        %p1027 = pneg %p655
        %p1028 = pneg %p652
        %p1029 = scmp.lt.s32.totalorder %s44, 1
        %s1030 = scalar_select %p1029, %s44, 1
        %s1031 = smul.addr %s1030, 6
        %s1032 = scalar_lea.vmem %s11, %s1031
        %p1033 = scmp.lt.s32.totalorder %s44, 1
        %s1034 = scalar_select %p1033, %s44, 1
        %s1035 = smul.addr %s1034, 2
        %s1036 = scalar_lea.vmem %s13, %s1035
        %p1037 = scmp.lt.s32.totalorder %s44, 1
        %s1038 = scalar_select %p1037, %s44, 1
        %s1039 = smul.addr %s1038, 2
        %s1040 = scalar_lea.vmem %s15, %s1039
        %p1041 = scmp.lt.s32.totalorder %s44, 1
        %s1042 = scalar_select %p1041, %s44, 1
        %s1043 = smul.addr %s1042, 2
        %s1044 = scalar_lea.vmem %s16, %s1043
        %p1045 = scmp.lt.s32.totalorder %s44, 1
        %s1046 = scalar_select %p1045, %s44, 1
        %s1047 = smul.addr %s1046, 2
        %s1048 = scalar_lea.vmem %s17, %s1047
        %p1049 = scmp.lt.s32.totalorder %s44, 1
        %s1050 = scalar_select %p1049, %s44, 1
        %s1051 = smul.addr %s1050, 64
        %s1052 = smul.addr %s1051, 8
        %s1053 = scalar_lea.vmem %s18, %s1052
        %p1054 = scmp.lt.s32.totalorder %s44, 1
        %s1055 = scalar_select %p1054, %s44, 1
        %s1056 = smul.addr %s1055, 4
        %s1057 = scalar_lea.vmem %s19, %s1056
        %p1058 = scmp.lt.s32.totalorder %s44, 1
        %s1059 = scalar_select %p1058, %s44, 1
        %s1060 = smul.addr %s1059, 2
        %s1061 = scalar_lea.vmem %s21, %s1060
        %p1062 = scmp.lt.s32.totalorder %s44, 1
        %s1063 = scalar_select %p1062, %s44, 1
        %s1064 = smul.addr %s1063, 2
        %s1065 = scalar_lea.vmem %s22, %s1064
        %p1066 = scmp.lt.s32.totalorder %s44, 1
        %s1067 = scalar_select %p1066, %s44, 1
        %s1068 = smul.addr %s1067, 2
        %s1069 = scalar_lea.vmem %s23, %s1068
        %p1070 = scmp.eq.s32.totalorder %s44, 0
        // Predicated region
        $region137: #{vilbert_forward.1} parent=115 // pred_check
          %p1071 = pneg %p1070
        $region138: #{vilbert_forward.1} parent=115 // pred_check_branch
          %1073 = sbr.rel (%p1071) target = $region140
        $region139: #{vilbert_forward.1} parent=115 // pred_region
          %v1074 = vld [vmem:[%s0] sm:$0xff]
          %v1075 = vld [vmem:[%s0 + $0x8] sm:$0xff]
          %v1076 = vld [vmem:[%s0 + $0x10] sm:$0xff]
          %v1077 = vld [vmem:[%s0 + $0x18] sm:$0xff]
          %v1078 = vld [vmem:[%s0 + $0x20] sm:$0xff]
          %v1079 = vld [vmem:[%s0 + $0x28] sm:$0xff]
          %v1080 = vld [vmem:[#allocation4] sm:$0xff]
          %v1081 = vld [vmem:[#allocation4 + $0x8] sm:$0xff]
          %v1082 = vld [vmem:[#allocation4 + $0x10] sm:$0xff]
          %v1083 = vld [vmem:[#allocation4 + $0x18] sm:$0xff]
          %v1084 = vld [vmem:[#allocation4 + $0x20] sm:$0xff]
          %v1085 = vld [vmem:[#allocation4 + $0x28] sm:$0xff]
          %v1086 = vld [vmem:[#allocation4 + $0x30] sm:$0xff]
          %v1087 = vld [vmem:[#allocation4 + $0x38] sm:$0xff]
          %v1088 = vld [vmem:[#allocation4 + $0x40] sm:$0xff]
          %v1089 = vld [vmem:[#allocation4 + $0x48] sm:$0xff]
          %v1090 = vld [vmem:[#allocation4 + $0x50] sm:$0xff]
          %v1091 = vld [vmem:[#allocation4 + $0x58] sm:$0xff]
          %v1092 = vld [vmem:[#allocation4 + $0x60] sm:$0xff]
          %v1093 = vld [vmem:[#allocation4 + $0x68] sm:$0xff]
          %v1094 = vld [vmem:[#allocation4 + $0x70] sm:$0xff]
          %v1095 = vld [vmem:[#allocation4 + $0x78] sm:$0xff]
          %v1096 = vld [vmem:[#allocation4 + $0x80] sm:$0xff]
          %v1097 = vld [vmem:[#allocation4 + $0x88] sm:$0xff]
          %v1098 = vld [vmem:[#allocation4 + $0x90] sm:$0xff]
          %v1099 = vld [vmem:[#allocation4 + $0x98] sm:$0xff]
          %v1100 = vld [vmem:[#allocation4 + $0xa0] sm:$0xff]
          %v1101 = vld [vmem:[#allocation4 + $0xa8] sm:$0xff]
          %v1102 = vld [vmem:[#allocation4 + $0xb0] sm:$0xff]
          %v1103 = vld [vmem:[#allocation4 + $0xb8] sm:$0xff]
          %v1104 = vld [vmem:[#allocation4 + $0xc0] sm:$0xff]
          %v1105 = vld [vmem:[#allocation4 + $0xc8] sm:$0xff]
          %v1106 = vld [vmem:[#allocation4 + $0xd0] sm:$0xff]
          %v1107 = vld [vmem:[#allocation4 + $0xd8] sm:$0xff]
          %v1108 = vld [vmem:[#allocation4 + $0xe0] sm:$0xff]
          %v1109 = vld [vmem:[#allocation4 + $0xe8] sm:$0xff]
          %v1110 = vld [vmem:[#allocation4 + $0xf0] sm:$0xff]
          %v1111 = vld [vmem:[#allocation4 + $0xf8] sm:$0xff]
          %v1112 = vld [vmem:[#allocation4 + $0x100] sm:$0xff]
          %v1113 = vld [vmem:[#allocation4 + $0x108] sm:$0xff]
          %v1114 = vld [vmem:[#allocation4 + $0x110] sm:$0xff]
          %v1115 = vld [vmem:[#allocation4 + $0x118] sm:$0xff]
          %v1116 = vld [vmem:[#allocation4 + $0x120] sm:$0xff]
          %v1117 = vld [vmem:[#allocation4 + $0x128] sm:$0xff]
          %v1118 = vld [vmem:[#allocation4 + $0x130] sm:$0xff]
          %v1119 = vld [vmem:[#allocation4 + $0x138] sm:$0xff]
          %v1120 = vld [vmem:[#allocation4 + $0x140] sm:$0xff]
          %v1121 = vld [vmem:[#allocation4 + $0x148] sm:$0xff]
          %v1122 = vld [vmem:[#allocation4 + $0x150] sm:$0xff]
          %v1123 = vld [vmem:[#allocation4 + $0x158] sm:$0xff]
          %v1124 = vld [vmem:[#allocation4 + $0x160] sm:$0xff]
          %v1125 = vld [vmem:[#allocation4 + $0x168] sm:$0xff]
          %v1126 = vld [vmem:[#allocation4 + $0x170] sm:$0xff]
          %v1127 = vld [vmem:[#allocation4 + $0x178] sm:$0xff]
          %v1128 = vld [vmem:[%s5] sm:$0x1]
          %v1130 = vlaneseq
          %v1131 = vshrl.u32 %v1130, 7
          %v1132 = vsub.s32 0, %v1131
          %v1133 = vrot.slane %v1128, %v1132
          %1135 = vmatprep.subr.mxu0 0.0
          %1136 = vmatpush1.msra.mxu0 %v1080
          %1137 = vmatprep.subr.mxu0 0.0
          %1138 = vmatpush1.msra.mxu0 %v1081
          %1139 = vmatprep.subr.mxu0 0.0
          %1140 = vmatpush1.msra.mxu0 %v1082
          %1141 = vmatprep.subr.mxu0 0.0
          %1142 = vmatpush1.msra.mxu0 %v1083
          %1143 = vmatprep.subr.mxu0 0.0
          %1144 = vmatpush1.msra.mxu0 %v1084
          %1145 = vmatprep.subr.mxu0 0.0
          %1146 = vmatpush1.msra.mxu0 %v1085
          %1147 = vmatprep.subr.mxu0 0.0
          %1148 = vmatpush1.msra.mxu0 %v1086
          %1149 = vmatprep.subr.mxu0 0.0
          %1150 = vmatpush1.msra.mxu0 %v1087
          %1151 = vmatprep.subr.mxu0 0.0
          %1152 = vmatpush1.msra.mxu0 %v1088
          %1153 = vmatprep.subr.mxu0 0.0
          %1154 = vmatpush1.msra.mxu0 %v1089
          %1155 = vmatprep.subr.mxu0 0.0
          %1156 = vmatpush1.msra.mxu0 %v1090
          %1157 = vmatprep.subr.mxu0 0.0
          %1158 = vmatpush1.msra.mxu0 %v1091
          %1159 = vmatprep.subr.mxu0 0.0
          %1160 = vmatpush1.msra.mxu0 %v1092
          %1161 = vmatprep.subr.mxu0 0.0
          %1162 = vmatpush1.msra.mxu0 %v1093
          %1163 = vmatprep.subr.mxu0 0.0
          %1164 = vmatpush1.msra.mxu0 %v1094
          %1165 = vmatprep.subr.mxu0 0.0
          %1166 = vmatpush1.msra.mxu0 %v1095
          %1167 = vmatprep.subr.mxu0 0.0
          %1168 = vmatpush1.msra.mxu0 %v1096
          %1169 = vmatprep.subr.mxu0 0.0
          %1170 = vmatpush1.msra.mxu0 %v1097
          %1171 = vmatprep.subr.mxu0 0.0
          %1172 = vmatpush1.msra.mxu0 %v1098
          %1173 = vmatprep.subr.mxu0 0.0
          %1174 = vmatpush1.msra.mxu0 %v1099
          %1175 = vmatprep.subr.mxu0 0.0
          %1176 = vmatpush1.msra.mxu0 %v1100
          %1177 = vmatprep.subr.mxu0 0.0
          %1178 = vmatpush1.msra.mxu0 %v1101
          %1179 = vmatprep.subr.mxu0 0.0
          %1180 = vmatpush1.msra.mxu0 %v1102
          %1181 = vmatprep.subr.mxu0 0.0
          %1182 = vmatpush1.msra.mxu0 %v1103
          %1183 = vmatprep.subr.mxu0 0.0
          %1184 = vmatpush1.msra.mxu0 %v1104
          %1185 = vmatprep.subr.mxu0 0.0
          %1186 = vmatpush1.msra.mxu0 %v1105
          %1187 = vmatprep.subr.mxu0 0.0
          %1188 = vmatpush1.msra.mxu0 %v1106
          %1189 = vmatprep.subr.mxu0 0.0
          %1190 = vmatpush1.msra.mxu0 %v1107
          %1191 = vmatprep.subr.mxu0 0.0
          %1192 = vmatpush1.msra.mxu0 %v1108
          %1193 = vmatprep.subr.mxu0 0.0
          %1194 = vmatpush1.msra.mxu0 %v1109
          %1195 = vmatprep.subr.mxu0 0.0
          %1196 = vmatpush1.msra.mxu0 %v1110
          %1197 = vmatprep.subr.mxu0 0.0
          %1198 = vmatpush1.msra.mxu0 %v1111
          %1199 = vmatprep.mubr.f32.mxu0 %v1075
          %1200 = vmatmul.mubr.f32.gmra.mrb[0].mxu0 %v1074
          %v1201 = vpop.f32.mrb[0].mxu0
          %v1202 = vadd.f32 %v1133, %v1201
          %v1203 = vpop.f32.mrb[0].mxu0
          %1204 = vmatprep.mubr.f32.mxu0 %v1078
          %1205 = vmatmul.mubr.f32.gmra.mrb[0].mxu0 %v1077
          %v1206 = vpop.f32.mrb[0].mxu0
          %v1207 = vadd.f32 %v1133, %v1206
          %v1208 = vpop.f32.mrb[0].mxu0
          %1209 = vdwg.mxu0
          %1210 = vmatprep.subr.mxu0 0.0
          %1211 = vmatpush1.msra.mxu0 %v1112
          %1212 = vmatprep.subr.mxu0 0.0
          %1213 = vmatpush1.msra.mxu0 %v1113
          %1214 = vmatprep.subr.mxu0 0.0
          %1215 = vmatpush1.msra.mxu0 %v1114
          %1216 = vmatprep.subr.mxu0 0.0
          %1217 = vmatpush1.msra.mxu0 %v1115
          %1218 = vmatprep.subr.mxu0 0.0
          %1219 = vmatpush1.msra.mxu0 %v1116
          %1220 = vmatprep.subr.mxu0 0.0
          %1221 = vmatpush1.msra.mxu0 %v1117
          %1222 = vmatprep.subr.mxu0 0.0
          %1223 = vmatpush1.msra.mxu0 %v1118
          %1224 = vmatprep.subr.mxu0 0.0
          %1225 = vmatpush1.msra.mxu0 %v1119
          %1226 = vmatprep.subr.mxu0 0.0
          %1227 = vmatpush1.msra.mxu0 %v1120
          %1228 = vmatprep.subr.mxu0 0.0
          %1229 = vmatpush1.msra.mxu0 %v1121
          %1230 = vmatprep.subr.mxu0 0.0
          %1231 = vmatpush1.msra.mxu0 %v1122
          %1232 = vmatprep.subr.mxu0 0.0
          %1233 = vmatpush1.msra.mxu0 %v1123
          %1234 = vmatprep.subr.mxu0 0.0
          %1235 = vmatpush1.msra.mxu0 %v1124
          %1236 = vmatprep.subr.mxu0 0.0
          %1237 = vmatpush1.msra.mxu0 %v1125
          %1238 = vmatprep.subr.mxu0 0.0
          %1239 = vmatpush1.msra.mxu0 %v1126
          %1240 = vmatprep.subr.mxu0 0.0
          %1241 = vmatpush1.msra.mxu0 %v1127
          %1242 = vmatprep.subr.mxu0 0.0
          %1243 = vmatpush1.msra.mxu0 0.0
          %1244 = vmatprep.subr.mxu0 0.0
          %1245 = vmatpush1.msra.mxu0 0.0
          %1246 = vmatprep.subr.mxu0 0.0
          %1247 = vmatpush1.msra.mxu0 0.0
          %1248 = vmatprep.subr.mxu0 0.0
          %1249 = vmatpush1.msra.mxu0 0.0
          %1250 = vmatprep.subr.mxu0 0.0
          %1251 = vmatpush1.msra.mxu0 0.0
          %1252 = vmatprep.subr.mxu0 0.0
          %1253 = vmatpush1.msra.mxu0 0.0
          %1254 = vmatprep.subr.mxu0 0.0
          %1255 = vmatpush1.msra.mxu0 0.0
          %1256 = vmatprep.subr.mxu0 0.0
          %1257 = vmatpush1.msra.mxu0 0.0
          %1258 = vmatprep.subr.mxu0 0.0
          %1259 = vmatpush1.msra.mxu0 0.0
          %1260 = vmatprep.subr.mxu0 0.0
          %1261 = vmatpush1.msra.mxu0 0.0
          %1262 = vmatprep.subr.mxu0 0.0
          %1263 = vmatpush1.msra.mxu0 0.0
          %1264 = vmatprep.subr.mxu0 0.0
          %1265 = vmatpush1.msra.mxu0 0.0
          %1266 = vmatprep.subr.mxu0 0.0
          %1267 = vmatpush1.msra.mxu0 0.0
          %1268 = vmatprep.subr.mxu0 0.0
          %1269 = vmatpush1.msra.mxu0 0.0
          %1270 = vmatprep.subr.mxu0 0.0
          %1271 = vmatpush1.msra.mxu0 0.0
          %1272 = vmatprep.subr.mxu0 0.0
          %1273 = vmatpush1.msra.mxu0 0.0
          %1274 = vmatprep.mubr.f32.mxu0 0.0
          %1275 = vmatmul.mubr.f32.gmra.mrb[0].mxu0 %v1076
          %v1276 = vpop.f32.mrb[0].mxu0
          %v1277 = vadd.f32 %v1202, %v1276
          %v1278 = vpop.f32.mrb[0].mxu0
          %1279 = vmatprep.mubr.f32.mxu0 0.0
          %1280 = vmatmul.mubr.f32.gmra.mrb[0].mxu0 %v1079
          %v1281 = vpop.f32.mrb[0].mxu0
          %v1282 = vadd.f32 %v1207, %v1281
          %v1283 = vpop.f32.mrb[0].mxu0
          %1284 = vdwg.mxu0
          %v1285 = vld [vmem:[%s6] sm:$0x1]
          %v1286 = vld [vmem:[%s7] sm:$0x1]
          %1287 = vadd.xlane.f32.xlu0 %v1277
          %v1288 = vpop.xlane.xlu0 %1287
          %1289 = vadd.xlane.f32.xlu0 %v1282
          %v1290 = vpop.xlane.xlu0 %1289
          %v1291 = vrcp.pop 128.0
          %v1292 = vmul.f32 %v1288, %v1291
          %v1293 = vmul.f32 %v1290, %v1291
          %v1294 = vsub.f32 %v1277, %v1292
          %v1295 = vsub.f32 %v1282, %v1293
          %v1296 = vmul.f32 %v1294, %v1294
          %v1297 = vmul.f32 %v1295, %v1295
          %1298 = vadd.xlane.f32.xlu0 %v1296
          %v1299 = vpop.xlane.xlu0 %1298
          %1300 = vadd.xlane.f32.xlu0 %v1297
          %v1301 = vpop.xlane.xlu0 %1300
          %v1302 = vmul.f32 %v1299, %v1291
          %v1303 = vmul.f32 %v1301, %v1291
          %v1304 = vadd.f32 %v1302, 1e-05
          %v1305 = vadd.f32 %v1303, 1e-05
          %v1306 = vrsqrt.pop %v1304
          %v1307 = vrsqrt.pop %v1305
          %v1308 = vmul.f32 %v1294, %v1306
          %v1309 = vmul.f32 %v1295, %v1307
          %v1311 = vlaneseq
          %v1312 = vshrl.u32 %v1311, 7
          %v1313 = vsub.s32 0, %v1312
          %v1314 = vrot.slane %v1285, %v1313
          %v1316 = vmul.f32 %v1308, %v1314
          %v1317 = vmul.f32 %v1309, %v1314
          %v1319 = vlaneseq
          %v1320 = vshrl.u32 %v1319, 7
          %v1321 = vsub.s32 0, %v1320
          %v1322 = vrot.slane %v1286, %v1321
          %v1324 = vadd.f32 %v1316, %v1322
          %v1325 = vadd.f32 %v1317, %v1322
          %1326 = vst [vmem:[#allocation2] sm:$0xff] %v1324
          %1327 = vst [vmem:[#allocation2 + $0x8] sm:$0xff] %v1325
          %v1328 = vld [vmem:[%s1] sm:$0xff]
          %v1329 = vld [vmem:[%s1 + $0x8] sm:$0xff]
          %v1330 = vld [vmem:[%s8] sm:$0x1]
          %v1331 = vld [vmem:[%s9] sm:$0x1]
          %1332 = vadd.xlane.f32.xlu0 %v1328
          %v1333 = vpop.xlane.xlu0 %1332
          %1334 = vadd.xlane.f32.xlu0 %v1329
          %v1335 = vpop.xlane.xlu0 %1334
          %v1336 = vmul.f32 %v1333, %v1291
          %v1337 = vmul.f32 %v1335, %v1291
          %v1338 = vsub.f32 %v1328, %v1336
          %v1339 = vsub.f32 %v1329, %v1337
          %v1340 = vmul.f32 %v1338, %v1338
          %v1341 = vmul.f32 %v1339, %v1339
          %1342 = vadd.xlane.f32.xlu0 %v1340
          %v1343 = vpop.xlane.xlu0 %1342
          %1344 = vadd.xlane.f32.xlu0 %v1341
          %v1345 = vpop.xlane.xlu0 %1344
          %v1346 = vmul.f32 %v1343, %v1291
          %v1347 = vmul.f32 %v1345, %v1291
          %v1348 = vadd.f32 %v1346, 1e-05
          %v1349 = vadd.f32 %v1347, 1e-05
          %v1350 = vrsqrt.pop %v1348
          %v1351 = vrsqrt.pop %v1349
          %v1352 = vmul.f32 %v1338, %v1350
          %v1353 = vmul.f32 %v1339, %v1351
          %v1355 = vlaneseq
          %v1356 = vshrl.u32 %v1355, 7
          %v1357 = vsub.s32 0, %v1356
          %v1358 = vrot.slane %v1330, %v1357
          %v1360 = vmul.f32 %v1352, %v1358
          %v1361 = vmul.f32 %v1353, %v1358
          %v1363 = vlaneseq
          %v1364 = vshrl.u32 %v1363, 7
          %v1365 = vsub.s32 0, %v1364
          %v1366 = vrot.slane %v1331, %v1365
          %v1368 = vadd.f32 %v1360, %v1366
          %v1369 = vadd.f32 %v1361, %v1366
          %1370 = vst [vmem:[#allocation3] sm:$0xff] %v1368
          %1371 = vst [vmem:[#allocation3 + $0x8] sm:$0xff] %v1369
        $region140: #{vilbert_forward.1} parent=115 // pred_fallthru
          _
        %v1372 = vld [vmem:[#allocation2] sm:$0xff]
        %v1373 = vld [vmem:[#allocation2 + $0x8] sm:$0xff]
        %v1374 = vld [vmem:[#allocation3] sm:$0xff]
        %v1375 = vld [vmem:[#allocation3 + $0x8] sm:$0xff]
        %v1376 = vld [vmem:[%s2] sm:$0x1]
        %v1377 = vld [vmem:[%s2 + $0x1] sm:$0x1]
        %v1378 = vld [vmem:[%s3] sm:$0x1]
        %v1379 = vld [vmem:[%s3 + $0x1] sm:$0x1]
        %v1380 = vld [vmem:[%s884] sm:$0xff]
        %v1381 = vld [vmem:[%s884 + $0x8] sm:$0xff]
        %v1382 = vld [vmem:[%s884 + $0x10] sm:$0xff]
        %v1383 = vld [vmem:[%s884 + $0x18] sm:$0xff]
        %v1384 = vld [vmem:[%s884 + $0x20] sm:$0xff]
        %v1385 = vld [vmem:[%s884 + $0x28] sm:$0xff]
        %v1386 = vld [vmem:[%s884 + $0x30] sm:$0xff]
        %v1387 = vld [vmem:[%s884 + $0x38] sm:$0xff]
        %v1388 = vld [vmem:[%s884 + $0x40] sm:$0xff]
        %v1389 = vld [vmem:[%s884 + $0x48] sm:$0xff]
        %v1390 = vld [vmem:[%s884 + $0x50] sm:$0xff]
        %v1391 = vld [vmem:[%s884 + $0x58] sm:$0xff]
        %v1392 = vld [vmem:[%s884 + $0x60] sm:$0xff]
        %v1393 = vld [vmem:[%s884 + $0x68] sm:$0xff]
        %v1394 = vld [vmem:[%s884 + $0x70] sm:$0xff]
        %v1395 = vld [vmem:[%s884 + $0x78] sm:$0xff]
        %v1396 = vld [vmem:[%s884 + $0x80] sm:$0xff]
        %v1397 = vld [vmem:[%s884 + $0x88] sm:$0xff]
        %v1398 = vld [vmem:[%s884 + $0x90] sm:$0xff]
        %v1399 = vld [vmem:[%s884 + $0x98] sm:$0xff]
        %v1400 = vld [vmem:[%s884 + $0xa0] sm:$0xff]
        %v1401 = vld [vmem:[%s884 + $0xa8] sm:$0xff]
        %v1402 = vld [vmem:[%s884 + $0xb0] sm:$0xff]
        %v1403 = vld [vmem:[%s884 + $0xb8] sm:$0xff]
        %v1404 = vld [vmem:[%s884 + $0xc0] sm:$0xff]
        %v1405 = vld [vmem:[%s884 + $0xc8] sm:$0xff]
        %v1406 = vld [vmem:[%s884 + $0xd0] sm:$0xff]
        %v1407 = vld [vmem:[%s884 + $0xd8] sm:$0xff]
        %v1408 = vld [vmem:[%s884 + $0xe0] sm:$0xff]
        %v1409 = vld [vmem:[%s884 + $0xe8] sm:$0xff]
        %v1410 = vld [vmem:[%s884 + $0xf0] sm:$0xff]
        %v1411 = vld [vmem:[%s884 + $0xf8] sm:$0xff]
        %v1412 = vld [vmem:[%s884 + $0x100] sm:$0xff]
        %v1413 = vld [vmem:[%s884 + $0x108] sm:$0xff]
        %v1414 = vld [vmem:[%s884 + $0x110] sm:$0xff]
        %v1415 = vld [vmem:[%s884 + $0x118] sm:$0xff]
        %v1416 = vld [vmem:[%s884 + $0x120] sm:$0xff]
        %v1417 = vld [vmem:[%s884 + $0x128] sm:$0xff]
        %v1418 = vld [vmem:[%s884 + $0x130] sm:$0xff]
        %v1419 = vld [vmem:[%s884 + $0x138] sm:$0xff]
        %v1420 = vld [vmem:[%s884 + $0x140] sm:$0xff]
        %v1421 = vld [vmem:[%s884 + $0x148] sm:$0xff]
        %v1422 = vld [vmem:[%s884 + $0x150] sm:$0xff]
        %v1423 = vld [vmem:[%s884 + $0x158] sm:$0xff]
        %v1424 = vld [vmem:[%s884 + $0x160] sm:$0xff]
        %v1425 = vld [vmem:[%s884 + $0x168] sm:$0xff]
        %v1426 = vld [vmem:[%s884 + $0x170] sm:$0xff]
        %v1427 = vld [vmem:[%s884 + $0x178] sm:$0xff]
        %v1428 = vld [vmem:[%s1032] sm:$0x7]
        %v1430 = vlaneseq
        %v1431 = vshrl.u32 %v1430, 7
        %v1432 = vsub.s32 0, %v1431
        %v1433 = vrot.slane %v1428, %v1432
        %v1434 = vlaneseq
        %v1435 = vshrl.u32 %v1434, 7
        %v1436 = vsub.s32 1, %v1435
        %v1437 = vrot.slane %v1428, %v1436
        %v1438 = vlaneseq
        %v1439 = vshrl.u32 %v1438, 7
        %v1440 = vsub.s32 2, %v1439
        %v1441 = vrot.slane %v1428, %v1440
        %1445 = vmatprep.subr.mxu0 %v1381
        %1446 = vmatpush1.msra.mxu0 %v1380
        %1447 = vmatprep.subr.mxu0 %v1384
        %1448 = vmatpush1.msra.mxu0 %v1383
        %1449 = vmatprep.subr.mxu0 %v1387
        %1450 = vmatpush1.msra.mxu0 %v1386
        %1451 = vmatprep.subr.mxu0 %v1390
        %1452 = vmatpush1.msra.mxu0 %v1389
        %1453 = vmatprep.subr.mxu0 %v1393
        %1454 = vmatpush1.msra.mxu0 %v1392
        %1455 = vmatprep.subr.mxu0 %v1396
        %1456 = vmatpush1.msra.mxu0 %v1395
        %1457 = vmatprep.subr.mxu0 %v1399
        %1458 = vmatpush1.msra.mxu0 %v1398
        %1459 = vmatprep.subr.mxu0 %v1402
        %1460 = vmatpush1.msra.mxu0 %v1401
        %1461 = vmatprep.subr.mxu0 %v1405
        %1462 = vmatpush1.msra.mxu0 %v1404
        %1463 = vmatprep.subr.mxu0 %v1408
        %1464 = vmatpush1.msra.mxu0 %v1407
        %1465 = vmatprep.subr.mxu0 %v1411
        %1466 = vmatpush1.msra.mxu0 %v1410
        %1467 = vmatprep.subr.mxu0 %v1414
        %1468 = vmatpush1.msra.mxu0 %v1413
        %1469 = vmatprep.subr.mxu0 %v1417
        %1470 = vmatpush1.msra.mxu0 %v1416
        %1471 = vmatprep.subr.mxu0 %v1420
        %1472 = vmatpush1.msra.mxu0 %v1419
        %1473 = vmatprep.subr.mxu0 %v1423
        %1474 = vmatpush1.msra.mxu0 %v1422
        %1475 = vmatprep.subr.mxu0 %v1426
        %1476 = vmatpush1.msra.mxu0 %v1425
        %1477 = vmatprep.subr.mxu0 0.0
        %1478 = vmatpush1.msra.mxu0 0.0
        %1479 = vmatprep.subr.mxu0 0.0
        %1480 = vmatpush1.msra.mxu0 0.0
        %1481 = vmatprep.subr.mxu0 0.0
        %1482 = vmatpush1.msra.mxu0 0.0
        %1483 = vmatprep.subr.mxu0 0.0
        %1484 = vmatpush1.msra.mxu0 0.0
        %1485 = vmatprep.subr.mxu0 0.0
        %1486 = vmatpush1.msra.mxu0 0.0
        %1487 = vmatprep.subr.mxu0 0.0
        %1488 = vmatpush1.msra.mxu0 0.0
        %1489 = vmatprep.subr.mxu0 0.0
        %1490 = vmatpush1.msra.mxu0 0.0
        %1491 = vmatprep.subr.mxu0 0.0
        %1492 = vmatpush1.msra.mxu0 0.0
        %1493 = vmatprep.subr.mxu0 0.0
        %1494 = vmatpush1.msra.mxu0 0.0
        %1495 = vmatprep.subr.mxu0 0.0
        %1496 = vmatpush1.msra.mxu0 0.0
        %1497 = vmatprep.subr.mxu0 0.0
        %1498 = vmatpush1.msra.mxu0 0.0
        %1499 = vmatprep.subr.mxu0 0.0
        %1500 = vmatpush1.msra.mxu0 0.0
        %1501 = vmatprep.subr.mxu0 0.0
        %1502 = vmatpush1.msra.mxu0 0.0
        %1503 = vmatprep.subr.mxu0 0.0
        %1504 = vmatpush1.msra.mxu0 0.0
        %1505 = vmatprep.subr.mxu0 0.0
        %1506 = vmatpush1.msra.mxu0 0.0
        %1507 = vmatprep.subr.mxu0 0.0
        %1508 = vmatpush1.msra.mxu0 0.0
        %1509 = vmatprep.mubr.f32.mxu0 0.0
        %1510 = vmatmul.mubr.f32.gmra.mrb[0].mxu0 %v1372
        %v1511 = vpop.f32.mrb[0].mxu0
        %v1512 = vadd.f32 %v1433, %v1511
        %v1513 = vpop.f32.mrb[0].mxu0
        %v1514 = vadd.f32 %v1437, %v1513
        %1515 = vmatprep.mubr.f32.mxu0 0.0
        %1516 = vmatmul.mubr.f32.gmra.mrb[0].mxu0 %v1373
        %v1517 = vpop.f32.mrb[0].mxu0
        %v1518 = vadd.f32 %v1433, %v1517
        %v1519 = vpop.f32.mrb[0].mxu0
        %v1520 = vadd.f32 %v1437, %v1519
        %1521 = vdwg.mxu0
        %1522 = vmatprep.subr.mxu0 0.0
        %1523 = vmatpush1.msra.mxu0 %v1382
        %1524 = vmatprep.subr.mxu0 0.0
        %1525 = vmatpush1.msra.mxu0 %v1385
        %1526 = vmatprep.subr.mxu0 0.0
        %1527 = vmatpush1.msra.mxu0 %v1388
        %1528 = vmatprep.subr.mxu0 0.0
        %1529 = vmatpush1.msra.mxu0 %v1391
        %1530 = vmatprep.subr.mxu0 0.0
        %1531 = vmatpush1.msra.mxu0 %v1394
        %1532 = vmatprep.subr.mxu0 0.0
        %1533 = vmatpush1.msra.mxu0 %v1397
        %1534 = vmatprep.subr.mxu0 0.0
        %1535 = vmatpush1.msra.mxu0 %v1400
        %1536 = vmatprep.subr.mxu0 0.0
        %1537 = vmatpush1.msra.mxu0 %v1403
        %1538 = vmatprep.subr.mxu0 0.0
        %1539 = vmatpush1.msra.mxu0 %v1406
        %1540 = vmatprep.subr.mxu0 0.0
        %1541 = vmatpush1.msra.mxu0 %v1409
        %1542 = vmatprep.subr.mxu0 0.0
        %1543 = vmatpush1.msra.mxu0 %v1412
        %1544 = vmatprep.subr.mxu0 0.0
        %1545 = vmatpush1.msra.mxu0 %v1415
        %1546 = vmatprep.subr.mxu0 0.0
        %1547 = vmatpush1.msra.mxu0 %v1418
        %1548 = vmatprep.subr.mxu0 0.0
        %1549 = vmatpush1.msra.mxu0 %v1421
        %1550 = vmatprep.subr.mxu0 0.0
        %1551 = vmatpush1.msra.mxu0 %v1424
        %1552 = vmatprep.subr.mxu0 0.0
        %1553 = vmatpush1.msra.mxu0 %v1427
        %1554 = vmatprep.subr.mxu0 0.0
        %1555 = vmatpush1.msra.mxu0 0.0
        %1556 = vmatprep.subr.mxu0 0.0
        %1557 = vmatpush1.msra.mxu0 0.0
        %1558 = vmatprep.subr.mxu0 0.0
        %1559 = vmatpush1.msra.mxu0 0.0
        %1560 = vmatprep.subr.mxu0 0.0
        %1561 = vmatpush1.msra.mxu0 0.0
        %1562 = vmatprep.subr.mxu0 0.0
        %1563 = vmatpush1.msra.mxu0 0.0
        %1564 = vmatprep.subr.mxu0 0.0
        %1565 = vmatpush1.msra.mxu0 0.0
        %1566 = vmatprep.subr.mxu0 0.0
        %1567 = vmatpush1.msra.mxu0 0.0
        %1568 = vmatprep.subr.mxu0 0.0
        %1569 = vmatpush1.msra.mxu0 0.0
        %1570 = vmatprep.subr.mxu0 0.0
        %1571 = vmatpush1.msra.mxu0 0.0
        %1572 = vmatprep.subr.mxu0 0.0
        %1573 = vmatpush1.msra.mxu0 0.0
        %1574 = vmatprep.subr.mxu0 0.0
        %1575 = vmatpush1.msra.mxu0 0.0
        %1576 = vmatprep.subr.mxu0 0.0
        %1577 = vmatpush1.msra.mxu0 0.0
        %1578 = vmatprep.subr.mxu0 0.0
        %1579 = vmatpush1.msra.mxu0 0.0
        %1580 = vmatprep.subr.mxu0 0.0
        %1581 = vmatpush1.msra.mxu0 0.0
        %1582 = vmatprep.subr.mxu0 0.0
        %1583 = vmatpush1.msra.mxu0 0.0
        %1584 = vmatprep.subr.mxu0 0.0
        %1585 = vmatpush1.msra.mxu0 0.0
        %1586 = vmatprep.mubr.f32.mxu0 0.0
        %1587 = vmatmul.mubr.f32.gmra.mrb[0].mxu0 %v1372
        %v1588 = vpop.f32.mrb[0].mxu0
        %v1589 = vadd.f32 %v1441, %v1588
        %v1590 = vpop.f32.mrb[0].mxu0
        %1591 = vmatprep.mubr.f32.mxu0 0.0
        %1592 = vmatmul.mubr.f32.gmra.mrb[0].mxu0 %v1373
        %v1593 = vpop.f32.mrb[0].mxu0
        %v1594 = vadd.f32 %v1441, %v1593
        %v1595 = vpop.f32.mrb[0].mxu0
        %1596 = vdwg.mxu0
        %s1597 = scalar_lea.vmem %s884, 384 [#allocation6]
        %v1598 = vld [vmem:[%s1597] sm:$0xff]
        %v1599 = vld [vmem:[%s1597 + $0x8] sm:$0xff]
        %v1600 = vld [vmem:[%s1597 + $0x10] sm:$0xff]
        %v1601 = vld [vmem:[%s1597 + $0x18] sm:$0xff]
        %v1602 = vld [vmem:[%s1597 + $0x20] sm:$0xff]
        %v1603 = vld [vmem:[%s1597 + $0x28] sm:$0xff]
        %v1604 = vld [vmem:[%s1597 + $0x30] sm:$0xff]
        %v1605 = vld [vmem:[%s1597 + $0x38] sm:$0xff]
        %v1606 = vld [vmem:[%s1597 + $0x40] sm:$0xff]
        %v1607 = vld [vmem:[%s1597 + $0x48] sm:$0xff]
        %v1608 = vld [vmem:[%s1597 + $0x50] sm:$0xff]
        %v1609 = vld [vmem:[%s1597 + $0x58] sm:$0xff]
        %v1610 = vld [vmem:[%s1597 + $0x60] sm:$0xff]
        %v1611 = vld [vmem:[%s1597 + $0x68] sm:$0xff]
        %v1612 = vld [vmem:[%s1597 + $0x70] sm:$0xff]
        %v1613 = vld [vmem:[%s1597 + $0x78] sm:$0xff]
        %v1614 = vld [vmem:[%s1597 + $0x80] sm:$0xff]
        %v1615 = vld [vmem:[%s1597 + $0x88] sm:$0xff]
        %v1616 = vld [vmem:[%s1597 + $0x90] sm:$0xff]
        %v1617 = vld [vmem:[%s1597 + $0x98] sm:$0xff]
        %v1618 = vld [vmem:[%s1597 + $0xa0] sm:$0xff]
        %v1619 = vld [vmem:[%s1597 + $0xa8] sm:$0xff]
        %v1620 = vld [vmem:[%s1597 + $0xb0] sm:$0xff]
        %v1621 = vld [vmem:[%s1597 + $0xb8] sm:$0xff]
        %v1622 = vld [vmem:[%s1597 + $0xc0] sm:$0xff]
        %v1623 = vld [vmem:[%s1597 + $0xc8] sm:$0xff]
        %v1624 = vld [vmem:[%s1597 + $0xd0] sm:$0xff]
        %v1625 = vld [vmem:[%s1597 + $0xd8] sm:$0xff]
        %v1626 = vld [vmem:[%s1597 + $0xe0] sm:$0xff]
        %v1627 = vld [vmem:[%s1597 + $0xe8] sm:$0xff]
        %v1628 = vld [vmem:[%s1597 + $0xf0] sm:$0xff]
        %v1629 = vld [vmem:[%s1597 + $0xf8] sm:$0xff]
        %v1630 = vld [vmem:[%s1597 + $0x100] sm:$0xff]
        %v1631 = vld [vmem:[%s1597 + $0x108] sm:$0xff]
        %v1632 = vld [vmem:[%s1597 + $0x110] sm:$0xff]
        %v1633 = vld [vmem:[%s1597 + $0x118] sm:$0xff]
        %v1634 = vld [vmem:[%s1597 + $0x120] sm:$0xff]
        %v1635 = vld [vmem:[%s1597 + $0x128] sm:$0xff]
        %v1636 = vld [vmem:[%s1597 + $0x130] sm:$0xff]
        %v1637 = vld [vmem:[%s1597 + $0x138] sm:$0xff]
        %v1638 = vld [vmem:[%s1597 + $0x140] sm:$0xff]
        %v1639 = vld [vmem:[%s1597 + $0x148] sm:$0xff]
        %v1640 = vld [vmem:[%s1597 + $0x150] sm:$0xff]
        %v1641 = vld [vmem:[%s1597 + $0x158] sm:$0xff]
        %v1642 = vld [vmem:[%s1597 + $0x160] sm:$0xff]
        %v1643 = vld [vmem:[%s1597 + $0x168] sm:$0xff]
        %v1644 = vld [vmem:[%s1597 + $0x170] sm:$0xff]
        %v1645 = vld [vmem:[%s1597 + $0x178] sm:$0xff]
        %s1646 = scalar_lea.vmem %s1032, 3
        %v1647 = vld [vmem:[%s1646] sm:$0x7]
        %v1649 = vlaneseq
        %v1650 = vshrl.u32 %v1649, 7
        %v1651 = vsub.s32 0, %v1650
        %v1652 = vrot.slane %v1647, %v1651
        %v1653 = vlaneseq
        %v1654 = vshrl.u32 %v1653, 7
        %v1655 = vsub.s32 1, %v1654
        %v1656 = vrot.slane %v1647, %v1655
        %v1657 = vlaneseq
        %v1658 = vshrl.u32 %v1657, 7
        %v1659 = vsub.s32 2, %v1658
        %v1660 = vrot.slane %v1647, %v1659
        %1664 = vmatprep.subr.mxu0 %v1599
        %1665 = vmatpush1.msra.mxu0 %v1598
        %1666 = vmatprep.subr.mxu0 %v1602
        %1667 = vmatpush1.msra.mxu0 %v1601
        %1668 = vmatprep.subr.mxu0 %v1605
        %1669 = vmatpush1.msra.mxu0 %v1604
        %1670 = vmatprep.subr.mxu0 %v1608
        %1671 = vmatpush1.msra.mxu0 %v1607
        %1672 = vmatprep.subr.mxu0 %v1611
        %1673 = vmatpush1.msra.mxu0 %v1610
        %1674 = vmatprep.subr.mxu0 %v1614
        %1675 = vmatpush1.msra.mxu0 %v1613
        %1676 = vmatprep.subr.mxu0 %v1617
        %1677 = vmatpush1.msra.mxu0 %v1616
        %1678 = vmatprep.subr.mxu0 %v1620
        %1679 = vmatpush1.msra.mxu0 %v1619
        %1680 = vmatprep.subr.mxu0 %v1623
        %1681 = vmatpush1.msra.mxu0 %v1622
        %1682 = vmatprep.subr.mxu0 %v1626
        %1683 = vmatpush1.msra.mxu0 %v1625
        %1684 = vmatprep.subr.mxu0 %v1629
        %1685 = vmatpush1.msra.mxu0 %v1628
        %1686 = vmatprep.subr.mxu0 %v1632
        %1687 = vmatpush1.msra.mxu0 %v1631
        %1688 = vmatprep.subr.mxu0 %v1635
        %1689 = vmatpush1.msra.mxu0 %v1634
        %1690 = vmatprep.subr.mxu0 %v1638
        %1691 = vmatpush1.msra.mxu0 %v1637
        %1692 = vmatprep.subr.mxu0 %v1641
        %1693 = vmatpush1.msra.mxu0 %v1640
        %1694 = vmatprep.subr.mxu0 %v1644
        %1695 = vmatpush1.msra.mxu0 %v1643
        %1696 = vmatprep.subr.mxu0 0.0
        %1697 = vmatpush1.msra.mxu0 0.0
        %1698 = vmatprep.subr.mxu0 0.0
        %1699 = vmatpush1.msra.mxu0 0.0
        %1700 = vmatprep.subr.mxu0 0.0
        %1701 = vmatpush1.msra.mxu0 0.0
        %1702 = vmatprep.subr.mxu0 0.0
        %1703 = vmatpush1.msra.mxu0 0.0
        %1704 = vmatprep.subr.mxu0 0.0
        %1705 = vmatpush1.msra.mxu0 0.0
        %1706 = vmatprep.subr.mxu0 0.0
        %1707 = vmatpush1.msra.mxu0 0.0
        %1708 = vmatprep.subr.mxu0 0.0
        %1709 = vmatpush1.msra.mxu0 0.0
        %1710 = vmatprep.subr.mxu0 0.0
        %1711 = vmatpush1.msra.mxu0 0.0
        %1712 = vmatprep.subr.mxu0 0.0
        %1713 = vmatpush1.msra.mxu0 0.0
        %1714 = vmatprep.subr.mxu0 0.0
        %1715 = vmatpush1.msra.mxu0 0.0
        %1716 = vmatprep.subr.mxu0 0.0
        %1717 = vmatpush1.msra.mxu0 0.0
        %1718 = vmatprep.subr.mxu0 0.0
        %1719 = vmatpush1.msra.mxu0 0.0
        %1720 = vmatprep.subr.mxu0 0.0
        %1721 = vmatpush1.msra.mxu0 0.0
        %1722 = vmatprep.subr.mxu0 0.0
        %1723 = vmatpush1.msra.mxu0 0.0
        %1724 = vmatprep.subr.mxu0 0.0
        %1725 = vmatpush1.msra.mxu0 0.0
        %1726 = vmatprep.subr.mxu0 0.0
        %1727 = vmatpush1.msra.mxu0 0.0
        %1728 = vmatprep.mubr.f32.mxu0 0.0
        %1729 = vmatmul.mubr.f32.gmra.mrb[0].mxu0 %v1374
        %v1730 = vpop.f32.mrb[0].mxu0
        %v1731 = vadd.f32 %v1652, %v1730
        %v1732 = vpop.f32.mrb[0].mxu0
        %v1733 = vadd.f32 %v1656, %v1732
        %1734 = vmatprep.mubr.f32.mxu0 0.0
        %1735 = vmatmul.mubr.f32.gmra.mrb[0].mxu0 %v1375
        %v1736 = vpop.f32.mrb[0].mxu0
        %v1737 = vadd.f32 %v1652, %v1736
        %v1738 = vpop.f32.mrb[0].mxu0
        %v1739 = vadd.f32 %v1656, %v1738
        %1740 = vdwg.mxu0
        %1741 = vmatprep.subr.mxu0 0.0
        %1742 = vmatpush1.msra.mxu0 %v1600
        %1743 = vmatprep.subr.mxu0 0.0
        %1744 = vmatpush1.msra.mxu0 %v1603
        %1745 = vmatprep.subr.mxu0 0.0
        %1746 = vmatpush1.msra.mxu0 %v1606
        %1747 = vmatprep.subr.mxu0 0.0
        %1748 = vmatpush1.msra.mxu0 %v1609
        %1749 = vmatprep.subr.mxu0 0.0
        %1750 = vmatpush1.msra.mxu0 %v1612
        %1751 = vmatprep.subr.mxu0 0.0
        %1752 = vmatpush1.msra.mxu0 %v1615
        %1753 = vmatprep.subr.mxu0 0.0
        %1754 = vmatpush1.msra.mxu0 %v1618
        %1755 = vmatprep.subr.mxu0 0.0
        %1756 = vmatpush1.msra.mxu0 %v1621
        %1757 = vmatprep.subr.mxu0 0.0
        %1758 = vmatpush1.msra.mxu0 %v1624
        %1759 = vmatprep.subr.mxu0 0.0
        %1760 = vmatpush1.msra.mxu0 %v1627
        %1761 = vmatprep.subr.mxu0 0.0
        %1762 = vmatpush1.msra.mxu0 %v1630
        %1763 = vmatprep.subr.mxu0 0.0
        %1764 = vmatpush1.msra.mxu0 %v1633
        %1765 = vmatprep.subr.mxu0 0.0
        %1766 = vmatpush1.msra.mxu0 %v1636
        %1767 = vmatprep.subr.mxu0 0.0
        %1768 = vmatpush1.msra.mxu0 %v1639
        %1769 = vmatprep.subr.mxu0 0.0
        %1770 = vmatpush1.msra.mxu0 %v1642
        %1771 = vmatprep.subr.mxu0 0.0
        %1772 = vmatpush1.msra.mxu0 %v1645
        %1773 = vmatprep.subr.mxu0 0.0
        %1774 = vmatpush1.msra.mxu0 0.0
        %1775 = vmatprep.subr.mxu0 0.0
        %1776 = vmatpush1.msra.mxu0 0.0
        %1777 = vmatprep.subr.mxu0 0.0
        %1778 = vmatpush1.msra.mxu0 0.0
        %1779 = vmatprep.subr.mxu0 0.0
        %1780 = vmatpush1.msra.mxu0 0.0
        %1781 = vmatprep.subr.mxu0 0.0
        %1782 = vmatpush1.msra.mxu0 0.0
        %1783 = vmatprep.subr.mxu0 0.0
        %1784 = vmatpush1.msra.mxu0 0.0
        %1785 = vmatprep.subr.mxu0 0.0
        %1786 = vmatpush1.msra.mxu0 0.0
        %1787 = vmatprep.subr.mxu0 0.0
        %1788 = vmatpush1.msra.mxu0 0.0
        %1789 = vmatprep.subr.mxu0 0.0
        %1790 = vmatpush1.msra.mxu0 0.0
        %1791 = vmatprep.subr.mxu0 0.0
        %1792 = vmatpush1.msra.mxu0 0.0
        %1793 = vmatprep.subr.mxu0 0.0
        %1794 = vmatpush1.msra.mxu0 0.0
        %1795 = vmatprep.subr.mxu0 0.0
        %1796 = vmatpush1.msra.mxu0 0.0
        %1797 = vmatprep.subr.mxu0 0.0
        %1798 = vmatpush1.msra.mxu0 0.0
        %1799 = vmatprep.subr.mxu0 0.0
        %1800 = vmatpush1.msra.mxu0 0.0
        %1801 = vmatprep.subr.mxu0 0.0
        %1802 = vmatpush1.msra.mxu0 0.0
        %1803 = vmatprep.subr.mxu0 0.0
        %1804 = vmatpush1.msra.mxu0 0.0
        %1805 = vmatprep.mubr.f32.mxu0 0.0
        %1806 = vmatmul.mubr.f32.gmra.mrb[0].mxu0 %v1374
        %v1807 = vpop.f32.mrb[0].mxu0
        %v1808 = vadd.f32 %v1660, %v1807
        %v1809 = vpop.f32.mrb[0].mxu0
        %1810 = vmatprep.mubr.f32.mxu0 0.0
        %1811 = vmatmul.mubr.f32.gmra.mrb[0].mxu0 %v1375
        %v1812 = vpop.f32.mrb[0].mxu0
        %v1813 = vadd.f32 %v1660, %v1812
        %v1814 = vpop.f32.mrb[0].mxu0
        %1815 = vdwg.mxu0
        %v1816 = vlaneseq
        %v1817 = vand.u32 %v1816, 127
        %vm1818 = vcmp.ge.s32.totalorder %v1817, 0
        %vm1819 = vcmp.lt.s32.totalorder %v1817, 16
        %vm1820 = vmand %vm1818, %vm1819
        %v1821 = vsel %vm1820, 1, 0
        %v1822 = vcvt.s32.f32 %v1821
        %vm1823 = vcmp.ge.s32.totalorder %v1817, 16
        %vm1824 = vcmp.lt.s32.totalorder %v1817, 32
        %vm1825 = vmand %vm1823, %vm1824
        %v1826 = vsel %vm1825, 1, 0
        %v1827 = vcvt.s32.f32 %v1826
        %vm1828 = vcmp.ge.s32.totalorder %v1817, 32
        %vm1829 = vcmp.lt.s32.totalorder %v1817, 48
        %vm1830 = vmand %vm1828, %vm1829
        %v1831 = vsel %vm1830, 1, 0
        %v1832 = vcvt.s32.f32 %v1831
        %vm1833 = vcmp.ge.s32.totalorder %v1817, 48
        %vm1834 = vcmp.lt.s32.totalorder %v1817, 64
        %vm1835 = vmand %vm1833, %vm1834
        %v1836 = vsel %vm1835, 1, 0
        %v1837 = vcvt.s32.f32 %v1836
        %vm1838 = vcmp.ge.s32.totalorder %v1817, 64
        %vm1839 = vcmp.lt.s32.totalorder %v1817, 80
        %vm1840 = vmand %vm1838, %vm1839
        %v1841 = vsel %vm1840, 1, 0
        %v1842 = vcvt.s32.f32 %v1841
        %vm1843 = vcmp.ge.s32.totalorder %v1817, 80
        %vm1844 = vcmp.lt.s32.totalorder %v1817, 96
        %vm1845 = vmand %vm1843, %vm1844
        %v1846 = vsel %vm1845, 1, 0
        %v1847 = vcvt.s32.f32 %v1846
        %vm1848 = vcmp.ge.s32.totalorder %v1817, 96
        %vm1849 = vcmp.lt.s32.totalorder %v1817, 112
        %vm1850 = vmand %vm1848, %vm1849
        %v1851 = vsel %vm1850, 1, 0
        %v1852 = vcvt.s32.f32 %v1851
        %vm1853 = vcmp.ge.s32.totalorder %v1817, 112
        %vm1854 = vcmp.lt.s32.totalorder %v1817, 128
        %vm1855 = vmand %vm1853, %vm1854
        %v1856 = vsel %vm1855, 1, 0
        %v1857 = vcvt.s32.f32 %v1856
        %v1858 = vld [vmem:[%s893] sm:$0xff]
        %v1859 = vld [vmem:[%s893 + $0x8] sm:$0xff]
        %v1860 = vld [vmem:[%s893 + $0x10] sm:$0xff]
        %v1861 = vld [vmem:[%s893 + $0x18] sm:$0xff]
        %v1862 = vld [vmem:[%s893 + $0x20] sm:$0xff]
        %v1863 = vld [vmem:[%s893 + $0x28] sm:$0xff]
        %v1864 = vld [vmem:[%s893 + $0x30] sm:$0xff]
        %v1865 = vld [vmem:[%s893 + $0x38] sm:$0xff]
        %v1866 = vld [vmem:[%s893 + $0x40] sm:$0xff]
        %v1867 = vld [vmem:[%s893 + $0x48] sm:$0xff]
        %v1868 = vld [vmem:[%s893 + $0x50] sm:$0xff]
        %v1869 = vld [vmem:[%s893 + $0x58] sm:$0xff]
        %v1870 = vld [vmem:[%s893 + $0x60] sm:$0xff]
        %v1871 = vld [vmem:[%s893 + $0x68] sm:$0xff]
        %v1872 = vld [vmem:[%s893 + $0x70] sm:$0xff]
        %v1873 = vld [vmem:[%s893 + $0x78] sm:$0xff]
        %v1874 = vld [vmem:[%s1036] sm:$0x1]
        %v1875 = vmul.f32 %v1733, %v1822
        %1876 = vmatprep.subr.mxu0 0.0
        %1877 = vmatpush1.xpose.msra.mxu0 %v1875
        %1878 = vmatprep.subr.mxu0 0.0
        %1879 = vmatpush1.xpose.msra.mxu0 0.0
        %1880 = vmatprep.subr.mxu0 0.0
        %1881 = vmatpush1.xpose.msra.mxu0 0.0
        %1882 = vmatprep.subr.mxu0 0.0
        %1883 = vmatpush1.xpose.msra.mxu0 0.0
        %1884 = vmatprep.subr.mxu0 0.0
        %1885 = vmatpush1.xpose.msra.mxu0 0.0
        %1886 = vmatprep.subr.mxu0 0.0
        %1887 = vmatpush1.xpose.msra.mxu0 0.0
        %1888 = vmatprep.subr.mxu0 0.0
        %1889 = vmatpush1.xpose.msra.mxu0 0.0
        %1890 = vmatprep.subr.mxu0 0.0
        %1891 = vmatpush1.xpose.msra.mxu0 0.0
        %1892 = vmatprep.subr.mxu0 0.0
        %1893 = vmatpush1.xpose.msra.mxu0 0.0
        %1894 = vmatprep.subr.mxu0 0.0
        %1895 = vmatpush1.xpose.msra.mxu0 0.0
        %1896 = vmatprep.subr.mxu0 0.0
        %1897 = vmatpush1.xpose.msra.mxu0 0.0
        %1898 = vmatprep.subr.mxu0 0.0
        %1899 = vmatpush1.xpose.msra.mxu0 0.0
        %1900 = vmatprep.subr.mxu0 0.0
        %1901 = vmatpush1.xpose.msra.mxu0 0.0
        %1902 = vmatprep.subr.mxu0 0.0
        %1903 = vmatpush1.xpose.msra.mxu0 0.0
        %1904 = vmatprep.subr.mxu0 0.0
        %1905 = vmatpush1.xpose.msra.mxu0 0.0
        %1906 = vmatprep.subr.mxu0 0.0
        %1907 = vmatpush1.xpose.msra.mxu0 0.0
        %1908 = vmatprep.subr.mxu0 0.0
        %1909 = vmatpush1.xpose.msra.mxu0 0.0
        %1910 = vmatprep.subr.mxu0 0.0
        %1911 = vmatpush1.xpose.msra.mxu0 0.0
        %1912 = vmatprep.subr.mxu0 0.0
        %1913 = vmatpush1.xpose.msra.mxu0 0.0
        %1914 = vmatprep.subr.mxu0 0.0
        %1915 = vmatpush1.xpose.msra.mxu0 0.0
        %1916 = vmatprep.subr.mxu0 0.0
        %1917 = vmatpush1.xpose.msra.mxu0 0.0
        %1918 = vmatprep.subr.mxu0 0.0
        %1919 = vmatpush1.xpose.msra.mxu0 0.0
        %1920 = vmatprep.subr.mxu0 0.0
        %1921 = vmatpush1.xpose.msra.mxu0 0.0
        %1922 = vmatprep.subr.mxu0 0.0
        %1923 = vmatpush1.xpose.msra.mxu0 0.0
        %1924 = vmatprep.subr.mxu0 0.0
        %1925 = vmatpush1.xpose.msra.mxu0 0.0
        %1926 = vmatprep.subr.mxu0 0.0
        %1927 = vmatpush1.xpose.msra.mxu0 0.0
        %1928 = vmatprep.subr.mxu0 0.0
        %1929 = vmatpush1.xpose.msra.mxu0 0.0
        %1930 = vmatprep.subr.mxu0 0.0
        %1931 = vmatpush1.xpose.msra.mxu0 0.0
        %1932 = vmatprep.subr.mxu0 0.0
        %1933 = vmatpush1.xpose.msra.mxu0 0.0
        %1934 = vmatprep.subr.mxu0 0.0
        %1935 = vmatpush1.xpose.msra.mxu0 0.0
        %1936 = vmatprep.subr.mxu0 0.0
        %1937 = vmatpush1.xpose.msra.mxu0 0.0
        %1938 = vmatprep.subr.mxu0 0.0
        %1939 = vmatpush1.xpose.msra.mxu0 0.0
        %1940 = vmatprep.mubr.f32.mxu0 0.0
        %1941 = vmatmul.mubr.f32.gmra.mrb[0].mxu0 %v1512
        %v1942 = vpop.f32.mrb[0].mxu0
        %v1943 = vadd.f32 0.0, %v1942
        %v1944 = vpop.f32.mrb[0].mxu0
        %1945 = vdwg.mxu0
        %v1946 = vmul.f32 %v1943, 0.25
        %v1948 = vlaneseq
        %v1949 = vshrl.u32 %v1948, 7
        %v1950 = vsub.s32 0, %v1949
        %v1951 = vrot.slane %v1378, %v1950
        %v1953 = vadd.f32 %v1946, %v1951
        %vm1954 = vcmask 64512
        %v1955 = vsel %vm1954, %v1953, -inf
        %1956 = vmax.xlane.f32.xlu0 %v1955
        %v1957 = vpop.xlane.xlu0 %1956
        %v1958 = vsub.f32 %v1953, %v1957
        %v1959 = vmul.f32 %v1958, 1.442695
        %v1960 = vpow.pop %v1959
        %v1961 = vsel %vm1954, %v1960, 0.0
        %1962 = vadd.xlane.f32.xlu0 %v1961
        %v1963 = vpop.xlane.xlu0 %1962
        %v1964 = vrcp.pop %v1963
        %v1965 = vmul.f32 %v1960, %v1964
        %v1966 = vmul.f32 %v1808, %v1822
        %v1967 = vmul.f32 %v1733, %v1827
        %1968 = vmatprep.subr.mxu0 0.0
        %1969 = vmatpush1.xpose.msra.mxu0 %v1967
        %1970 = vmatprep.subr.mxu0 0.0
        %1971 = vmatpush1.xpose.msra.mxu0 0.0
        %1972 = vmatprep.subr.mxu0 0.0
        %1973 = vmatpush1.xpose.msra.mxu0 0.0
        %1974 = vmatprep.subr.mxu0 0.0
        %1975 = vmatpush1.xpose.msra.mxu0 0.0
        %1976 = vmatprep.subr.mxu0 0.0
        %1977 = vmatpush1.xpose.msra.mxu0 0.0
        %1978 = vmatprep.subr.mxu0 0.0
        %1979 = vmatpush1.xpose.msra.mxu0 0.0
        %1980 = vmatprep.subr.mxu0 0.0
        %1981 = vmatpush1.xpose.msra.mxu0 0.0
        %1982 = vmatprep.subr.mxu0 0.0
        %1983 = vmatpush1.xpose.msra.mxu0 0.0
        %1984 = vmatprep.subr.mxu0 0.0
        %1985 = vmatpush1.xpose.msra.mxu0 0.0
        %1986 = vmatprep.subr.mxu0 0.0
        %1987 = vmatpush1.xpose.msra.mxu0 0.0
        %1988 = vmatprep.subr.mxu0 0.0
        %1989 = vmatpush1.xpose.msra.mxu0 0.0
        %1990 = vmatprep.subr.mxu0 0.0
        %1991 = vmatpush1.xpose.msra.mxu0 0.0
        %1992 = vmatprep.subr.mxu0 0.0
        %1993 = vmatpush1.xpose.msra.mxu0 0.0
        %1994 = vmatprep.subr.mxu0 0.0
        %1995 = vmatpush1.xpose.msra.mxu0 0.0
        %1996 = vmatprep.subr.mxu0 0.0
        %1997 = vmatpush1.xpose.msra.mxu0 0.0
        %1998 = vmatprep.subr.mxu0 0.0
        %1999 = vmatpush1.xpose.msra.mxu0 0.0
        %2000 = vmatprep.subr.mxu0 0.0
        %2001 = vmatpush1.xpose.msra.mxu0 0.0
        %2002 = vmatprep.subr.mxu0 0.0
        %2003 = vmatpush1.xpose.msra.mxu0 0.0
        %2004 = vmatprep.subr.mxu0 0.0
        %2005 = vmatpush1.xpose.msra.mxu0 0.0
        %2006 = vmatprep.subr.mxu0 0.0
        %2007 = vmatpush1.xpose.msra.mxu0 0.0
        %2008 = vmatprep.subr.mxu0 0.0
        %2009 = vmatpush1.xpose.msra.mxu0 0.0
        %2010 = vmatprep.subr.mxu0 0.0
        %2011 = vmatpush1.xpose.msra.mxu0 0.0
        %2012 = vmatprep.subr.mxu0 0.0
        %2013 = vmatpush1.xpose.msra.mxu0 0.0
        %2014 = vmatprep.subr.mxu0 0.0
        %2015 = vmatpush1.xpose.msra.mxu0 0.0
        %2016 = vmatprep.subr.mxu0 0.0
        %2017 = vmatpush1.xpose.msra.mxu0 0.0
        %2018 = vmatprep.subr.mxu0 0.0
        %2019 = vmatpush1.xpose.msra.mxu0 0.0
        %2020 = vmatprep.subr.mxu0 0.0
        %2021 = vmatpush1.xpose.msra.mxu0 0.0
        %2022 = vmatprep.subr.mxu0 0.0
        %2023 = vmatpush1.xpose.msra.mxu0 0.0
        %2024 = vmatprep.subr.mxu0 0.0
        %2025 = vmatpush1.xpose.msra.mxu0 0.0
        %2026 = vmatprep.subr.mxu0 0.0
        %2027 = vmatpush1.xpose.msra.mxu0 0.0
        %2028 = vmatprep.subr.mxu0 0.0
        %2029 = vmatpush1.xpose.msra.mxu0 0.0
        %2030 = vmatprep.subr.mxu0 0.0
        %2031 = vmatpush1.xpose.msra.mxu0 0.0
        %2032 = vmatprep.mubr.f32.mxu0 0.0
        %2033 = vmatmul.mubr.f32.gmra.mrb[0].mxu0 %v1512
        %v2034 = vpop.f32.mrb[0].mxu0
        %v2035 = vadd.f32 0.0, %v2034
        %v2036 = vpop.f32.mrb[0].mxu0
        %2037 = vdwg.mxu0
        %v2038 = vmul.f32 %v2035, 0.25
        %v2039 = vadd.f32 %v2038, %v1951
        %v2040 = vsel %vm1954, %v2039, -inf
        %2041 = vmax.xlane.f32.xlu0 %v2040
        %v2042 = vpop.xlane.xlu0 %2041
        %v2043 = vsub.f32 %v2039, %v2042
        %v2044 = vmul.f32 %v2043, 1.442695
        %v2045 = vpow.pop %v2044
        %v2046 = vsel %vm1954, %v2045, 0.0
        %2047 = vadd.xlane.f32.xlu0 %v2046
        %v2048 = vpop.xlane.xlu0 %2047
        %v2049 = vrcp.pop %v2048
        %v2050 = vmul.f32 %v2045, %v2049
        %v2051 = vmul.f32 %v1808, %v1827
        %v2053 = vsel %vm1954, %v2050, 0
        %2055 = vmatprep.subr.mxu0 0.0
        %2056 = vmatpush1.msra.mxu0 %v2051
        %2057 = vmatprep.subr.mxu0 0.0
        %2058 = vmatpush1.msra.mxu0 0.0
        %2059 = vmatprep.subr.mxu0 0.0
        %2060 = vmatpush1.msra.mxu0 0.0
        %2061 = vmatprep.subr.mxu0 0.0
        %2062 = vmatpush1.msra.mxu0 0.0
        %2063 = vmatprep.subr.mxu0 0.0
        %2064 = vmatpush1.msra.mxu0 0.0
        %2065 = vmatprep.subr.mxu0 0.0
        %2066 = vmatpush1.msra.mxu0 0.0
        %2067 = vmatprep.subr.mxu0 0.0
        %2068 = vmatpush1.msra.mxu0 0.0
        %2069 = vmatprep.subr.mxu0 0.0
        %2070 = vmatpush1.msra.mxu0 0.0
        %2071 = vmatprep.subr.mxu0 0.0
        %2072 = vmatpush1.msra.mxu0 0.0
        %2073 = vmatprep.subr.mxu0 0.0
        %2074 = vmatpush1.msra.mxu0 0.0
        %2075 = vmatprep.subr.mxu0 0.0
        %2076 = vmatpush1.msra.mxu0 0.0
        %2077 = vmatprep.subr.mxu0 0.0
        %2078 = vmatpush1.msra.mxu0 0.0
        %2079 = vmatprep.subr.mxu0 0.0
        %2080 = vmatpush1.msra.mxu0 0.0
        %2081 = vmatprep.subr.mxu0 0.0
        %2082 = vmatpush1.msra.mxu0 0.0
        %2083 = vmatprep.subr.mxu0 0.0
        %2084 = vmatpush1.msra.mxu0 0.0
        %2085 = vmatprep.subr.mxu0 0.0
        %2086 = vmatpush1.msra.mxu0 0.0
        %2087 = vmatprep.subr.mxu0 0.0
        %2088 = vmatpush1.msra.mxu0 0.0
        %2089 = vmatprep.subr.mxu0 0.0
        %2090 = vmatpush1.msra.mxu0 0.0
        %2091 = vmatprep.subr.mxu0 0.0
        %2092 = vmatpush1.msra.mxu0 0.0
        %2093 = vmatprep.subr.mxu0 0.0
        %2094 = vmatpush1.msra.mxu0 0.0
        %2095 = vmatprep.subr.mxu0 0.0
        %2096 = vmatpush1.msra.mxu0 0.0
        %2097 = vmatprep.subr.mxu0 0.0
        %2098 = vmatpush1.msra.mxu0 0.0
        %2099 = vmatprep.subr.mxu0 0.0
        %2100 = vmatpush1.msra.mxu0 0.0
        %2101 = vmatprep.subr.mxu0 0.0
        %2102 = vmatpush1.msra.mxu0 0.0
        %2103 = vmatprep.subr.mxu0 0.0
        %2104 = vmatpush1.msra.mxu0 0.0
        %2105 = vmatprep.subr.mxu0 0.0
        %2106 = vmatpush1.msra.mxu0 0.0
        %2107 = vmatprep.subr.mxu0 0.0
        %2108 = vmatpush1.msra.mxu0 0.0
        %2109 = vmatprep.subr.mxu0 0.0
        %2110 = vmatpush1.msra.mxu0 0.0
        %2111 = vmatprep.subr.mxu0 0.0
        %2112 = vmatpush1.msra.mxu0 0.0
        %2113 = vmatprep.subr.mxu0 0.0
        %2114 = vmatpush1.msra.mxu0 0.0
        %2115 = vmatprep.subr.mxu0 0.0
        %2116 = vmatpush1.msra.mxu0 0.0
        %2117 = vmatprep.subr.mxu0 0.0
        %2118 = vmatpush1.msra.mxu0 0.0
        %2119 = vmatprep.mubr.f32.mxu0 0.0
        %2120 = vmatmul.mubr.f32.gmra.mrb[0].mxu0 %v2053
        %v2121 = vpop.f32.mrb[0].mxu0
        %v2122 = vadd.f32 0.0, %v2121
        %v2123 = vpop.f32.mrb[0].mxu0
        %2124 = vdwg.mxu0
        %v2126 = vsel %vm1954, %v1965, 0
        %2128 = vmatprep.subr.mxu0 0.0
        %2129 = vmatpush1.msra.mxu0 %v1966
        %2130 = vmatprep.subr.mxu0 0.0
        %2131 = vmatpush1.msra.mxu0 0.0
        %2132 = vmatprep.subr.mxu0 0.0
        %2133 = vmatpush1.msra.mxu0 0.0
        %2134 = vmatprep.subr.mxu0 0.0
        %2135 = vmatpush1.msra.mxu0 0.0
        %2136 = vmatprep.subr.mxu0 0.0
        %2137 = vmatpush1.msra.mxu0 0.0
        %2138 = vmatprep.subr.mxu0 0.0
        %2139 = vmatpush1.msra.mxu0 0.0
        %2140 = vmatprep.subr.mxu0 0.0
        %2141 = vmatpush1.msra.mxu0 0.0
        %2142 = vmatprep.subr.mxu0 0.0
        %2143 = vmatpush1.msra.mxu0 0.0
        %2144 = vmatprep.subr.mxu0 0.0
        %2145 = vmatpush1.msra.mxu0 0.0
        %2146 = vmatprep.subr.mxu0 0.0
        %2147 = vmatpush1.msra.mxu0 0.0
        %2148 = vmatprep.subr.mxu0 0.0
        %2149 = vmatpush1.msra.mxu0 0.0
        %2150 = vmatprep.subr.mxu0 0.0
        %2151 = vmatpush1.msra.mxu0 0.0
        %2152 = vmatprep.subr.mxu0 0.0
        %2153 = vmatpush1.msra.mxu0 0.0
        %2154 = vmatprep.subr.mxu0 0.0
        %2155 = vmatpush1.msra.mxu0 0.0
        %2156 = vmatprep.subr.mxu0 0.0
        %2157 = vmatpush1.msra.mxu0 0.0
        %2158 = vmatprep.subr.mxu0 0.0
        %2159 = vmatpush1.msra.mxu0 0.0
        %2160 = vmatprep.subr.mxu0 0.0
        %2161 = vmatpush1.msra.mxu0 0.0
        %2162 = vmatprep.subr.mxu0 0.0
        %2163 = vmatpush1.msra.mxu0 0.0
        %2164 = vmatprep.subr.mxu0 0.0
        %2165 = vmatpush1.msra.mxu0 0.0
        %2166 = vmatprep.subr.mxu0 0.0
        %2167 = vmatpush1.msra.mxu0 0.0
        %2168 = vmatprep.subr.mxu0 0.0
        %2169 = vmatpush1.msra.mxu0 0.0
        %2170 = vmatprep.subr.mxu0 0.0
        %2171 = vmatpush1.msra.mxu0 0.0
        %2172 = vmatprep.subr.mxu0 0.0
        %2173 = vmatpush1.msra.mxu0 0.0
        %2174 = vmatprep.subr.mxu0 0.0
        %2175 = vmatpush1.msra.mxu0 0.0
        %2176 = vmatprep.subr.mxu0 0.0
        %2177 = vmatpush1.msra.mxu0 0.0
        %2178 = vmatprep.subr.mxu0 0.0
        %2179 = vmatpush1.msra.mxu0 0.0
        %2180 = vmatprep.subr.mxu0 0.0
        %2181 = vmatpush1.msra.mxu0 0.0
        %2182 = vmatprep.subr.mxu0 0.0
        %2183 = vmatpush1.msra.mxu0 0.0
        %2184 = vmatprep.subr.mxu0 0.0
        %2185 = vmatpush1.msra.mxu0 0.0
        %2186 = vmatprep.subr.mxu0 0.0
        %2187 = vmatpush1.msra.mxu0 0.0
        %2188 = vmatprep.subr.mxu0 0.0
        %2189 = vmatpush1.msra.mxu0 0.0
        %2190 = vmatprep.subr.mxu0 0.0
        %2191 = vmatpush1.msra.mxu0 0.0
        %2192 = vmatprep.mubr.f32.mxu0 0.0
        %2193 = vmatmul.mubr.f32.gmra.mrb[0].mxu0 %v2126
        %v2194 = vpop.f32.mrb[0].mxu0
        %v2195 = vadd.f32 %v2122, %v2194
        %v2196 = vpop.f32.mrb[0].mxu0
        %2197 = vdwg.mxu0
        %v2198 = vmul.f32 %v1733, %v1832
        %2199 = vmatprep.subr.mxu0 0.0
        %2200 = vmatpush1.xpose.msra.mxu0 %v2198
        %2201 = vmatprep.subr.mxu0 0.0
        %2202 = vmatpush1.xpose.msra.mxu0 0.0
        %2203 = vmatprep.subr.mxu0 0.0
        %2204 = vmatpush1.xpose.msra.mxu0 0.0
        %2205 = vmatprep.subr.mxu0 0.0
        %2206 = vmatpush1.xpose.msra.mxu0 0.0
        %2207 = vmatprep.subr.mxu0 0.0
        %2208 = vmatpush1.xpose.msra.mxu0 0.0
        %2209 = vmatprep.subr.mxu0 0.0
        %2210 = vmatpush1.xpose.msra.mxu0 0.0
        %2211 = vmatprep.subr.mxu0 0.0
        %2212 = vmatpush1.xpose.msra.mxu0 0.0
        %2213 = vmatprep.subr.mxu0 0.0
        %2214 = vmatpush1.xpose.msra.mxu0 0.0
        %2215 = vmatprep.subr.mxu0 0.0
        %2216 = vmatpush1.xpose.msra.mxu0 0.0
        %2217 = vmatprep.subr.mxu0 0.0
        %2218 = vmatpush1.xpose.msra.mxu0 0.0
        %2219 = vmatprep.subr.mxu0 0.0
        %2220 = vmatpush1.xpose.msra.mxu0 0.0
        %2221 = vmatprep.subr.mxu0 0.0
        %2222 = vmatpush1.xpose.msra.mxu0 0.0
        %2223 = vmatprep.subr.mxu0 0.0
        %2224 = vmatpush1.xpose.msra.mxu0 0.0
        %2225 = vmatprep.subr.mxu0 0.0
        %2226 = vmatpush1.xpose.msra.mxu0 0.0
        %2227 = vmatprep.subr.mxu0 0.0
        %2228 = vmatpush1.xpose.msra.mxu0 0.0
        %2229 = vmatprep.subr.mxu0 0.0
        %2230 = vmatpush1.xpose.msra.mxu0 0.0
        %2231 = vmatprep.subr.mxu0 0.0
        %2232 = vmatpush1.xpose.msra.mxu0 0.0
        %2233 = vmatprep.subr.mxu0 0.0
        %2234 = vmatpush1.xpose.msra.mxu0 0.0
        %2235 = vmatprep.subr.mxu0 0.0
        %2236 = vmatpush1.xpose.msra.mxu0 0.0
        %2237 = vmatprep.subr.mxu0 0.0
        %2238 = vmatpush1.xpose.msra.mxu0 0.0
        %2239 = vmatprep.subr.mxu0 0.0
        %2240 = vmatpush1.xpose.msra.mxu0 0.0
        %2241 = vmatprep.subr.mxu0 0.0
        %2242 = vmatpush1.xpose.msra.mxu0 0.0
        %2243 = vmatprep.subr.mxu0 0.0
        %2244 = vmatpush1.xpose.msra.mxu0 0.0
        %2245 = vmatprep.subr.mxu0 0.0
        %2246 = vmatpush1.xpose.msra.mxu0 0.0
        %2247 = vmatprep.subr.mxu0 0.0
        %2248 = vmatpush1.xpose.msra.mxu0 0.0
        %2249 = vmatprep.subr.mxu0 0.0
        %2250 = vmatpush1.xpose.msra.mxu0 0.0
        %2251 = vmatprep.subr.mxu0 0.0
        %2252 = vmatpush1.xpose.msra.mxu0 0.0
        %2253 = vmatprep.subr.mxu0 0.0
        %2254 = vmatpush1.xpose.msra.mxu0 0.0
        %2255 = vmatprep.subr.mxu0 0.0
        %2256 = vmatpush1.xpose.msra.mxu0 0.0
        %2257 = vmatprep.subr.mxu0 0.0
        %2258 = vmatpush1.xpose.msra.mxu0 0.0
        %2259 = vmatprep.subr.mxu0 0.0
        %2260 = vmatpush1.xpose.msra.mxu0 0.0
        %2261 = vmatprep.subr.mxu0 0.0
        %2262 = vmatpush1.xpose.msra.mxu0 0.0
        %2263 = vmatprep.mubr.f32.mxu0 0.0
        %2264 = vmatmul.mubr.f32.gmra.mrb[0].mxu0 %v1512
        %v2265 = vpop.f32.mrb[0].mxu0
        %v2266 = vadd.f32 0.0, %v2265
        %v2267 = vpop.f32.mrb[0].mxu0
        %2268 = vdwg.mxu0
        %v2269 = vmul.f32 %v2266, 0.25
        %v2270 = vadd.f32 %v2269, %v1951
        %v2271 = vsel %vm1954, %v2270, -inf
        %2272 = vmax.xlane.f32.xlu0 %v2271
        %v2273 = vpop.xlane.xlu0 %2272
        %v2274 = vsub.f32 %v2270, %v2273
        %v2275 = vmul.f32 %v2274, 1.442695
        %v2276 = vpow.pop %v2275
        %v2277 = vsel %vm1954, %v2276, 0.0
        %2278 = vadd.xlane.f32.xlu0 %v2277
        %v2279 = vpop.xlane.xlu0 %2278
        %v2280 = vrcp.pop %v2279
        %v2281 = vmul.f32 %v2276, %v2280
        %v2282 = vmul.f32 %v1808, %v1832
        %v2284 = vsel %vm1954, %v2281, 0
        %2286 = vmatprep.subr.mxu0 0.0
        %2287 = vmatpush1.msra.mxu0 %v2282
        %2288 = vmatprep.subr.mxu0 0.0
        %2289 = vmatpush1.msra.mxu0 0.0
        %2290 = vmatprep.subr.mxu0 0.0
        %2291 = vmatpush1.msra.mxu0 0.0
        %2292 = vmatprep.subr.mxu0 0.0
        %2293 = vmatpush1.msra.mxu0 0.0
        %2294 = vmatprep.subr.mxu0 0.0
        %2295 = vmatpush1.msra.mxu0 0.0
        %2296 = vmatprep.subr.mxu0 0.0
        %2297 = vmatpush1.msra.mxu0 0.0
        %2298 = vmatprep.subr.mxu0 0.0
        %2299 = vmatpush1.msra.mxu0 0.0
        %2300 = vmatprep.subr.mxu0 0.0
        %2301 = vmatpush1.msra.mxu0 0.0
        %2302 = vmatprep.subr.mxu0 0.0
        %2303 = vmatpush1.msra.mxu0 0.0
        %2304 = vmatprep.subr.mxu0 0.0
        %2305 = vmatpush1.msra.mxu0 0.0
        %2306 = vmatprep.subr.mxu0 0.0
        %2307 = vmatpush1.msra.mxu0 0.0
        %2308 = vmatprep.subr.mxu0 0.0
        %2309 = vmatpush1.msra.mxu0 0.0
        %2310 = vmatprep.subr.mxu0 0.0
        %2311 = vmatpush1.msra.mxu0 0.0
        %2312 = vmatprep.subr.mxu0 0.0
        %2313 = vmatpush1.msra.mxu0 0.0
        %2314 = vmatprep.subr.mxu0 0.0
        %2315 = vmatpush1.msra.mxu0 0.0
        %2316 = vmatprep.subr.mxu0 0.0
        %2317 = vmatpush1.msra.mxu0 0.0
        %2318 = vmatprep.subr.mxu0 0.0
        %2319 = vmatpush1.msra.mxu0 0.0
        %2320 = vmatprep.subr.mxu0 0.0
        %2321 = vmatpush1.msra.mxu0 0.0
        %2322 = vmatprep.subr.mxu0 0.0
        %2323 = vmatpush1.msra.mxu0 0.0
        %2324 = vmatprep.subr.mxu0 0.0
        %2325 = vmatpush1.msra.mxu0 0.0
        %2326 = vmatprep.subr.mxu0 0.0
        %2327 = vmatpush1.msra.mxu0 0.0
        %2328 = vmatprep.subr.mxu0 0.0
        %2329 = vmatpush1.msra.mxu0 0.0
        %2330 = vmatprep.subr.mxu0 0.0
        %2331 = vmatpush1.msra.mxu0 0.0
        %2332 = vmatprep.subr.mxu0 0.0
        %2333 = vmatpush1.msra.mxu0 0.0
        %2334 = vmatprep.subr.mxu0 0.0
        %2335 = vmatpush1.msra.mxu0 0.0
        %2336 = vmatprep.subr.mxu0 0.0
        %2337 = vmatpush1.msra.mxu0 0.0
        %2338 = vmatprep.subr.mxu0 0.0
        %2339 = vmatpush1.msra.mxu0 0.0
        %2340 = vmatprep.subr.mxu0 0.0
        %2341 = vmatpush1.msra.mxu0 0.0
        %2342 = vmatprep.subr.mxu0 0.0
        %2343 = vmatpush1.msra.mxu0 0.0
        %2344 = vmatprep.subr.mxu0 0.0
        %2345 = vmatpush1.msra.mxu0 0.0
        %2346 = vmatprep.subr.mxu0 0.0
        %2347 = vmatpush1.msra.mxu0 0.0
        %2348 = vmatprep.subr.mxu0 0.0
        %2349 = vmatpush1.msra.mxu0 0.0
        %2350 = vmatprep.mubr.f32.mxu0 0.0
        %2351 = vmatmul.mubr.f32.gmra.mrb[0].mxu0 %v2284
        %v2352 = vpop.f32.mrb[0].mxu0
        %v2353 = vadd.f32 0.0, %v2352
        %v2354 = vpop.f32.mrb[0].mxu0
        %2355 = vdwg.mxu0
        %v2356 = vadd.f32 %v2195, %v2353
        %v2357 = vmul.f32 %v1733, %v1837
        %2358 = vmatprep.subr.mxu0 0.0
        %2359 = vmatpush1.xpose.msra.mxu0 %v2357
        %2360 = vmatprep.subr.mxu0 0.0
        %2361 = vmatpush1.xpose.msra.mxu0 0.0
        %2362 = vmatprep.subr.mxu0 0.0
        %2363 = vmatpush1.xpose.msra.mxu0 0.0
        %2364 = vmatprep.subr.mxu0 0.0
        %2365 = vmatpush1.xpose.msra.mxu0 0.0
        %2366 = vmatprep.subr.mxu0 0.0
        %2367 = vmatpush1.xpose.msra.mxu0 0.0
        %2368 = vmatprep.subr.mxu0 0.0
        %2369 = vmatpush1.xpose.msra.mxu0 0.0
        %2370 = vmatprep.subr.mxu0 0.0
        %2371 = vmatpush1.xpose.msra.mxu0 0.0
        %2372 = vmatprep.subr.mxu0 0.0
        %2373 = vmatpush1.xpose.msra.mxu0 0.0
        %2374 = vmatprep.subr.mxu0 0.0
        %2375 = vmatpush1.xpose.msra.mxu0 0.0
        %2376 = vmatprep.subr.mxu0 0.0
        %2377 = vmatpush1.xpose.msra.mxu0 0.0
        %2378 = vmatprep.subr.mxu0 0.0
        %2379 = vmatpush1.xpose.msra.mxu0 0.0
        %2380 = vmatprep.subr.mxu0 0.0
        %2381 = vmatpush1.xpose.msra.mxu0 0.0
        %2382 = vmatprep.subr.mxu0 0.0
        %2383 = vmatpush1.xpose.msra.mxu0 0.0
        %2384 = vmatprep.subr.mxu0 0.0
        %2385 = vmatpush1.xpose.msra.mxu0 0.0
        %2386 = vmatprep.subr.mxu0 0.0
        %2387 = vmatpush1.xpose.msra.mxu0 0.0
        %2388 = vmatprep.subr.mxu0 0.0
        %2389 = vmatpush1.xpose.msra.mxu0 0.0
        %2390 = vmatprep.subr.mxu0 0.0
        %2391 = vmatpush1.xpose.msra.mxu0 0.0
        %2392 = vmatprep.subr.mxu0 0.0
        %2393 = vmatpush1.xpose.msra.mxu0 0.0
        %2394 = vmatprep.subr.mxu0 0.0
        %2395 = vmatpush1.xpose.msra.mxu0 0.0
        %2396 = vmatprep.subr.mxu0 0.0
        %2397 = vmatpush1.xpose.msra.mxu0 0.0
        %2398 = vmatprep.subr.mxu0 0.0
        %2399 = vmatpush1.xpose.msra.mxu0 0.0
        %2400 = vmatprep.subr.mxu0 0.0
        %2401 = vmatpush1.xpose.msra.mxu0 0.0
        %2402 = vmatprep.subr.mxu0 0.0
        %2403 = vmatpush1.xpose.msra.mxu0 0.0
        %2404 = vmatprep.subr.mxu0 0.0
        %2405 = vmatpush1.xpose.msra.mxu0 0.0
        %2406 = vmatprep.subr.mxu0 0.0
        %2407 = vmatpush1.xpose.msra.mxu0 0.0
        %2408 = vmatprep.subr.mxu0 0.0
        %2409 = vmatpush1.xpose.msra.mxu0 0.0
        %2410 = vmatprep.subr.mxu0 0.0
        %2411 = vmatpush1.xpose.msra.mxu0 0.0
        %2412 = vmatprep.subr.mxu0 0.0
        %2413 = vmatpush1.xpose.msra.mxu0 0.0
        %2414 = vmatprep.subr.mxu0 0.0
        %2415 = vmatpush1.xpose.msra.mxu0 0.0
        %2416 = vmatprep.subr.mxu0 0.0
        %2417 = vmatpush1.xpose.msra.mxu0 0.0
        %2418 = vmatprep.subr.mxu0 0.0
        %2419 = vmatpush1.xpose.msra.mxu0 0.0
        %2420 = vmatprep.subr.mxu0 0.0
        %2421 = vmatpush1.xpose.msra.mxu0 0.0
        %2422 = vmatprep.mubr.f32.mxu0 0.0
        %2423 = vmatmul.mubr.f32.gmra.mrb[0].mxu0 %v1512
        %v2424 = vpop.f32.mrb[0].mxu0
        %v2425 = vadd.f32 0.0, %v2424
        %v2426 = vpop.f32.mrb[0].mxu0
        %2427 = vdwg.mxu0
        %v2428 = vmul.f32 %v2425, 0.25
        %v2429 = vadd.f32 %v2428, %v1951
        %v2430 = vsel %vm1954, %v2429, -inf
        %2431 = vmax.xlane.f32.xlu0 %v2430
        %v2432 = vpop.xlane.xlu0 %2431
        %v2433 = vsub.f32 %v2429, %v2432
        %v2434 = vmul.f32 %v2433, 1.442695
        %v2435 = vpow.pop %v2434
        %v2436 = vsel %vm1954, %v2435, 0.0
        %2437 = vadd.xlane.f32.xlu0 %v2436
        %v2438 = vpop.xlane.xlu0 %2437
        %v2439 = vrcp.pop %v2438
        %v2440 = vmul.f32 %v2435, %v2439
        %v2441 = vmul.f32 %v1808, %v1837
        %v2443 = vsel %vm1954, %v2440, 0
        %2445 = vmatprep.subr.mxu0 0.0
        %2446 = vmatpush1.msra.mxu0 %v2441
        %2447 = vmatprep.subr.mxu0 0.0
        %2448 = vmatpush1.msra.mxu0 0.0
        %2449 = vmatprep.subr.mxu0 0.0
        %2450 = vmatpush1.msra.mxu0 0.0
        %2451 = vmatprep.subr.mxu0 0.0
        %2452 = vmatpush1.msra.mxu0 0.0
        %2453 = vmatprep.subr.mxu0 0.0
        %2454 = vmatpush1.msra.mxu0 0.0
        %2455 = vmatprep.subr.mxu0 0.0
        %2456 = vmatpush1.msra.mxu0 0.0
        %2457 = vmatprep.subr.mxu0 0.0
        %2458 = vmatpush1.msra.mxu0 0.0
        %2459 = vmatprep.subr.mxu0 0.0
        %2460 = vmatpush1.msra.mxu0 0.0
        %2461 = vmatprep.subr.mxu0 0.0
        %2462 = vmatpush1.msra.mxu0 0.0
        %2463 = vmatprep.subr.mxu0 0.0
        %2464 = vmatpush1.msra.mxu0 0.0
        %2465 = vmatprep.subr.mxu0 0.0
        %2466 = vmatpush1.msra.mxu0 0.0
        %2467 = vmatprep.subr.mxu0 0.0
        %2468 = vmatpush1.msra.mxu0 0.0
        %2469 = vmatprep.subr.mxu0 0.0
        %2470 = vmatpush1.msra.mxu0 0.0
        %2471 = vmatprep.subr.mxu0 0.0
        %2472 = vmatpush1.msra.mxu0 0.0
        %2473 = vmatprep.subr.mxu0 0.0
        %2474 = vmatpush1.msra.mxu0 0.0
        %2475 = vmatprep.subr.mxu0 0.0
        %2476 = vmatpush1.msra.mxu0 0.0
        %2477 = vmatprep.subr.mxu0 0.0
        %2478 = vmatpush1.msra.mxu0 0.0
        %2479 = vmatprep.subr.mxu0 0.0
        %2480 = vmatpush1.msra.mxu0 0.0
        %2481 = vmatprep.subr.mxu0 0.0
        %2482 = vmatpush1.msra.mxu0 0.0
        %2483 = vmatprep.subr.mxu0 0.0
        %2484 = vmatpush1.msra.mxu0 0.0
        %2485 = vmatprep.subr.mxu0 0.0
        %2486 = vmatpush1.msra.mxu0 0.0
        %2487 = vmatprep.subr.mxu0 0.0
        %2488 = vmatpush1.msra.mxu0 0.0
        %2489 = vmatprep.subr.mxu0 0.0
        %2490 = vmatpush1.msra.mxu0 0.0
        %2491 = vmatprep.subr.mxu0 0.0
        %2492 = vmatpush1.msra.mxu0 0.0
        %2493 = vmatprep.subr.mxu0 0.0
        %2494 = vmatpush1.msra.mxu0 0.0
        %2495 = vmatprep.subr.mxu0 0.0
        %2496 = vmatpush1.msra.mxu0 0.0
        %2497 = vmatprep.subr.mxu0 0.0
        %2498 = vmatpush1.msra.mxu0 0.0
        %2499 = vmatprep.subr.mxu0 0.0
        %2500 = vmatpush1.msra.mxu0 0.0
        %2501 = vmatprep.subr.mxu0 0.0
        %2502 = vmatpush1.msra.mxu0 0.0
        %2503 = vmatprep.subr.mxu0 0.0
        %2504 = vmatpush1.msra.mxu0 0.0
        %2505 = vmatprep.subr.mxu0 0.0
        %2506 = vmatpush1.msra.mxu0 0.0
        %2507 = vmatprep.subr.mxu0 0.0
        %2508 = vmatpush1.msra.mxu0 0.0
        %2509 = vmatprep.mubr.f32.mxu0 0.0
        %2510 = vmatmul.mubr.f32.gmra.mrb[0].mxu0 %v2443
        %v2511 = vpop.f32.mrb[0].mxu0
        %v2512 = vadd.f32 0.0, %v2511
        %v2513 = vpop.f32.mrb[0].mxu0
        %2514 = vdwg.mxu0
        %v2515 = vadd.f32 %v2356, %v2512
        %v2516 = vmul.f32 %v1733, %v1842
        %2517 = vmatprep.subr.mxu0 0.0
        %2518 = vmatpush1.xpose.msra.mxu0 %v2516
        %2519 = vmatprep.subr.mxu0 0.0
        %2520 = vmatpush1.xpose.msra.mxu0 0.0
        %2521 = vmatprep.subr.mxu0 0.0
        %2522 = vmatpush1.xpose.msra.mxu0 0.0
        %2523 = vmatprep.subr.mxu0 0.0
        %2524 = vmatpush1.xpose.msra.mxu0 0.0
        %2525 = vmatprep.subr.mxu0 0.0
        %2526 = vmatpush1.xpose.msra.mxu0 0.0
        %2527 = vmatprep.subr.mxu0 0.0
        %2528 = vmatpush1.xpose.msra.mxu0 0.0
        %2529 = vmatprep.subr.mxu0 0.0
        %2530 = vmatpush1.xpose.msra.mxu0 0.0
        %2531 = vmatprep.subr.mxu0 0.0
        %2532 = vmatpush1.xpose.msra.mxu0 0.0
        %2533 = vmatprep.subr.mxu0 0.0
        %2534 = vmatpush1.xpose.msra.mxu0 0.0
        %2535 = vmatprep.subr.mxu0 0.0
        %2536 = vmatpush1.xpose.msra.mxu0 0.0
        %2537 = vmatprep.subr.mxu0 0.0
        %2538 = vmatpush1.xpose.msra.mxu0 0.0
        %2539 = vmatprep.subr.mxu0 0.0
        %2540 = vmatpush1.xpose.msra.mxu0 0.0
        %2541 = vmatprep.subr.mxu0 0.0
        %2542 = vmatpush1.xpose.msra.mxu0 0.0
        %2543 = vmatprep.subr.mxu0 0.0
        %2544 = vmatpush1.xpose.msra.mxu0 0.0
        %2545 = vmatprep.subr.mxu0 0.0
        %2546 = vmatpush1.xpose.msra.mxu0 0.0
        %2547 = vmatprep.subr.mxu0 0.0
        %2548 = vmatpush1.xpose.msra.mxu0 0.0
        %2549 = vmatprep.subr.mxu0 0.0
        %2550 = vmatpush1.xpose.msra.mxu0 0.0
        %2551 = vmatprep.subr.mxu0 0.0
        %2552 = vmatpush1.xpose.msra.mxu0 0.0
        %2553 = vmatprep.subr.mxu0 0.0
        %2554 = vmatpush1.xpose.msra.mxu0 0.0
        %2555 = vmatprep.subr.mxu0 0.0
        %2556 = vmatpush1.xpose.msra.mxu0 0.0
        %2557 = vmatprep.subr.mxu0 0.0
        %2558 = vmatpush1.xpose.msra.mxu0 0.0
        %2559 = vmatprep.subr.mxu0 0.0
        %2560 = vmatpush1.xpose.msra.mxu0 0.0
        %2561 = vmatprep.subr.mxu0 0.0
        %2562 = vmatpush1.xpose.msra.mxu0 0.0
        %2563 = vmatprep.subr.mxu0 0.0
        %2564 = vmatpush1.xpose.msra.mxu0 0.0
        %2565 = vmatprep.subr.mxu0 0.0
        %2566 = vmatpush1.xpose.msra.mxu0 0.0
        %2567 = vmatprep.subr.mxu0 0.0
        %2568 = vmatpush1.xpose.msra.mxu0 0.0
        %2569 = vmatprep.subr.mxu0 0.0
        %2570 = vmatpush1.xpose.msra.mxu0 0.0
        %2571 = vmatprep.subr.mxu0 0.0
        %2572 = vmatpush1.xpose.msra.mxu0 0.0
        %2573 = vmatprep.subr.mxu0 0.0
        %2574 = vmatpush1.xpose.msra.mxu0 0.0
        %2575 = vmatprep.subr.mxu0 0.0
        %2576 = vmatpush1.xpose.msra.mxu0 0.0
        %2577 = vmatprep.subr.mxu0 0.0
        %2578 = vmatpush1.xpose.msra.mxu0 0.0
        %2579 = vmatprep.subr.mxu0 0.0
        %2580 = vmatpush1.xpose.msra.mxu0 0.0
        %2581 = vmatprep.mubr.f32.mxu0 0.0
        %2582 = vmatmul.mubr.f32.gmra.mrb[0].mxu0 %v1512
        %v2583 = vpop.f32.mrb[0].mxu0
        %v2584 = vadd.f32 0.0, %v2583
        %v2585 = vpop.f32.mrb[0].mxu0
        %2586 = vdwg.mxu0
        %v2587 = vmul.f32 %v2584, 0.25
        %v2588 = vadd.f32 %v2587, %v1951
        %v2589 = vsel %vm1954, %v2588, -inf
        %2590 = vmax.xlane.f32.xlu0 %v2589
        %v2591 = vpop.xlane.xlu0 %2590
        %v2592 = vsub.f32 %v2588, %v2591
        %v2593 = vmul.f32 %v2592, 1.442695
        %v2594 = vpow.pop %v2593
        %v2595 = vsel %vm1954, %v2594, 0.0
        %2596 = vadd.xlane.f32.xlu0 %v2595
        %v2597 = vpop.xlane.xlu0 %2596
        %v2598 = vrcp.pop %v2597
        %v2599 = vmul.f32 %v2594, %v2598
        %v2600 = vmul.f32 %v1808, %v1842
        %v2602 = vsel %vm1954, %v2599, 0
        %2604 = vmatprep.subr.mxu0 0.0
        %2605 = vmatpush1.msra.mxu0 %v2600
        %2606 = vmatprep.subr.mxu0 0.0
        %2607 = vmatpush1.msra.mxu0 0.0
        %2608 = vmatprep.subr.mxu0 0.0
        %2609 = vmatpush1.msra.mxu0 0.0
        %2610 = vmatprep.subr.mxu0 0.0
        %2611 = vmatpush1.msra.mxu0 0.0
        %2612 = vmatprep.subr.mxu0 0.0
        %2613 = vmatpush1.msra.mxu0 0.0
        %2614 = vmatprep.subr.mxu0 0.0
        %2615 = vmatpush1.msra.mxu0 0.0
        %2616 = vmatprep.subr.mxu0 0.0
        %2617 = vmatpush1.msra.mxu0 0.0
        %2618 = vmatprep.subr.mxu0 0.0
        %2619 = vmatpush1.msra.mxu0 0.0
        %2620 = vmatprep.subr.mxu0 0.0
        %2621 = vmatpush1.msra.mxu0 0.0
        %2622 = vmatprep.subr.mxu0 0.0
        %2623 = vmatpush1.msra.mxu0 0.0
        %2624 = vmatprep.subr.mxu0 0.0
        %2625 = vmatpush1.msra.mxu0 0.0
        %2626 = vmatprep.subr.mxu0 0.0
        %2627 = vmatpush1.msra.mxu0 0.0
        %2628 = vmatprep.subr.mxu0 0.0
        %2629 = vmatpush1.msra.mxu0 0.0
        %2630 = vmatprep.subr.mxu0 0.0
        %2631 = vmatpush1.msra.mxu0 0.0
        %2632 = vmatprep.subr.mxu0 0.0
        %2633 = vmatpush1.msra.mxu0 0.0
        %2634 = vmatprep.subr.mxu0 0.0
        %2635 = vmatpush1.msra.mxu0 0.0
        %2636 = vmatprep.subr.mxu0 0.0
        %2637 = vmatpush1.msra.mxu0 0.0
        %2638 = vmatprep.subr.mxu0 0.0
        %2639 = vmatpush1.msra.mxu0 0.0
        %2640 = vmatprep.subr.mxu0 0.0
        %2641 = vmatpush1.msra.mxu0 0.0
        %2642 = vmatprep.subr.mxu0 0.0
        %2643 = vmatpush1.msra.mxu0 0.0
        %2644 = vmatprep.subr.mxu0 0.0
        %2645 = vmatpush1.msra.mxu0 0.0
        %2646 = vmatprep.subr.mxu0 0.0
        %2647 = vmatpush1.msra.mxu0 0.0
        %2648 = vmatprep.subr.mxu0 0.0
        %2649 = vmatpush1.msra.mxu0 0.0
        %2650 = vmatprep.subr.mxu0 0.0
        %2651 = vmatpush1.msra.mxu0 0.0
        %2652 = vmatprep.subr.mxu0 0.0
        %2653 = vmatpush1.msra.mxu0 0.0
        %2654 = vmatprep.subr.mxu0 0.0
        %2655 = vmatpush1.msra.mxu0 0.0
        %2656 = vmatprep.subr.mxu0 0.0
        %2657 = vmatpush1.msra.mxu0 0.0
        %2658 = vmatprep.subr.mxu0 0.0
        %2659 = vmatpush1.msra.mxu0 0.0
        %2660 = vmatprep.subr.mxu0 0.0
        %2661 = vmatpush1.msra.mxu0 0.0
        %2662 = vmatprep.subr.mxu0 0.0
        %2663 = vmatpush1.msra.mxu0 0.0
        %2664 = vmatprep.subr.mxu0 0.0
        %2665 = vmatpush1.msra.mxu0 0.0
        %2666 = vmatprep.subr.mxu0 0.0
        %2667 = vmatpush1.msra.mxu0 0.0
        %2668 = vmatprep.mubr.f32.mxu0 0.0
        %2669 = vmatmul.mubr.f32.gmra.mrb[0].mxu0 %v2602
        %v2670 = vpop.f32.mrb[0].mxu0
        %v2671 = vadd.f32 0.0, %v2670
        %v2672 = vpop.f32.mrb[0].mxu0
        %2673 = vdwg.mxu0
        %v2674 = vadd.f32 %v2515, %v2671
        %v2675 = vmul.f32 %v1733, %v1847
        %2676 = vmatprep.subr.mxu0 0.0
        %2677 = vmatpush1.xpose.msra.mxu0 %v2675
        %2678 = vmatprep.subr.mxu0 0.0
        %2679 = vmatpush1.xpose.msra.mxu0 0.0
        %2680 = vmatprep.subr.mxu0 0.0
        %2681 = vmatpush1.xpose.msra.mxu0 0.0
        %2682 = vmatprep.subr.mxu0 0.0
        %2683 = vmatpush1.xpose.msra.mxu0 0.0
        %2684 = vmatprep.subr.mxu0 0.0
        %2685 = vmatpush1.xpose.msra.mxu0 0.0
        %2686 = vmatprep.subr.mxu0 0.0
        %2687 = vmatpush1.xpose.msra.mxu0 0.0
        %2688 = vmatprep.subr.mxu0 0.0
        %2689 = vmatpush1.xpose.msra.mxu0 0.0
        %2690 = vmatprep.subr.mxu0 0.0
        %2691 = vmatpush1.xpose.msra.mxu0 0.0
        %2692 = vmatprep.subr.mxu0 0.0
        %2693 = vmatpush1.xpose.msra.mxu0 0.0
        %2694 = vmatprep.subr.mxu0 0.0
        %2695 = vmatpush1.xpose.msra.mxu0 0.0
        %2696 = vmatprep.subr.mxu0 0.0
        %2697 = vmatpush1.xpose.msra.mxu0 0.0
        %2698 = vmatprep.subr.mxu0 0.0
        %2699 = vmatpush1.xpose.msra.mxu0 0.0
        %2700 = vmatprep.subr.mxu0 0.0
        %2701 = vmatpush1.xpose.msra.mxu0 0.0
        %2702 = vmatprep.subr.mxu0 0.0
        %2703 = vmatpush1.xpose.msra.mxu0 0.0
        %2704 = vmatprep.subr.mxu0 0.0
        %2705 = vmatpush1.xpose.msra.mxu0 0.0
        %2706 = vmatprep.subr.mxu0 0.0
        %2707 = vmatpush1.xpose.msra.mxu0 0.0
        %2708 = vmatprep.subr.mxu0 0.0
        %2709 = vmatpush1.xpose.msra.mxu0 0.0
        %2710 = vmatprep.subr.mxu0 0.0
        %2711 = vmatpush1.xpose.msra.mxu0 0.0
        %2712 = vmatprep.subr.mxu0 0.0
        %2713 = vmatpush1.xpose.msra.mxu0 0.0
        %2714 = vmatprep.subr.mxu0 0.0
        %2715 = vmatpush1.xpose.msra.mxu0 0.0
        %2716 = vmatprep.subr.mxu0 0.0
        %2717 = vmatpush1.xpose.msra.mxu0 0.0
        %2718 = vmatprep.subr.mxu0 0.0
        %2719 = vmatpush1.xpose.msra.mxu0 0.0
        %2720 = vmatprep.subr.mxu0 0.0
        %2721 = vmatpush1.xpose.msra.mxu0 0.0
        %2722 = vmatprep.subr.mxu0 0.0
        %2723 = vmatpush1.xpose.msra.mxu0 0.0
        %2724 = vmatprep.subr.mxu0 0.0
        %2725 = vmatpush1.xpose.msra.mxu0 0.0
        %2726 = vmatprep.subr.mxu0 0.0
        %2727 = vmatpush1.xpose.msra.mxu0 0.0
        %2728 = vmatprep.subr.mxu0 0.0
        %2729 = vmatpush1.xpose.msra.mxu0 0.0
        %2730 = vmatprep.subr.mxu0 0.0
        %2731 = vmatpush1.xpose.msra.mxu0 0.0
        %2732 = vmatprep.subr.mxu0 0.0
        %2733 = vmatpush1.xpose.msra.mxu0 0.0
        %2734 = vmatprep.subr.mxu0 0.0
        %2735 = vmatpush1.xpose.msra.mxu0 0.0
        %2736 = vmatprep.subr.mxu0 0.0
        %2737 = vmatpush1.xpose.msra.mxu0 0.0
        %2738 = vmatprep.subr.mxu0 0.0
        %2739 = vmatpush1.xpose.msra.mxu0 0.0
        %2740 = vmatprep.mubr.f32.mxu0 0.0
        %2741 = vmatmul.mubr.f32.gmra.mrb[0].mxu0 %v1512
        %v2742 = vpop.f32.mrb[0].mxu0
        %v2743 = vadd.f32 0.0, %v2742
        %v2744 = vpop.f32.mrb[0].mxu0
        %2745 = vdwg.mxu0
        %v2746 = vmul.f32 %v2743, 0.25
        %v2747 = vadd.f32 %v2746, %v1951
        %v2748 = vsel %vm1954, %v2747, -inf
        %2749 = vmax.xlane.f32.xlu0 %v2748
        %v2750 = vpop.xlane.xlu0 %2749
        %v2751 = vsub.f32 %v2747, %v2750
        %v2752 = vmul.f32 %v2751, 1.442695
        %v2753 = vpow.pop %v2752
        %v2754 = vsel %vm1954, %v2753, 0.0
        %2755 = vadd.xlane.f32.xlu0 %v2754
        %v2756 = vpop.xlane.xlu0 %2755
        %v2757 = vrcp.pop %v2756
        %v2758 = vmul.f32 %v2753, %v2757
        %v2759 = vmul.f32 %v1808, %v1847
        %v2761 = vsel %vm1954, %v2758, 0
        %2763 = vmatprep.subr.mxu0 0.0
        %2764 = vmatpush1.msra.mxu0 %v2759
        %2765 = vmatprep.subr.mxu0 0.0
        %2766 = vmatpush1.msra.mxu0 0.0
        %2767 = vmatprep.subr.mxu0 0.0
        %2768 = vmatpush1.msra.mxu0 0.0
        %2769 = vmatprep.subr.mxu0 0.0
        %2770 = vmatpush1.msra.mxu0 0.0
        %2771 = vmatprep.subr.mxu0 0.0
        %2772 = vmatpush1.msra.mxu0 0.0
        %2773 = vmatprep.subr.mxu0 0.0
        %2774 = vmatpush1.msra.mxu0 0.0
        %2775 = vmatprep.subr.mxu0 0.0
        %2776 = vmatpush1.msra.mxu0 0.0
        %2777 = vmatprep.subr.mxu0 0.0
        %2778 = vmatpush1.msra.mxu0 0.0
        %2779 = vmatprep.subr.mxu0 0.0
        %2780 = vmatpush1.msra.mxu0 0.0
        %2781 = vmatprep.subr.mxu0 0.0
        %2782 = vmatpush1.msra.mxu0 0.0
        %2783 = vmatprep.subr.mxu0 0.0
        %2784 = vmatpush1.msra.mxu0 0.0
        %2785 = vmatprep.subr.mxu0 0.0
        %2786 = vmatpush1.msra.mxu0 0.0
        %2787 = vmatprep.subr.mxu0 0.0
        %2788 = vmatpush1.msra.mxu0 0.0
        %2789 = vmatprep.subr.mxu0 0.0
        %2790 = vmatpush1.msra.mxu0 0.0
        %2791 = vmatprep.subr.mxu0 0.0
        %2792 = vmatpush1.msra.mxu0 0.0
        %2793 = vmatprep.subr.mxu0 0.0
        %2794 = vmatpush1.msra.mxu0 0.0
        %2795 = vmatprep.subr.mxu0 0.0
        %2796 = vmatpush1.msra.mxu0 0.0
        %2797 = vmatprep.subr.mxu0 0.0
        %2798 = vmatpush1.msra.mxu0 0.0
        %2799 = vmatprep.subr.mxu0 0.0
        %2800 = vmatpush1.msra.mxu0 0.0
        %2801 = vmatprep.subr.mxu0 0.0
        %2802 = vmatpush1.msra.mxu0 0.0
        %2803 = vmatprep.subr.mxu0 0.0
        %2804 = vmatpush1.msra.mxu0 0.0
        %2805 = vmatprep.subr.mxu0 0.0
        %2806 = vmatpush1.msra.mxu0 0.0
        %2807 = vmatprep.subr.mxu0 0.0
        %2808 = vmatpush1.msra.mxu0 0.0
        %2809 = vmatprep.subr.mxu0 0.0
        %2810 = vmatpush1.msra.mxu0 0.0
        %2811 = vmatprep.subr.mxu0 0.0
        %2812 = vmatpush1.msra.mxu0 0.0
        %2813 = vmatprep.subr.mxu0 0.0
        %2814 = vmatpush1.msra.mxu0 0.0
        %2815 = vmatprep.subr.mxu0 0.0
        %2816 = vmatpush1.msra.mxu0 0.0
        %2817 = vmatprep.subr.mxu0 0.0
        %2818 = vmatpush1.msra.mxu0 0.0
        %2819 = vmatprep.subr.mxu0 0.0
        %2820 = vmatpush1.msra.mxu0 0.0
        %2821 = vmatprep.subr.mxu0 0.0
        %2822 = vmatpush1.msra.mxu0 0.0
        %2823 = vmatprep.subr.mxu0 0.0
        %2824 = vmatpush1.msra.mxu0 0.0
        %2825 = vmatprep.subr.mxu0 0.0
        %2826 = vmatpush1.msra.mxu0 0.0
        %2827 = vmatprep.mubr.f32.mxu0 0.0
        %2828 = vmatmul.mubr.f32.gmra.mrb[0].mxu0 %v2761
        %v2829 = vpop.f32.mrb[0].mxu0
        %v2830 = vadd.f32 0.0, %v2829
        %v2831 = vpop.f32.mrb[0].mxu0
        %2832 = vdwg.mxu0
        %v2833 = vadd.f32 %v2674, %v2830
        %v2834 = vmul.f32 %v1733, %v1852
        %2835 = vmatprep.subr.mxu0 0.0
        %2836 = vmatpush1.xpose.msra.mxu0 %v2834
        %2837 = vmatprep.subr.mxu0 0.0
        %2838 = vmatpush1.xpose.msra.mxu0 0.0
        %2839 = vmatprep.subr.mxu0 0.0
        %2840 = vmatpush1.xpose.msra.mxu0 0.0
        %2841 = vmatprep.subr.mxu0 0.0
        %2842 = vmatpush1.xpose.msra.mxu0 0.0
        %2843 = vmatprep.subr.mxu0 0.0
        %2844 = vmatpush1.xpose.msra.mxu0 0.0
        %2845 = vmatprep.subr.mxu0 0.0
        %2846 = vmatpush1.xpose.msra.mxu0 0.0
        %2847 = vmatprep.subr.mxu0 0.0
        %2848 = vmatpush1.xpose.msra.mxu0 0.0
        %2849 = vmatprep.subr.mxu0 0.0
        %2850 = vmatpush1.xpose.msra.mxu0 0.0
        %2851 = vmatprep.subr.mxu0 0.0
        %2852 = vmatpush1.xpose.msra.mxu0 0.0
        %2853 = vmatprep.subr.mxu0 0.0
        %2854 = vmatpush1.xpose.msra.mxu0 0.0
        %2855 = vmatprep.subr.mxu0 0.0
        %2856 = vmatpush1.xpose.msra.mxu0 0.0
        %2857 = vmatprep.subr.mxu0 0.0
        %2858 = vmatpush1.xpose.msra.mxu0 0.0
        %2859 = vmatprep.subr.mxu0 0.0
        %2860 = vmatpush1.xpose.msra.mxu0 0.0
        %2861 = vmatprep.subr.mxu0 0.0
        %2862 = vmatpush1.xpose.msra.mxu0 0.0
        %2863 = vmatprep.subr.mxu0 0.0
        %2864 = vmatpush1.xpose.msra.mxu0 0.0
        %2865 = vmatprep.subr.mxu0 0.0
        %2866 = vmatpush1.xpose.msra.mxu0 0.0
        %2867 = vmatprep.subr.mxu0 0.0
        %2868 = vmatpush1.xpose.msra.mxu0 0.0
        %2869 = vmatprep.subr.mxu0 0.0
        %2870 = vmatpush1.xpose.msra.mxu0 0.0
        %2871 = vmatprep.subr.mxu0 0.0
        %2872 = vmatpush1.xpose.msra.mxu0 0.0
        %2873 = vmatprep.subr.mxu0 0.0
        %2874 = vmatpush1.xpose.msra.mxu0 0.0
        %2875 = vmatprep.subr.mxu0 0.0
        %2876 = vmatpush1.xpose.msra.mxu0 0.0
        %2877 = vmatprep.subr.mxu0 0.0
        %2878 = vmatpush1.xpose.msra.mxu0 0.0
        %2879 = vmatprep.subr.mxu0 0.0
        %2880 = vmatpush1.xpose.msra.mxu0 0.0
        %2881 = vmatprep.subr.mxu0 0.0
        %2882 = vmatpush1.xpose.msra.mxu0 0.0
        %2883 = vmatprep.subr.mxu0 0.0
        %2884 = vmatpush1.xpose.msra.mxu0 0.0
        %2885 = vmatprep.subr.mxu0 0.0
        %2886 = vmatpush1.xpose.msra.mxu0 0.0
        %2887 = vmatprep.subr.mxu0 0.0
        %2888 = vmatpush1.xpose.msra.mxu0 0.0
        %2889 = vmatprep.subr.mxu0 0.0
        %2890 = vmatpush1.xpose.msra.mxu0 0.0
        %2891 = vmatprep.subr.mxu0 0.0
        %2892 = vmatpush1.xpose.msra.mxu0 0.0
        %2893 = vmatprep.subr.mxu0 0.0
        %2894 = vmatpush1.xpose.msra.mxu0 0.0
        %2895 = vmatprep.subr.mxu0 0.0
        %2896 = vmatpush1.xpose.msra.mxu0 0.0
        %2897 = vmatprep.subr.mxu0 0.0
        %2898 = vmatpush1.xpose.msra.mxu0 0.0
        %2899 = vmatprep.mubr.f32.mxu0 0.0
        %2900 = vmatmul.mubr.f32.gmra.mrb[0].mxu0 %v1512
        %v2901 = vpop.f32.mrb[0].mxu0
        %v2902 = vadd.f32 0.0, %v2901
        %v2903 = vpop.f32.mrb[0].mxu0
        %2904 = vdwg.mxu0
        %v2905 = vmul.f32 %v2902, 0.25
        %v2906 = vadd.f32 %v2905, %v1951
        %v2907 = vsel %vm1954, %v2906, -inf
        %2908 = vmax.xlane.f32.xlu0 %v2907
        %v2909 = vpop.xlane.xlu0 %2908
        %v2910 = vsub.f32 %v2906, %v2909
        %v2911 = vmul.f32 %v2910, 1.442695
        %v2912 = vpow.pop %v2911
        %v2913 = vsel %vm1954, %v2912, 0.0
        %2914 = vadd.xlane.f32.xlu0 %v2913
        %v2915 = vpop.xlane.xlu0 %2914
        %v2916 = vrcp.pop %v2915
        %v2917 = vmul.f32 %v2912, %v2916
        %v2918 = vmul.f32 %v1808, %v1852
        %v2920 = vsel %vm1954, %v2917, 0
        %2922 = vmatprep.subr.mxu0 0.0
        %2923 = vmatpush1.msra.mxu0 %v2918
        %2924 = vmatprep.subr.mxu0 0.0
        %2925 = vmatpush1.msra.mxu0 0.0
        %2926 = vmatprep.subr.mxu0 0.0
        %2927 = vmatpush1.msra.mxu0 0.0
        %2928 = vmatprep.subr.mxu0 0.0
        %2929 = vmatpush1.msra.mxu0 0.0
        %2930 = vmatprep.subr.mxu0 0.0
        %2931 = vmatpush1.msra.mxu0 0.0
        %2932 = vmatprep.subr.mxu0 0.0
        %2933 = vmatpush1.msra.mxu0 0.0
        %2934 = vmatprep.subr.mxu0 0.0
        %2935 = vmatpush1.msra.mxu0 0.0
        %2936 = vmatprep.subr.mxu0 0.0
        %2937 = vmatpush1.msra.mxu0 0.0
        %2938 = vmatprep.subr.mxu0 0.0
        %2939 = vmatpush1.msra.mxu0 0.0
        %2940 = vmatprep.subr.mxu0 0.0
        %2941 = vmatpush1.msra.mxu0 0.0
        %2942 = vmatprep.subr.mxu0 0.0
        %2943 = vmatpush1.msra.mxu0 0.0
        %2944 = vmatprep.subr.mxu0 0.0
        %2945 = vmatpush1.msra.mxu0 0.0
        %2946 = vmatprep.subr.mxu0 0.0
        %2947 = vmatpush1.msra.mxu0 0.0
        %2948 = vmatprep.subr.mxu0 0.0
        %2949 = vmatpush1.msra.mxu0 0.0
        %2950 = vmatprep.subr.mxu0 0.0
        %2951 = vmatpush1.msra.mxu0 0.0
        %2952 = vmatprep.subr.mxu0 0.0
        %2953 = vmatpush1.msra.mxu0 0.0
        %2954 = vmatprep.subr.mxu0 0.0
        %2955 = vmatpush1.msra.mxu0 0.0
        %2956 = vmatprep.subr.mxu0 0.0
        %2957 = vmatpush1.msra.mxu0 0.0
        %2958 = vmatprep.subr.mxu0 0.0
        %2959 = vmatpush1.msra.mxu0 0.0
        %2960 = vmatprep.subr.mxu0 0.0
        %2961 = vmatpush1.msra.mxu0 0.0
        %2962 = vmatprep.subr.mxu0 0.0
        %2963 = vmatpush1.msra.mxu0 0.0
        %2964 = vmatprep.subr.mxu0 0.0
        %2965 = vmatpush1.msra.mxu0 0.0
        %2966 = vmatprep.subr.mxu0 0.0
        %2967 = vmatpush1.msra.mxu0 0.0
        %2968 = vmatprep.subr.mxu0 0.0
        %2969 = vmatpush1.msra.mxu0 0.0
        %2970 = vmatprep.subr.mxu0 0.0
        %2971 = vmatpush1.msra.mxu0 0.0
        %2972 = vmatprep.subr.mxu0 0.0
        %2973 = vmatpush1.msra.mxu0 0.0
        %2974 = vmatprep.subr.mxu0 0.0
        %2975 = vmatpush1.msra.mxu0 0.0
        %2976 = vmatprep.subr.mxu0 0.0
        %2977 = vmatpush1.msra.mxu0 0.0
        %2978 = vmatprep.subr.mxu0 0.0
        %2979 = vmatpush1.msra.mxu0 0.0
        %2980 = vmatprep.subr.mxu0 0.0
        %2981 = vmatpush1.msra.mxu0 0.0
        %2982 = vmatprep.subr.mxu0 0.0
        %2983 = vmatpush1.msra.mxu0 0.0
        %2984 = vmatprep.subr.mxu0 0.0
        %2985 = vmatpush1.msra.mxu0 0.0
        %2986 = vmatprep.mubr.f32.mxu0 0.0
        %2987 = vmatmul.mubr.f32.gmra.mrb[0].mxu0 %v2920
        %v2988 = vpop.f32.mrb[0].mxu0
        %v2989 = vadd.f32 0.0, %v2988
        %v2990 = vpop.f32.mrb[0].mxu0
        %2991 = vdwg.mxu0
        %v2992 = vadd.f32 %v2833, %v2989
        %v2993 = vmul.f32 %v1733, %v1857
        %2994 = vmatprep.subr.mxu0 0.0
        %2995 = vmatpush1.xpose.msra.mxu0 %v2993
        %2996 = vmatprep.subr.mxu0 0.0
        %2997 = vmatpush1.xpose.msra.mxu0 0.0
        %2998 = vmatprep.subr.mxu0 0.0
        %2999 = vmatpush1.xpose.msra.mxu0 0.0
        %3000 = vmatprep.subr.mxu0 0.0
        %3001 = vmatpush1.xpose.msra.mxu0 0.0
        %3002 = vmatprep.subr.mxu0 0.0
        %3003 = vmatpush1.xpose.msra.mxu0 0.0
        %3004 = vmatprep.subr.mxu0 0.0
        %3005 = vmatpush1.xpose.msra.mxu0 0.0
        %3006 = vmatprep.subr.mxu0 0.0
        %3007 = vmatpush1.xpose.msra.mxu0 0.0
        %3008 = vmatprep.subr.mxu0 0.0
        %3009 = vmatpush1.xpose.msra.mxu0 0.0
        %3010 = vmatprep.subr.mxu0 0.0
        %3011 = vmatpush1.xpose.msra.mxu0 0.0
        %3012 = vmatprep.subr.mxu0 0.0
        %3013 = vmatpush1.xpose.msra.mxu0 0.0
        %3014 = vmatprep.subr.mxu0 0.0
        %3015 = vmatpush1.xpose.msra.mxu0 0.0
        %3016 = vmatprep.subr.mxu0 0.0
        %3017 = vmatpush1.xpose.msra.mxu0 0.0
        %3018 = vmatprep.subr.mxu0 0.0
        %3019 = vmatpush1.xpose.msra.mxu0 0.0
        %3020 = vmatprep.subr.mxu0 0.0
        %3021 = vmatpush1.xpose.msra.mxu0 0.0
        %3022 = vmatprep.subr.mxu0 0.0
        %3023 = vmatpush1.xpose.msra.mxu0 0.0
        %3024 = vmatprep.subr.mxu0 0.0
        %3025 = vmatpush1.xpose.msra.mxu0 0.0
        %3026 = vmatprep.subr.mxu0 0.0
        %3027 = vmatpush1.xpose.msra.mxu0 0.0
        %3028 = vmatprep.subr.mxu0 0.0
        %3029 = vmatpush1.xpose.msra.mxu0 0.0
        %3030 = vmatprep.subr.mxu0 0.0
        %3031 = vmatpush1.xpose.msra.mxu0 0.0
        %3032 = vmatprep.subr.mxu0 0.0
        %3033 = vmatpush1.xpose.msra.mxu0 0.0
        %3034 = vmatprep.subr.mxu0 0.0
        %3035 = vmatpush1.xpose.msra.mxu0 0.0
        %3036 = vmatprep.subr.mxu0 0.0
        %3037 = vmatpush1.xpose.msra.mxu0 0.0
        %3038 = vmatprep.subr.mxu0 0.0
        %3039 = vmatpush1.xpose.msra.mxu0 0.0
        %3040 = vmatprep.subr.mxu0 0.0
        %3041 = vmatpush1.xpose.msra.mxu0 0.0
        %3042 = vmatprep.subr.mxu0 0.0
        %3043 = vmatpush1.xpose.msra.mxu0 0.0
        %3044 = vmatprep.subr.mxu0 0.0
        %3045 = vmatpush1.xpose.msra.mxu0 0.0
        %3046 = vmatprep.subr.mxu0 0.0
        %3047 = vmatpush1.xpose.msra.mxu0 0.0
        %3048 = vmatprep.subr.mxu0 0.0
        %3049 = vmatpush1.xpose.msra.mxu0 0.0
        %3050 = vmatprep.subr.mxu0 0.0
        %3051 = vmatpush1.xpose.msra.mxu0 0.0
        %3052 = vmatprep.subr.mxu0 0.0
        %3053 = vmatpush1.xpose.msra.mxu0 0.0
        %3054 = vmatprep.subr.mxu0 0.0
        %3055 = vmatpush1.xpose.msra.mxu0 0.0
        %3056 = vmatprep.subr.mxu0 0.0
        %3057 = vmatpush1.xpose.msra.mxu0 0.0
        %3058 = vmatprep.mubr.f32.mxu0 0.0
        %3059 = vmatmul.mubr.f32.gmra.mrb[0].mxu0 %v1512
        %v3060 = vpop.f32.mrb[0].mxu0
        %v3061 = vadd.f32 0.0, %v3060
        %v3062 = vpop.f32.mrb[0].mxu0
        %3063 = vdwg.mxu0
        %v3064 = vmul.f32 %v3061, 0.25
        %v3065 = vadd.f32 %v3064, %v1951
        %v3066 = vsel %vm1954, %v3065, -inf
        %3067 = vmax.xlane.f32.xlu0 %v3066
        %v3068 = vpop.xlane.xlu0 %3067
        %v3069 = vsub.f32 %v3065, %v3068
        %v3070 = vmul.f32 %v3069, 1.442695
        %v3071 = vpow.pop %v3070
        %v3072 = vsel %vm1954, %v3071, 0.0
        %3073 = vadd.xlane.f32.xlu0 %v3072
        %v3074 = vpop.xlane.xlu0 %3073
        %v3075 = vrcp.pop %v3074
        %v3076 = vmul.f32 %v3071, %v3075
        %v3077 = vmul.f32 %v1808, %v1857
        %v3079 = vsel %vm1954, %v3076, 0
        %3081 = vmatprep.subr.mxu0 0.0
        %3082 = vmatpush1.msra.mxu0 %v3077
        %3083 = vmatprep.subr.mxu0 0.0
        %3084 = vmatpush1.msra.mxu0 0.0
        %3085 = vmatprep.subr.mxu0 0.0
        %3086 = vmatpush1.msra.mxu0 0.0
        %3087 = vmatprep.subr.mxu0 0.0
        %3088 = vmatpush1.msra.mxu0 0.0
        %3089 = vmatprep.subr.mxu0 0.0
        %3090 = vmatpush1.msra.mxu0 0.0
        %3091 = vmatprep.subr.mxu0 0.0
        %3092 = vmatpush1.msra.mxu0 0.0
        %3093 = vmatprep.subr.mxu0 0.0
        %3094 = vmatpush1.msra.mxu0 0.0
        %3095 = vmatprep.subr.mxu0 0.0
        %3096 = vmatpush1.msra.mxu0 0.0
        %3097 = vmatprep.subr.mxu0 0.0
        %3098 = vmatpush1.msra.mxu0 0.0
        %3099 = vmatprep.subr.mxu0 0.0
        %3100 = vmatpush1.msra.mxu0 0.0
        %3101 = vmatprep.subr.mxu0 0.0
        %3102 = vmatpush1.msra.mxu0 0.0
        %3103 = vmatprep.subr.mxu0 0.0
        %3104 = vmatpush1.msra.mxu0 0.0
        %3105 = vmatprep.subr.mxu0 0.0
        %3106 = vmatpush1.msra.mxu0 0.0
        %3107 = vmatprep.subr.mxu0 0.0
        %3108 = vmatpush1.msra.mxu0 0.0
        %3109 = vmatprep.subr.mxu0 0.0
        %3110 = vmatpush1.msra.mxu0 0.0
        %3111 = vmatprep.subr.mxu0 0.0
        %3112 = vmatpush1.msra.mxu0 0.0
        %3113 = vmatprep.subr.mxu0 0.0
        %3114 = vmatpush1.msra.mxu0 0.0
        %3115 = vmatprep.subr.mxu0 0.0
        %3116 = vmatpush1.msra.mxu0 0.0
        %3117 = vmatprep.subr.mxu0 0.0
        %3118 = vmatpush1.msra.mxu0 0.0
        %3119 = vmatprep.subr.mxu0 0.0
        %3120 = vmatpush1.msra.mxu0 0.0
        %3121 = vmatprep.subr.mxu0 0.0
        %3122 = vmatpush1.msra.mxu0 0.0
        %3123 = vmatprep.subr.mxu0 0.0
        %3124 = vmatpush1.msra.mxu0 0.0
        %3125 = vmatprep.subr.mxu0 0.0
        %3126 = vmatpush1.msra.mxu0 0.0
        %3127 = vmatprep.subr.mxu0 0.0
        %3128 = vmatpush1.msra.mxu0 0.0
        %3129 = vmatprep.subr.mxu0 0.0
        %3130 = vmatpush1.msra.mxu0 0.0
        %3131 = vmatprep.subr.mxu0 0.0
        %3132 = vmatpush1.msra.mxu0 0.0
        %3133 = vmatprep.subr.mxu0 0.0
        %3134 = vmatpush1.msra.mxu0 0.0
        %3135 = vmatprep.subr.mxu0 0.0
        %3136 = vmatpush1.msra.mxu0 0.0
        %3137 = vmatprep.subr.mxu0 0.0
        %3138 = vmatpush1.msra.mxu0 0.0
        %3139 = vmatprep.subr.mxu0 0.0
        %3140 = vmatpush1.msra.mxu0 0.0
        %3141 = vmatprep.subr.mxu0 0.0
        %3142 = vmatpush1.msra.mxu0 0.0
        %3143 = vmatprep.subr.mxu0 0.0
        %3144 = vmatpush1.msra.mxu0 0.0
        %3145 = vmatprep.mubr.f32.mxu0 0.0
        %3146 = vmatmul.mubr.f32.gmra.mrb[0].mxu0 %v3079
        %v3147 = vpop.f32.mrb[0].mxu0
        %v3148 = vadd.f32 0.0, %v3147
        %v3149 = vpop.f32.mrb[0].mxu0
        %3150 = vdwg.mxu0
        %v3151 = vadd.f32 %v2992, %v3148
        %v3152 = vmul.f32 %v1739, %v1822
        %3153 = vmatprep.subr.mxu0 0.0
        %3154 = vmatpush1.xpose.msra.mxu0 %v3152
        %3155 = vmatprep.subr.mxu0 0.0
        %3156 = vmatpush1.xpose.msra.mxu0 0.0
        %3157 = vmatprep.subr.mxu0 0.0
        %3158 = vmatpush1.xpose.msra.mxu0 0.0
        %3159 = vmatprep.subr.mxu0 0.0
        %3160 = vmatpush1.xpose.msra.mxu0 0.0
        %3161 = vmatprep.subr.mxu0 0.0
        %3162 = vmatpush1.xpose.msra.mxu0 0.0
        %3163 = vmatprep.subr.mxu0 0.0
        %3164 = vmatpush1.xpose.msra.mxu0 0.0
        %3165 = vmatprep.subr.mxu0 0.0
        %3166 = vmatpush1.xpose.msra.mxu0 0.0
        %3167 = vmatprep.subr.mxu0 0.0
        %3168 = vmatpush1.xpose.msra.mxu0 0.0
        %3169 = vmatprep.subr.mxu0 0.0
        %3170 = vmatpush1.xpose.msra.mxu0 0.0
        %3171 = vmatprep.subr.mxu0 0.0
        %3172 = vmatpush1.xpose.msra.mxu0 0.0
        %3173 = vmatprep.subr.mxu0 0.0
        %3174 = vmatpush1.xpose.msra.mxu0 0.0
        %3175 = vmatprep.subr.mxu0 0.0
        %3176 = vmatpush1.xpose.msra.mxu0 0.0
        %3177 = vmatprep.subr.mxu0 0.0
        %3178 = vmatpush1.xpose.msra.mxu0 0.0
        %3179 = vmatprep.subr.mxu0 0.0
        %3180 = vmatpush1.xpose.msra.mxu0 0.0
        %3181 = vmatprep.subr.mxu0 0.0
        %3182 = vmatpush1.xpose.msra.mxu0 0.0
        %3183 = vmatprep.subr.mxu0 0.0
        %3184 = vmatpush1.xpose.msra.mxu0 0.0
        %3185 = vmatprep.subr.mxu0 0.0
        %3186 = vmatpush1.xpose.msra.mxu0 0.0
        %3187 = vmatprep.subr.mxu0 0.0
        %3188 = vmatpush1.xpose.msra.mxu0 0.0
        %3189 = vmatprep.subr.mxu0 0.0
        %3190 = vmatpush1.xpose.msra.mxu0 0.0
        %3191 = vmatprep.subr.mxu0 0.0
        %3192 = vmatpush1.xpose.msra.mxu0 0.0
        %3193 = vmatprep.subr.mxu0 0.0
        %3194 = vmatpush1.xpose.msra.mxu0 0.0
        %3195 = vmatprep.subr.mxu0 0.0
        %3196 = vmatpush1.xpose.msra.mxu0 0.0
        %3197 = vmatprep.subr.mxu0 0.0
        %3198 = vmatpush1.xpose.msra.mxu0 0.0
        %3199 = vmatprep.subr.mxu0 0.0
        %3200 = vmatpush1.xpose.msra.mxu0 0.0
        %3201 = vmatprep.subr.mxu0 0.0
        %3202 = vmatpush1.xpose.msra.mxu0 0.0
        %3203 = vmatprep.subr.mxu0 0.0
        %3204 = vmatpush1.xpose.msra.mxu0 0.0
        %3205 = vmatprep.subr.mxu0 0.0
        %3206 = vmatpush1.xpose.msra.mxu0 0.0
        %3207 = vmatprep.subr.mxu0 0.0
        %3208 = vmatpush1.xpose.msra.mxu0 0.0
        %3209 = vmatprep.subr.mxu0 0.0
        %3210 = vmatpush1.xpose.msra.mxu0 0.0
        %3211 = vmatprep.subr.mxu0 0.0
        %3212 = vmatpush1.xpose.msra.mxu0 0.0
        %3213 = vmatprep.subr.mxu0 0.0
        %3214 = vmatpush1.xpose.msra.mxu0 0.0
        %3215 = vmatprep.subr.mxu0 0.0
        %3216 = vmatpush1.xpose.msra.mxu0 0.0
        %3217 = vmatprep.mubr.f32.mxu0 0.0
        %3218 = vmatmul.mubr.f32.gmra.mrb[0].mxu0 %v1518
        %v3219 = vpop.f32.mrb[0].mxu0
        %v3220 = vadd.f32 0.0, %v3219
        %v3221 = vpop.f32.mrb[0].mxu0
        %3222 = vdwg.mxu0
        %v3223 = vmul.f32 %v3220, 0.25
        %v3225 = vlaneseq
        %v3226 = vshrl.u32 %v3225, 7
        %v3227 = vsub.s32 0, %v3226
        %v3228 = vrot.slane %v1379, %v3227
        %v3230 = vadd.f32 %v3223, %v3228
        %v3231 = vsel %vm1954, %v3230, -inf
        %3232 = vmax.xlane.f32.xlu0 %v3231
        %v3233 = vpop.xlane.xlu0 %3232
        %v3234 = vsub.f32 %v3230, %v3233
        %v3235 = vmul.f32 %v3234, 1.442695
        %v3236 = vpow.pop %v3235
        %v3237 = vsel %vm1954, %v3236, 0.0
        %3238 = vadd.xlane.f32.xlu0 %v3237
        %v3239 = vpop.xlane.xlu0 %3238
        %v3240 = vrcp.pop %v3239
        %v3241 = vmul.f32 %v3236, %v3240
        %v3242 = vmul.f32 %v1813, %v1822
        %v3243 = vmul.f32 %v1739, %v1827
        %3244 = vmatprep.subr.mxu0 0.0
        %3245 = vmatpush1.xpose.msra.mxu0 %v3243
        %3246 = vmatprep.subr.mxu0 0.0
        %3247 = vmatpush1.xpose.msra.mxu0 0.0
        %3248 = vmatprep.subr.mxu0 0.0
        %3249 = vmatpush1.xpose.msra.mxu0 0.0
        %3250 = vmatprep.subr.mxu0 0.0
        %3251 = vmatpush1.xpose.msra.mxu0 0.0
        %3252 = vmatprep.subr.mxu0 0.0
        %3253 = vmatpush1.xpose.msra.mxu0 0.0
        %3254 = vmatprep.subr.mxu0 0.0
        %3255 = vmatpush1.xpose.msra.mxu0 0.0
        %3256 = vmatprep.subr.mxu0 0.0
        %3257 = vmatpush1.xpose.msra.mxu0 0.0
        %3258 = vmatprep.subr.mxu0 0.0
        %3259 = vmatpush1.xpose.msra.mxu0 0.0
        %3260 = vmatprep.subr.mxu0 0.0
        %3261 = vmatpush1.xpose.msra.mxu0 0.0
        %3262 = vmatprep.subr.mxu0 0.0
        %3263 = vmatpush1.xpose.msra.mxu0 0.0
        %3264 = vmatprep.subr.mxu0 0.0
        %3265 = vmatpush1.xpose.msra.mxu0 0.0
        %3266 = vmatprep.subr.mxu0 0.0
        %3267 = vmatpush1.xpose.msra.mxu0 0.0
        %3268 = vmatprep.subr.mxu0 0.0
        %3269 = vmatpush1.xpose.msra.mxu0 0.0
        %3270 = vmatprep.subr.mxu0 0.0
        %3271 = vmatpush1.xpose.msra.mxu0 0.0
        %3272 = vmatprep.subr.mxu0 0.0
        %3273 = vmatpush1.xpose.msra.mxu0 0.0
        %3274 = vmatprep.subr.mxu0 0.0
        %3275 = vmatpush1.xpose.msra.mxu0 0.0
        %3276 = vmatprep.subr.mxu0 0.0
        %3277 = vmatpush1.xpose.msra.mxu0 0.0
        %3278 = vmatprep.subr.mxu0 0.0
        %3279 = vmatpush1.xpose.msra.mxu0 0.0
        %3280 = vmatprep.subr.mxu0 0.0
        %3281 = vmatpush1.xpose.msra.mxu0 0.0
        %3282 = vmatprep.subr.mxu0 0.0
        %3283 = vmatpush1.xpose.msra.mxu0 0.0
        %3284 = vmatprep.subr.mxu0 0.0
        %3285 = vmatpush1.xpose.msra.mxu0 0.0
        %3286 = vmatprep.subr.mxu0 0.0
        %3287 = vmatpush1.xpose.msra.mxu0 0.0
        %3288 = vmatprep.subr.mxu0 0.0
        %3289 = vmatpush1.xpose.msra.mxu0 0.0
        %3290 = vmatprep.subr.mxu0 0.0
        %3291 = vmatpush1.xpose.msra.mxu0 0.0
        %3292 = vmatprep.subr.mxu0 0.0
        %3293 = vmatpush1.xpose.msra.mxu0 0.0
        %3294 = vmatprep.subr.mxu0 0.0
        %3295 = vmatpush1.xpose.msra.mxu0 0.0
        %3296 = vmatprep.subr.mxu0 0.0
        %3297 = vmatpush1.xpose.msra.mxu0 0.0
        %3298 = vmatprep.subr.mxu0 0.0
        %3299 = vmatpush1.xpose.msra.mxu0 0.0
        %3300 = vmatprep.subr.mxu0 0.0
        %3301 = vmatpush1.xpose.msra.mxu0 0.0
        %3302 = vmatprep.subr.mxu0 0.0
        %3303 = vmatpush1.xpose.msra.mxu0 0.0
        %3304 = vmatprep.subr.mxu0 0.0
        %3305 = vmatpush1.xpose.msra.mxu0 0.0
        %3306 = vmatprep.subr.mxu0 0.0
        %3307 = vmatpush1.xpose.msra.mxu0 0.0
        %3308 = vmatprep.mubr.f32.mxu0 0.0
        %3309 = vmatmul.mubr.f32.gmra.mrb[0].mxu0 %v1518
        %v3310 = vpop.f32.mrb[0].mxu0
        %v3311 = vadd.f32 0.0, %v3310
        %v3312 = vpop.f32.mrb[0].mxu0
        %3313 = vdwg.mxu0
        %v3314 = vmul.f32 %v3311, 0.25
        %v3315 = vadd.f32 %v3314, %v3228
        %v3316 = vsel %vm1954, %v3315, -inf
        %3317 = vmax.xlane.f32.xlu0 %v3316
        %v3318 = vpop.xlane.xlu0 %3317
        %v3319 = vsub.f32 %v3315, %v3318
        %v3320 = vmul.f32 %v3319, 1.442695
        %v3321 = vpow.pop %v3320
        %v3322 = vsel %vm1954, %v3321, 0.0
        %3323 = vadd.xlane.f32.xlu0 %v3322
        %v3324 = vpop.xlane.xlu0 %3323
        %v3325 = vrcp.pop %v3324
        %v3326 = vmul.f32 %v3321, %v3325
        %v3327 = vmul.f32 %v1813, %v1827
        %v3329 = vsel %vm1954, %v3326, 0
        %3331 = vmatprep.subr.mxu0 0.0
        %3332 = vmatpush1.msra.mxu0 %v3327
        %3333 = vmatprep.subr.mxu0 0.0
        %3334 = vmatpush1.msra.mxu0 0.0
        %3335 = vmatprep.subr.mxu0 0.0
        %3336 = vmatpush1.msra.mxu0 0.0
        %3337 = vmatprep.subr.mxu0 0.0
        %3338 = vmatpush1.msra.mxu0 0.0
        %3339 = vmatprep.subr.mxu0 0.0
        %3340 = vmatpush1.msra.mxu0 0.0
        %3341 = vmatprep.subr.mxu0 0.0
        %3342 = vmatpush1.msra.mxu0 0.0
        %3343 = vmatprep.subr.mxu0 0.0
        %3344 = vmatpush1.msra.mxu0 0.0
        %3345 = vmatprep.subr.mxu0 0.0
        %3346 = vmatpush1.msra.mxu0 0.0
        %3347 = vmatprep.subr.mxu0 0.0
        %3348 = vmatpush1.msra.mxu0 0.0
        %3349 = vmatprep.subr.mxu0 0.0
        %3350 = vmatpush1.msra.mxu0 0.0
        %3351 = vmatprep.subr.mxu0 0.0
        %3352 = vmatpush1.msra.mxu0 0.0
        %3353 = vmatprep.subr.mxu0 0.0
        %3354 = vmatpush1.msra.mxu0 0.0
        %3355 = vmatprep.subr.mxu0 0.0
        %3356 = vmatpush1.msra.mxu0 0.0
        %3357 = vmatprep.subr.mxu0 0.0
        %3358 = vmatpush1.msra.mxu0 0.0
        %3359 = vmatprep.subr.mxu0 0.0
        %3360 = vmatpush1.msra.mxu0 0.0
        %3361 = vmatprep.subr.mxu0 0.0
        %3362 = vmatpush1.msra.mxu0 0.0
        %3363 = vmatprep.subr.mxu0 0.0
        %3364 = vmatpush1.msra.mxu0 0.0
        %3365 = vmatprep.subr.mxu0 0.0
        %3366 = vmatpush1.msra.mxu0 0.0
        %3367 = vmatprep.subr.mxu0 0.0
        %3368 = vmatpush1.msra.mxu0 0.0
        %3369 = vmatprep.subr.mxu0 0.0
        %3370 = vmatpush1.msra.mxu0 0.0
        %3371 = vmatprep.subr.mxu0 0.0
        %3372 = vmatpush1.msra.mxu0 0.0
        %3373 = vmatprep.subr.mxu0 0.0
        %3374 = vmatpush1.msra.mxu0 0.0
        %3375 = vmatprep.subr.mxu0 0.0
        %3376 = vmatpush1.msra.mxu0 0.0
        %3377 = vmatprep.subr.mxu0 0.0
        %3378 = vmatpush1.msra.mxu0 0.0
        %3379 = vmatprep.subr.mxu0 0.0
        %3380 = vmatpush1.msra.mxu0 0.0
        %3381 = vmatprep.subr.mxu0 0.0
        %3382 = vmatpush1.msra.mxu0 0.0
        %3383 = vmatprep.subr.mxu0 0.0
        %3384 = vmatpush1.msra.mxu0 0.0
        %3385 = vmatprep.subr.mxu0 0.0
        %3386 = vmatpush1.msra.mxu0 0.0
        %3387 = vmatprep.subr.mxu0 0.0
        %3388 = vmatpush1.msra.mxu0 0.0
        %3389 = vmatprep.subr.mxu0 0.0
        %3390 = vmatpush1.msra.mxu0 0.0
        %3391 = vmatprep.subr.mxu0 0.0
        %3392 = vmatpush1.msra.mxu0 0.0
        %3393 = vmatprep.subr.mxu0 0.0
        %3394 = vmatpush1.msra.mxu0 0.0
        %3395 = vmatprep.mubr.f32.mxu0 0.0
        %3396 = vmatmul.mubr.f32.gmra.mrb[0].mxu0 %v3329
        %v3397 = vpop.f32.mrb[0].mxu0
        %v3398 = vadd.f32 0.0, %v3397
        %v3399 = vpop.f32.mrb[0].mxu0
        %3400 = vdwg.mxu0
        %v3402 = vsel %vm1954, %v3241, 0
        %3404 = vmatprep.subr.mxu0 0.0
        %3405 = vmatpush1.msra.mxu0 %v3242
        %3406 = vmatprep.subr.mxu0 0.0
        %3407 = vmatpush1.msra.mxu0 0.0
        %3408 = vmatprep.subr.mxu0 0.0
        %3409 = vmatpush1.msra.mxu0 0.0
        %3410 = vmatprep.subr.mxu0 0.0
        %3411 = vmatpush1.msra.mxu0 0.0
        %3412 = vmatprep.subr.mxu0 0.0
        %3413 = vmatpush1.msra.mxu0 0.0
        %3414 = vmatprep.subr.mxu0 0.0
        %3415 = vmatpush1.msra.mxu0 0.0
        %3416 = vmatprep.subr.mxu0 0.0
        %3417 = vmatpush1.msra.mxu0 0.0
        %3418 = vmatprep.subr.mxu0 0.0
        %3419 = vmatpush1.msra.mxu0 0.0
        %3420 = vmatprep.subr.mxu0 0.0
        %3421 = vmatpush1.msra.mxu0 0.0
        %3422 = vmatprep.subr.mxu0 0.0
        %3423 = vmatpush1.msra.mxu0 0.0
        %3424 = vmatprep.subr.mxu0 0.0
        %3425 = vmatpush1.msra.mxu0 0.0
        %3426 = vmatprep.subr.mxu0 0.0
        %3427 = vmatpush1.msra.mxu0 0.0
        %3428 = vmatprep.subr.mxu0 0.0
        %3429 = vmatpush1.msra.mxu0 0.0
        %3430 = vmatprep.subr.mxu0 0.0
        %3431 = vmatpush1.msra.mxu0 0.0
        %3432 = vmatprep.subr.mxu0 0.0
        %3433 = vmatpush1.msra.mxu0 0.0
        %3434 = vmatprep.subr.mxu0 0.0
        %3435 = vmatpush1.msra.mxu0 0.0
        %3436 = vmatprep.subr.mxu0 0.0
        %3437 = vmatpush1.msra.mxu0 0.0
        %3438 = vmatprep.subr.mxu0 0.0
        %3439 = vmatpush1.msra.mxu0 0.0
        %3440 = vmatprep.subr.mxu0 0.0
        %3441 = vmatpush1.msra.mxu0 0.0
        %3442 = vmatprep.subr.mxu0 0.0
        %3443 = vmatpush1.msra.mxu0 0.0
        %3444 = vmatprep.subr.mxu0 0.0
        %3445 = vmatpush1.msra.mxu0 0.0
        %3446 = vmatprep.subr.mxu0 0.0
        %3447 = vmatpush1.msra.mxu0 0.0
        %3448 = vmatprep.subr.mxu0 0.0
        %3449 = vmatpush1.msra.mxu0 0.0
        %3450 = vmatprep.subr.mxu0 0.0
        %3451 = vmatpush1.msra.mxu0 0.0
        %3452 = vmatprep.subr.mxu0 0.0
        %3453 = vmatpush1.msra.mxu0 0.0
        %3454 = vmatprep.subr.mxu0 0.0
        %3455 = vmatpush1.msra.mxu0 0.0
        %3456 = vmatprep.subr.mxu0 0.0
        %3457 = vmatpush1.msra.mxu0 0.0
        %3458 = vmatprep.subr.mxu0 0.0
        %3459 = vmatpush1.msra.mxu0 0.0
        %3460 = vmatprep.subr.mxu0 0.0
        %3461 = vmatpush1.msra.mxu0 0.0
        %3462 = vmatprep.subr.mxu0 0.0
        %3463 = vmatpush1.msra.mxu0 0.0
        %3464 = vmatprep.subr.mxu0 0.0
        %3465 = vmatpush1.msra.mxu0 0.0
        %3466 = vmatprep.subr.mxu0 0.0
        %3467 = vmatpush1.msra.mxu0 0.0
        %3468 = vmatprep.mubr.f32.mxu0 0.0
        %3469 = vmatmul.mubr.f32.gmra.mrb[0].mxu0 %v3402
        %v3470 = vpop.f32.mrb[0].mxu0
        %v3471 = vadd.f32 %v3398, %v3470
        %v3472 = vpop.f32.mrb[0].mxu0
        %3473 = vdwg.mxu0
        %v3474 = vmul.f32 %v1739, %v1832
        %3475 = vmatprep.subr.mxu0 0.0
        %3476 = vmatpush1.xpose.msra.mxu0 %v3474
        %3477 = vmatprep.subr.mxu0 0.0
        %3478 = vmatpush1.xpose.msra.mxu0 0.0
        %3479 = vmatprep.subr.mxu0 0.0
        %3480 = vmatpush1.xpose.msra.mxu0 0.0
        %3481 = vmatprep.subr.mxu0 0.0
        %3482 = vmatpush1.xpose.msra.mxu0 0.0
        %3483 = vmatprep.subr.mxu0 0.0
        %3484 = vmatpush1.xpose.msra.mxu0 0.0
        %3485 = vmatprep.subr.mxu0 0.0
        %3486 = vmatpush1.xpose.msra.mxu0 0.0
        %3487 = vmatprep.subr.mxu0 0.0
        %3488 = vmatpush1.xpose.msra.mxu0 0.0
        %3489 = vmatprep.subr.mxu0 0.0
        %3490 = vmatpush1.xpose.msra.mxu0 0.0
        %3491 = vmatprep.subr.mxu0 0.0
        %3492 = vmatpush1.xpose.msra.mxu0 0.0
        %3493 = vmatprep.subr.mxu0 0.0
        %3494 = vmatpush1.xpose.msra.mxu0 0.0
        %3495 = vmatprep.subr.mxu0 0.0
        %3496 = vmatpush1.xpose.msra.mxu0 0.0
        %3497 = vmatprep.subr.mxu0 0.0
        %3498 = vmatpush1.xpose.msra.mxu0 0.0
        %3499 = vmatprep.subr.mxu0 0.0
        %3500 = vmatpush1.xpose.msra.mxu0 0.0
        %3501 = vmatprep.subr.mxu0 0.0
        %3502 = vmatpush1.xpose.msra.mxu0 0.0
        %3503 = vmatprep.subr.mxu0 0.0
        %3504 = vmatpush1.xpose.msra.mxu0 0.0
        %3505 = vmatprep.subr.mxu0 0.0
        %3506 = vmatpush1.xpose.msra.mxu0 0.0
        %3507 = vmatprep.subr.mxu0 0.0
        %3508 = vmatpush1.xpose.msra.mxu0 0.0
        %3509 = vmatprep.subr.mxu0 0.0
        %3510 = vmatpush1.xpose.msra.mxu0 0.0
        %3511 = vmatprep.subr.mxu0 0.0
        %3512 = vmatpush1.xpose.msra.mxu0 0.0
        %3513 = vmatprep.subr.mxu0 0.0
        %3514 = vmatpush1.xpose.msra.mxu0 0.0
        %3515 = vmatprep.subr.mxu0 0.0
        %3516 = vmatpush1.xpose.msra.mxu0 0.0
        %3517 = vmatprep.subr.mxu0 0.0
        %3518 = vmatpush1.xpose.msra.mxu0 0.0
        %3519 = vmatprep.subr.mxu0 0.0
        %3520 = vmatpush1.xpose.msra.mxu0 0.0
        %3521 = vmatprep.subr.mxu0 0.0
        %3522 = vmatpush1.xpose.msra.mxu0 0.0
        %3523 = vmatprep.subr.mxu0 0.0
        %3524 = vmatpush1.xpose.msra.mxu0 0.0
        %3525 = vmatprep.subr.mxu0 0.0
        %3526 = vmatpush1.xpose.msra.mxu0 0.0
        %3527 = vmatprep.subr.mxu0 0.0
        %3528 = vmatpush1.xpose.msra.mxu0 0.0
        %3529 = vmatprep.subr.mxu0 0.0
        %3530 = vmatpush1.xpose.msra.mxu0 0.0
        %3531 = vmatprep.subr.mxu0 0.0
        %3532 = vmatpush1.xpose.msra.mxu0 0.0
        %3533 = vmatprep.subr.mxu0 0.0
        %3534 = vmatpush1.xpose.msra.mxu0 0.0
        %3535 = vmatprep.subr.mxu0 0.0
        %3536 = vmatpush1.xpose.msra.mxu0 0.0
        %3537 = vmatprep.subr.mxu0 0.0
        %3538 = vmatpush1.xpose.msra.mxu0 0.0
        %3539 = vmatprep.mubr.f32.mxu0 0.0
        %3540 = vmatmul.mubr.f32.gmra.mrb[0].mxu0 %v1518
        %v3541 = vpop.f32.mrb[0].mxu0
        %v3542 = vadd.f32 0.0, %v3541
        %v3543 = vpop.f32.mrb[0].mxu0
        %3544 = vdwg.mxu0
        %v3545 = vmul.f32 %v3542, 0.25
        %v3546 = vadd.f32 %v3545, %v3228
        %v3547 = vsel %vm1954, %v3546, -inf
        %3548 = vmax.xlane.f32.xlu0 %v3547
        %v3549 = vpop.xlane.xlu0 %3548
        %v3550 = vsub.f32 %v3546, %v3549
        %v3551 = vmul.f32 %v3550, 1.442695
        %v3552 = vpow.pop %v3551
        %v3553 = vsel %vm1954, %v3552, 0.0
        %3554 = vadd.xlane.f32.xlu0 %v3553
        %v3555 = vpop.xlane.xlu0 %3554
        %v3556 = vrcp.pop %v3555
        %v3557 = vmul.f32 %v3552, %v3556
        %v3558 = vmul.f32 %v1813, %v1832
        %v3560 = vsel %vm1954, %v3557, 0
        %3562 = vmatprep.subr.mxu0 0.0
        %3563 = vmatpush1.msra.mxu0 %v3558
        %3564 = vmatprep.subr.mxu0 0.0
        %3565 = vmatpush1.msra.mxu0 0.0
        %3566 = vmatprep.subr.mxu0 0.0
        %3567 = vmatpush1.msra.mxu0 0.0
        %3568 = vmatprep.subr.mxu0 0.0
        %3569 = vmatpush1.msra.mxu0 0.0
        %3570 = vmatprep.subr.mxu0 0.0
        %3571 = vmatpush1.msra.mxu0 0.0
        %3572 = vmatprep.subr.mxu0 0.0
        %3573 = vmatpush1.msra.mxu0 0.0
        %3574 = vmatprep.subr.mxu0 0.0
        %3575 = vmatpush1.msra.mxu0 0.0
        %3576 = vmatprep.subr.mxu0 0.0
        %3577 = vmatpush1.msra.mxu0 0.0
        %3578 = vmatprep.subr.mxu0 0.0
        %3579 = vmatpush1.msra.mxu0 0.0
        %3580 = vmatprep.subr.mxu0 0.0
        %3581 = vmatpush1.msra.mxu0 0.0
        %3582 = vmatprep.subr.mxu0 0.0
        %3583 = vmatpush1.msra.mxu0 0.0
        %3584 = vmatprep.subr.mxu0 0.0
        %3585 = vmatpush1.msra.mxu0 0.0
        %3586 = vmatprep.subr.mxu0 0.0
        %3587 = vmatpush1.msra.mxu0 0.0
        %3588 = vmatprep.subr.mxu0 0.0
        %3589 = vmatpush1.msra.mxu0 0.0
        %3590 = vmatprep.subr.mxu0 0.0
        %3591 = vmatpush1.msra.mxu0 0.0
        %3592 = vmatprep.subr.mxu0 0.0
        %3593 = vmatpush1.msra.mxu0 0.0
        %3594 = vmatprep.subr.mxu0 0.0
        %3595 = vmatpush1.msra.mxu0 0.0
        %3596 = vmatprep.subr.mxu0 0.0
        %3597 = vmatpush1.msra.mxu0 0.0
        %3598 = vmatprep.subr.mxu0 0.0
        %3599 = vmatpush1.msra.mxu0 0.0
        %3600 = vmatprep.subr.mxu0 0.0
        %3601 = vmatpush1.msra.mxu0 0.0
        %3602 = vmatprep.subr.mxu0 0.0
        %3603 = vmatpush1.msra.mxu0 0.0
        %3604 = vmatprep.subr.mxu0 0.0
        %3605 = vmatpush1.msra.mxu0 0.0
        %3606 = vmatprep.subr.mxu0 0.0
        %3607 = vmatpush1.msra.mxu0 0.0
        %3608 = vmatprep.subr.mxu0 0.0
        %3609 = vmatpush1.msra.mxu0 0.0
        %3610 = vmatprep.subr.mxu0 0.0
        %3611 = vmatpush1.msra.mxu0 0.0
        %3612 = vmatprep.subr.mxu0 0.0
        %3613 = vmatpush1.msra.mxu0 0.0
        %3614 = vmatprep.subr.mxu0 0.0
        %3615 = vmatpush1.msra.mxu0 0.0
        %3616 = vmatprep.subr.mxu0 0.0
        %3617 = vmatpush1.msra.mxu0 0.0
        %3618 = vmatprep.subr.mxu0 0.0
        %3619 = vmatpush1.msra.mxu0 0.0
        %3620 = vmatprep.subr.mxu0 0.0
        %3621 = vmatpush1.msra.mxu0 0.0
        %3622 = vmatprep.subr.mxu0 0.0
        %3623 = vmatpush1.msra.mxu0 0.0
        %3624 = vmatprep.subr.mxu0 0.0
        %3625 = vmatpush1.msra.mxu0 0.0
        %3626 = vmatprep.mubr.f32.mxu0 0.0
        %3627 = vmatmul.mubr.f32.gmra.mrb[0].mxu0 %v3560
        %v3628 = vpop.f32.mrb[0].mxu0
        %v3629 = vadd.f32 0.0, %v3628
        %v3630 = vpop.f32.mrb[0].mxu0
        %3631 = vdwg.mxu0
        %v3632 = vadd.f32 %v3471, %v3629
        %v3633 = vmul.f32 %v1739, %v1837
        %3634 = vmatprep.subr.mxu0 0.0
        %3635 = vmatpush1.xpose.msra.mxu0 %v3633
        %3636 = vmatprep.subr.mxu0 0.0
        %3637 = vmatpush1.xpose.msra.mxu0 0.0
        %3638 = vmatprep.subr.mxu0 0.0
        %3639 = vmatpush1.xpose.msra.mxu0 0.0
        %3640 = vmatprep.subr.mxu0 0.0
        %3641 = vmatpush1.xpose.msra.mxu0 0.0
        %3642 = vmatprep.subr.mxu0 0.0
        %3643 = vmatpush1.xpose.msra.mxu0 0.0
        %3644 = vmatprep.subr.mxu0 0.0
        %3645 = vmatpush1.xpose.msra.mxu0 0.0
        %3646 = vmatprep.subr.mxu0 0.0
        %3647 = vmatpush1.xpose.msra.mxu0 0.0
        %3648 = vmatprep.subr.mxu0 0.0
        %3649 = vmatpush1.xpose.msra.mxu0 0.0
        %3650 = vmatprep.subr.mxu0 0.0
        %3651 = vmatpush1.xpose.msra.mxu0 0.0
        %3652 = vmatprep.subr.mxu0 0.0
        %3653 = vmatpush1.xpose.msra.mxu0 0.0
        %3654 = vmatprep.subr.mxu0 0.0
        %3655 = vmatpush1.xpose.msra.mxu0 0.0
        %3656 = vmatprep.subr.mxu0 0.0
        %3657 = vmatpush1.xpose.msra.mxu0 0.0
        %3658 = vmatprep.subr.mxu0 0.0
        %3659 = vmatpush1.xpose.msra.mxu0 0.0
        %3660 = vmatprep.subr.mxu0 0.0
        %3661 = vmatpush1.xpose.msra.mxu0 0.0
        %3662 = vmatprep.subr.mxu0 0.0
        %3663 = vmatpush1.xpose.msra.mxu0 0.0
        %3664 = vmatprep.subr.mxu0 0.0
        %3665 = vmatpush1.xpose.msra.mxu0 0.0
        %3666 = vmatprep.subr.mxu0 0.0
        %3667 = vmatpush1.xpose.msra.mxu0 0.0
        %3668 = vmatprep.subr.mxu0 0.0
        %3669 = vmatpush1.xpose.msra.mxu0 0.0
        %3670 = vmatprep.subr.mxu0 0.0
        %3671 = vmatpush1.xpose.msra.mxu0 0.0
        %3672 = vmatprep.subr.mxu0 0.0
        %3673 = vmatpush1.xpose.msra.mxu0 0.0
        %3674 = vmatprep.subr.mxu0 0.0
        %3675 = vmatpush1.xpose.msra.mxu0 0.0
        %3676 = vmatprep.subr.mxu0 0.0
        %3677 = vmatpush1.xpose.msra.mxu0 0.0
        %3678 = vmatprep.subr.mxu0 0.0
        %3679 = vmatpush1.xpose.msra.mxu0 0.0
        %3680 = vmatprep.subr.mxu0 0.0
        %3681 = vmatpush1.xpose.msra.mxu0 0.0
        %3682 = vmatprep.subr.mxu0 0.0
        %3683 = vmatpush1.xpose.msra.mxu0 0.0
        %3684 = vmatprep.subr.mxu0 0.0
        %3685 = vmatpush1.xpose.msra.mxu0 0.0
        %3686 = vmatprep.subr.mxu0 0.0
        %3687 = vmatpush1.xpose.msra.mxu0 0.0
        %3688 = vmatprep.subr.mxu0 0.0
        %3689 = vmatpush1.xpose.msra.mxu0 0.0
        %3690 = vmatprep.subr.mxu0 0.0
        %3691 = vmatpush1.xpose.msra.mxu0 0.0
        %3692 = vmatprep.subr.mxu0 0.0
        %3693 = vmatpush1.xpose.msra.mxu0 0.0
        %3694 = vmatprep.subr.mxu0 0.0
        %3695 = vmatpush1.xpose.msra.mxu0 0.0
        %3696 = vmatprep.subr.mxu0 0.0
        %3697 = vmatpush1.xpose.msra.mxu0 0.0
        %3698 = vmatprep.mubr.f32.mxu0 0.0
        %3699 = vmatmul.mubr.f32.gmra.mrb[0].mxu0 %v1518
        %v3700 = vpop.f32.mrb[0].mxu0
        %v3701 = vadd.f32 0.0, %v3700
        %v3702 = vpop.f32.mrb[0].mxu0
        %3703 = vdwg.mxu0
        %v3704 = vmul.f32 %v3701, 0.25
        %v3705 = vadd.f32 %v3704, %v3228
        %v3706 = vsel %vm1954, %v3705, -inf
        %3707 = vmax.xlane.f32.xlu0 %v3706
        %v3708 = vpop.xlane.xlu0 %3707
        %v3709 = vsub.f32 %v3705, %v3708
        %v3710 = vmul.f32 %v3709, 1.442695
        %v3711 = vpow.pop %v3710
        %v3712 = vsel %vm1954, %v3711, 0.0
        %3713 = vadd.xlane.f32.xlu0 %v3712
        %v3714 = vpop.xlane.xlu0 %3713
        %v3715 = vrcp.pop %v3714
        %v3716 = vmul.f32 %v3711, %v3715
        %v3717 = vmul.f32 %v1813, %v1837
        %v3719 = vsel %vm1954, %v3716, 0
        %3721 = vmatprep.subr.mxu0 0.0
        %3722 = vmatpush1.msra.mxu0 %v3717
        %3723 = vmatprep.subr.mxu0 0.0
        %3724 = vmatpush1.msra.mxu0 0.0
        %3725 = vmatprep.subr.mxu0 0.0
        %3726 = vmatpush1.msra.mxu0 0.0
        %3727 = vmatprep.subr.mxu0 0.0
        %3728 = vmatpush1.msra.mxu0 0.0
        %3729 = vmatprep.subr.mxu0 0.0
        %3730 = vmatpush1.msra.mxu0 0.0
        %3731 = vmatprep.subr.mxu0 0.0
        %3732 = vmatpush1.msra.mxu0 0.0
        %3733 = vmatprep.subr.mxu0 0.0
        %3734 = vmatpush1.msra.mxu0 0.0
        %3735 = vmatprep.subr.mxu0 0.0
        %3736 = vmatpush1.msra.mxu0 0.0
        %3737 = vmatprep.subr.mxu0 0.0
        %3738 = vmatpush1.msra.mxu0 0.0
        %3739 = vmatprep.subr.mxu0 0.0
        %3740 = vmatpush1.msra.mxu0 0.0
        %3741 = vmatprep.subr.mxu0 0.0
        %3742 = vmatpush1.msra.mxu0 0.0
        %3743 = vmatprep.subr.mxu0 0.0
        %3744 = vmatpush1.msra.mxu0 0.0
        %3745 = vmatprep.subr.mxu0 0.0
        %3746 = vmatpush1.msra.mxu0 0.0
        %3747 = vmatprep.subr.mxu0 0.0
        %3748 = vmatpush1.msra.mxu0 0.0
        %3749 = vmatprep.subr.mxu0 0.0
        %3750 = vmatpush1.msra.mxu0 0.0
        %3751 = vmatprep.subr.mxu0 0.0
        %3752 = vmatpush1.msra.mxu0 0.0
        %3753 = vmatprep.subr.mxu0 0.0
        %3754 = vmatpush1.msra.mxu0 0.0
        %3755 = vmatprep.subr.mxu0 0.0
        %3756 = vmatpush1.msra.mxu0 0.0
        %3757 = vmatprep.subr.mxu0 0.0
        %3758 = vmatpush1.msra.mxu0 0.0
        %3759 = vmatprep.subr.mxu0 0.0
        %3760 = vmatpush1.msra.mxu0 0.0
        %3761 = vmatprep.subr.mxu0 0.0
        %3762 = vmatpush1.msra.mxu0 0.0
        %3763 = vmatprep.subr.mxu0 0.0
        %3764 = vmatpush1.msra.mxu0 0.0
        %3765 = vmatprep.subr.mxu0 0.0
        %3766 = vmatpush1.msra.mxu0 0.0
        %3767 = vmatprep.subr.mxu0 0.0
        %3768 = vmatpush1.msra.mxu0 0.0
        %3769 = vmatprep.subr.mxu0 0.0
        %3770 = vmatpush1.msra.mxu0 0.0
        %3771 = vmatprep.subr.mxu0 0.0
        %3772 = vmatpush1.msra.mxu0 0.0
        %3773 = vmatprep.subr.mxu0 0.0
        %3774 = vmatpush1.msra.mxu0 0.0
        %3775 = vmatprep.subr.mxu0 0.0
        %3776 = vmatpush1.msra.mxu0 0.0
        %3777 = vmatprep.subr.mxu0 0.0
        %3778 = vmatpush1.msra.mxu0 0.0
        %3779 = vmatprep.subr.mxu0 0.0
        %3780 = vmatpush1.msra.mxu0 0.0
        %3781 = vmatprep.subr.mxu0 0.0
        %3782 = vmatpush1.msra.mxu0 0.0
        %3783 = vmatprep.subr.mxu0 0.0
        %3784 = vmatpush1.msra.mxu0 0.0
        %3785 = vmatprep.mubr.f32.mxu0 0.0
        %3786 = vmatmul.mubr.f32.gmra.mrb[0].mxu0 %v3719
        %v3787 = vpop.f32.mrb[0].mxu0
        %v3788 = vadd.f32 0.0, %v3787
        %v3789 = vpop.f32.mrb[0].mxu0
        %3790 = vdwg.mxu0
        %v3791 = vadd.f32 %v3632, %v3788
        %v3792 = vmul.f32 %v1739, %v1842
        %3793 = vmatprep.subr.mxu0 0.0
        %3794 = vmatpush1.xpose.msra.mxu0 %v3792
        %3795 = vmatprep.subr.mxu0 0.0
        %3796 = vmatpush1.xpose.msra.mxu0 0.0
        %3797 = vmatprep.subr.mxu0 0.0
        %3798 = vmatpush1.xpose.msra.mxu0 0.0
        %3799 = vmatprep.subr.mxu0 0.0
        %3800 = vmatpush1.xpose.msra.mxu0 0.0
        %3801 = vmatprep.subr.mxu0 0.0
        %3802 = vmatpush1.xpose.msra.mxu0 0.0
        %3803 = vmatprep.subr.mxu0 0.0
        %3804 = vmatpush1.xpose.msra.mxu0 0.0
        %3805 = vmatprep.subr.mxu0 0.0
        %3806 = vmatpush1.xpose.msra.mxu0 0.0
        %3807 = vmatprep.subr.mxu0 0.0
        %3808 = vmatpush1.xpose.msra.mxu0 0.0
        %3809 = vmatprep.subr.mxu0 0.0
        %3810 = vmatpush1.xpose.msra.mxu0 0.0
        %3811 = vmatprep.subr.mxu0 0.0
        %3812 = vmatpush1.xpose.msra.mxu0 0.0
        %3813 = vmatprep.subr.mxu0 0.0
        %3814 = vmatpush1.xpose.msra.mxu0 0.0
        %3815 = vmatprep.subr.mxu0 0.0
        %3816 = vmatpush1.xpose.msra.mxu0 0.0
        %3817 = vmatprep.subr.mxu0 0.0
        %3818 = vmatpush1.xpose.msra.mxu0 0.0
        %3819 = vmatprep.subr.mxu0 0.0
        %3820 = vmatpush1.xpose.msra.mxu0 0.0
        %3821 = vmatprep.subr.mxu0 0.0
        %3822 = vmatpush1.xpose.msra.mxu0 0.0
        %3823 = vmatprep.subr.mxu0 0.0
        %3824 = vmatpush1.xpose.msra.mxu0 0.0
        %3825 = vmatprep.subr.mxu0 0.0
        %3826 = vmatpush1.xpose.msra.mxu0 0.0
        %3827 = vmatprep.subr.mxu0 0.0
        %3828 = vmatpush1.xpose.msra.mxu0 0.0
        %3829 = vmatprep.subr.mxu0 0.0
        %3830 = vmatpush1.xpose.msra.mxu0 0.0
        %3831 = vmatprep.subr.mxu0 0.0
        %3832 = vmatpush1.xpose.msra.mxu0 0.0
        %3833 = vmatprep.subr.mxu0 0.0
        %3834 = vmatpush1.xpose.msra.mxu0 0.0
        %3835 = vmatprep.subr.mxu0 0.0
        %3836 = vmatpush1.xpose.msra.mxu0 0.0
        %3837 = vmatprep.subr.mxu0 0.0
        %3838 = vmatpush1.xpose.msra.mxu0 0.0
        %3839 = vmatprep.subr.mxu0 0.0
        %3840 = vmatpush1.xpose.msra.mxu0 0.0
        %3841 = vmatprep.subr.mxu0 0.0
        %3842 = vmatpush1.xpose.msra.mxu0 0.0
        %3843 = vmatprep.subr.mxu0 0.0
        %3844 = vmatpush1.xpose.msra.mxu0 0.0
        %3845 = vmatprep.subr.mxu0 0.0
        %3846 = vmatpush1.xpose.msra.mxu0 0.0
        %3847 = vmatprep.subr.mxu0 0.0
        %3848 = vmatpush1.xpose.msra.mxu0 0.0
        %3849 = vmatprep.subr.mxu0 0.0
        %3850 = vmatpush1.xpose.msra.mxu0 0.0
        %3851 = vmatprep.subr.mxu0 0.0
        %3852 = vmatpush1.xpose.msra.mxu0 0.0
        %3853 = vmatprep.subr.mxu0 0.0
        %3854 = vmatpush1.xpose.msra.mxu0 0.0
        %3855 = vmatprep.subr.mxu0 0.0
        %3856 = vmatpush1.xpose.msra.mxu0 0.0
        %3857 = vmatprep.mubr.f32.mxu0 0.0
        %3858 = vmatmul.mubr.f32.gmra.mrb[0].mxu0 %v1518
        %v3859 = vpop.f32.mrb[0].mxu0
        %v3860 = vadd.f32 0.0, %v3859
        %v3861 = vpop.f32.mrb[0].mxu0
        %3862 = vdwg.mxu0
        %v3863 = vmul.f32 %v3860, 0.25
        %v3864 = vadd.f32 %v3863, %v3228
        %v3865 = vsel %vm1954, %v3864, -inf
        %3866 = vmax.xlane.f32.xlu0 %v3865
        %v3867 = vpop.xlane.xlu0 %3866
        %v3868 = vsub.f32 %v3864, %v3867
        %v3869 = vmul.f32 %v3868, 1.442695
        %v3870 = vpow.pop %v3869
        %v3871 = vsel %vm1954, %v3870, 0.0
        %3872 = vadd.xlane.f32.xlu0 %v3871
        %v3873 = vpop.xlane.xlu0 %3872
        %v3874 = vrcp.pop %v3873
        %v3875 = vmul.f32 %v3870, %v3874
        %v3876 = vmul.f32 %v1813, %v1842
        %v3878 = vsel %vm1954, %v3875, 0
        %3880 = vmatprep.subr.mxu0 0.0
        %3881 = vmatpush1.msra.mxu0 %v3876
        %3882 = vmatprep.subr.mxu0 0.0
        %3883 = vmatpush1.msra.mxu0 0.0
        %3884 = vmatprep.subr.mxu0 0.0
        %3885 = vmatpush1.msra.mxu0 0.0
        %3886 = vmatprep.subr.mxu0 0.0
        %3887 = vmatpush1.msra.mxu0 0.0
        %3888 = vmatprep.subr.mxu0 0.0
        %3889 = vmatpush1.msra.mxu0 0.0
        %3890 = vmatprep.subr.mxu0 0.0
        %3891 = vmatpush1.msra.mxu0 0.0
        %3892 = vmatprep.subr.mxu0 0.0
        %3893 = vmatpush1.msra.mxu0 0.0
        %3894 = vmatprep.subr.mxu0 0.0
        %3895 = vmatpush1.msra.mxu0 0.0
        %3896 = vmatprep.subr.mxu0 0.0
        %3897 = vmatpush1.msra.mxu0 0.0
        %3898 = vmatprep.subr.mxu0 0.0
        %3899 = vmatpush1.msra.mxu0 0.0
        %3900 = vmatprep.subr.mxu0 0.0
        %3901 = vmatpush1.msra.mxu0 0.0
        %3902 = vmatprep.subr.mxu0 0.0
        %3903 = vmatpush1.msra.mxu0 0.0
        %3904 = vmatprep.subr.mxu0 0.0
        %3905 = vmatpush1.msra.mxu0 0.0
        %3906 = vmatprep.subr.mxu0 0.0
        %3907 = vmatpush1.msra.mxu0 0.0
        %3908 = vmatprep.subr.mxu0 0.0
        %3909 = vmatpush1.msra.mxu0 0.0
        %3910 = vmatprep.subr.mxu0 0.0
        %3911 = vmatpush1.msra.mxu0 0.0
        %3912 = vmatprep.subr.mxu0 0.0
        %3913 = vmatpush1.msra.mxu0 0.0
        %3914 = vmatprep.subr.mxu0 0.0
        %3915 = vmatpush1.msra.mxu0 0.0
        %3916 = vmatprep.subr.mxu0 0.0
        %3917 = vmatpush1.msra.mxu0 0.0
        %3918 = vmatprep.subr.mxu0 0.0
        %3919 = vmatpush1.msra.mxu0 0.0
        %3920 = vmatprep.subr.mxu0 0.0
        %3921 = vmatpush1.msra.mxu0 0.0
        %3922 = vmatprep.subr.mxu0 0.0
        %3923 = vmatpush1.msra.mxu0 0.0
        %3924 = vmatprep.subr.mxu0 0.0
        %3925 = vmatpush1.msra.mxu0 0.0
        %3926 = vmatprep.subr.mxu0 0.0
        %3927 = vmatpush1.msra.mxu0 0.0
        %3928 = vmatprep.subr.mxu0 0.0
        %3929 = vmatpush1.msra.mxu0 0.0
        %3930 = vmatprep.subr.mxu0 0.0
        %3931 = vmatpush1.msra.mxu0 0.0
        %3932 = vmatprep.subr.mxu0 0.0
        %3933 = vmatpush1.msra.mxu0 0.0
        %3934 = vmatprep.subr.mxu0 0.0
        %3935 = vmatpush1.msra.mxu0 0.0
        %3936 = vmatprep.subr.mxu0 0.0
        %3937 = vmatpush1.msra.mxu0 0.0
        %3938 = vmatprep.subr.mxu0 0.0
        %3939 = vmatpush1.msra.mxu0 0.0
        %3940 = vmatprep.subr.mxu0 0.0
        %3941 = vmatpush1.msra.mxu0 0.0
        %3942 = vmatprep.subr.mxu0 0.0
        %3943 = vmatpush1.msra.mxu0 0.0
        %3944 = vmatprep.mubr.f32.mxu0 0.0
        %3945 = vmatmul.mubr.f32.gmra.mrb[0].mxu0 %v3878
        %v3946 = vpop.f32.mrb[0].mxu0
        %v3947 = vadd.f32 0.0, %v3946
        %v3948 = vpop.f32.mrb[0].mxu0
        %3949 = vdwg.mxu0
        %v3950 = vadd.f32 %v3791, %v3947
        %v3951 = vmul.f32 %v1739, %v1847
        %3952 = vmatprep.subr.mxu0 0.0
        %3953 = vmatpush1.xpose.msra.mxu0 %v3951
        %3954 = vmatprep.subr.mxu0 0.0
        %3955 = vmatpush1.xpose.msra.mxu0 0.0
        %3956 = vmatprep.subr.mxu0 0.0
        %3957 = vmatpush1.xpose.msra.mxu0 0.0
        %3958 = vmatprep.subr.mxu0 0.0
        %3959 = vmatpush1.xpose.msra.mxu0 0.0
        %3960 = vmatprep.subr.mxu0 0.0
        %3961 = vmatpush1.xpose.msra.mxu0 0.0
        %3962 = vmatprep.subr.mxu0 0.0
        %3963 = vmatpush1.xpose.msra.mxu0 0.0
        %3964 = vmatprep.subr.mxu0 0.0
        %3965 = vmatpush1.xpose.msra.mxu0 0.0
        %3966 = vmatprep.subr.mxu0 0.0
        %3967 = vmatpush1.xpose.msra.mxu0 0.0
        %3968 = vmatprep.subr.mxu0 0.0
        %3969 = vmatpush1.xpose.msra.mxu0 0.0
        %3970 = vmatprep.subr.mxu0 0.0
        %3971 = vmatpush1.xpose.msra.mxu0 0.0
        %3972 = vmatprep.subr.mxu0 0.0
        %3973 = vmatpush1.xpose.msra.mxu0 0.0
        %3974 = vmatprep.subr.mxu0 0.0
        %3975 = vmatpush1.xpose.msra.mxu0 0.0
        %3976 = vmatprep.subr.mxu0 0.0
        %3977 = vmatpush1.xpose.msra.mxu0 0.0
        %3978 = vmatprep.subr.mxu0 0.0
        %3979 = vmatpush1.xpose.msra.mxu0 0.0
        %3980 = vmatprep.subr.mxu0 0.0
        %3981 = vmatpush1.xpose.msra.mxu0 0.0
        %3982 = vmatprep.subr.mxu0 0.0
        %3983 = vmatpush1.xpose.msra.mxu0 0.0
        %3984 = vmatprep.subr.mxu0 0.0
        %3985 = vmatpush1.xpose.msra.mxu0 0.0
        %3986 = vmatprep.subr.mxu0 0.0
        %3987 = vmatpush1.xpose.msra.mxu0 0.0
        %3988 = vmatprep.subr.mxu0 0.0
        %3989 = vmatpush1.xpose.msra.mxu0 0.0
        %3990 = vmatprep.subr.mxu0 0.0
        %3991 = vmatpush1.xpose.msra.mxu0 0.0
        %3992 = vmatprep.subr.mxu0 0.0
        %3993 = vmatpush1.xpose.msra.mxu0 0.0
        %3994 = vmatprep.subr.mxu0 0.0
        %3995 = vmatpush1.xpose.msra.mxu0 0.0
        %3996 = vmatprep.subr.mxu0 0.0
        %3997 = vmatpush1.xpose.msra.mxu0 0.0
        %3998 = vmatprep.subr.mxu0 0.0
        %3999 = vmatpush1.xpose.msra.mxu0 0.0
        %4000 = vmatprep.subr.mxu0 0.0
        %4001 = vmatpush1.xpose.msra.mxu0 0.0
        %4002 = vmatprep.subr.mxu0 0.0
        %4003 = vmatpush1.xpose.msra.mxu0 0.0
        %4004 = vmatprep.subr.mxu0 0.0
        %4005 = vmatpush1.xpose.msra.mxu0 0.0
        %4006 = vmatprep.subr.mxu0 0.0
        %4007 = vmatpush1.xpose.msra.mxu0 0.0
        %4008 = vmatprep.subr.mxu0 0.0
        %4009 = vmatpush1.xpose.msra.mxu0 0.0
        %4010 = vmatprep.subr.mxu0 0.0
        %4011 = vmatpush1.xpose.msra.mxu0 0.0
        %4012 = vmatprep.subr.mxu0 0.0
        %4013 = vmatpush1.xpose.msra.mxu0 0.0
        %4014 = vmatprep.subr.mxu0 0.0
        %4015 = vmatpush1.xpose.msra.mxu0 0.0
        %4016 = vmatprep.mubr.f32.mxu0 0.0
        %4017 = vmatmul.mubr.f32.gmra.mrb[0].mxu0 %v1518
        %v4018 = vpop.f32.mrb[0].mxu0
        %v4019 = vadd.f32 0.0, %v4018
        %v4020 = vpop.f32.mrb[0].mxu0
        %4021 = vdwg.mxu0
        %v4022 = vmul.f32 %v4019, 0.25
        %v4023 = vadd.f32 %v4022, %v3228
        %v4024 = vsel %vm1954, %v4023, -inf
        %4025 = vmax.xlane.f32.xlu0 %v4024
        %v4026 = vpop.xlane.xlu0 %4025
        %v4027 = vsub.f32 %v4023, %v4026
        %v4028 = vmul.f32 %v4027, 1.442695
        %v4029 = vpow.pop %v4028
        %v4030 = vsel %vm1954, %v4029, 0.0
        %4031 = vadd.xlane.f32.xlu0 %v4030
        %v4032 = vpop.xlane.xlu0 %4031
        %v4033 = vrcp.pop %v4032
        %v4034 = vmul.f32 %v4029, %v4033
        %v4035 = vmul.f32 %v1813, %v1847
        %v4037 = vsel %vm1954, %v4034, 0
        %4039 = vmatprep.subr.mxu0 0.0
        %4040 = vmatpush1.msra.mxu0 %v4035
        %4041 = vmatprep.subr.mxu0 0.0
        %4042 = vmatpush1.msra.mxu0 0.0
        %4043 = vmatprep.subr.mxu0 0.0
        %4044 = vmatpush1.msra.mxu0 0.0
        %4045 = vmatprep.subr.mxu0 0.0
        %4046 = vmatpush1.msra.mxu0 0.0
        %4047 = vmatprep.subr.mxu0 0.0
        %4048 = vmatpush1.msra.mxu0 0.0
        %4049 = vmatprep.subr.mxu0 0.0
        %4050 = vmatpush1.msra.mxu0 0.0
        %4051 = vmatprep.subr.mxu0 0.0
        %4052 = vmatpush1.msra.mxu0 0.0
        %4053 = vmatprep.subr.mxu0 0.0
        %4054 = vmatpush1.msra.mxu0 0.0
        %4055 = vmatprep.subr.mxu0 0.0
        %4056 = vmatpush1.msra.mxu0 0.0
        %4057 = vmatprep.subr.mxu0 0.0
        %4058 = vmatpush1.msra.mxu0 0.0
        %4059 = vmatprep.subr.mxu0 0.0
        %4060 = vmatpush1.msra.mxu0 0.0
        %4061 = vmatprep.subr.mxu0 0.0
        %4062 = vmatpush1.msra.mxu0 0.0
        %4063 = vmatprep.subr.mxu0 0.0
        %4064 = vmatpush1.msra.mxu0 0.0
        %4065 = vmatprep.subr.mxu0 0.0
        %4066 = vmatpush1.msra.mxu0 0.0
        %4067 = vmatprep.subr.mxu0 0.0
        %4068 = vmatpush1.msra.mxu0 0.0
        %4069 = vmatprep.subr.mxu0 0.0
        %4070 = vmatpush1.msra.mxu0 0.0
        %4071 = vmatprep.subr.mxu0 0.0
        %4072 = vmatpush1.msra.mxu0 0.0
        %4073 = vmatprep.subr.mxu0 0.0
        %4074 = vmatpush1.msra.mxu0 0.0
        %4075 = vmatprep.subr.mxu0 0.0
        %4076 = vmatpush1.msra.mxu0 0.0
        %4077 = vmatprep.subr.mxu0 0.0
        %4078 = vmatpush1.msra.mxu0 0.0
        %4079 = vmatprep.subr.mxu0 0.0
        %4080 = vmatpush1.msra.mxu0 0.0
        %4081 = vmatprep.subr.mxu0 0.0
        %4082 = vmatpush1.msra.mxu0 0.0
        %4083 = vmatprep.subr.mxu0 0.0
        %4084 = vmatpush1.msra.mxu0 0.0
        %4085 = vmatprep.subr.mxu0 0.0
        %4086 = vmatpush1.msra.mxu0 0.0
        %4087 = vmatprep.subr.mxu0 0.0
        %4088 = vmatpush1.msra.mxu0 0.0
        %4089 = vmatprep.subr.mxu0 0.0
        %4090 = vmatpush1.msra.mxu0 0.0
        %4091 = vmatprep.subr.mxu0 0.0
        %4092 = vmatpush1.msra.mxu0 0.0
        %4093 = vmatprep.subr.mxu0 0.0
        %4094 = vmatpush1.msra.mxu0 0.0
        %4095 = vmatprep.subr.mxu0 0.0
        %4096 = vmatpush1.msra.mxu0 0.0
        %4097 = vmatprep.subr.mxu0 0.0
        %4098 = vmatpush1.msra.mxu0 0.0
        %4099 = vmatprep.subr.mxu0 0.0
        %4100 = vmatpush1.msra.mxu0 0.0
        %4101 = vmatprep.subr.mxu0 0.0
        %4102 = vmatpush1.msra.mxu0 0.0
        %4103 = vmatprep.mubr.f32.mxu0 0.0
        %4104 = vmatmul.mubr.f32.gmra.mrb[0].mxu0 %v4037
        %v4105 = vpop.f32.mrb[0].mxu0
        %v4106 = vadd.f32 0.0, %v4105
        %v4107 = vpop.f32.mrb[0].mxu0
        %4108 = vdwg.mxu0
        %v4109 = vadd.f32 %v3950, %v4106
        %v4110 = vmul.f32 %v1739, %v1852
        %4111 = vmatprep.subr.mxu0 0.0
        %4112 = vmatpush1.xpose.msra.mxu0 %v4110
        %4113 = vmatprep.subr.mxu0 0.0
        %4114 = vmatpush1.xpose.msra.mxu0 0.0
        %4115 = vmatprep.subr.mxu0 0.0
        %4116 = vmatpush1.xpose.msra.mxu0 0.0
        %4117 = vmatprep.subr.mxu0 0.0
        %4118 = vmatpush1.xpose.msra.mxu0 0.0
        %4119 = vmatprep.subr.mxu0 0.0
        %4120 = vmatpush1.xpose.msra.mxu0 0.0
        %4121 = vmatprep.subr.mxu0 0.0
        %4122 = vmatpush1.xpose.msra.mxu0 0.0
        %4123 = vmatprep.subr.mxu0 0.0
        %4124 = vmatpush1.xpose.msra.mxu0 0.0
        %4125 = vmatprep.subr.mxu0 0.0
        %4126 = vmatpush1.xpose.msra.mxu0 0.0
        %4127 = vmatprep.subr.mxu0 0.0
        %4128 = vmatpush1.xpose.msra.mxu0 0.0
        %4129 = vmatprep.subr.mxu0 0.0
        %4130 = vmatpush1.xpose.msra.mxu0 0.0
        %4131 = vmatprep.subr.mxu0 0.0
        %4132 = vmatpush1.xpose.msra.mxu0 0.0
        %4133 = vmatprep.subr.mxu0 0.0
        %4134 = vmatpush1.xpose.msra.mxu0 0.0
        %4135 = vmatprep.subr.mxu0 0.0
        %4136 = vmatpush1.xpose.msra.mxu0 0.0
        %4137 = vmatprep.subr.mxu0 0.0
        %4138 = vmatpush1.xpose.msra.mxu0 0.0
        %4139 = vmatprep.subr.mxu0 0.0
        %4140 = vmatpush1.xpose.msra.mxu0 0.0
        %4141 = vmatprep.subr.mxu0 0.0
        %4142 = vmatpush1.xpose.msra.mxu0 0.0
        %4143 = vmatprep.subr.mxu0 0.0
        %4144 = vmatpush1.xpose.msra.mxu0 0.0
        %4145 = vmatprep.subr.mxu0 0.0
        %4146 = vmatpush1.xpose.msra.mxu0 0.0
        %4147 = vmatprep.subr.mxu0 0.0
        %4148 = vmatpush1.xpose.msra.mxu0 0.0
        %4149 = vmatprep.subr.mxu0 0.0
        %4150 = vmatpush1.xpose.msra.mxu0 0.0
        %4151 = vmatprep.subr.mxu0 0.0
        %4152 = vmatpush1.xpose.msra.mxu0 0.0
        %4153 = vmatprep.subr.mxu0 0.0
        %4154 = vmatpush1.xpose.msra.mxu0 0.0
        %4155 = vmatprep.subr.mxu0 0.0
        %4156 = vmatpush1.xpose.msra.mxu0 0.0
        %4157 = vmatprep.subr.mxu0 0.0
        %4158 = vmatpush1.xpose.msra.mxu0 0.0
        %4159 = vmatprep.subr.mxu0 0.0
        %4160 = vmatpush1.xpose.msra.mxu0 0.0
        %4161 = vmatprep.subr.mxu0 0.0
        %4162 = vmatpush1.xpose.msra.mxu0 0.0
        %4163 = vmatprep.subr.mxu0 0.0
        %4164 = vmatpush1.xpose.msra.mxu0 0.0
        %4165 = vmatprep.subr.mxu0 0.0
        %4166 = vmatpush1.xpose.msra.mxu0 0.0
        %4167 = vmatprep.subr.mxu0 0.0
        %4168 = vmatpush1.xpose.msra.mxu0 0.0
        %4169 = vmatprep.subr.mxu0 0.0
        %4170 = vmatpush1.xpose.msra.mxu0 0.0
        %4171 = vmatprep.subr.mxu0 0.0
        %4172 = vmatpush1.xpose.msra.mxu0 0.0
        %4173 = vmatprep.subr.mxu0 0.0
        %4174 = vmatpush1.xpose.msra.mxu0 0.0
        %4175 = vmatprep.mubr.f32.mxu0 0.0
        %4176 = vmatmul.mubr.f32.gmra.mrb[0].mxu0 %v1518
        %v4177 = vpop.f32.mrb[0].mxu0
        %v4178 = vadd.f32 0.0, %v4177
        %v4179 = vpop.f32.mrb[0].mxu0
        %4180 = vdwg.mxu0
        %v4181 = vmul.f32 %v4178, 0.25
        %v4182 = vadd.f32 %v4181, %v3228
        %v4183 = vsel %vm1954, %v4182, -inf
        %4184 = vmax.xlane.f32.xlu0 %v4183
        %v4185 = vpop.xlane.xlu0 %4184
        %v4186 = vsub.f32 %v4182, %v4185
        %v4187 = vmul.f32 %v4186, 1.442695
        %v4188 = vpow.pop %v4187
        %v4189 = vsel %vm1954, %v4188, 0.0
        %4190 = vadd.xlane.f32.xlu0 %v4189
        %v4191 = vpop.xlane.xlu0 %4190
        %v4192 = vrcp.pop %v4191
        %v4193 = vmul.f32 %v4188, %v4192
        %v4194 = vmul.f32 %v1813, %v1852
        %v4196 = vsel %vm1954, %v4193, 0
        %4198 = vmatprep.subr.mxu0 0.0
        %4199 = vmatpush1.msra.mxu0 %v4194
        %4200 = vmatprep.subr.mxu0 0.0
        %4201 = vmatpush1.msra.mxu0 0.0
        %4202 = vmatprep.subr.mxu0 0.0
        %4203 = vmatpush1.msra.mxu0 0.0
        %4204 = vmatprep.subr.mxu0 0.0
        %4205 = vmatpush1.msra.mxu0 0.0
        %4206 = vmatprep.subr.mxu0 0.0
        %4207 = vmatpush1.msra.mxu0 0.0
        %4208 = vmatprep.subr.mxu0 0.0
        %4209 = vmatpush1.msra.mxu0 0.0
        %4210 = vmatprep.subr.mxu0 0.0
        %4211 = vmatpush1.msra.mxu0 0.0
        %4212 = vmatprep.subr.mxu0 0.0
        %4213 = vmatpush1.msra.mxu0 0.0
        %4214 = vmatprep.subr.mxu0 0.0
        %4215 = vmatpush1.msra.mxu0 0.0
        %4216 = vmatprep.subr.mxu0 0.0
        %4217 = vmatpush1.msra.mxu0 0.0
        %4218 = vmatprep.subr.mxu0 0.0
        %4219 = vmatpush1.msra.mxu0 0.0
        %4220 = vmatprep.subr.mxu0 0.0
        %4221 = vmatpush1.msra.mxu0 0.0
        %4222 = vmatprep.subr.mxu0 0.0
        %4223 = vmatpush1.msra.mxu0 0.0
        %4224 = vmatprep.subr.mxu0 0.0
        %4225 = vmatpush1.msra.mxu0 0.0
        %4226 = vmatprep.subr.mxu0 0.0
        %4227 = vmatpush1.msra.mxu0 0.0
        %4228 = vmatprep.subr.mxu0 0.0
        %4229 = vmatpush1.msra.mxu0 0.0
        %4230 = vmatprep.subr.mxu0 0.0
        %4231 = vmatpush1.msra.mxu0 0.0
        %4232 = vmatprep.subr.mxu0 0.0
        %4233 = vmatpush1.msra.mxu0 0.0
        %4234 = vmatprep.subr.mxu0 0.0
        %4235 = vmatpush1.msra.mxu0 0.0
        %4236 = vmatprep.subr.mxu0 0.0
        %4237 = vmatpush1.msra.mxu0 0.0
        %4238 = vmatprep.subr.mxu0 0.0
        %4239 = vmatpush1.msra.mxu0 0.0
        %4240 = vmatprep.subr.mxu0 0.0
        %4241 = vmatpush1.msra.mxu0 0.0
        %4242 = vmatprep.subr.mxu0 0.0
        %4243 = vmatpush1.msra.mxu0 0.0
        %4244 = vmatprep.subr.mxu0 0.0
        %4245 = vmatpush1.msra.mxu0 0.0
        %4246 = vmatprep.subr.mxu0 0.0
        %4247 = vmatpush1.msra.mxu0 0.0
        %4248 = vmatprep.subr.mxu0 0.0
        %4249 = vmatpush1.msra.mxu0 0.0
        %4250 = vmatprep.subr.mxu0 0.0
        %4251 = vmatpush1.msra.mxu0 0.0
        %4252 = vmatprep.subr.mxu0 0.0
        %4253 = vmatpush1.msra.mxu0 0.0
        %4254 = vmatprep.subr.mxu0 0.0
        %4255 = vmatpush1.msra.mxu0 0.0
        %4256 = vmatprep.subr.mxu0 0.0
        %4257 = vmatpush1.msra.mxu0 0.0
        %4258 = vmatprep.subr.mxu0 0.0
        %4259 = vmatpush1.msra.mxu0 0.0
        %4260 = vmatprep.subr.mxu0 0.0
        %4261 = vmatpush1.msra.mxu0 0.0
        %4262 = vmatprep.mubr.f32.mxu0 0.0
        %4263 = vmatmul.mubr.f32.gmra.mrb[0].mxu0 %v4196
        %v4264 = vpop.f32.mrb[0].mxu0
        %v4265 = vadd.f32 0.0, %v4264
        %v4266 = vpop.f32.mrb[0].mxu0
        %4267 = vdwg.mxu0
        %v4268 = vadd.f32 %v4109, %v4265
        %v4269 = vmul.f32 %v1739, %v1857
        %4270 = vmatprep.subr.mxu0 0.0
        %4271 = vmatpush1.xpose.msra.mxu0 %v4269
        %4272 = vmatprep.subr.mxu0 0.0
        %4273 = vmatpush1.xpose.msra.mxu0 0.0
        %4274 = vmatprep.subr.mxu0 0.0
        %4275 = vmatpush1.xpose.msra.mxu0 0.0
        %4276 = vmatprep.subr.mxu0 0.0
        %4277 = vmatpush1.xpose.msra.mxu0 0.0
        %4278 = vmatprep.subr.mxu0 0.0
        %4279 = vmatpush1.xpose.msra.mxu0 0.0
        %4280 = vmatprep.subr.mxu0 0.0
        %4281 = vmatpush1.xpose.msra.mxu0 0.0
        %4282 = vmatprep.subr.mxu0 0.0
        %4283 = vmatpush1.xpose.msra.mxu0 0.0
        %4284 = vmatprep.subr.mxu0 0.0
        %4285 = vmatpush1.xpose.msra.mxu0 0.0
        %4286 = vmatprep.subr.mxu0 0.0
        %4287 = vmatpush1.xpose.msra.mxu0 0.0
        %4288 = vmatprep.subr.mxu0 0.0
        %4289 = vmatpush1.xpose.msra.mxu0 0.0
        %4290 = vmatprep.subr.mxu0 0.0
        %4291 = vmatpush1.xpose.msra.mxu0 0.0
        %4292 = vmatprep.subr.mxu0 0.0
        %4293 = vmatpush1.xpose.msra.mxu0 0.0
        %4294 = vmatprep.subr.mxu0 0.0
        %4295 = vmatpush1.xpose.msra.mxu0 0.0
        %4296 = vmatprep.subr.mxu0 0.0
        %4297 = vmatpush1.xpose.msra.mxu0 0.0
        %4298 = vmatprep.subr.mxu0 0.0
        %4299 = vmatpush1.xpose.msra.mxu0 0.0
        %4300 = vmatprep.subr.mxu0 0.0
        %4301 = vmatpush1.xpose.msra.mxu0 0.0
        %4302 = vmatprep.subr.mxu0 0.0
        %4303 = vmatpush1.xpose.msra.mxu0 0.0
        %4304 = vmatprep.subr.mxu0 0.0
        %4305 = vmatpush1.xpose.msra.mxu0 0.0
        %4306 = vmatprep.subr.mxu0 0.0
        %4307 = vmatpush1.xpose.msra.mxu0 0.0
        %4308 = vmatprep.subr.mxu0 0.0
        %4309 = vmatpush1.xpose.msra.mxu0 0.0
        %4310 = vmatprep.subr.mxu0 0.0
        %4311 = vmatpush1.xpose.msra.mxu0 0.0
        %4312 = vmatprep.subr.mxu0 0.0
        %4313 = vmatpush1.xpose.msra.mxu0 0.0
        %4314 = vmatprep.subr.mxu0 0.0
        %4315 = vmatpush1.xpose.msra.mxu0 0.0
        %4316 = vmatprep.subr.mxu0 0.0
        %4317 = vmatpush1.xpose.msra.mxu0 0.0
        %4318 = vmatprep.subr.mxu0 0.0
        %4319 = vmatpush1.xpose.msra.mxu0 0.0
        %4320 = vmatprep.subr.mxu0 0.0
        %4321 = vmatpush1.xpose.msra.mxu0 0.0
        %4322 = vmatprep.subr.mxu0 0.0
        %4323 = vmatpush1.xpose.msra.mxu0 0.0
        %4324 = vmatprep.subr.mxu0 0.0
        %4325 = vmatpush1.xpose.msra.mxu0 0.0
        %4326 = vmatprep.subr.mxu0 0.0
        %4327 = vmatpush1.xpose.msra.mxu0 0.0
        %4328 = vmatprep.subr.mxu0 0.0
        %4329 = vmatpush1.xpose.msra.mxu0 0.0
        %4330 = vmatprep.subr.mxu0 0.0
        %4331 = vmatpush1.xpose.msra.mxu0 0.0
        %4332 = vmatprep.subr.mxu0 0.0
        %4333 = vmatpush1.xpose.msra.mxu0 0.0
        %4334 = vmatprep.mubr.f32.mxu0 0.0
        %4335 = vmatmul.mubr.f32.gmra.mrb[0].mxu0 %v1518
        %v4336 = vpop.f32.mrb[0].mxu0
        %v4337 = vadd.f32 0.0, %v4336
        %v4338 = vpop.f32.mrb[0].mxu0
        %4339 = vdwg.mxu0
        %v4340 = vmul.f32 %v4337, 0.25
        %v4341 = vadd.f32 %v4340, %v3228
        %v4342 = vsel %vm1954, %v4341, -inf
        %4343 = vmax.xlane.f32.xlu0 %v4342
        %v4344 = vpop.xlane.xlu0 %4343
        %v4345 = vsub.f32 %v4341, %v4344
        %v4346 = vmul.f32 %v4345, 1.442695
        %v4347 = vpow.pop %v4346
        %v4348 = vsel %vm1954, %v4347, 0.0
        %4349 = vadd.xlane.f32.xlu0 %v4348
        %v4350 = vpop.xlane.xlu0 %4349
        %v4351 = vrcp.pop %v4350
        %v4352 = vmul.f32 %v4347, %v4351
        %v4353 = vmul.f32 %v1813, %v1857
        %v4355 = vsel %vm1954, %v4352, 0
        %4357 = vmatprep.subr.mxu0 0.0
        %4358 = vmatpush1.msra.mxu0 %v4353
        %4359 = vmatprep.subr.mxu0 0.0
        %4360 = vmatpush1.msra.mxu0 0.0
        %4361 = vmatprep.subr.mxu0 0.0
        %4362 = vmatpush1.msra.mxu0 0.0
        %4363 = vmatprep.subr.mxu0 0.0
        %4364 = vmatpush1.msra.mxu0 0.0
        %4365 = vmatprep.subr.mxu0 0.0
        %4366 = vmatpush1.msra.mxu0 0.0
        %4367 = vmatprep.subr.mxu0 0.0
        %4368 = vmatpush1.msra.mxu0 0.0
        %4369 = vmatprep.subr.mxu0 0.0
        %4370 = vmatpush1.msra.mxu0 0.0
        %4371 = vmatprep.subr.mxu0 0.0
        %4372 = vmatpush1.msra.mxu0 0.0
        %4373 = vmatprep.subr.mxu0 0.0
        %4374 = vmatpush1.msra.mxu0 0.0
        %4375 = vmatprep.subr.mxu0 0.0
        %4376 = vmatpush1.msra.mxu0 0.0
        %4377 = vmatprep.subr.mxu0 0.0
        %4378 = vmatpush1.msra.mxu0 0.0
        %4379 = vmatprep.subr.mxu0 0.0
        %4380 = vmatpush1.msra.mxu0 0.0
        %4381 = vmatprep.subr.mxu0 0.0
        %4382 = vmatpush1.msra.mxu0 0.0
        %4383 = vmatprep.subr.mxu0 0.0
        %4384 = vmatpush1.msra.mxu0 0.0
        %4385 = vmatprep.subr.mxu0 0.0
        %4386 = vmatpush1.msra.mxu0 0.0
        %4387 = vmatprep.subr.mxu0 0.0
        %4388 = vmatpush1.msra.mxu0 0.0
        %4389 = vmatprep.subr.mxu0 0.0
        %4390 = vmatpush1.msra.mxu0 0.0
        %4391 = vmatprep.subr.mxu0 0.0
        %4392 = vmatpush1.msra.mxu0 0.0
        %4393 = vmatprep.subr.mxu0 0.0
        %4394 = vmatpush1.msra.mxu0 0.0
        %4395 = vmatprep.subr.mxu0 0.0
        %4396 = vmatpush1.msra.mxu0 0.0
        %4397 = vmatprep.subr.mxu0 0.0
        %4398 = vmatpush1.msra.mxu0 0.0
        %4399 = vmatprep.subr.mxu0 0.0
        %4400 = vmatpush1.msra.mxu0 0.0
        %4401 = vmatprep.subr.mxu0 0.0
        %4402 = vmatpush1.msra.mxu0 0.0
        %4403 = vmatprep.subr.mxu0 0.0
        %4404 = vmatpush1.msra.mxu0 0.0
        %4405 = vmatprep.subr.mxu0 0.0
        %4406 = vmatpush1.msra.mxu0 0.0
        %4407 = vmatprep.subr.mxu0 0.0
        %4408 = vmatpush1.msra.mxu0 0.0
        %4409 = vmatprep.subr.mxu0 0.0
        %4410 = vmatpush1.msra.mxu0 0.0
        %4411 = vmatprep.subr.mxu0 0.0
        %4412 = vmatpush1.msra.mxu0 0.0
        %4413 = vmatprep.subr.mxu0 0.0
        %4414 = vmatpush1.msra.mxu0 0.0
        %4415 = vmatprep.subr.mxu0 0.0
        %4416 = vmatpush1.msra.mxu0 0.0
        %4417 = vmatprep.subr.mxu0 0.0
        %4418 = vmatpush1.msra.mxu0 0.0
        %4419 = vmatprep.subr.mxu0 0.0
        %4420 = vmatpush1.msra.mxu0 0.0
        %4421 = vmatprep.mubr.f32.mxu0 0.0
        %4422 = vmatmul.mubr.f32.gmra.mrb[0].mxu0 %v4355
        %v4423 = vpop.f32.mrb[0].mxu0
        %v4424 = vadd.f32 0.0, %v4423
        %v4425 = vpop.f32.mrb[0].mxu0
        %4426 = vdwg.mxu0
        %v4427 = vadd.f32 %v4268, %v4424
        %v4429 = vlaneseq
        %v4430 = vshrl.u32 %v4429, 7
        %v4431 = vsub.s32 0, %v4430
        %v4432 = vrot.slane %v1874, %v4431
        %4434 = vmatprep.subr.mxu0 0.0
        %4435 = vmatpush1.msra.mxu0 %v1858
        %4436 = vmatprep.subr.mxu0 0.0
        %4437 = vmatpush1.msra.mxu0 %v1859
        %4438 = vmatprep.subr.mxu0 0.0
        %4439 = vmatpush1.msra.mxu0 %v1860
        %4440 = vmatprep.subr.mxu0 0.0
        %4441 = vmatpush1.msra.mxu0 %v1861
        %4442 = vmatprep.subr.mxu0 0.0
        %4443 = vmatpush1.msra.mxu0 %v1862
        %4444 = vmatprep.subr.mxu0 0.0
        %4445 = vmatpush1.msra.mxu0 %v1863
        %4446 = vmatprep.subr.mxu0 0.0
        %4447 = vmatpush1.msra.mxu0 %v1864
        %4448 = vmatprep.subr.mxu0 0.0
        %4449 = vmatpush1.msra.mxu0 %v1865
        %4450 = vmatprep.subr.mxu0 0.0
        %4451 = vmatpush1.msra.mxu0 %v1866
        %4452 = vmatprep.subr.mxu0 0.0
        %4453 = vmatpush1.msra.mxu0 %v1867
        %4454 = vmatprep.subr.mxu0 0.0
        %4455 = vmatpush1.msra.mxu0 %v1868
        %4456 = vmatprep.subr.mxu0 0.0
        %4457 = vmatpush1.msra.mxu0 %v1869
        %4458 = vmatprep.subr.mxu0 0.0
        %4459 = vmatpush1.msra.mxu0 %v1870
        %4460 = vmatprep.subr.mxu0 0.0
        %4461 = vmatpush1.msra.mxu0 %v1871
        %4462 = vmatprep.subr.mxu0 0.0
        %4463 = vmatpush1.msra.mxu0 %v1872
        %4464 = vmatprep.subr.mxu0 0.0
        %4465 = vmatpush1.msra.mxu0 %v1873
        %4466 = vmatprep.subr.mxu0 0.0
        %4467 = vmatpush1.msra.mxu0 0.0
        %4468 = vmatprep.subr.mxu0 0.0
        %4469 = vmatpush1.msra.mxu0 0.0
        %4470 = vmatprep.subr.mxu0 0.0
        %4471 = vmatpush1.msra.mxu0 0.0
        %4472 = vmatprep.subr.mxu0 0.0
        %4473 = vmatpush1.msra.mxu0 0.0
        %4474 = vmatprep.subr.mxu0 0.0
        %4475 = vmatpush1.msra.mxu0 0.0
        %4476 = vmatprep.subr.mxu0 0.0
        %4477 = vmatpush1.msra.mxu0 0.0
        %4478 = vmatprep.subr.mxu0 0.0
        %4479 = vmatpush1.msra.mxu0 0.0
        %4480 = vmatprep.subr.mxu0 0.0
        %4481 = vmatpush1.msra.mxu0 0.0
        %4482 = vmatprep.subr.mxu0 0.0
        %4483 = vmatpush1.msra.mxu0 0.0
        %4484 = vmatprep.subr.mxu0 0.0
        %4485 = vmatpush1.msra.mxu0 0.0
        %4486 = vmatprep.subr.mxu0 0.0
        %4487 = vmatpush1.msra.mxu0 0.0
        %4488 = vmatprep.subr.mxu0 0.0
        %4489 = vmatpush1.msra.mxu0 0.0
        %4490 = vmatprep.subr.mxu0 0.0
        %4491 = vmatpush1.msra.mxu0 0.0
        %4492 = vmatprep.subr.mxu0 0.0
        %4493 = vmatpush1.msra.mxu0 0.0
        %4494 = vmatprep.subr.mxu0 0.0
        %4495 = vmatpush1.msra.mxu0 0.0
        %4496 = vmatprep.subr.mxu0 0.0
        %4497 = vmatpush1.msra.mxu0 0.0
        %4498 = vmatprep.mubr.f32.mxu0 0.0
        %4499 = vmatmul.mubr.f32.gmra.mrb[0].mxu0 %v3151
        %v4500 = vpop.f32.mrb[0].mxu0
        %v4501 = vadd.f32 %v4432, %v4500
        %v4502 = vpop.f32.mrb[0].mxu0
        %4503 = vmatprep.mubr.f32.mxu0 0.0
        %4504 = vmatmul.mubr.f32.gmra.mrb[0].mxu0 %v4427
        %v4505 = vpop.f32.mrb[0].mxu0
        %v4506 = vadd.f32 %v4432, %v4505
        %v4507 = vpop.f32.mrb[0].mxu0
        %4508 = vdwg.mxu0
        %s4509 = scalar_lea.vmem %s893, 128 [#allocation8]
        %v4510 = vld [vmem:[%s4509] sm:$0xff]
        %v4511 = vld [vmem:[%s4509 + $0x8] sm:$0xff]
        %v4512 = vld [vmem:[%s4509 + $0x10] sm:$0xff]
        %v4513 = vld [vmem:[%s4509 + $0x18] sm:$0xff]
        %v4514 = vld [vmem:[%s4509 + $0x20] sm:$0xff]
        %v4515 = vld [vmem:[%s4509 + $0x28] sm:$0xff]
        %v4516 = vld [vmem:[%s4509 + $0x30] sm:$0xff]
        %v4517 = vld [vmem:[%s4509 + $0x38] sm:$0xff]
        %v4518 = vld [vmem:[%s4509 + $0x40] sm:$0xff]
        %v4519 = vld [vmem:[%s4509 + $0x48] sm:$0xff]
        %v4520 = vld [vmem:[%s4509 + $0x50] sm:$0xff]
        %v4521 = vld [vmem:[%s4509 + $0x58] sm:$0xff]
        %v4522 = vld [vmem:[%s4509 + $0x60] sm:$0xff]
        %v4523 = vld [vmem:[%s4509 + $0x68] sm:$0xff]
        %v4524 = vld [vmem:[%s4509 + $0x70] sm:$0xff]
        %v4525 = vld [vmem:[%s4509 + $0x78] sm:$0xff]
        %s4526 = scalar_lea.vmem %s1036, 1
        %v4527 = vld [vmem:[%s4526] sm:$0x1]
        %v4528 = vmul.f32 %v1514, %v1822
        %4529 = vmatprep.subr.mxu0 0.0
        %4530 = vmatpush1.xpose.msra.mxu0 %v4528
        %4531 = vmatprep.subr.mxu0 0.0
        %4532 = vmatpush1.xpose.msra.mxu0 0.0
        %4533 = vmatprep.subr.mxu0 0.0
        %4534 = vmatpush1.xpose.msra.mxu0 0.0
        %4535 = vmatprep.subr.mxu0 0.0
        %4536 = vmatpush1.xpose.msra.mxu0 0.0
        %4537 = vmatprep.subr.mxu0 0.0
        %4538 = vmatpush1.xpose.msra.mxu0 0.0
        %4539 = vmatprep.subr.mxu0 0.0
        %4540 = vmatpush1.xpose.msra.mxu0 0.0
        %4541 = vmatprep.subr.mxu0 0.0
        %4542 = vmatpush1.xpose.msra.mxu0 0.0
        %4543 = vmatprep.subr.mxu0 0.0
        %4544 = vmatpush1.xpose.msra.mxu0 0.0
        %4545 = vmatprep.subr.mxu0 0.0
        %4546 = vmatpush1.xpose.msra.mxu0 0.0
        %4547 = vmatprep.subr.mxu0 0.0
        %4548 = vmatpush1.xpose.msra.mxu0 0.0
        %4549 = vmatprep.subr.mxu0 0.0
        %4550 = vmatpush1.xpose.msra.mxu0 0.0
        %4551 = vmatprep.subr.mxu0 0.0
        %4552 = vmatpush1.xpose.msra.mxu0 0.0
        %4553 = vmatprep.subr.mxu0 0.0
        %4554 = vmatpush1.xpose.msra.mxu0 0.0
        %4555 = vmatprep.subr.mxu0 0.0
        %4556 = vmatpush1.xpose.msra.mxu0 0.0
        %4557 = vmatprep.subr.mxu0 0.0
        %4558 = vmatpush1.xpose.msra.mxu0 0.0
        %4559 = vmatprep.subr.mxu0 0.0
        %4560 = vmatpush1.xpose.msra.mxu0 0.0
        %4561 = vmatprep.subr.mxu0 0.0
        %4562 = vmatpush1.xpose.msra.mxu0 0.0
        %4563 = vmatprep.subr.mxu0 0.0
        %4564 = vmatpush1.xpose.msra.mxu0 0.0
        %4565 = vmatprep.subr.mxu0 0.0
        %4566 = vmatpush1.xpose.msra.mxu0 0.0
        %4567 = vmatprep.subr.mxu0 0.0
        %4568 = vmatpush1.xpose.msra.mxu0 0.0
        %4569 = vmatprep.subr.mxu0 0.0
        %4570 = vmatpush1.xpose.msra.mxu0 0.0
        %4571 = vmatprep.subr.mxu0 0.0
        %4572 = vmatpush1.xpose.msra.mxu0 0.0
        %4573 = vmatprep.subr.mxu0 0.0
        %4574 = vmatpush1.xpose.msra.mxu0 0.0
        %4575 = vmatprep.subr.mxu0 0.0
        %4576 = vmatpush1.xpose.msra.mxu0 0.0
        %4577 = vmatprep.subr.mxu0 0.0
        %4578 = vmatpush1.xpose.msra.mxu0 0.0
        %4579 = vmatprep.subr.mxu0 0.0
        %4580 = vmatpush1.xpose.msra.mxu0 0.0
        %4581 = vmatprep.subr.mxu0 0.0
        %4582 = vmatpush1.xpose.msra.mxu0 0.0
        %4583 = vmatprep.subr.mxu0 0.0
        %4584 = vmatpush1.xpose.msra.mxu0 0.0
        %4585 = vmatprep.subr.mxu0 0.0
        %4586 = vmatpush1.xpose.msra.mxu0 0.0
        %4587 = vmatprep.subr.mxu0 0.0
        %4588 = vmatpush1.xpose.msra.mxu0 0.0
        %4589 = vmatprep.subr.mxu0 0.0
        %4590 = vmatpush1.xpose.msra.mxu0 0.0
        %4591 = vmatprep.subr.mxu0 0.0
        %4592 = vmatpush1.xpose.msra.mxu0 0.0
        %4593 = vmatprep.mubr.f32.mxu0 0.0
        %4594 = vmatmul.mubr.f32.gmra.mrb[0].mxu0 %v1731
        %v4595 = vpop.f32.mrb[0].mxu0
        %v4596 = vadd.f32 0.0, %v4595
        %v4597 = vpop.f32.mrb[0].mxu0
        %4598 = vdwg.mxu0
        %v4599 = vmul.f32 %v4596, 0.25
        %v4601 = vlaneseq
        %v4602 = vshrl.u32 %v4601, 7
        %v4603 = vsub.s32 0, %v4602
        %v4604 = vrot.slane %v1376, %v4603
        %v4606 = vadd.f32 %v4599, %v4604
        %v4607 = vsel %vm1954, %v4606, -inf
        %4608 = vmax.xlane.f32.xlu0 %v4607
        %v4609 = vpop.xlane.xlu0 %4608
        %v4610 = vsub.f32 %v4606, %v4609
        %v4611 = vmul.f32 %v4610, 1.442695
        %v4612 = vpow.pop %v4611
        %v4613 = vsel %vm1954, %v4612, 0.0
        %4614 = vadd.xlane.f32.xlu0 %v4613
        %v4615 = vpop.xlane.xlu0 %4614
        %v4616 = vrcp.pop %v4615
        %v4617 = vmul.f32 %v4612, %v4616
        %v4618 = vmul.f32 %v1589, %v1822
        %v4619 = vmul.f32 %v1514, %v1827
        %4620 = vmatprep.subr.mxu0 0.0
        %4621 = vmatpush1.xpose.msra.mxu0 %v4619
        %4622 = vmatprep.subr.mxu0 0.0
        %4623 = vmatpush1.xpose.msra.mxu0 0.0
        %4624 = vmatprep.subr.mxu0 0.0
        %4625 = vmatpush1.xpose.msra.mxu0 0.0
        %4626 = vmatprep.subr.mxu0 0.0
        %4627 = vmatpush1.xpose.msra.mxu0 0.0
        %4628 = vmatprep.subr.mxu0 0.0
        %4629 = vmatpush1.xpose.msra.mxu0 0.0
        %4630 = vmatprep.subr.mxu0 0.0
        %4631 = vmatpush1.xpose.msra.mxu0 0.0
        %4632 = vmatprep.subr.mxu0 0.0
        %4633 = vmatpush1.xpose.msra.mxu0 0.0
        %4634 = vmatprep.subr.mxu0 0.0
        %4635 = vmatpush1.xpose.msra.mxu0 0.0
        %4636 = vmatprep.subr.mxu0 0.0
        %4637 = vmatpush1.xpose.msra.mxu0 0.0
        %4638 = vmatprep.subr.mxu0 0.0
        %4639 = vmatpush1.xpose.msra.mxu0 0.0
        %4640 = vmatprep.subr.mxu0 0.0
        %4641 = vmatpush1.xpose.msra.mxu0 0.0
        %4642 = vmatprep.subr.mxu0 0.0
        %4643 = vmatpush1.xpose.msra.mxu0 0.0
        %4644 = vmatprep.subr.mxu0 0.0
        %4645 = vmatpush1.xpose.msra.mxu0 0.0
        %4646 = vmatprep.subr.mxu0 0.0
        %4647 = vmatpush1.xpose.msra.mxu0 0.0
        %4648 = vmatprep.subr.mxu0 0.0
        %4649 = vmatpush1.xpose.msra.mxu0 0.0
        %4650 = vmatprep.subr.mxu0 0.0
        %4651 = vmatpush1.xpose.msra.mxu0 0.0
        %4652 = vmatprep.subr.mxu0 0.0
        %4653 = vmatpush1.xpose.msra.mxu0 0.0
        %4654 = vmatprep.subr.mxu0 0.0
        %4655 = vmatpush1.xpose.msra.mxu0 0.0
        %4656 = vmatprep.subr.mxu0 0.0
        %4657 = vmatpush1.xpose.msra.mxu0 0.0
        %4658 = vmatprep.subr.mxu0 0.0
        %4659 = vmatpush1.xpose.msra.mxu0 0.0
        %4660 = vmatprep.subr.mxu0 0.0
        %4661 = vmatpush1.xpose.msra.mxu0 0.0
        %4662 = vmatprep.subr.mxu0 0.0
        %4663 = vmatpush1.xpose.msra.mxu0 0.0
        %4664 = vmatprep.subr.mxu0 0.0
        %4665 = vmatpush1.xpose.msra.mxu0 0.0
        %4666 = vmatprep.subr.mxu0 0.0
        %4667 = vmatpush1.xpose.msra.mxu0 0.0
        %4668 = vmatprep.subr.mxu0 0.0
        %4669 = vmatpush1.xpose.msra.mxu0 0.0
        %4670 = vmatprep.subr.mxu0 0.0
        %4671 = vmatpush1.xpose.msra.mxu0 0.0
        %4672 = vmatprep.subr.mxu0 0.0
        %4673 = vmatpush1.xpose.msra.mxu0 0.0
        %4674 = vmatprep.subr.mxu0 0.0
        %4675 = vmatpush1.xpose.msra.mxu0 0.0
        %4676 = vmatprep.subr.mxu0 0.0
        %4677 = vmatpush1.xpose.msra.mxu0 0.0
        %4678 = vmatprep.subr.mxu0 0.0
        %4679 = vmatpush1.xpose.msra.mxu0 0.0
        %4680 = vmatprep.subr.mxu0 0.0
        %4681 = vmatpush1.xpose.msra.mxu0 0.0
        %4682 = vmatprep.subr.mxu0 0.0
        %4683 = vmatpush1.xpose.msra.mxu0 0.0
        %4684 = vmatprep.mubr.f32.mxu0 0.0
        %4685 = vmatmul.mubr.f32.gmra.mrb[0].mxu0 %v1731
        %v4686 = vpop.f32.mrb[0].mxu0
        %v4687 = vadd.f32 0.0, %v4686
        %v4688 = vpop.f32.mrb[0].mxu0
        %4689 = vdwg.mxu0
        %v4690 = vmul.f32 %v4687, 0.25
        %v4691 = vadd.f32 %v4690, %v4604
        %v4692 = vsel %vm1954, %v4691, -inf
        %4693 = vmax.xlane.f32.xlu0 %v4692
        %v4694 = vpop.xlane.xlu0 %4693
        %v4695 = vsub.f32 %v4691, %v4694
        %v4696 = vmul.f32 %v4695, 1.442695
        %v4697 = vpow.pop %v4696
        %v4698 = vsel %vm1954, %v4697, 0.0
        %4699 = vadd.xlane.f32.xlu0 %v4698
        %v4700 = vpop.xlane.xlu0 %4699
        %v4701 = vrcp.pop %v4700
        %v4702 = vmul.f32 %v4697, %v4701
        %v4703 = vmul.f32 %v1589, %v1827
        %v4705 = vsel %vm1954, %v4702, 0
        %4707 = vmatprep.subr.mxu0 0.0
        %4708 = vmatpush1.msra.mxu0 %v4703
        %4709 = vmatprep.subr.mxu0 0.0
        %4710 = vmatpush1.msra.mxu0 0.0
        %4711 = vmatprep.subr.mxu0 0.0
        %4712 = vmatpush1.msra.mxu0 0.0
        %4713 = vmatprep.subr.mxu0 0.0
        %4714 = vmatpush1.msra.mxu0 0.0
        %4715 = vmatprep.subr.mxu0 0.0
        %4716 = vmatpush1.msra.mxu0 0.0
        %4717 = vmatprep.subr.mxu0 0.0
        %4718 = vmatpush1.msra.mxu0 0.0
        %4719 = vmatprep.subr.mxu0 0.0
        %4720 = vmatpush1.msra.mxu0 0.0
        %4721 = vmatprep.subr.mxu0 0.0
        %4722 = vmatpush1.msra.mxu0 0.0
        %4723 = vmatprep.subr.mxu0 0.0
        %4724 = vmatpush1.msra.mxu0 0.0
        %4725 = vmatprep.subr.mxu0 0.0
        %4726 = vmatpush1.msra.mxu0 0.0
        %4727 = vmatprep.subr.mxu0 0.0
        %4728 = vmatpush1.msra.mxu0 0.0
        %4729 = vmatprep.subr.mxu0 0.0
        %4730 = vmatpush1.msra.mxu0 0.0
        %4731 = vmatprep.subr.mxu0 0.0
        %4732 = vmatpush1.msra.mxu0 0.0
        %4733 = vmatprep.subr.mxu0 0.0
        %4734 = vmatpush1.msra.mxu0 0.0
        %4735 = vmatprep.subr.mxu0 0.0
        %4736 = vmatpush1.msra.mxu0 0.0
        %4737 = vmatprep.subr.mxu0 0.0
        %4738 = vmatpush1.msra.mxu0 0.0
        %4739 = vmatprep.subr.mxu0 0.0
        %4740 = vmatpush1.msra.mxu0 0.0
        %4741 = vmatprep.subr.mxu0 0.0
        %4742 = vmatpush1.msra.mxu0 0.0
        %4743 = vmatprep.subr.mxu0 0.0
        %4744 = vmatpush1.msra.mxu0 0.0
        %4745 = vmatprep.subr.mxu0 0.0
        %4746 = vmatpush1.msra.mxu0 0.0
        %4747 = vmatprep.subr.mxu0 0.0
        %4748 = vmatpush1.msra.mxu0 0.0
        %4749 = vmatprep.subr.mxu0 0.0
        %4750 = vmatpush1.msra.mxu0 0.0
        %4751 = vmatprep.subr.mxu0 0.0
        %4752 = vmatpush1.msra.mxu0 0.0
        %4753 = vmatprep.subr.mxu0 0.0
        %4754 = vmatpush1.msra.mxu0 0.0
        %4755 = vmatprep.subr.mxu0 0.0
        %4756 = vmatpush1.msra.mxu0 0.0
        %4757 = vmatprep.subr.mxu0 0.0
        %4758 = vmatpush1.msra.mxu0 0.0
        %4759 = vmatprep.subr.mxu0 0.0
        %4760 = vmatpush1.msra.mxu0 0.0
        %4761 = vmatprep.subr.mxu0 0.0
        %4762 = vmatpush1.msra.mxu0 0.0
        %4763 = vmatprep.subr.mxu0 0.0
        %4764 = vmatpush1.msra.mxu0 0.0
        %4765 = vmatprep.subr.mxu0 0.0
        %4766 = vmatpush1.msra.mxu0 0.0
        %4767 = vmatprep.subr.mxu0 0.0
        %4768 = vmatpush1.msra.mxu0 0.0
        %4769 = vmatprep.subr.mxu0 0.0
        %4770 = vmatpush1.msra.mxu0 0.0
        %4771 = vmatprep.mubr.f32.mxu0 0.0
        %4772 = vmatmul.mubr.f32.gmra.mrb[0].mxu0 %v4705
        %v4773 = vpop.f32.mrb[0].mxu0
        %v4774 = vadd.f32 0.0, %v4773
        %v4775 = vpop.f32.mrb[0].mxu0
        %4776 = vdwg.mxu0
        %v4778 = vsel %vm1954, %v4617, 0
        %4780 = vmatprep.subr.mxu0 0.0
        %4781 = vmatpush1.msra.mxu0 %v4618
        %4782 = vmatprep.subr.mxu0 0.0
        %4783 = vmatpush1.msra.mxu0 0.0
        %4784 = vmatprep.subr.mxu0 0.0
        %4785 = vmatpush1.msra.mxu0 0.0
        %4786 = vmatprep.subr.mxu0 0.0
        %4787 = vmatpush1.msra.mxu0 0.0
        %4788 = vmatprep.subr.mxu0 0.0
        %4789 = vmatpush1.msra.mxu0 0.0
        %4790 = vmatprep.subr.mxu0 0.0
        %4791 = vmatpush1.msra.mxu0 0.0
        %4792 = vmatprep.subr.mxu0 0.0
        %4793 = vmatpush1.msra.mxu0 0.0
        %4794 = vmatprep.subr.mxu0 0.0
        %4795 = vmatpush1.msra.mxu0 0.0
        %4796 = vmatprep.subr.mxu0 0.0
        %4797 = vmatpush1.msra.mxu0 0.0
        %4798 = vmatprep.subr.mxu0 0.0
        %4799 = vmatpush1.msra.mxu0 0.0
        %4800 = vmatprep.subr.mxu0 0.0
        %4801 = vmatpush1.msra.mxu0 0.0
        %4802 = vmatprep.subr.mxu0 0.0
        %4803 = vmatpush1.msra.mxu0 0.0
        %4804 = vmatprep.subr.mxu0 0.0
        %4805 = vmatpush1.msra.mxu0 0.0
        %4806 = vmatprep.subr.mxu0 0.0
        %4807 = vmatpush1.msra.mxu0 0.0
        %4808 = vmatprep.subr.mxu0 0.0
        %4809 = vmatpush1.msra.mxu0 0.0
        %4810 = vmatprep.subr.mxu0 0.0
        %4811 = vmatpush1.msra.mxu0 0.0
        %4812 = vmatprep.subr.mxu0 0.0
        %4813 = vmatpush1.msra.mxu0 0.0
        %4814 = vmatprep.subr.mxu0 0.0
        %4815 = vmatpush1.msra.mxu0 0.0
        %4816 = vmatprep.subr.mxu0 0.0
        %4817 = vmatpush1.msra.mxu0 0.0
        %4818 = vmatprep.subr.mxu0 0.0
        %4819 = vmatpush1.msra.mxu0 0.0
        %4820 = vmatprep.subr.mxu0 0.0
        %4821 = vmatpush1.msra.mxu0 0.0
        %4822 = vmatprep.subr.mxu0 0.0
        %4823 = vmatpush1.msra.mxu0 0.0
        %4824 = vmatprep.subr.mxu0 0.0
        %4825 = vmatpush1.msra.mxu0 0.0
        %4826 = vmatprep.subr.mxu0 0.0
        %4827 = vmatpush1.msra.mxu0 0.0
        %4828 = vmatprep.subr.mxu0 0.0
        %4829 = vmatpush1.msra.mxu0 0.0
        %4830 = vmatprep.subr.mxu0 0.0
        %4831 = vmatpush1.msra.mxu0 0.0
        %4832 = vmatprep.subr.mxu0 0.0
        %4833 = vmatpush1.msra.mxu0 0.0
        %4834 = vmatprep.subr.mxu0 0.0
        %4835 = vmatpush1.msra.mxu0 0.0
        %4836 = vmatprep.subr.mxu0 0.0
        %4837 = vmatpush1.msra.mxu0 0.0
        %4838 = vmatprep.subr.mxu0 0.0
        %4839 = vmatpush1.msra.mxu0 0.0
        %4840 = vmatprep.subr.mxu0 0.0
        %4841 = vmatpush1.msra.mxu0 0.0
        %4842 = vmatprep.subr.mxu0 0.0
        %4843 = vmatpush1.msra.mxu0 0.0
        %4844 = vmatprep.mubr.f32.mxu0 0.0
        %4845 = vmatmul.mubr.f32.gmra.mrb[0].mxu0 %v4778
        %v4846 = vpop.f32.mrb[0].mxu0
        %v4847 = vadd.f32 %v4774, %v4846
        %v4848 = vpop.f32.mrb[0].mxu0
        %4849 = vdwg.mxu0
        %v4850 = vmul.f32 %v1514, %v1832
        %4851 = vmatprep.subr.mxu0 0.0
        %4852 = vmatpush1.xpose.msra.mxu0 %v4850
        %4853 = vmatprep.subr.mxu0 0.0
        %4854 = vmatpush1.xpose.msra.mxu0 0.0
        %4855 = vmatprep.subr.mxu0 0.0
        %4856 = vmatpush1.xpose.msra.mxu0 0.0
        %4857 = vmatprep.subr.mxu0 0.0
        %4858 = vmatpush1.xpose.msra.mxu0 0.0
        %4859 = vmatprep.subr.mxu0 0.0
        %4860 = vmatpush1.xpose.msra.mxu0 0.0
        %4861 = vmatprep.subr.mxu0 0.0
        %4862 = vmatpush1.xpose.msra.mxu0 0.0
        %4863 = vmatprep.subr.mxu0 0.0
        %4864 = vmatpush1.xpose.msra.mxu0 0.0
        %4865 = vmatprep.subr.mxu0 0.0
        %4866 = vmatpush1.xpose.msra.mxu0 0.0
        %4867 = vmatprep.subr.mxu0 0.0
        %4868 = vmatpush1.xpose.msra.mxu0 0.0
        %4869 = vmatprep.subr.mxu0 0.0
        %4870 = vmatpush1.xpose.msra.mxu0 0.0
        %4871 = vmatprep.subr.mxu0 0.0
        %4872 = vmatpush1.xpose.msra.mxu0 0.0
        %4873 = vmatprep.subr.mxu0 0.0
        %4874 = vmatpush1.xpose.msra.mxu0 0.0
        %4875 = vmatprep.subr.mxu0 0.0
        %4876 = vmatpush1.xpose.msra.mxu0 0.0
        %4877 = vmatprep.subr.mxu0 0.0
        %4878 = vmatpush1.xpose.msra.mxu0 0.0
        %4879 = vmatprep.subr.mxu0 0.0
        %4880 = vmatpush1.xpose.msra.mxu0 0.0
        %4881 = vmatprep.subr.mxu0 0.0
        %4882 = vmatpush1.xpose.msra.mxu0 0.0
        %4883 = vmatprep.subr.mxu0 0.0
        %4884 = vmatpush1.xpose.msra.mxu0 0.0
        %4885 = vmatprep.subr.mxu0 0.0
        %4886 = vmatpush1.xpose.msra.mxu0 0.0
        %4887 = vmatprep.subr.mxu0 0.0
        %4888 = vmatpush1.xpose.msra.mxu0 0.0
        %4889 = vmatprep.subr.mxu0 0.0
        %4890 = vmatpush1.xpose.msra.mxu0 0.0
        %4891 = vmatprep.subr.mxu0 0.0
        %4892 = vmatpush1.xpose.msra.mxu0 0.0
        %4893 = vmatprep.subr.mxu0 0.0
        %4894 = vmatpush1.xpose.msra.mxu0 0.0
        %4895 = vmatprep.subr.mxu0 0.0
        %4896 = vmatpush1.xpose.msra.mxu0 0.0
        %4897 = vmatprep.subr.mxu0 0.0
        %4898 = vmatpush1.xpose.msra.mxu0 0.0
        %4899 = vmatprep.subr.mxu0 0.0
        %4900 = vmatpush1.xpose.msra.mxu0 0.0
        %4901 = vmatprep.subr.mxu0 0.0
        %4902 = vmatpush1.xpose.msra.mxu0 0.0
        %4903 = vmatprep.subr.mxu0 0.0
        %4904 = vmatpush1.xpose.msra.mxu0 0.0
        %4905 = vmatprep.subr.mxu0 0.0
        %4906 = vmatpush1.xpose.msra.mxu0 0.0
        %4907 = vmatprep.subr.mxu0 0.0
        %4908 = vmatpush1.xpose.msra.mxu0 0.0
        %4909 = vmatprep.subr.mxu0 0.0
        %4910 = vmatpush1.xpose.msra.mxu0 0.0
        %4911 = vmatprep.subr.mxu0 0.0
        %4912 = vmatpush1.xpose.msra.mxu0 0.0
        %4913 = vmatprep.subr.mxu0 0.0
        %4914 = vmatpush1.xpose.msra.mxu0 0.0
        %4915 = vmatprep.mubr.f32.mxu0 0.0
        %4916 = vmatmul.mubr.f32.gmra.mrb[0].mxu0 %v1731
        %v4917 = vpop.f32.mrb[0].mxu0
        %v4918 = vadd.f32 0.0, %v4917
        %v4919 = vpop.f32.mrb[0].mxu0
        %4920 = vdwg.mxu0
        %v4921 = vmul.f32 %v4918, 0.25
        %v4922 = vadd.f32 %v4921, %v4604
        %v4923 = vsel %vm1954, %v4922, -inf
        %4924 = vmax.xlane.f32.xlu0 %v4923
        %v4925 = vpop.xlane.xlu0 %4924
        %v4926 = vsub.f32 %v4922, %v4925
        %v4927 = vmul.f32 %v4926, 1.442695
        %v4928 = vpow.pop %v4927
        %v4929 = vsel %vm1954, %v4928, 0.0
        %4930 = vadd.xlane.f32.xlu0 %v4929
        %v4931 = vpop.xlane.xlu0 %4930
        %v4932 = vrcp.pop %v4931
        %v4933 = vmul.f32 %v4928, %v4932
        %v4934 = vmul.f32 %v1589, %v1832
        %v4936 = vsel %vm1954, %v4933, 0
        %4938 = vmatprep.subr.mxu0 0.0
        %4939 = vmatpush1.msra.mxu0 %v4934
        %4940 = vmatprep.subr.mxu0 0.0
        %4941 = vmatpush1.msra.mxu0 0.0
        %4942 = vmatprep.subr.mxu0 0.0
        %4943 = vmatpush1.msra.mxu0 0.0
        %4944 = vmatprep.subr.mxu0 0.0
        %4945 = vmatpush1.msra.mxu0 0.0
        %4946 = vmatprep.subr.mxu0 0.0
        %4947 = vmatpush1.msra.mxu0 0.0
        %4948 = vmatprep.subr.mxu0 0.0
        %4949 = vmatpush1.msra.mxu0 0.0
        %4950 = vmatprep.subr.mxu0 0.0
        %4951 = vmatpush1.msra.mxu0 0.0
        %4952 = vmatprep.subr.mxu0 0.0
        %4953 = vmatpush1.msra.mxu0 0.0
        %4954 = vmatprep.subr.mxu0 0.0
        %4955 = vmatpush1.msra.mxu0 0.0
        %4956 = vmatprep.subr.mxu0 0.0
        %4957 = vmatpush1.msra.mxu0 0.0
        %4958 = vmatprep.subr.mxu0 0.0
        %4959 = vmatpush1.msra.mxu0 0.0
        %4960 = vmatprep.subr.mxu0 0.0
        %4961 = vmatpush1.msra.mxu0 0.0
        %4962 = vmatprep.subr.mxu0 0.0
        %4963 = vmatpush1.msra.mxu0 0.0
        %4964 = vmatprep.subr.mxu0 0.0
        %4965 = vmatpush1.msra.mxu0 0.0
        %4966 = vmatprep.subr.mxu0 0.0
        %4967 = vmatpush1.msra.mxu0 0.0
        %4968 = vmatprep.subr.mxu0 0.0
        %4969 = vmatpush1.msra.mxu0 0.0
        %4970 = vmatprep.subr.mxu0 0.0
        %4971 = vmatpush1.msra.mxu0 0.0
        %4972 = vmatprep.subr.mxu0 0.0
        %4973 = vmatpush1.msra.mxu0 0.0
        %4974 = vmatprep.subr.mxu0 0.0
        %4975 = vmatpush1.msra.mxu0 0.0
        %4976 = vmatprep.subr.mxu0 0.0
        %4977 = vmatpush1.msra.mxu0 0.0
        %4978 = vmatprep.subr.mxu0 0.0
        %4979 = vmatpush1.msra.mxu0 0.0
        %4980 = vmatprep.subr.mxu0 0.0
        %4981 = vmatpush1.msra.mxu0 0.0
        %4982 = vmatprep.subr.mxu0 0.0
        %4983 = vmatpush1.msra.mxu0 0.0
        %4984 = vmatprep.subr.mxu0 0.0
        %4985 = vmatpush1.msra.mxu0 0.0
        %4986 = vmatprep.subr.mxu0 0.0
        %4987 = vmatpush1.msra.mxu0 0.0
        %4988 = vmatprep.subr.mxu0 0.0
        %4989 = vmatpush1.msra.mxu0 0.0
        %4990 = vmatprep.subr.mxu0 0.0
        %4991 = vmatpush1.msra.mxu0 0.0
        %4992 = vmatprep.subr.mxu0 0.0
        %4993 = vmatpush1.msra.mxu0 0.0
        %4994 = vmatprep.subr.mxu0 0.0
        %4995 = vmatpush1.msra.mxu0 0.0
        %4996 = vmatprep.subr.mxu0 0.0
        %4997 = vmatpush1.msra.mxu0 0.0
        %4998 = vmatprep.subr.mxu0 0.0
        %4999 = vmatpush1.msra.mxu0 0.0
        %5000 = vmatprep.subr.mxu0 0.0
        %5001 = vmatpush1.msra.mxu0 0.0
        %5002 = vmatprep.mubr.f32.mxu0 0.0
        %5003 = vmatmul.mubr.f32.gmra.mrb[0].mxu0 %v4936
        %v5004 = vpop.f32.mrb[0].mxu0
        %v5005 = vadd.f32 0.0, %v5004
        %v5006 = vpop.f32.mrb[0].mxu0
        %5007 = vdwg.mxu0
        %v5008 = vadd.f32 %v4847, %v5005
        %v5009 = vmul.f32 %v1514, %v1837
        %5010 = vmatprep.subr.mxu0 0.0
        %5011 = vmatpush1.xpose.msra.mxu0 %v5009
        %5012 = vmatprep.subr.mxu0 0.0
        %5013 = vmatpush1.xpose.msra.mxu0 0.0
        %5014 = vmatprep.subr.mxu0 0.0
        %5015 = vmatpush1.xpose.msra.mxu0 0.0
        %5016 = vmatprep.subr.mxu0 0.0
        %5017 = vmatpush1.xpose.msra.mxu0 0.0
        %5018 = vmatprep.subr.mxu0 0.0
        %5019 = vmatpush1.xpose.msra.mxu0 0.0
        %5020 = vmatprep.subr.mxu0 0.0
        %5021 = vmatpush1.xpose.msra.mxu0 0.0
        %5022 = vmatprep.subr.mxu0 0.0
        %5023 = vmatpush1.xpose.msra.mxu0 0.0
        %5024 = vmatprep.subr.mxu0 0.0
        %5025 = vmatpush1.xpose.msra.mxu0 0.0
        %5026 = vmatprep.subr.mxu0 0.0
        %5027 = vmatpush1.xpose.msra.mxu0 0.0
        %5028 = vmatprep.subr.mxu0 0.0
        %5029 = vmatpush1.xpose.msra.mxu0 0.0
        %5030 = vmatprep.subr.mxu0 0.0
        %5031 = vmatpush1.xpose.msra.mxu0 0.0
        %5032 = vmatprep.subr.mxu0 0.0
        %5033 = vmatpush1.xpose.msra.mxu0 0.0
        %5034 = vmatprep.subr.mxu0 0.0
        %5035 = vmatpush1.xpose.msra.mxu0 0.0
        %5036 = vmatprep.subr.mxu0 0.0
        %5037 = vmatpush1.xpose.msra.mxu0 0.0
        %5038 = vmatprep.subr.mxu0 0.0
        %5039 = vmatpush1.xpose.msra.mxu0 0.0
        %5040 = vmatprep.subr.mxu0 0.0
        %5041 = vmatpush1.xpose.msra.mxu0 0.0
        %5042 = vmatprep.subr.mxu0 0.0
        %5043 = vmatpush1.xpose.msra.mxu0 0.0
        %5044 = vmatprep.subr.mxu0 0.0
        %5045 = vmatpush1.xpose.msra.mxu0 0.0
        %5046 = vmatprep.subr.mxu0 0.0
        %5047 = vmatpush1.xpose.msra.mxu0 0.0
        %5048 = vmatprep.subr.mxu0 0.0
        %5049 = vmatpush1.xpose.msra.mxu0 0.0
        %5050 = vmatprep.subr.mxu0 0.0
        %5051 = vmatpush1.xpose.msra.mxu0 0.0
        %5052 = vmatprep.subr.mxu0 0.0
        %5053 = vmatpush1.xpose.msra.mxu0 0.0
        %5054 = vmatprep.subr.mxu0 0.0
        %5055 = vmatpush1.xpose.msra.mxu0 0.0
        %5056 = vmatprep.subr.mxu0 0.0
        %5057 = vmatpush1.xpose.msra.mxu0 0.0
        %5058 = vmatprep.subr.mxu0 0.0
        %5059 = vmatpush1.xpose.msra.mxu0 0.0
        %5060 = vmatprep.subr.mxu0 0.0
        %5061 = vmatpush1.xpose.msra.mxu0 0.0
        %5062 = vmatprep.subr.mxu0 0.0
        %5063 = vmatpush1.xpose.msra.mxu0 0.0
        %5064 = vmatprep.subr.mxu0 0.0
        %5065 = vmatpush1.xpose.msra.mxu0 0.0
        %5066 = vmatprep.subr.mxu0 0.0
        %5067 = vmatpush1.xpose.msra.mxu0 0.0
        %5068 = vmatprep.subr.mxu0 0.0
        %5069 = vmatpush1.xpose.msra.mxu0 0.0
        %5070 = vmatprep.subr.mxu0 0.0
        %5071 = vmatpush1.xpose.msra.mxu0 0.0
        %5072 = vmatprep.subr.mxu0 0.0
        %5073 = vmatpush1.xpose.msra.mxu0 0.0
        %5074 = vmatprep.mubr.f32.mxu0 0.0
        %5075 = vmatmul.mubr.f32.gmra.mrb[0].mxu0 %v1731
        %v5076 = vpop.f32.mrb[0].mxu0
        %v5077 = vadd.f32 0.0, %v5076
        %v5078 = vpop.f32.mrb[0].mxu0
        %5079 = vdwg.mxu0
        %v5080 = vmul.f32 %v5077, 0.25
        %v5081 = vadd.f32 %v5080, %v4604
        %v5082 = vsel %vm1954, %v5081, -inf
        %5083 = vmax.xlane.f32.xlu0 %v5082
        %v5084 = vpop.xlane.xlu0 %5083
        %v5085 = vsub.f32 %v5081, %v5084
        %v5086 = vmul.f32 %v5085, 1.442695
        %v5087 = vpow.pop %v5086
        %v5088 = vsel %vm1954, %v5087, 0.0
        %5089 = vadd.xlane.f32.xlu0 %v5088
        %v5090 = vpop.xlane.xlu0 %5089
        %v5091 = vrcp.pop %v5090
        %v5092 = vmul.f32 %v5087, %v5091
        %v5093 = vmul.f32 %v1589, %v1837
        %v5095 = vsel %vm1954, %v5092, 0
        %5097 = vmatprep.subr.mxu0 0.0
        %5098 = vmatpush1.msra.mxu0 %v5093
        %5099 = vmatprep.subr.mxu0 0.0
        %5100 = vmatpush1.msra.mxu0 0.0
        %5101 = vmatprep.subr.mxu0 0.0
        %5102 = vmatpush1.msra.mxu0 0.0
        %5103 = vmatprep.subr.mxu0 0.0
        %5104 = vmatpush1.msra.mxu0 0.0
        %5105 = vmatprep.subr.mxu0 0.0
        %5106 = vmatpush1.msra.mxu0 0.0
        %5107 = vmatprep.subr.mxu0 0.0
        %5108 = vmatpush1.msra.mxu0 0.0
        %5109 = vmatprep.subr.mxu0 0.0
        %5110 = vmatpush1.msra.mxu0 0.0
        %5111 = vmatprep.subr.mxu0 0.0
        %5112 = vmatpush1.msra.mxu0 0.0
        %5113 = vmatprep.subr.mxu0 0.0
        %5114 = vmatpush1.msra.mxu0 0.0
        %5115 = vmatprep.subr.mxu0 0.0
        %5116 = vmatpush1.msra.mxu0 0.0
        %5117 = vmatprep.subr.mxu0 0.0
        %5118 = vmatpush1.msra.mxu0 0.0
        %5119 = vmatprep.subr.mxu0 0.0
        %5120 = vmatpush1.msra.mxu0 0.0
        %5121 = vmatprep.subr.mxu0 0.0
        %5122 = vmatpush1.msra.mxu0 0.0
        %5123 = vmatprep.subr.mxu0 0.0
        %5124 = vmatpush1.msra.mxu0 0.0
        %5125 = vmatprep.subr.mxu0 0.0
        %5126 = vmatpush1.msra.mxu0 0.0
        %5127 = vmatprep.subr.mxu0 0.0
        %5128 = vmatpush1.msra.mxu0 0.0
        %5129 = vmatprep.subr.mxu0 0.0
        %5130 = vmatpush1.msra.mxu0 0.0
        %5131 = vmatprep.subr.mxu0 0.0
        %5132 = vmatpush1.msra.mxu0 0.0
        %5133 = vmatprep.subr.mxu0 0.0
        %5134 = vmatpush1.msra.mxu0 0.0
        %5135 = vmatprep.subr.mxu0 0.0
        %5136 = vmatpush1.msra.mxu0 0.0
        %5137 = vmatprep.subr.mxu0 0.0
        %5138 = vmatpush1.msra.mxu0 0.0
        %5139 = vmatprep.subr.mxu0 0.0
        %5140 = vmatpush1.msra.mxu0 0.0
        %5141 = vmatprep.subr.mxu0 0.0
        %5142 = vmatpush1.msra.mxu0 0.0
        %5143 = vmatprep.subr.mxu0 0.0
        %5144 = vmatpush1.msra.mxu0 0.0
        %5145 = vmatprep.subr.mxu0 0.0
        %5146 = vmatpush1.msra.mxu0 0.0
        %5147 = vmatprep.subr.mxu0 0.0
        %5148 = vmatpush1.msra.mxu0 0.0
        %5149 = vmatprep.subr.mxu0 0.0
        %5150 = vmatpush1.msra.mxu0 0.0
        %5151 = vmatprep.subr.mxu0 0.0
        %5152 = vmatpush1.msra.mxu0 0.0
        %5153 = vmatprep.subr.mxu0 0.0
        %5154 = vmatpush1.msra.mxu0 0.0
        %5155 = vmatprep.subr.mxu0 0.0
        %5156 = vmatpush1.msra.mxu0 0.0
        %5157 = vmatprep.subr.mxu0 0.0
        %5158 = vmatpush1.msra.mxu0 0.0
        %5159 = vmatprep.subr.mxu0 0.0
        %5160 = vmatpush1.msra.mxu0 0.0
        %5161 = vmatprep.mubr.f32.mxu0 0.0
        %5162 = vmatmul.mubr.f32.gmra.mrb[0].mxu0 %v5095
        %v5163 = vpop.f32.mrb[0].mxu0
        %v5164 = vadd.f32 0.0, %v5163
        %v5165 = vpop.f32.mrb[0].mxu0
        %5166 = vdwg.mxu0
        %v5167 = vadd.f32 %v5008, %v5164
        %v5168 = vmul.f32 %v1514, %v1842
        %5169 = vmatprep.subr.mxu0 0.0
        %5170 = vmatpush1.xpose.msra.mxu0 %v5168
        %5171 = vmatprep.subr.mxu0 0.0
        %5172 = vmatpush1.xpose.msra.mxu0 0.0
        %5173 = vmatprep.subr.mxu0 0.0
        %5174 = vmatpush1.xpose.msra.mxu0 0.0
        %5175 = vmatprep.subr.mxu0 0.0
        %5176 = vmatpush1.xpose.msra.mxu0 0.0
        %5177 = vmatprep.subr.mxu0 0.0
        %5178 = vmatpush1.xpose.msra.mxu0 0.0
        %5179 = vmatprep.subr.mxu0 0.0
        %5180 = vmatpush1.xpose.msra.mxu0 0.0
        %5181 = vmatprep.subr.mxu0 0.0
        %5182 = vmatpush1.xpose.msra.mxu0 0.0
        %5183 = vmatprep.subr.mxu0 0.0
        %5184 = vmatpush1.xpose.msra.mxu0 0.0
        %5185 = vmatprep.subr.mxu0 0.0
        %5186 = vmatpush1.xpose.msra.mxu0 0.0
        %5187 = vmatprep.subr.mxu0 0.0
        %5188 = vmatpush1.xpose.msra.mxu0 0.0
        %5189 = vmatprep.subr.mxu0 0.0
        %5190 = vmatpush1.xpose.msra.mxu0 0.0
        %5191 = vmatprep.subr.mxu0 0.0
        %5192 = vmatpush1.xpose.msra.mxu0 0.0
        %5193 = vmatprep.subr.mxu0 0.0
        %5194 = vmatpush1.xpose.msra.mxu0 0.0
        %5195 = vmatprep.subr.mxu0 0.0
        %5196 = vmatpush1.xpose.msra.mxu0 0.0
        %5197 = vmatprep.subr.mxu0 0.0
        %5198 = vmatpush1.xpose.msra.mxu0 0.0
        %5199 = vmatprep.subr.mxu0 0.0
        %5200 = vmatpush1.xpose.msra.mxu0 0.0
        %5201 = vmatprep.subr.mxu0 0.0
        %5202 = vmatpush1.xpose.msra.mxu0 0.0
        %5203 = vmatprep.subr.mxu0 0.0
        %5204 = vmatpush1.xpose.msra.mxu0 0.0
        %5205 = vmatprep.subr.mxu0 0.0
        %5206 = vmatpush1.xpose.msra.mxu0 0.0
        %5207 = vmatprep.subr.mxu0 0.0
        %5208 = vmatpush1.xpose.msra.mxu0 0.0
        %5209 = vmatprep.subr.mxu0 0.0
        %5210 = vmatpush1.xpose.msra.mxu0 0.0
        %5211 = vmatprep.subr.mxu0 0.0
        %5212 = vmatpush1.xpose.msra.mxu0 0.0
        %5213 = vmatprep.subr.mxu0 0.0
        %5214 = vmatpush1.xpose.msra.mxu0 0.0
        %5215 = vmatprep.subr.mxu0 0.0
        %5216 = vmatpush1.xpose.msra.mxu0 0.0
        %5217 = vmatprep.subr.mxu0 0.0
        %5218 = vmatpush1.xpose.msra.mxu0 0.0
        %5219 = vmatprep.subr.mxu0 0.0
        %5220 = vmatpush1.xpose.msra.mxu0 0.0
        %5221 = vmatprep.subr.mxu0 0.0
        %5222 = vmatpush1.xpose.msra.mxu0 0.0
        %5223 = vmatprep.subr.mxu0 0.0
        %5224 = vmatpush1.xpose.msra.mxu0 0.0
        %5225 = vmatprep.subr.mxu0 0.0
        %5226 = vmatpush1.xpose.msra.mxu0 0.0
        %5227 = vmatprep.subr.mxu0 0.0
        %5228 = vmatpush1.xpose.msra.mxu0 0.0
        %5229 = vmatprep.subr.mxu0 0.0
        %5230 = vmatpush1.xpose.msra.mxu0 0.0
        %5231 = vmatprep.subr.mxu0 0.0
        %5232 = vmatpush1.xpose.msra.mxu0 0.0
        %5233 = vmatprep.mubr.f32.mxu0 0.0
        %5234 = vmatmul.mubr.f32.gmra.mrb[0].mxu0 %v1731
        %v5235 = vpop.f32.mrb[0].mxu0
        %v5236 = vadd.f32 0.0, %v5235
        %v5237 = vpop.f32.mrb[0].mxu0
        %5238 = vdwg.mxu0
        %v5239 = vmul.f32 %v5236, 0.25
        %v5240 = vadd.f32 %v5239, %v4604
        %v5241 = vsel %vm1954, %v5240, -inf
        %5242 = vmax.xlane.f32.xlu0 %v5241
        %v5243 = vpop.xlane.xlu0 %5242
        %v5244 = vsub.f32 %v5240, %v5243
        %v5245 = vmul.f32 %v5244, 1.442695
        %v5246 = vpow.pop %v5245
        %v5247 = vsel %vm1954, %v5246, 0.0
        %5248 = vadd.xlane.f32.xlu0 %v5247
        %v5249 = vpop.xlane.xlu0 %5248
        %v5250 = vrcp.pop %v5249
        %v5251 = vmul.f32 %v5246, %v5250
        %v5252 = vmul.f32 %v1589, %v1842
        %v5254 = vsel %vm1954, %v5251, 0
        %5256 = vmatprep.subr.mxu0 0.0
        %5257 = vmatpush1.msra.mxu0 %v5252
        %5258 = vmatprep.subr.mxu0 0.0
        %5259 = vmatpush1.msra.mxu0 0.0
        %5260 = vmatprep.subr.mxu0 0.0
        %5261 = vmatpush1.msra.mxu0 0.0
        %5262 = vmatprep.subr.mxu0 0.0
        %5263 = vmatpush1.msra.mxu0 0.0
        %5264 = vmatprep.subr.mxu0 0.0
        %5265 = vmatpush1.msra.mxu0 0.0
        %5266 = vmatprep.subr.mxu0 0.0
        %5267 = vmatpush1.msra.mxu0 0.0
        %5268 = vmatprep.subr.mxu0 0.0
        %5269 = vmatpush1.msra.mxu0 0.0
        %5270 = vmatprep.subr.mxu0 0.0
        %5271 = vmatpush1.msra.mxu0 0.0
        %5272 = vmatprep.subr.mxu0 0.0
        %5273 = vmatpush1.msra.mxu0 0.0
        %5274 = vmatprep.subr.mxu0 0.0
        %5275 = vmatpush1.msra.mxu0 0.0
        %5276 = vmatprep.subr.mxu0 0.0
        %5277 = vmatpush1.msra.mxu0 0.0
        %5278 = vmatprep.subr.mxu0 0.0
        %5279 = vmatpush1.msra.mxu0 0.0
        %5280 = vmatprep.subr.mxu0 0.0
        %5281 = vmatpush1.msra.mxu0 0.0
        %5282 = vmatprep.subr.mxu0 0.0
        %5283 = vmatpush1.msra.mxu0 0.0
        %5284 = vmatprep.subr.mxu0 0.0
        %5285 = vmatpush1.msra.mxu0 0.0
        %5286 = vmatprep.subr.mxu0 0.0
        %5287 = vmatpush1.msra.mxu0 0.0
        %5288 = vmatprep.subr.mxu0 0.0
        %5289 = vmatpush1.msra.mxu0 0.0
        %5290 = vmatprep.subr.mxu0 0.0
        %5291 = vmatpush1.msra.mxu0 0.0
        %5292 = vmatprep.subr.mxu0 0.0
        %5293 = vmatpush1.msra.mxu0 0.0
        %5294 = vmatprep.subr.mxu0 0.0
        %5295 = vmatpush1.msra.mxu0 0.0
        %5296 = vmatprep.subr.mxu0 0.0
        %5297 = vmatpush1.msra.mxu0 0.0
        %5298 = vmatprep.subr.mxu0 0.0
        %5299 = vmatpush1.msra.mxu0 0.0
        %5300 = vmatprep.subr.mxu0 0.0
        %5301 = vmatpush1.msra.mxu0 0.0
        %5302 = vmatprep.subr.mxu0 0.0
        %5303 = vmatpush1.msra.mxu0 0.0
        %5304 = vmatprep.subr.mxu0 0.0
        %5305 = vmatpush1.msra.mxu0 0.0
        %5306 = vmatprep.subr.mxu0 0.0
        %5307 = vmatpush1.msra.mxu0 0.0
        %5308 = vmatprep.subr.mxu0 0.0
        %5309 = vmatpush1.msra.mxu0 0.0
        %5310 = vmatprep.subr.mxu0 0.0
        %5311 = vmatpush1.msra.mxu0 0.0
        %5312 = vmatprep.subr.mxu0 0.0
        %5313 = vmatpush1.msra.mxu0 0.0
        %5314 = vmatprep.subr.mxu0 0.0
        %5315 = vmatpush1.msra.mxu0 0.0
        %5316 = vmatprep.subr.mxu0 0.0
        %5317 = vmatpush1.msra.mxu0 0.0
        %5318 = vmatprep.subr.mxu0 0.0
        %5319 = vmatpush1.msra.mxu0 0.0
        %5320 = vmatprep.mubr.f32.mxu0 0.0
        %5321 = vmatmul.mubr.f32.gmra.mrb[0].mxu0 %v5254
        %v5322 = vpop.f32.mrb[0].mxu0
        %v5323 = vadd.f32 0.0, %v5322
        %v5324 = vpop.f32.mrb[0].mxu0
        %5325 = vdwg.mxu0
        %v5326 = vadd.f32 %v5167, %v5323
        %v5327 = vmul.f32 %v1514, %v1847
        %5328 = vmatprep.subr.mxu0 0.0
        %5329 = vmatpush1.xpose.msra.mxu0 %v5327
        %5330 = vmatprep.subr.mxu0 0.0
        %5331 = vmatpush1.xpose.msra.mxu0 0.0
        %5332 = vmatprep.subr.mxu0 0.0
        %5333 = vmatpush1.xpose.msra.mxu0 0.0
        %5334 = vmatprep.subr.mxu0 0.0
        %5335 = vmatpush1.xpose.msra.mxu0 0.0
        %5336 = vmatprep.subr.mxu0 0.0
        %5337 = vmatpush1.xpose.msra.mxu0 0.0
        %5338 = vmatprep.subr.mxu0 0.0
        %5339 = vmatpush1.xpose.msra.mxu0 0.0
        %5340 = vmatprep.subr.mxu0 0.0
        %5341 = vmatpush1.xpose.msra.mxu0 0.0
        %5342 = vmatprep.subr.mxu0 0.0
        %5343 = vmatpush1.xpose.msra.mxu0 0.0
        %5344 = vmatprep.subr.mxu0 0.0
        %5345 = vmatpush1.xpose.msra.mxu0 0.0
        %5346 = vmatprep.subr.mxu0 0.0
        %5347 = vmatpush1.xpose.msra.mxu0 0.0
        %5348 = vmatprep.subr.mxu0 0.0
        %5349 = vmatpush1.xpose.msra.mxu0 0.0
        %5350 = vmatprep.subr.mxu0 0.0
        %5351 = vmatpush1.xpose.msra.mxu0 0.0
        %5352 = vmatprep.subr.mxu0 0.0
        %5353 = vmatpush1.xpose.msra.mxu0 0.0
        %5354 = vmatprep.subr.mxu0 0.0
        %5355 = vmatpush1.xpose.msra.mxu0 0.0
        %5356 = vmatprep.subr.mxu0 0.0
        %5357 = vmatpush1.xpose.msra.mxu0 0.0
        %5358 = vmatprep.subr.mxu0 0.0
        %5359 = vmatpush1.xpose.msra.mxu0 0.0
        %5360 = vmatprep.subr.mxu0 0.0
        %5361 = vmatpush1.xpose.msra.mxu0 0.0
        %5362 = vmatprep.subr.mxu0 0.0
        %5363 = vmatpush1.xpose.msra.mxu0 0.0
        %5364 = vmatprep.subr.mxu0 0.0
        %5365 = vmatpush1.xpose.msra.mxu0 0.0
        %5366 = vmatprep.subr.mxu0 0.0
        %5367 = vmatpush1.xpose.msra.mxu0 0.0
        %5368 = vmatprep.subr.mxu0 0.0
        %5369 = vmatpush1.xpose.msra.mxu0 0.0
        %5370 = vmatprep.subr.mxu0 0.0
        %5371 = vmatpush1.xpose.msra.mxu0 0.0
        %5372 = vmatprep.subr.mxu0 0.0
        %5373 = vmatpush1.xpose.msra.mxu0 0.0
        %5374 = vmatprep.subr.mxu0 0.0
        %5375 = vmatpush1.xpose.msra.mxu0 0.0
        %5376 = vmatprep.subr.mxu0 0.0
        %5377 = vmatpush1.xpose.msra.mxu0 0.0
        %5378 = vmatprep.subr.mxu0 0.0
        %5379 = vmatpush1.xpose.msra.mxu0 0.0
        %5380 = vmatprep.subr.mxu0 0.0
        %5381 = vmatpush1.xpose.msra.mxu0 0.0
        %5382 = vmatprep.subr.mxu0 0.0
        %5383 = vmatpush1.xpose.msra.mxu0 0.0
        %5384 = vmatprep.subr.mxu0 0.0
        %5385 = vmatpush1.xpose.msra.mxu0 0.0
        %5386 = vmatprep.subr.mxu0 0.0
        %5387 = vmatpush1.xpose.msra.mxu0 0.0
        %5388 = vmatprep.subr.mxu0 0.0
        %5389 = vmatpush1.xpose.msra.mxu0 0.0
        %5390 = vmatprep.subr.mxu0 0.0
        %5391 = vmatpush1.xpose.msra.mxu0 0.0
        %5392 = vmatprep.mubr.f32.mxu0 0.0
        %5393 = vmatmul.mubr.f32.gmra.mrb[0].mxu0 %v1731
        %v5394 = vpop.f32.mrb[0].mxu0
        %v5395 = vadd.f32 0.0, %v5394
        %v5396 = vpop.f32.mrb[0].mxu0
        %5397 = vdwg.mxu0
        %v5398 = vmul.f32 %v5395, 0.25
        %v5399 = vadd.f32 %v5398, %v4604
        %v5400 = vsel %vm1954, %v5399, -inf
        %5401 = vmax.xlane.f32.xlu0 %v5400
        %v5402 = vpop.xlane.xlu0 %5401
        %v5403 = vsub.f32 %v5399, %v5402
        %v5404 = vmul.f32 %v5403, 1.442695
        %v5405 = vpow.pop %v5404
        %v5406 = vsel %vm1954, %v5405, 0.0
        %5407 = vadd.xlane.f32.xlu0 %v5406
        %v5408 = vpop.xlane.xlu0 %5407
        %v5409 = vrcp.pop %v5408
        %v5410 = vmul.f32 %v5405, %v5409
        %v5411 = vmul.f32 %v1589, %v1847
        %v5413 = vsel %vm1954, %v5410, 0
        %5415 = vmatprep.subr.mxu0 0.0
        %5416 = vmatpush1.msra.mxu0 %v5411
        %5417 = vmatprep.subr.mxu0 0.0
        %5418 = vmatpush1.msra.mxu0 0.0
        %5419 = vmatprep.subr.mxu0 0.0
        %5420 = vmatpush1.msra.mxu0 0.0
        %5421 = vmatprep.subr.mxu0 0.0
        %5422 = vmatpush1.msra.mxu0 0.0
        %5423 = vmatprep.subr.mxu0 0.0
        %5424 = vmatpush1.msra.mxu0 0.0
        %5425 = vmatprep.subr.mxu0 0.0
        %5426 = vmatpush1.msra.mxu0 0.0
        %5427 = vmatprep.subr.mxu0 0.0
        %5428 = vmatpush1.msra.mxu0 0.0
        %5429 = vmatprep.subr.mxu0 0.0
        %5430 = vmatpush1.msra.mxu0 0.0
        %5431 = vmatprep.subr.mxu0 0.0
        %5432 = vmatpush1.msra.mxu0 0.0
        %5433 = vmatprep.subr.mxu0 0.0
        %5434 = vmatpush1.msra.mxu0 0.0
        %5435 = vmatprep.subr.mxu0 0.0
        %5436 = vmatpush1.msra.mxu0 0.0
        %5437 = vmatprep.subr.mxu0 0.0
        %5438 = vmatpush1.msra.mxu0 0.0
        %5439 = vmatprep.subr.mxu0 0.0
        %5440 = vmatpush1.msra.mxu0 0.0
        %5441 = vmatprep.subr.mxu0 0.0
        %5442 = vmatpush1.msra.mxu0 0.0
        %5443 = vmatprep.subr.mxu0 0.0
        %5444 = vmatpush1.msra.mxu0 0.0
        %5445 = vmatprep.subr.mxu0 0.0
        %5446 = vmatpush1.msra.mxu0 0.0
        %5447 = vmatprep.subr.mxu0 0.0
        %5448 = vmatpush1.msra.mxu0 0.0
        %5449 = vmatprep.subr.mxu0 0.0
        %5450 = vmatpush1.msra.mxu0 0.0
        %5451 = vmatprep.subr.mxu0 0.0
        %5452 = vmatpush1.msra.mxu0 0.0
        %5453 = vmatprep.subr.mxu0 0.0
        %5454 = vmatpush1.msra.mxu0 0.0
        %5455 = vmatprep.subr.mxu0 0.0
        %5456 = vmatpush1.msra.mxu0 0.0
        %5457 = vmatprep.subr.mxu0 0.0
        %5458 = vmatpush1.msra.mxu0 0.0
        %5459 = vmatprep.subr.mxu0 0.0
        %5460 = vmatpush1.msra.mxu0 0.0
        %5461 = vmatprep.subr.mxu0 0.0
        %5462 = vmatpush1.msra.mxu0 0.0
        %5463 = vmatprep.subr.mxu0 0.0
        %5464 = vmatpush1.msra.mxu0 0.0
        %5465 = vmatprep.subr.mxu0 0.0
        %5466 = vmatpush1.msra.mxu0 0.0
        %5467 = vmatprep.subr.mxu0 0.0
        %5468 = vmatpush1.msra.mxu0 0.0
        %5469 = vmatprep.subr.mxu0 0.0
        %5470 = vmatpush1.msra.mxu0 0.0
        %5471 = vmatprep.subr.mxu0 0.0
        %5472 = vmatpush1.msra.mxu0 0.0
        %5473 = vmatprep.subr.mxu0 0.0
        %5474 = vmatpush1.msra.mxu0 0.0
        %5475 = vmatprep.subr.mxu0 0.0
        %5476 = vmatpush1.msra.mxu0 0.0
        %5477 = vmatprep.subr.mxu0 0.0
        %5478 = vmatpush1.msra.mxu0 0.0
        %5479 = vmatprep.mubr.f32.mxu0 0.0
        %5480 = vmatmul.mubr.f32.gmra.mrb[0].mxu0 %v5413
        %v5481 = vpop.f32.mrb[0].mxu0
        %v5482 = vadd.f32 0.0, %v5481
        %v5483 = vpop.f32.mrb[0].mxu0
        %5484 = vdwg.mxu0
        %v5485 = vadd.f32 %v5326, %v5482
        %v5486 = vmul.f32 %v1514, %v1852
        %5487 = vmatprep.subr.mxu0 0.0
        %5488 = vmatpush1.xpose.msra.mxu0 %v5486
        %5489 = vmatprep.subr.mxu0 0.0
        %5490 = vmatpush1.xpose.msra.mxu0 0.0
        %5491 = vmatprep.subr.mxu0 0.0
        %5492 = vmatpush1.xpose.msra.mxu0 0.0
        %5493 = vmatprep.subr.mxu0 0.0
        %5494 = vmatpush1.xpose.msra.mxu0 0.0
        %5495 = vmatprep.subr.mxu0 0.0
        %5496 = vmatpush1.xpose.msra.mxu0 0.0
        %5497 = vmatprep.subr.mxu0 0.0
        %5498 = vmatpush1.xpose.msra.mxu0 0.0
        %5499 = vmatprep.subr.mxu0 0.0
        %5500 = vmatpush1.xpose.msra.mxu0 0.0
        %5501 = vmatprep.subr.mxu0 0.0
        %5502 = vmatpush1.xpose.msra.mxu0 0.0
        %5503 = vmatprep.subr.mxu0 0.0
        %5504 = vmatpush1.xpose.msra.mxu0 0.0
        %5505 = vmatprep.subr.mxu0 0.0
        %5506 = vmatpush1.xpose.msra.mxu0 0.0
        %5507 = vmatprep.subr.mxu0 0.0
        %5508 = vmatpush1.xpose.msra.mxu0 0.0
        %5509 = vmatprep.subr.mxu0 0.0
        %5510 = vmatpush1.xpose.msra.mxu0 0.0
        %5511 = vmatprep.subr.mxu0 0.0
        %5512 = vmatpush1.xpose.msra.mxu0 0.0
        %5513 = vmatprep.subr.mxu0 0.0
        %5514 = vmatpush1.xpose.msra.mxu0 0.0
        %5515 = vmatprep.subr.mxu0 0.0
        %5516 = vmatpush1.xpose.msra.mxu0 0.0
        %5517 = vmatprep.subr.mxu0 0.0
        %5518 = vmatpush1.xpose.msra.mxu0 0.0
        %5519 = vmatprep.subr.mxu0 0.0
        %5520 = vmatpush1.xpose.msra.mxu0 0.0
        %5521 = vmatprep.subr.mxu0 0.0
        %5522 = vmatpush1.xpose.msra.mxu0 0.0
        %5523 = vmatprep.subr.mxu0 0.0
        %5524 = vmatpush1.xpose.msra.mxu0 0.0
        %5525 = vmatprep.subr.mxu0 0.0
        %5526 = vmatpush1.xpose.msra.mxu0 0.0
        %5527 = vmatprep.subr.mxu0 0.0
        %5528 = vmatpush1.xpose.msra.mxu0 0.0
        %5529 = vmatprep.subr.mxu0 0.0
        %5530 = vmatpush1.xpose.msra.mxu0 0.0
        %5531 = vmatprep.subr.mxu0 0.0
        %5532 = vmatpush1.xpose.msra.mxu0 0.0
        %5533 = vmatprep.subr.mxu0 0.0
        %5534 = vmatpush1.xpose.msra.mxu0 0.0
        %5535 = vmatprep.subr.mxu0 0.0
        %5536 = vmatpush1.xpose.msra.mxu0 0.0
        %5537 = vmatprep.subr.mxu0 0.0
        %5538 = vmatpush1.xpose.msra.mxu0 0.0
        %5539 = vmatprep.subr.mxu0 0.0
        %5540 = vmatpush1.xpose.msra.mxu0 0.0
        %5541 = vmatprep.subr.mxu0 0.0
        %5542 = vmatpush1.xpose.msra.mxu0 0.0
        %5543 = vmatprep.subr.mxu0 0.0
        %5544 = vmatpush1.xpose.msra.mxu0 0.0
        %5545 = vmatprep.subr.mxu0 0.0
        %5546 = vmatpush1.xpose.msra.mxu0 0.0
        %5547 = vmatprep.subr.mxu0 0.0
        %5548 = vmatpush1.xpose.msra.mxu0 0.0
        %5549 = vmatprep.subr.mxu0 0.0
        %5550 = vmatpush1.xpose.msra.mxu0 0.0
        %5551 = vmatprep.mubr.f32.mxu0 0.0
        %5552 = vmatmul.mubr.f32.gmra.mrb[0].mxu0 %v1731
        %v5553 = vpop.f32.mrb[0].mxu0
        %v5554 = vadd.f32 0.0, %v5553
        %v5555 = vpop.f32.mrb[0].mxu0
        %5556 = vdwg.mxu0
        %v5557 = vmul.f32 %v5554, 0.25
        %v5558 = vadd.f32 %v5557, %v4604
        %v5559 = vsel %vm1954, %v5558, -inf
        %5560 = vmax.xlane.f32.xlu0 %v5559
        %v5561 = vpop.xlane.xlu0 %5560
        %v5562 = vsub.f32 %v5558, %v5561
        %v5563 = vmul.f32 %v5562, 1.442695
        %v5564 = vpow.pop %v5563
        %v5565 = vsel %vm1954, %v5564, 0.0
        %5566 = vadd.xlane.f32.xlu0 %v5565
        %v5567 = vpop.xlane.xlu0 %5566
        %v5568 = vrcp.pop %v5567
        %v5569 = vmul.f32 %v5564, %v5568
        %v5570 = vmul.f32 %v1589, %v1852
        %v5572 = vsel %vm1954, %v5569, 0
        %5574 = vmatprep.subr.mxu0 0.0
        %5575 = vmatpush1.msra.mxu0 %v5570
        %5576 = vmatprep.subr.mxu0 0.0
        %5577 = vmatpush1.msra.mxu0 0.0
        %5578 = vmatprep.subr.mxu0 0.0
        %5579 = vmatpush1.msra.mxu0 0.0
        %5580 = vmatprep.subr.mxu0 0.0
        %5581 = vmatpush1.msra.mxu0 0.0
        %5582 = vmatprep.subr.mxu0 0.0
        %5583 = vmatpush1.msra.mxu0 0.0
        %5584 = vmatprep.subr.mxu0 0.0
        %5585 = vmatpush1.msra.mxu0 0.0
        %5586 = vmatprep.subr.mxu0 0.0
        %5587 = vmatpush1.msra.mxu0 0.0
        %5588 = vmatprep.subr.mxu0 0.0
        %5589 = vmatpush1.msra.mxu0 0.0
        %5590 = vmatprep.subr.mxu0 0.0
        %5591 = vmatpush1.msra.mxu0 0.0
        %5592 = vmatprep.subr.mxu0 0.0
        %5593 = vmatpush1.msra.mxu0 0.0
        %5594 = vmatprep.subr.mxu0 0.0
        %5595 = vmatpush1.msra.mxu0 0.0
        %5596 = vmatprep.subr.mxu0 0.0
        %5597 = vmatpush1.msra.mxu0 0.0
        %5598 = vmatprep.subr.mxu0 0.0
        %5599 = vmatpush1.msra.mxu0 0.0
        %5600 = vmatprep.subr.mxu0 0.0
        %5601 = vmatpush1.msra.mxu0 0.0
        %5602 = vmatprep.subr.mxu0 0.0
        %5603 = vmatpush1.msra.mxu0 0.0
        %5604 = vmatprep.subr.mxu0 0.0
        %5605 = vmatpush1.msra.mxu0 0.0
        %5606 = vmatprep.subr.mxu0 0.0
        %5607 = vmatpush1.msra.mxu0 0.0
        %5608 = vmatprep.subr.mxu0 0.0
        %5609 = vmatpush1.msra.mxu0 0.0
        %5610 = vmatprep.subr.mxu0 0.0
        %5611 = vmatpush1.msra.mxu0 0.0
        %5612 = vmatprep.subr.mxu0 0.0
        %5613 = vmatpush1.msra.mxu0 0.0
        %5614 = vmatprep.subr.mxu0 0.0
        %5615 = vmatpush1.msra.mxu0 0.0
        %5616 = vmatprep.subr.mxu0 0.0
        %5617 = vmatpush1.msra.mxu0 0.0
        %5618 = vmatprep.subr.mxu0 0.0
        %5619 = vmatpush1.msra.mxu0 0.0
        %5620 = vmatprep.subr.mxu0 0.0
        %5621 = vmatpush1.msra.mxu0 0.0
        %5622 = vmatprep.subr.mxu0 0.0
        %5623 = vmatpush1.msra.mxu0 0.0
        %5624 = vmatprep.subr.mxu0 0.0
        %5625 = vmatpush1.msra.mxu0 0.0
        %5626 = vmatprep.subr.mxu0 0.0
        %5627 = vmatpush1.msra.mxu0 0.0
        %5628 = vmatprep.subr.mxu0 0.0
        %5629 = vmatpush1.msra.mxu0 0.0
        %5630 = vmatprep.subr.mxu0 0.0
        %5631 = vmatpush1.msra.mxu0 0.0
        %5632 = vmatprep.subr.mxu0 0.0
        %5633 = vmatpush1.msra.mxu0 0.0
        %5634 = vmatprep.subr.mxu0 0.0
        %5635 = vmatpush1.msra.mxu0 0.0
        %5636 = vmatprep.subr.mxu0 0.0
        %5637 = vmatpush1.msra.mxu0 0.0
        %5638 = vmatprep.mubr.f32.mxu0 0.0
        %5639 = vmatmul.mubr.f32.gmra.mrb[0].mxu0 %v5572
        %v5640 = vpop.f32.mrb[0].mxu0
        %v5641 = vadd.f32 0.0, %v5640
        %v5642 = vpop.f32.mrb[0].mxu0
        %5643 = vdwg.mxu0
        %v5644 = vadd.f32 %v5485, %v5641
        %v5645 = vmul.f32 %v1514, %v1857
        %5646 = vmatprep.subr.mxu0 0.0
        %5647 = vmatpush1.xpose.msra.mxu0 %v5645
        %5648 = vmatprep.subr.mxu0 0.0
        %5649 = vmatpush1.xpose.msra.mxu0 0.0
        %5650 = vmatprep.subr.mxu0 0.0
        %5651 = vmatpush1.xpose.msra.mxu0 0.0
        %5652 = vmatprep.subr.mxu0 0.0
        %5653 = vmatpush1.xpose.msra.mxu0 0.0
        %5654 = vmatprep.subr.mxu0 0.0
        %5655 = vmatpush1.xpose.msra.mxu0 0.0
        %5656 = vmatprep.subr.mxu0 0.0
        %5657 = vmatpush1.xpose.msra.mxu0 0.0
        %5658 = vmatprep.subr.mxu0 0.0
        %5659 = vmatpush1.xpose.msra.mxu0 0.0
        %5660 = vmatprep.subr.mxu0 0.0
        %5661 = vmatpush1.xpose.msra.mxu0 0.0
        %5662 = vmatprep.subr.mxu0 0.0
        %5663 = vmatpush1.xpose.msra.mxu0 0.0
        %5664 = vmatprep.subr.mxu0 0.0
        %5665 = vmatpush1.xpose.msra.mxu0 0.0
        %5666 = vmatprep.subr.mxu0 0.0
        %5667 = vmatpush1.xpose.msra.mxu0 0.0
        %5668 = vmatprep.subr.mxu0 0.0
        %5669 = vmatpush1.xpose.msra.mxu0 0.0
        %5670 = vmatprep.subr.mxu0 0.0
        %5671 = vmatpush1.xpose.msra.mxu0 0.0
        %5672 = vmatprep.subr.mxu0 0.0
        %5673 = vmatpush1.xpose.msra.mxu0 0.0
        %5674 = vmatprep.subr.mxu0 0.0
        %5675 = vmatpush1.xpose.msra.mxu0 0.0
        %5676 = vmatprep.subr.mxu0 0.0
        %5677 = vmatpush1.xpose.msra.mxu0 0.0
        %5678 = vmatprep.subr.mxu0 0.0
        %5679 = vmatpush1.xpose.msra.mxu0 0.0
        %5680 = vmatprep.subr.mxu0 0.0
        %5681 = vmatpush1.xpose.msra.mxu0 0.0
        %5682 = vmatprep.subr.mxu0 0.0
        %5683 = vmatpush1.xpose.msra.mxu0 0.0
        %5684 = vmatprep.subr.mxu0 0.0
        %5685 = vmatpush1.xpose.msra.mxu0 0.0
        %5686 = vmatprep.subr.mxu0 0.0
        %5687 = vmatpush1.xpose.msra.mxu0 0.0
        %5688 = vmatprep.subr.mxu0 0.0
        %5689 = vmatpush1.xpose.msra.mxu0 0.0
        %5690 = vmatprep.subr.mxu0 0.0
        %5691 = vmatpush1.xpose.msra.mxu0 0.0
        %5692 = vmatprep.subr.mxu0 0.0
        %5693 = vmatpush1.xpose.msra.mxu0 0.0
        %5694 = vmatprep.subr.mxu0 0.0
        %5695 = vmatpush1.xpose.msra.mxu0 0.0
        %5696 = vmatprep.subr.mxu0 0.0
        %5697 = vmatpush1.xpose.msra.mxu0 0.0
        %5698 = vmatprep.subr.mxu0 0.0
        %5699 = vmatpush1.xpose.msra.mxu0 0.0
        %5700 = vmatprep.subr.mxu0 0.0
        %5701 = vmatpush1.xpose.msra.mxu0 0.0
        %5702 = vmatprep.subr.mxu0 0.0
        %5703 = vmatpush1.xpose.msra.mxu0 0.0
        %5704 = vmatprep.subr.mxu0 0.0
        %5705 = vmatpush1.xpose.msra.mxu0 0.0
        %5706 = vmatprep.subr.mxu0 0.0
        %5707 = vmatpush1.xpose.msra.mxu0 0.0
        %5708 = vmatprep.subr.mxu0 0.0
        %5709 = vmatpush1.xpose.msra.mxu0 0.0
        %5710 = vmatprep.mubr.f32.mxu0 0.0
        %5711 = vmatmul.mubr.f32.gmra.mrb[0].mxu0 %v1731
        %v5712 = vpop.f32.mrb[0].mxu0
        %v5713 = vadd.f32 0.0, %v5712
        %v5714 = vpop.f32.mrb[0].mxu0
        %5715 = vdwg.mxu0
        %v5716 = vmul.f32 %v5713, 0.25
        %v5717 = vadd.f32 %v5716, %v4604
        %v5718 = vsel %vm1954, %v5717, -inf
        %5719 = vmax.xlane.f32.xlu0 %v5718
        %v5720 = vpop.xlane.xlu0 %5719
        %v5721 = vsub.f32 %v5717, %v5720
        %v5722 = vmul.f32 %v5721, 1.442695
        %v5723 = vpow.pop %v5722
        %v5724 = vsel %vm1954, %v5723, 0.0
        %5725 = vadd.xlane.f32.xlu0 %v5724
        %v5726 = vpop.xlane.xlu0 %5725
        %v5727 = vrcp.pop %v5726
        %v5728 = vmul.f32 %v5723, %v5727
        %v5729 = vmul.f32 %v1589, %v1857
        %v5731 = vsel %vm1954, %v5728, 0
        %5733 = vmatprep.subr.mxu0 0.0
        %5734 = vmatpush1.msra.mxu0 %v5729
        %5735 = vmatprep.subr.mxu0 0.0
        %5736 = vmatpush1.msra.mxu0 0.0
        %5737 = vmatprep.subr.mxu0 0.0
        %5738 = vmatpush1.msra.mxu0 0.0
        %5739 = vmatprep.subr.mxu0 0.0
        %5740 = vmatpush1.msra.mxu0 0.0
        %5741 = vmatprep.subr.mxu0 0.0
        %5742 = vmatpush1.msra.mxu0 0.0
        %5743 = vmatprep.subr.mxu0 0.0
        %5744 = vmatpush1.msra.mxu0 0.0
        %5745 = vmatprep.subr.mxu0 0.0
        %5746 = vmatpush1.msra.mxu0 0.0
        %5747 = vmatprep.subr.mxu0 0.0
        %5748 = vmatpush1.msra.mxu0 0.0
        %5749 = vmatprep.subr.mxu0 0.0
        %5750 = vmatpush1.msra.mxu0 0.0
        %5751 = vmatprep.subr.mxu0 0.0
        %5752 = vmatpush1.msra.mxu0 0.0
        %5753 = vmatprep.subr.mxu0 0.0
        %5754 = vmatpush1.msra.mxu0 0.0
        %5755 = vmatprep.subr.mxu0 0.0
        %5756 = vmatpush1.msra.mxu0 0.0
        %5757 = vmatprep.subr.mxu0 0.0
        %5758 = vmatpush1.msra.mxu0 0.0
        %5759 = vmatprep.subr.mxu0 0.0
        %5760 = vmatpush1.msra.mxu0 0.0
        %5761 = vmatprep.subr.mxu0 0.0
        %5762 = vmatpush1.msra.mxu0 0.0
        %5763 = vmatprep.subr.mxu0 0.0
        %5764 = vmatpush1.msra.mxu0 0.0
        %5765 = vmatprep.subr.mxu0 0.0
        %5766 = vmatpush1.msra.mxu0 0.0
        %5767 = vmatprep.subr.mxu0 0.0
        %5768 = vmatpush1.msra.mxu0 0.0
        %5769 = vmatprep.subr.mxu0 0.0
        %5770 = vmatpush1.msra.mxu0 0.0
        %5771 = vmatprep.subr.mxu0 0.0
        %5772 = vmatpush1.msra.mxu0 0.0
        %5773 = vmatprep.subr.mxu0 0.0
        %5774 = vmatpush1.msra.mxu0 0.0
        %5775 = vmatprep.subr.mxu0 0.0
        %5776 = vmatpush1.msra.mxu0 0.0
        %5777 = vmatprep.subr.mxu0 0.0
        %5778 = vmatpush1.msra.mxu0 0.0
        %5779 = vmatprep.subr.mxu0 0.0
        %5780 = vmatpush1.msra.mxu0 0.0
        %5781 = vmatprep.subr.mxu0 0.0
        %5782 = vmatpush1.msra.mxu0 0.0
        %5783 = vmatprep.subr.mxu0 0.0
        %5784 = vmatpush1.msra.mxu0 0.0
        %5785 = vmatprep.subr.mxu0 0.0
        %5786 = vmatpush1.msra.mxu0 0.0
        %5787 = vmatprep.subr.mxu0 0.0
        %5788 = vmatpush1.msra.mxu0 0.0
        %5789 = vmatprep.subr.mxu0 0.0
        %5790 = vmatpush1.msra.mxu0 0.0
        %5791 = vmatprep.subr.mxu0 0.0
        %5792 = vmatpush1.msra.mxu0 0.0
        %5793 = vmatprep.subr.mxu0 0.0
        %5794 = vmatpush1.msra.mxu0 0.0
        %5795 = vmatprep.subr.mxu0 0.0
        %5796 = vmatpush1.msra.mxu0 0.0
        %5797 = vmatprep.mubr.f32.mxu0 0.0
        %5798 = vmatmul.mubr.f32.gmra.mrb[0].mxu0 %v5731
        %v5799 = vpop.f32.mrb[0].mxu0
        %v5800 = vadd.f32 0.0, %v5799
        %v5801 = vpop.f32.mrb[0].mxu0
        %5802 = vdwg.mxu0
        %v5803 = vadd.f32 %v5644, %v5800
        %v5804 = vmul.f32 %v1520, %v1822
        %5805 = vmatprep.subr.mxu0 0.0
        %5806 = vmatpush1.xpose.msra.mxu0 %v5804
        %5807 = vmatprep.subr.mxu0 0.0
        %5808 = vmatpush1.xpose.msra.mxu0 0.0
        %5809 = vmatprep.subr.mxu0 0.0
        %5810 = vmatpush1.xpose.msra.mxu0 0.0
        %5811 = vmatprep.subr.mxu0 0.0
        %5812 = vmatpush1.xpose.msra.mxu0 0.0
        %5813 = vmatprep.subr.mxu0 0.0
        %5814 = vmatpush1.xpose.msra.mxu0 0.0
        %5815 = vmatprep.subr.mxu0 0.0
        %5816 = vmatpush1.xpose.msra.mxu0 0.0
        %5817 = vmatprep.subr.mxu0 0.0
        %5818 = vmatpush1.xpose.msra.mxu0 0.0
        %5819 = vmatprep.subr.mxu0 0.0
        %5820 = vmatpush1.xpose.msra.mxu0 0.0
        %5821 = vmatprep.subr.mxu0 0.0
        %5822 = vmatpush1.xpose.msra.mxu0 0.0
        %5823 = vmatprep.subr.mxu0 0.0
        %5824 = vmatpush1.xpose.msra.mxu0 0.0
        %5825 = vmatprep.subr.mxu0 0.0
        %5826 = vmatpush1.xpose.msra.mxu0 0.0
        %5827 = vmatprep.subr.mxu0 0.0
        %5828 = vmatpush1.xpose.msra.mxu0 0.0
        %5829 = vmatprep.subr.mxu0 0.0
        %5830 = vmatpush1.xpose.msra.mxu0 0.0
        %5831 = vmatprep.subr.mxu0 0.0
        %5832 = vmatpush1.xpose.msra.mxu0 0.0
        %5833 = vmatprep.subr.mxu0 0.0
        %5834 = vmatpush1.xpose.msra.mxu0 0.0
        %5835 = vmatprep.subr.mxu0 0.0
        %5836 = vmatpush1.xpose.msra.mxu0 0.0
        %5837 = vmatprep.subr.mxu0 0.0
        %5838 = vmatpush1.xpose.msra.mxu0 0.0
        %5839 = vmatprep.subr.mxu0 0.0
        %5840 = vmatpush1.xpose.msra.mxu0 0.0
        %5841 = vmatprep.subr.mxu0 0.0
        %5842 = vmatpush1.xpose.msra.mxu0 0.0
        %5843 = vmatprep.subr.mxu0 0.0
        %5844 = vmatpush1.xpose.msra.mxu0 0.0
        %5845 = vmatprep.subr.mxu0 0.0
        %5846 = vmatpush1.xpose.msra.mxu0 0.0
        %5847 = vmatprep.subr.mxu0 0.0
        %5848 = vmatpush1.xpose.msra.mxu0 0.0
        %5849 = vmatprep.subr.mxu0 0.0
        %5850 = vmatpush1.xpose.msra.mxu0 0.0
        %5851 = vmatprep.subr.mxu0 0.0
        %5852 = vmatpush1.xpose.msra.mxu0 0.0
        %5853 = vmatprep.subr.mxu0 0.0
        %5854 = vmatpush1.xpose.msra.mxu0 0.0
        %5855 = vmatprep.subr.mxu0 0.0
        %5856 = vmatpush1.xpose.msra.mxu0 0.0
        %5857 = vmatprep.subr.mxu0 0.0
        %5858 = vmatpush1.xpose.msra.mxu0 0.0
        %5859 = vmatprep.subr.mxu0 0.0
        %5860 = vmatpush1.xpose.msra.mxu0 0.0
        %5861 = vmatprep.subr.mxu0 0.0
        %5862 = vmatpush1.xpose.msra.mxu0 0.0
        %5863 = vmatprep.subr.mxu0 0.0
        %5864 = vmatpush1.xpose.msra.mxu0 0.0
        %5865 = vmatprep.subr.mxu0 0.0
        %5866 = vmatpush1.xpose.msra.mxu0 0.0
        %5867 = vmatprep.subr.mxu0 0.0
        %5868 = vmatpush1.xpose.msra.mxu0 0.0
        %5869 = vmatprep.mubr.f32.mxu0 0.0
        %5870 = vmatmul.mubr.f32.gmra.mrb[0].mxu0 %v1737
        %v5871 = vpop.f32.mrb[0].mxu0
        %v5872 = vadd.f32 0.0, %v5871
        %v5873 = vpop.f32.mrb[0].mxu0
        %5874 = vdwg.mxu0
        %v5875 = vmul.f32 %v5872, 0.25
        %v5877 = vlaneseq
        %v5878 = vshrl.u32 %v5877, 7
        %v5879 = vsub.s32 0, %v5878
        %v5880 = vrot.slane %v1377, %v5879
        %v5882 = vadd.f32 %v5875, %v5880
        %v5883 = vsel %vm1954, %v5882, -inf
        %5884 = vmax.xlane.f32.xlu0 %v5883
        %v5885 = vpop.xlane.xlu0 %5884
        %v5886 = vsub.f32 %v5882, %v5885
        %v5887 = vmul.f32 %v5886, 1.442695
        %v5888 = vpow.pop %v5887
        %v5889 = vsel %vm1954, %v5888, 0.0
        %5890 = vadd.xlane.f32.xlu0 %v5889
        %v5891 = vpop.xlane.xlu0 %5890
        %v5892 = vrcp.pop %v5891
        %v5893 = vmul.f32 %v5888, %v5892
        %v5894 = vmul.f32 %v1594, %v1822
        %v5895 = vmul.f32 %v1520, %v1827
        %5896 = vmatprep.subr.mxu0 0.0
        %5897 = vmatpush1.xpose.msra.mxu0 %v5895
        %5898 = vmatprep.subr.mxu0 0.0
        %5899 = vmatpush1.xpose.msra.mxu0 0.0
        %5900 = vmatprep.subr.mxu0 0.0
        %5901 = vmatpush1.xpose.msra.mxu0 0.0
        %5902 = vmatprep.subr.mxu0 0.0
        %5903 = vmatpush1.xpose.msra.mxu0 0.0
        %5904 = vmatprep.subr.mxu0 0.0
        %5905 = vmatpush1.xpose.msra.mxu0 0.0
        %5906 = vmatprep.subr.mxu0 0.0
        %5907 = vmatpush1.xpose.msra.mxu0 0.0
        %5908 = vmatprep.subr.mxu0 0.0
        %5909 = vmatpush1.xpose.msra.mxu0 0.0
        %5910 = vmatprep.subr.mxu0 0.0
        %5911 = vmatpush1.xpose.msra.mxu0 0.0
        %5912 = vmatprep.subr.mxu0 0.0
        %5913 = vmatpush1.xpose.msra.mxu0 0.0
        %5914 = vmatprep.subr.mxu0 0.0
        %5915 = vmatpush1.xpose.msra.mxu0 0.0
        %5916 = vmatprep.subr.mxu0 0.0
        %5917 = vmatpush1.xpose.msra.mxu0 0.0
        %5918 = vmatprep.subr.mxu0 0.0
        %5919 = vmatpush1.xpose.msra.mxu0 0.0
        %5920 = vmatprep.subr.mxu0 0.0
        %5921 = vmatpush1.xpose.msra.mxu0 0.0
        %5922 = vmatprep.subr.mxu0 0.0
        %5923 = vmatpush1.xpose.msra.mxu0 0.0
        %5924 = vmatprep.subr.mxu0 0.0
        %5925 = vmatpush1.xpose.msra.mxu0 0.0
        %5926 = vmatprep.subr.mxu0 0.0
        %5927 = vmatpush1.xpose.msra.mxu0 0.0
        %5928 = vmatprep.subr.mxu0 0.0
        %5929 = vmatpush1.xpose.msra.mxu0 0.0
        %5930 = vmatprep.subr.mxu0 0.0
        %5931 = vmatpush1.xpose.msra.mxu0 0.0
        %5932 = vmatprep.subr.mxu0 0.0
        %5933 = vmatpush1.xpose.msra.mxu0 0.0
        %5934 = vmatprep.subr.mxu0 0.0
        %5935 = vmatpush1.xpose.msra.mxu0 0.0
        %5936 = vmatprep.subr.mxu0 0.0
        %5937 = vmatpush1.xpose.msra.mxu0 0.0
        %5938 = vmatprep.subr.mxu0 0.0
        %5939 = vmatpush1.xpose.msra.mxu0 0.0
        %5940 = vmatprep.subr.mxu0 0.0
        %5941 = vmatpush1.xpose.msra.mxu0 0.0
        %5942 = vmatprep.subr.mxu0 0.0
        %5943 = vmatpush1.xpose.msra.mxu0 0.0
        %5944 = vmatprep.subr.mxu0 0.0
        %5945 = vmatpush1.xpose.msra.mxu0 0.0
        %5946 = vmatprep.subr.mxu0 0.0
        %5947 = vmatpush1.xpose.msra.mxu0 0.0
        %5948 = vmatprep.subr.mxu0 0.0
        %5949 = vmatpush1.xpose.msra.mxu0 0.0
        %5950 = vmatprep.subr.mxu0 0.0
        %5951 = vmatpush1.xpose.msra.mxu0 0.0
        %5952 = vmatprep.subr.mxu0 0.0
        %5953 = vmatpush1.xpose.msra.mxu0 0.0
        %5954 = vmatprep.subr.mxu0 0.0
        %5955 = vmatpush1.xpose.msra.mxu0 0.0
        %5956 = vmatprep.subr.mxu0 0.0
        %5957 = vmatpush1.xpose.msra.mxu0 0.0
        %5958 = vmatprep.subr.mxu0 0.0
        %5959 = vmatpush1.xpose.msra.mxu0 0.0
        %5960 = vmatprep.mubr.f32.mxu0 0.0
        %5961 = vmatmul.mubr.f32.gmra.mrb[0].mxu0 %v1737
        %v5962 = vpop.f32.mrb[0].mxu0
        %v5963 = vadd.f32 0.0, %v5962
        %v5964 = vpop.f32.mrb[0].mxu0
        %5965 = vdwg.mxu0
        %v5966 = vmul.f32 %v5963, 0.25
        %v5967 = vadd.f32 %v5966, %v5880
        %v5968 = vsel %vm1954, %v5967, -inf
        %5969 = vmax.xlane.f32.xlu0 %v5968
        %v5970 = vpop.xlane.xlu0 %5969
        %v5971 = vsub.f32 %v5967, %v5970
        %v5972 = vmul.f32 %v5971, 1.442695
        %v5973 = vpow.pop %v5972
        %v5974 = vsel %vm1954, %v5973, 0.0
        %5975 = vadd.xlane.f32.xlu0 %v5974
        %v5976 = vpop.xlane.xlu0 %5975
        %v5977 = vrcp.pop %v5976
        %v5978 = vmul.f32 %v5973, %v5977
        %v5979 = vmul.f32 %v1594, %v1827
        %v5981 = vsel %vm1954, %v5978, 0
        %5983 = vmatprep.subr.mxu0 0.0
        %5984 = vmatpush1.msra.mxu0 %v5979
        %5985 = vmatprep.subr.mxu0 0.0
        %5986 = vmatpush1.msra.mxu0 0.0
        %5987 = vmatprep.subr.mxu0 0.0
        %5988 = vmatpush1.msra.mxu0 0.0
        %5989 = vmatprep.subr.mxu0 0.0
        %5990 = vmatpush1.msra.mxu0 0.0
        %5991 = vmatprep.subr.mxu0 0.0
        %5992 = vmatpush1.msra.mxu0 0.0
        %5993 = vmatprep.subr.mxu0 0.0
        %5994 = vmatpush1.msra.mxu0 0.0
        %5995 = vmatprep.subr.mxu0 0.0
        %5996 = vmatpush1.msra.mxu0 0.0
        %5997 = vmatprep.subr.mxu0 0.0
        %5998 = vmatpush1.msra.mxu0 0.0
        %5999 = vmatprep.subr.mxu0 0.0
        %6000 = vmatpush1.msra.mxu0 0.0
        %6001 = vmatprep.subr.mxu0 0.0
        %6002 = vmatpush1.msra.mxu0 0.0
        %6003 = vmatprep.subr.mxu0 0.0
        %6004 = vmatpush1.msra.mxu0 0.0
        %6005 = vmatprep.subr.mxu0 0.0
        %6006 = vmatpush1.msra.mxu0 0.0
        %6007 = vmatprep.subr.mxu0 0.0
        %6008 = vmatpush1.msra.mxu0 0.0
        %6009 = vmatprep.subr.mxu0 0.0
        %6010 = vmatpush1.msra.mxu0 0.0
        %6011 = vmatprep.subr.mxu0 0.0
        %6012 = vmatpush1.msra.mxu0 0.0
        %6013 = vmatprep.subr.mxu0 0.0
        %6014 = vmatpush1.msra.mxu0 0.0
        %6015 = vmatprep.subr.mxu0 0.0
        %6016 = vmatpush1.msra.mxu0 0.0
        %6017 = vmatprep.subr.mxu0 0.0
        %6018 = vmatpush1.msra.mxu0 0.0
        %6019 = vmatprep.subr.mxu0 0.0
        %6020 = vmatpush1.msra.mxu0 0.0
        %6021 = vmatprep.subr.mxu0 0.0
        %6022 = vmatpush1.msra.mxu0 0.0
        %6023 = vmatprep.subr.mxu0 0.0
        %6024 = vmatpush1.msra.mxu0 0.0
        %6025 = vmatprep.subr.mxu0 0.0
        %6026 = vmatpush1.msra.mxu0 0.0
        %6027 = vmatprep.subr.mxu0 0.0
        %6028 = vmatpush1.msra.mxu0 0.0
        %6029 = vmatprep.subr.mxu0 0.0
        %6030 = vmatpush1.msra.mxu0 0.0
        %6031 = vmatprep.subr.mxu0 0.0
        %6032 = vmatpush1.msra.mxu0 0.0
        %6033 = vmatprep.subr.mxu0 0.0
        %6034 = vmatpush1.msra.mxu0 0.0
        %6035 = vmatprep.subr.mxu0 0.0
        %6036 = vmatpush1.msra.mxu0 0.0
        %6037 = vmatprep.subr.mxu0 0.0
        %6038 = vmatpush1.msra.mxu0 0.0
        %6039 = vmatprep.subr.mxu0 0.0
        %6040 = vmatpush1.msra.mxu0 0.0
        %6041 = vmatprep.subr.mxu0 0.0
        %6042 = vmatpush1.msra.mxu0 0.0
        %6043 = vmatprep.subr.mxu0 0.0
        %6044 = vmatpush1.msra.mxu0 0.0
        %6045 = vmatprep.subr.mxu0 0.0
        %6046 = vmatpush1.msra.mxu0 0.0
        %6047 = vmatprep.mubr.f32.mxu0 0.0
        %6048 = vmatmul.mubr.f32.gmra.mrb[0].mxu0 %v5981
        %v6049 = vpop.f32.mrb[0].mxu0
        %v6050 = vadd.f32 0.0, %v6049
        %v6051 = vpop.f32.mrb[0].mxu0
        %6052 = vdwg.mxu0
        %v6054 = vsel %vm1954, %v5893, 0
        %6056 = vmatprep.subr.mxu0 0.0
        %6057 = vmatpush1.msra.mxu0 %v5894
        %6058 = vmatprep.subr.mxu0 0.0
        %6059 = vmatpush1.msra.mxu0 0.0
        %6060 = vmatprep.subr.mxu0 0.0
        %6061 = vmatpush1.msra.mxu0 0.0
        %6062 = vmatprep.subr.mxu0 0.0
        %6063 = vmatpush1.msra.mxu0 0.0
        %6064 = vmatprep.subr.mxu0 0.0
        %6065 = vmatpush1.msra.mxu0 0.0
        %6066 = vmatprep.subr.mxu0 0.0
        %6067 = vmatpush1.msra.mxu0 0.0
        %6068 = vmatprep.subr.mxu0 0.0
        %6069 = vmatpush1.msra.mxu0 0.0
        %6070 = vmatprep.subr.mxu0 0.0
        %6071 = vmatpush1.msra.mxu0 0.0
        %6072 = vmatprep.subr.mxu0 0.0
        %6073 = vmatpush1.msra.mxu0 0.0
        %6074 = vmatprep.subr.mxu0 0.0
        %6075 = vmatpush1.msra.mxu0 0.0
        %6076 = vmatprep.subr.mxu0 0.0
        %6077 = vmatpush1.msra.mxu0 0.0
        %6078 = vmatprep.subr.mxu0 0.0
        %6079 = vmatpush1.msra.mxu0 0.0
        %6080 = vmatprep.subr.mxu0 0.0
        %6081 = vmatpush1.msra.mxu0 0.0
        %6082 = vmatprep.subr.mxu0 0.0
        %6083 = vmatpush1.msra.mxu0 0.0
        %6084 = vmatprep.subr.mxu0 0.0
        %6085 = vmatpush1.msra.mxu0 0.0
        %6086 = vmatprep.subr.mxu0 0.0
        %6087 = vmatpush1.msra.mxu0 0.0
        %6088 = vmatprep.subr.mxu0 0.0
        %6089 = vmatpush1.msra.mxu0 0.0
        %6090 = vmatprep.subr.mxu0 0.0
        %6091 = vmatpush1.msra.mxu0 0.0
        %6092 = vmatprep.subr.mxu0 0.0
        %6093 = vmatpush1.msra.mxu0 0.0
        %6094 = vmatprep.subr.mxu0 0.0
        %6095 = vmatpush1.msra.mxu0 0.0
        %6096 = vmatprep.subr.mxu0 0.0
        %6097 = vmatpush1.msra.mxu0 0.0
        %6098 = vmatprep.subr.mxu0 0.0
        %6099 = vmatpush1.msra.mxu0 0.0
        %6100 = vmatprep.subr.mxu0 0.0
        %6101 = vmatpush1.msra.mxu0 0.0
        %6102 = vmatprep.subr.mxu0 0.0
        %6103 = vmatpush1.msra.mxu0 0.0
        %6104 = vmatprep.subr.mxu0 0.0
        %6105 = vmatpush1.msra.mxu0 0.0
        %6106 = vmatprep.subr.mxu0 0.0
        %6107 = vmatpush1.msra.mxu0 0.0
        %6108 = vmatprep.subr.mxu0 0.0
        %6109 = vmatpush1.msra.mxu0 0.0
        %6110 = vmatprep.subr.mxu0 0.0
        %6111 = vmatpush1.msra.mxu0 0.0
        %6112 = vmatprep.subr.mxu0 0.0
        %6113 = vmatpush1.msra.mxu0 0.0
        %6114 = vmatprep.subr.mxu0 0.0
        %6115 = vmatpush1.msra.mxu0 0.0
        %6116 = vmatprep.subr.mxu0 0.0
        %6117 = vmatpush1.msra.mxu0 0.0
        %6118 = vmatprep.subr.mxu0 0.0
        %6119 = vmatpush1.msra.mxu0 0.0
        %6120 = vmatprep.mubr.f32.mxu0 0.0
        %6121 = vmatmul.mubr.f32.gmra.mrb[0].mxu0 %v6054
        %v6122 = vpop.f32.mrb[0].mxu0
        %v6123 = vadd.f32 %v6050, %v6122
        %v6124 = vpop.f32.mrb[0].mxu0
        %6125 = vdwg.mxu0
        %v6126 = vmul.f32 %v1520, %v1832
        %6127 = vmatprep.subr.mxu0 0.0
        %6128 = vmatpush1.xpose.msra.mxu0 %v6126
        %6129 = vmatprep.subr.mxu0 0.0
        %6130 = vmatpush1.xpose.msra.mxu0 0.0
        %6131 = vmatprep.subr.mxu0 0.0
        %6132 = vmatpush1.xpose.msra.mxu0 0.0
        %6133 = vmatprep.subr.mxu0 0.0
        %6134 = vmatpush1.xpose.msra.mxu0 0.0
        %6135 = vmatprep.subr.mxu0 0.0
        %6136 = vmatpush1.xpose.msra.mxu0 0.0
        %6137 = vmatprep.subr.mxu0 0.0
        %6138 = vmatpush1.xpose.msra.mxu0 0.0
        %6139 = vmatprep.subr.mxu0 0.0
        %6140 = vmatpush1.xpose.msra.mxu0 0.0
        %6141 = vmatprep.subr.mxu0 0.0
        %6142 = vmatpush1.xpose.msra.mxu0 0.0
        %6143 = vmatprep.subr.mxu0 0.0
        %6144 = vmatpush1.xpose.msra.mxu0 0.0
        %6145 = vmatprep.subr.mxu0 0.0
        %6146 = vmatpush1.xpose.msra.mxu0 0.0
        %6147 = vmatprep.subr.mxu0 0.0
        %6148 = vmatpush1.xpose.msra.mxu0 0.0
        %6149 = vmatprep.subr.mxu0 0.0
        %6150 = vmatpush1.xpose.msra.mxu0 0.0
        %6151 = vmatprep.subr.mxu0 0.0
        %6152 = vmatpush1.xpose.msra.mxu0 0.0
        %6153 = vmatprep.subr.mxu0 0.0
        %6154 = vmatpush1.xpose.msra.mxu0 0.0
        %6155 = vmatprep.subr.mxu0 0.0
        %6156 = vmatpush1.xpose.msra.mxu0 0.0
        %6157 = vmatprep.subr.mxu0 0.0
        %6158 = vmatpush1.xpose.msra.mxu0 0.0
        %6159 = vmatprep.subr.mxu0 0.0
        %6160 = vmatpush1.xpose.msra.mxu0 0.0
        %6161 = vmatprep.subr.mxu0 0.0
        %6162 = vmatpush1.xpose.msra.mxu0 0.0
        %6163 = vmatprep.subr.mxu0 0.0
        %6164 = vmatpush1.xpose.msra.mxu0 0.0
        %6165 = vmatprep.subr.mxu0 0.0
        %6166 = vmatpush1.xpose.msra.mxu0 0.0
        %6167 = vmatprep.subr.mxu0 0.0
        %6168 = vmatpush1.xpose.msra.mxu0 0.0
        %6169 = vmatprep.subr.mxu0 0.0
        %6170 = vmatpush1.xpose.msra.mxu0 0.0
        %6171 = vmatprep.subr.mxu0 0.0
        %6172 = vmatpush1.xpose.msra.mxu0 0.0
        %6173 = vmatprep.subr.mxu0 0.0
        %6174 = vmatpush1.xpose.msra.mxu0 0.0
        %6175 = vmatprep.subr.mxu0 0.0
        %6176 = vmatpush1.xpose.msra.mxu0 0.0
        %6177 = vmatprep.subr.mxu0 0.0
        %6178 = vmatpush1.xpose.msra.mxu0 0.0
        %6179 = vmatprep.subr.mxu0 0.0
        %6180 = vmatpush1.xpose.msra.mxu0 0.0
        %6181 = vmatprep.subr.mxu0 0.0
        %6182 = vmatpush1.xpose.msra.mxu0 0.0
        %6183 = vmatprep.subr.mxu0 0.0
        %6184 = vmatpush1.xpose.msra.mxu0 0.0
        %6185 = vmatprep.subr.mxu0 0.0
        %6186 = vmatpush1.xpose.msra.mxu0 0.0
        %6187 = vmatprep.subr.mxu0 0.0
        %6188 = vmatpush1.xpose.msra.mxu0 0.0
        %6189 = vmatprep.subr.mxu0 0.0
        %6190 = vmatpush1.xpose.msra.mxu0 0.0
        %6191 = vmatprep.mubr.f32.mxu0 0.0
        %6192 = vmatmul.mubr.f32.gmra.mrb[0].mxu0 %v1737
        %v6193 = vpop.f32.mrb[0].mxu0
        %v6194 = vadd.f32 0.0, %v6193
        %v6195 = vpop.f32.mrb[0].mxu0
        %6196 = vdwg.mxu0
        %v6197 = vmul.f32 %v6194, 0.25
        %v6198 = vadd.f32 %v6197, %v5880
        %v6199 = vsel %vm1954, %v6198, -inf
        %6200 = vmax.xlane.f32.xlu0 %v6199
        %v6201 = vpop.xlane.xlu0 %6200
        %v6202 = vsub.f32 %v6198, %v6201
        %v6203 = vmul.f32 %v6202, 1.442695
        %v6204 = vpow.pop %v6203
        %v6205 = vsel %vm1954, %v6204, 0.0
        %6206 = vadd.xlane.f32.xlu0 %v6205
        %v6207 = vpop.xlane.xlu0 %6206
        %v6208 = vrcp.pop %v6207
        %v6209 = vmul.f32 %v6204, %v6208
        %v6210 = vmul.f32 %v1594, %v1832
        %v6212 = vsel %vm1954, %v6209, 0
        %6214 = vmatprep.subr.mxu0 0.0
        %6215 = vmatpush1.msra.mxu0 %v6210
        %6216 = vmatprep.subr.mxu0 0.0
        %6217 = vmatpush1.msra.mxu0 0.0
        %6218 = vmatprep.subr.mxu0 0.0
        %6219 = vmatpush1.msra.mxu0 0.0
        %6220 = vmatprep.subr.mxu0 0.0
        %6221 = vmatpush1.msra.mxu0 0.0
        %6222 = vmatprep.subr.mxu0 0.0
        %6223 = vmatpush1.msra.mxu0 0.0
        %6224 = vmatprep.subr.mxu0 0.0
        %6225 = vmatpush1.msra.mxu0 0.0
        %6226 = vmatprep.subr.mxu0 0.0
        %6227 = vmatpush1.msra.mxu0 0.0
        %6228 = vmatprep.subr.mxu0 0.0
        %6229 = vmatpush1.msra.mxu0 0.0
        %6230 = vmatprep.subr.mxu0 0.0
        %6231 = vmatpush1.msra.mxu0 0.0
        %6232 = vmatprep.subr.mxu0 0.0
        %6233 = vmatpush1.msra.mxu0 0.0
        %6234 = vmatprep.subr.mxu0 0.0
        %6235 = vmatpush1.msra.mxu0 0.0
        %6236 = vmatprep.subr.mxu0 0.0
        %6237 = vmatpush1.msra.mxu0 0.0
        %6238 = vmatprep.subr.mxu0 0.0
        %6239 = vmatpush1.msra.mxu0 0.0
        %6240 = vmatprep.subr.mxu0 0.0
        %6241 = vmatpush1.msra.mxu0 0.0
        %6242 = vmatprep.subr.mxu0 0.0
        %6243 = vmatpush1.msra.mxu0 0.0
        %6244 = vmatprep.subr.mxu0 0.0
        %6245 = vmatpush1.msra.mxu0 0.0
        %6246 = vmatprep.subr.mxu0 0.0
        %6247 = vmatpush1.msra.mxu0 0.0
        %6248 = vmatprep.subr.mxu0 0.0
        %6249 = vmatpush1.msra.mxu0 0.0
        %6250 = vmatprep.subr.mxu0 0.0
        %6251 = vmatpush1.msra.mxu0 0.0
        %6252 = vmatprep.subr.mxu0 0.0
        %6253 = vmatpush1.msra.mxu0 0.0
        %6254 = vmatprep.subr.mxu0 0.0
        %6255 = vmatpush1.msra.mxu0 0.0
        %6256 = vmatprep.subr.mxu0 0.0
        %6257 = vmatpush1.msra.mxu0 0.0
        %6258 = vmatprep.subr.mxu0 0.0
        %6259 = vmatpush1.msra.mxu0 0.0
        %6260 = vmatprep.subr.mxu0 0.0
        %6261 = vmatpush1.msra.mxu0 0.0
        %6262 = vmatprep.subr.mxu0 0.0
        %6263 = vmatpush1.msra.mxu0 0.0
        %6264 = vmatprep.subr.mxu0 0.0
        %6265 = vmatpush1.msra.mxu0 0.0
        %6266 = vmatprep.subr.mxu0 0.0
        %6267 = vmatpush1.msra.mxu0 0.0
        %6268 = vmatprep.subr.mxu0 0.0
        %6269 = vmatpush1.msra.mxu0 0.0
        %6270 = vmatprep.subr.mxu0 0.0
        %6271 = vmatpush1.msra.mxu0 0.0
        %6272 = vmatprep.subr.mxu0 0.0
        %6273 = vmatpush1.msra.mxu0 0.0
        %6274 = vmatprep.subr.mxu0 0.0
        %6275 = vmatpush1.msra.mxu0 0.0
        %6276 = vmatprep.subr.mxu0 0.0
        %6277 = vmatpush1.msra.mxu0 0.0
        %6278 = vmatprep.mubr.f32.mxu0 0.0
        %6279 = vmatmul.mubr.f32.gmra.mrb[0].mxu0 %v6212
        %v6280 = vpop.f32.mrb[0].mxu0
        %v6281 = vadd.f32 0.0, %v6280
        %v6282 = vpop.f32.mrb[0].mxu0
        %6283 = vdwg.mxu0
        %v6284 = vadd.f32 %v6123, %v6281
        %v6285 = vmul.f32 %v1520, %v1837
        %6286 = vmatprep.subr.mxu0 0.0
        %6287 = vmatpush1.xpose.msra.mxu0 %v6285
        %6288 = vmatprep.subr.mxu0 0.0
        %6289 = vmatpush1.xpose.msra.mxu0 0.0
        %6290 = vmatprep.subr.mxu0 0.0
        %6291 = vmatpush1.xpose.msra.mxu0 0.0
        %6292 = vmatprep.subr.mxu0 0.0
        %6293 = vmatpush1.xpose.msra.mxu0 0.0
        %6294 = vmatprep.subr.mxu0 0.0
        %6295 = vmatpush1.xpose.msra.mxu0 0.0
        %6296 = vmatprep.subr.mxu0 0.0
        %6297 = vmatpush1.xpose.msra.mxu0 0.0
        %6298 = vmatprep.subr.mxu0 0.0
        %6299 = vmatpush1.xpose.msra.mxu0 0.0
        %6300 = vmatprep.subr.mxu0 0.0
        %6301 = vmatpush1.xpose.msra.mxu0 0.0
        %6302 = vmatprep.subr.mxu0 0.0
        %6303 = vmatpush1.xpose.msra.mxu0 0.0
        %6304 = vmatprep.subr.mxu0 0.0
        %6305 = vmatpush1.xpose.msra.mxu0 0.0
        %6306 = vmatprep.subr.mxu0 0.0
        %6307 = vmatpush1.xpose.msra.mxu0 0.0
        %6308 = vmatprep.subr.mxu0 0.0
        %6309 = vmatpush1.xpose.msra.mxu0 0.0
        %6310 = vmatprep.subr.mxu0 0.0
        %6311 = vmatpush1.xpose.msra.mxu0 0.0
        %6312 = vmatprep.subr.mxu0 0.0
        %6313 = vmatpush1.xpose.msra.mxu0 0.0
        %6314 = vmatprep.subr.mxu0 0.0
        %6315 = vmatpush1.xpose.msra.mxu0 0.0
        %6316 = vmatprep.subr.mxu0 0.0
        %6317 = vmatpush1.xpose.msra.mxu0 0.0
        %6318 = vmatprep.subr.mxu0 0.0
        %6319 = vmatpush1.xpose.msra.mxu0 0.0
        %6320 = vmatprep.subr.mxu0 0.0
        %6321 = vmatpush1.xpose.msra.mxu0 0.0
        %6322 = vmatprep.subr.mxu0 0.0
        %6323 = vmatpush1.xpose.msra.mxu0 0.0
        %6324 = vmatprep.subr.mxu0 0.0
        %6325 = vmatpush1.xpose.msra.mxu0 0.0
        %6326 = vmatprep.subr.mxu0 0.0
        %6327 = vmatpush1.xpose.msra.mxu0 0.0
        %6328 = vmatprep.subr.mxu0 0.0
        %6329 = vmatpush1.xpose.msra.mxu0 0.0
        %6330 = vmatprep.subr.mxu0 0.0
        %6331 = vmatpush1.xpose.msra.mxu0 0.0
        %6332 = vmatprep.subr.mxu0 0.0
        %6333 = vmatpush1.xpose.msra.mxu0 0.0
        %6334 = vmatprep.subr.mxu0 0.0
        %6335 = vmatpush1.xpose.msra.mxu0 0.0
        %6336 = vmatprep.subr.mxu0 0.0
        %6337 = vmatpush1.xpose.msra.mxu0 0.0
        %6338 = vmatprep.subr.mxu0 0.0
        %6339 = vmatpush1.xpose.msra.mxu0 0.0
        %6340 = vmatprep.subr.mxu0 0.0
        %6341 = vmatpush1.xpose.msra.mxu0 0.0
        %6342 = vmatprep.subr.mxu0 0.0
        %6343 = vmatpush1.xpose.msra.mxu0 0.0
        %6344 = vmatprep.subr.mxu0 0.0
        %6345 = vmatpush1.xpose.msra.mxu0 0.0
        %6346 = vmatprep.subr.mxu0 0.0
        %6347 = vmatpush1.xpose.msra.mxu0 0.0
        %6348 = vmatprep.subr.mxu0 0.0
        %6349 = vmatpush1.xpose.msra.mxu0 0.0
        %6350 = vmatprep.mubr.f32.mxu0 0.0
        %6351 = vmatmul.mubr.f32.gmra.mrb[0].mxu0 %v1737
        %v6352 = vpop.f32.mrb[0].mxu0
        %v6353 = vadd.f32 0.0, %v6352
        %v6354 = vpop.f32.mrb[0].mxu0
        %6355 = vdwg.mxu0
        %v6356 = vmul.f32 %v6353, 0.25
        %v6357 = vadd.f32 %v6356, %v5880
        %v6358 = vsel %vm1954, %v6357, -inf
        %6359 = vmax.xlane.f32.xlu0 %v6358
        %v6360 = vpop.xlane.xlu0 %6359
        %v6361 = vsub.f32 %v6357, %v6360
        %v6362 = vmul.f32 %v6361, 1.442695
        %v6363 = vpow.pop %v6362
        %v6364 = vsel %vm1954, %v6363, 0.0
        %6365 = vadd.xlane.f32.xlu0 %v6364
        %v6366 = vpop.xlane.xlu0 %6365
        %v6367 = vrcp.pop %v6366
        %v6368 = vmul.f32 %v6363, %v6367
        %v6369 = vmul.f32 %v1594, %v1837
        %v6371 = vsel %vm1954, %v6368, 0
        %6373 = vmatprep.subr.mxu0 0.0
        %6374 = vmatpush1.msra.mxu0 %v6369
        %6375 = vmatprep.subr.mxu0 0.0
        %6376 = vmatpush1.msra.mxu0 0.0
        %6377 = vmatprep.subr.mxu0 0.0
        %6378 = vmatpush1.msra.mxu0 0.0
        %6379 = vmatprep.subr.mxu0 0.0
        %6380 = vmatpush1.msra.mxu0 0.0
        %6381 = vmatprep.subr.mxu0 0.0
        %6382 = vmatpush1.msra.mxu0 0.0
        %6383 = vmatprep.subr.mxu0 0.0
        %6384 = vmatpush1.msra.mxu0 0.0
        %6385 = vmatprep.subr.mxu0 0.0
        %6386 = vmatpush1.msra.mxu0 0.0
        %6387 = vmatprep.subr.mxu0 0.0
        %6388 = vmatpush1.msra.mxu0 0.0
        %6389 = vmatprep.subr.mxu0 0.0
        %6390 = vmatpush1.msra.mxu0 0.0
        %6391 = vmatprep.subr.mxu0 0.0
        %6392 = vmatpush1.msra.mxu0 0.0
        %6393 = vmatprep.subr.mxu0 0.0
        %6394 = vmatpush1.msra.mxu0 0.0
        %6395 = vmatprep.subr.mxu0 0.0
        %6396 = vmatpush1.msra.mxu0 0.0
        %6397 = vmatprep.subr.mxu0 0.0
        %6398 = vmatpush1.msra.mxu0 0.0
        %6399 = vmatprep.subr.mxu0 0.0
        %6400 = vmatpush1.msra.mxu0 0.0
        %6401 = vmatprep.subr.mxu0 0.0
        %6402 = vmatpush1.msra.mxu0 0.0
        %6403 = vmatprep.subr.mxu0 0.0
        %6404 = vmatpush1.msra.mxu0 0.0
        %6405 = vmatprep.subr.mxu0 0.0
        %6406 = vmatpush1.msra.mxu0 0.0
        %6407 = vmatprep.subr.mxu0 0.0
        %6408 = vmatpush1.msra.mxu0 0.0
        %6409 = vmatprep.subr.mxu0 0.0
        %6410 = vmatpush1.msra.mxu0 0.0
        %6411 = vmatprep.subr.mxu0 0.0
        %6412 = vmatpush1.msra.mxu0 0.0
        %6413 = vmatprep.subr.mxu0 0.0
        %6414 = vmatpush1.msra.mxu0 0.0
        %6415 = vmatprep.subr.mxu0 0.0
        %6416 = vmatpush1.msra.mxu0 0.0
        %6417 = vmatprep.subr.mxu0 0.0
        %6418 = vmatpush1.msra.mxu0 0.0
        %6419 = vmatprep.subr.mxu0 0.0
        %6420 = vmatpush1.msra.mxu0 0.0
        %6421 = vmatprep.subr.mxu0 0.0
        %6422 = vmatpush1.msra.mxu0 0.0
        %6423 = vmatprep.subr.mxu0 0.0
        %6424 = vmatpush1.msra.mxu0 0.0
        %6425 = vmatprep.subr.mxu0 0.0
        %6426 = vmatpush1.msra.mxu0 0.0
        %6427 = vmatprep.subr.mxu0 0.0
        %6428 = vmatpush1.msra.mxu0 0.0
        %6429 = vmatprep.subr.mxu0 0.0
        %6430 = vmatpush1.msra.mxu0 0.0
        %6431 = vmatprep.subr.mxu0 0.0
        %6432 = vmatpush1.msra.mxu0 0.0
        %6433 = vmatprep.subr.mxu0 0.0
        %6434 = vmatpush1.msra.mxu0 0.0
        %6435 = vmatprep.subr.mxu0 0.0
        %6436 = vmatpush1.msra.mxu0 0.0
        %6437 = vmatprep.mubr.f32.mxu0 0.0
        %6438 = vmatmul.mubr.f32.gmra.mrb[0].mxu0 %v6371
        %v6439 = vpop.f32.mrb[0].mxu0
        %v6440 = vadd.f32 0.0, %v6439
        %v6441 = vpop.f32.mrb[0].mxu0
        %6442 = vdwg.mxu0
        %v6443 = vadd.f32 %v6284, %v6440
        %v6444 = vmul.f32 %v1520, %v1842
        %6445 = vmatprep.subr.mxu0 0.0
        %6446 = vmatpush1.xpose.msra.mxu0 %v6444
        %6447 = vmatprep.subr.mxu0 0.0
        %6448 = vmatpush1.xpose.msra.mxu0 0.0
        %6449 = vmatprep.subr.mxu0 0.0
        %6450 = vmatpush1.xpose.msra.mxu0 0.0
        %6451 = vmatprep.subr.mxu0 0.0
        %6452 = vmatpush1.xpose.msra.mxu0 0.0
        %6453 = vmatprep.subr.mxu0 0.0
        %6454 = vmatpush1.xpose.msra.mxu0 0.0
        %6455 = vmatprep.subr.mxu0 0.0
        %6456 = vmatpush1.xpose.msra.mxu0 0.0
        %6457 = vmatprep.subr.mxu0 0.0
        %6458 = vmatpush1.xpose.msra.mxu0 0.0
        %6459 = vmatprep.subr.mxu0 0.0
        %6460 = vmatpush1.xpose.msra.mxu0 0.0
        %6461 = vmatprep.subr.mxu0 0.0
        %6462 = vmatpush1.xpose.msra.mxu0 0.0
        %6463 = vmatprep.subr.mxu0 0.0
        %6464 = vmatpush1.xpose.msra.mxu0 0.0
        %6465 = vmatprep.subr.mxu0 0.0
        %6466 = vmatpush1.xpose.msra.mxu0 0.0
        %6467 = vmatprep.subr.mxu0 0.0
        %6468 = vmatpush1.xpose.msra.mxu0 0.0
        %6469 = vmatprep.subr.mxu0 0.0
        %6470 = vmatpush1.xpose.msra.mxu0 0.0
        %6471 = vmatprep.subr.mxu0 0.0
        %6472 = vmatpush1.xpose.msra.mxu0 0.0
        %6473 = vmatprep.subr.mxu0 0.0
        %6474 = vmatpush1.xpose.msra.mxu0 0.0
        %6475 = vmatprep.subr.mxu0 0.0
        %6476 = vmatpush1.xpose.msra.mxu0 0.0
        %6477 = vmatprep.subr.mxu0 0.0
        %6478 = vmatpush1.xpose.msra.mxu0 0.0
        %6479 = vmatprep.subr.mxu0 0.0
        %6480 = vmatpush1.xpose.msra.mxu0 0.0
        %6481 = vmatprep.subr.mxu0 0.0
        %6482 = vmatpush1.xpose.msra.mxu0 0.0
        %6483 = vmatprep.subr.mxu0 0.0
        %6484 = vmatpush1.xpose.msra.mxu0 0.0
        %6485 = vmatprep.subr.mxu0 0.0
        %6486 = vmatpush1.xpose.msra.mxu0 0.0
        %6487 = vmatprep.subr.mxu0 0.0
        %6488 = vmatpush1.xpose.msra.mxu0 0.0
        %6489 = vmatprep.subr.mxu0 0.0
        %6490 = vmatpush1.xpose.msra.mxu0 0.0
        %6491 = vmatprep.subr.mxu0 0.0
        %6492 = vmatpush1.xpose.msra.mxu0 0.0
        %6493 = vmatprep.subr.mxu0 0.0
        %6494 = vmatpush1.xpose.msra.mxu0 0.0
        %6495 = vmatprep.subr.mxu0 0.0
        %6496 = vmatpush1.xpose.msra.mxu0 0.0
        %6497 = vmatprep.subr.mxu0 0.0
        %6498 = vmatpush1.xpose.msra.mxu0 0.0
        %6499 = vmatprep.subr.mxu0 0.0
        %6500 = vmatpush1.xpose.msra.mxu0 0.0
        %6501 = vmatprep.subr.mxu0 0.0
        %6502 = vmatpush1.xpose.msra.mxu0 0.0
        %6503 = vmatprep.subr.mxu0 0.0
        %6504 = vmatpush1.xpose.msra.mxu0 0.0
        %6505 = vmatprep.subr.mxu0 0.0
        %6506 = vmatpush1.xpose.msra.mxu0 0.0
        %6507 = vmatprep.subr.mxu0 0.0
        %6508 = vmatpush1.xpose.msra.mxu0 0.0
        %6509 = vmatprep.mubr.f32.mxu0 0.0
        %6510 = vmatmul.mubr.f32.gmra.mrb[0].mxu0 %v1737
        %v6511 = vpop.f32.mrb[0].mxu0
        %v6512 = vadd.f32 0.0, %v6511
        %v6513 = vpop.f32.mrb[0].mxu0
        %6514 = vdwg.mxu0
        %v6515 = vmul.f32 %v6512, 0.25
        %v6516 = vadd.f32 %v6515, %v5880
        %v6517 = vsel %vm1954, %v6516, -inf
        %6518 = vmax.xlane.f32.xlu0 %v6517
        %v6519 = vpop.xlane.xlu0 %6518
        %v6520 = vsub.f32 %v6516, %v6519
        %v6521 = vmul.f32 %v6520, 1.442695
        %v6522 = vpow.pop %v6521
        %v6523 = vsel %vm1954, %v6522, 0.0
        %6524 = vadd.xlane.f32.xlu0 %v6523
        %v6525 = vpop.xlane.xlu0 %6524
        %v6526 = vrcp.pop %v6525
        %v6527 = vmul.f32 %v6522, %v6526
        %v6528 = vmul.f32 %v1594, %v1842
        %v6530 = vsel %vm1954, %v6527, 0
        %6532 = vmatprep.subr.mxu0 0.0
        %6533 = vmatpush1.msra.mxu0 %v6528
        %6534 = vmatprep.subr.mxu0 0.0
        %6535 = vmatpush1.msra.mxu0 0.0
        %6536 = vmatprep.subr.mxu0 0.0
        %6537 = vmatpush1.msra.mxu0 0.0
        %6538 = vmatprep.subr.mxu0 0.0
        %6539 = vmatpush1.msra.mxu0 0.0
        %6540 = vmatprep.subr.mxu0 0.0
        %6541 = vmatpush1.msra.mxu0 0.0
        %6542 = vmatprep.subr.mxu0 0.0
        %6543 = vmatpush1.msra.mxu0 0.0
        %6544 = vmatprep.subr.mxu0 0.0
        %6545 = vmatpush1.msra.mxu0 0.0
        %6546 = vmatprep.subr.mxu0 0.0
        %6547 = vmatpush1.msra.mxu0 0.0
        %6548 = vmatprep.subr.mxu0 0.0
        %6549 = vmatpush1.msra.mxu0 0.0
        %6550 = vmatprep.subr.mxu0 0.0
        %6551 = vmatpush1.msra.mxu0 0.0
        %6552 = vmatprep.subr.mxu0 0.0
        %6553 = vmatpush1.msra.mxu0 0.0
        %6554 = vmatprep.subr.mxu0 0.0
        %6555 = vmatpush1.msra.mxu0 0.0
        %6556 = vmatprep.subr.mxu0 0.0
        %6557 = vmatpush1.msra.mxu0 0.0
        %6558 = vmatprep.subr.mxu0 0.0
        %6559 = vmatpush1.msra.mxu0 0.0
        %6560 = vmatprep.subr.mxu0 0.0
        %6561 = vmatpush1.msra.mxu0 0.0
        %6562 = vmatprep.subr.mxu0 0.0
        %6563 = vmatpush1.msra.mxu0 0.0
        %6564 = vmatprep.subr.mxu0 0.0
        %6565 = vmatpush1.msra.mxu0 0.0
        %6566 = vmatprep.subr.mxu0 0.0
        %6567 = vmatpush1.msra.mxu0 0.0
        %6568 = vmatprep.subr.mxu0 0.0
        %6569 = vmatpush1.msra.mxu0 0.0
        %6570 = vmatprep.subr.mxu0 0.0
        %6571 = vmatpush1.msra.mxu0 0.0
        %6572 = vmatprep.subr.mxu0 0.0
        %6573 = vmatpush1.msra.mxu0 0.0
        %6574 = vmatprep.subr.mxu0 0.0
        %6575 = vmatpush1.msra.mxu0 0.0
        %6576 = vmatprep.subr.mxu0 0.0
        %6577 = vmatpush1.msra.mxu0 0.0
        %6578 = vmatprep.subr.mxu0 0.0
        %6579 = vmatpush1.msra.mxu0 0.0
        %6580 = vmatprep.subr.mxu0 0.0
        %6581 = vmatpush1.msra.mxu0 0.0
        %6582 = vmatprep.subr.mxu0 0.0
        %6583 = vmatpush1.msra.mxu0 0.0
        %6584 = vmatprep.subr.mxu0 0.0
        %6585 = vmatpush1.msra.mxu0 0.0
        %6586 = vmatprep.subr.mxu0 0.0
        %6587 = vmatpush1.msra.mxu0 0.0
        %6588 = vmatprep.subr.mxu0 0.0
        %6589 = vmatpush1.msra.mxu0 0.0
        %6590 = vmatprep.subr.mxu0 0.0
        %6591 = vmatpush1.msra.mxu0 0.0
        %6592 = vmatprep.subr.mxu0 0.0
        %6593 = vmatpush1.msra.mxu0 0.0
        %6594 = vmatprep.subr.mxu0 0.0
        %6595 = vmatpush1.msra.mxu0 0.0
        %6596 = vmatprep.mubr.f32.mxu0 0.0
        %6597 = vmatmul.mubr.f32.gmra.mrb[0].mxu0 %v6530
        %v6598 = vpop.f32.mrb[0].mxu0
        %v6599 = vadd.f32 0.0, %v6598
        %v6600 = vpop.f32.mrb[0].mxu0
        %6601 = vdwg.mxu0
        %v6602 = vadd.f32 %v6443, %v6599
        %v6603 = vmul.f32 %v1520, %v1847
        %6604 = vmatprep.subr.mxu0 0.0
        %6605 = vmatpush1.xpose.msra.mxu0 %v6603
        %6606 = vmatprep.subr.mxu0 0.0
        %6607 = vmatpush1.xpose.msra.mxu0 0.0
        %6608 = vmatprep.subr.mxu0 0.0
        %6609 = vmatpush1.xpose.msra.mxu0 0.0
        %6610 = vmatprep.subr.mxu0 0.0
        %6611 = vmatpush1.xpose.msra.mxu0 0.0
        %6612 = vmatprep.subr.mxu0 0.0
        %6613 = vmatpush1.xpose.msra.mxu0 0.0
        %6614 = vmatprep.subr.mxu0 0.0
        %6615 = vmatpush1.xpose.msra.mxu0 0.0
        %6616 = vmatprep.subr.mxu0 0.0
        %6617 = vmatpush1.xpose.msra.mxu0 0.0
        %6618 = vmatprep.subr.mxu0 0.0
        %6619 = vmatpush1.xpose.msra.mxu0 0.0
        %6620 = vmatprep.subr.mxu0 0.0
        %6621 = vmatpush1.xpose.msra.mxu0 0.0
        %6622 = vmatprep.subr.mxu0 0.0
        %6623 = vmatpush1.xpose.msra.mxu0 0.0
        %6624 = vmatprep.subr.mxu0 0.0
        %6625 = vmatpush1.xpose.msra.mxu0 0.0
        %6626 = vmatprep.subr.mxu0 0.0
        %6627 = vmatpush1.xpose.msra.mxu0 0.0
        %6628 = vmatprep.subr.mxu0 0.0
        %6629 = vmatpush1.xpose.msra.mxu0 0.0
        %6630 = vmatprep.subr.mxu0 0.0
        %6631 = vmatpush1.xpose.msra.mxu0 0.0
        %6632 = vmatprep.subr.mxu0 0.0
        %6633 = vmatpush1.xpose.msra.mxu0 0.0
        %6634 = vmatprep.subr.mxu0 0.0
        %6635 = vmatpush1.xpose.msra.mxu0 0.0
        %6636 = vmatprep.subr.mxu0 0.0
        %6637 = vmatpush1.xpose.msra.mxu0 0.0
        %6638 = vmatprep.subr.mxu0 0.0
        %6639 = vmatpush1.xpose.msra.mxu0 0.0
        %6640 = vmatprep.subr.mxu0 0.0
        %6641 = vmatpush1.xpose.msra.mxu0 0.0
        %6642 = vmatprep.subr.mxu0 0.0
        %6643 = vmatpush1.xpose.msra.mxu0 0.0
        %6644 = vmatprep.subr.mxu0 0.0
        %6645 = vmatpush1.xpose.msra.mxu0 0.0
        %6646 = vmatprep.subr.mxu0 0.0
        %6647 = vmatpush1.xpose.msra.mxu0 0.0
        %6648 = vmatprep.subr.mxu0 0.0
        %6649 = vmatpush1.xpose.msra.mxu0 0.0
        %6650 = vmatprep.subr.mxu0 0.0
        %6651 = vmatpush1.xpose.msra.mxu0 0.0
        %6652 = vmatprep.subr.mxu0 0.0
        %6653 = vmatpush1.xpose.msra.mxu0 0.0
        %6654 = vmatprep.subr.mxu0 0.0
        %6655 = vmatpush1.xpose.msra.mxu0 0.0
        %6656 = vmatprep.subr.mxu0 0.0
        %6657 = vmatpush1.xpose.msra.mxu0 0.0
        %6658 = vmatprep.subr.mxu0 0.0
        %6659 = vmatpush1.xpose.msra.mxu0 0.0
        %6660 = vmatprep.subr.mxu0 0.0
        %6661 = vmatpush1.xpose.msra.mxu0 0.0
        %6662 = vmatprep.subr.mxu0 0.0
        %6663 = vmatpush1.xpose.msra.mxu0 0.0
        %6664 = vmatprep.subr.mxu0 0.0
        %6665 = vmatpush1.xpose.msra.mxu0 0.0
        %6666 = vmatprep.subr.mxu0 0.0
        %6667 = vmatpush1.xpose.msra.mxu0 0.0
        %6668 = vmatprep.mubr.f32.mxu0 0.0
        %6669 = vmatmul.mubr.f32.gmra.mrb[0].mxu0 %v1737
        %v6670 = vpop.f32.mrb[0].mxu0
        %v6671 = vadd.f32 0.0, %v6670
        %v6672 = vpop.f32.mrb[0].mxu0
        %6673 = vdwg.mxu0
        %v6674 = vmul.f32 %v6671, 0.25
        %v6675 = vadd.f32 %v6674, %v5880
        %v6676 = vsel %vm1954, %v6675, -inf
        %6677 = vmax.xlane.f32.xlu0 %v6676
        %v6678 = vpop.xlane.xlu0 %6677
        %v6679 = vsub.f32 %v6675, %v6678
        %v6680 = vmul.f32 %v6679, 1.442695
        %v6681 = vpow.pop %v6680
        %v6682 = vsel %vm1954, %v6681, 0.0
        %6683 = vadd.xlane.f32.xlu0 %v6682
        %v6684 = vpop.xlane.xlu0 %6683
        %v6685 = vrcp.pop %v6684
        %v6686 = vmul.f32 %v6681, %v6685
        %v6687 = vmul.f32 %v1594, %v1847
        %v6689 = vsel %vm1954, %v6686, 0
        %6691 = vmatprep.subr.mxu0 0.0
        %6692 = vmatpush1.msra.mxu0 %v6687
        %6693 = vmatprep.subr.mxu0 0.0
        %6694 = vmatpush1.msra.mxu0 0.0
        %6695 = vmatprep.subr.mxu0 0.0
        %6696 = vmatpush1.msra.mxu0 0.0
        %6697 = vmatprep.subr.mxu0 0.0
        %6698 = vmatpush1.msra.mxu0 0.0
        %6699 = vmatprep.subr.mxu0 0.0
        %6700 = vmatpush1.msra.mxu0 0.0
        %6701 = vmatprep.subr.mxu0 0.0
        %6702 = vmatpush1.msra.mxu0 0.0
        %6703 = vmatprep.subr.mxu0 0.0
        %6704 = vmatpush1.msra.mxu0 0.0
        %6705 = vmatprep.subr.mxu0 0.0
        %6706 = vmatpush1.msra.mxu0 0.0
        %6707 = vmatprep.subr.mxu0 0.0
        %6708 = vmatpush1.msra.mxu0 0.0
        %6709 = vmatprep.subr.mxu0 0.0
        %6710 = vmatpush1.msra.mxu0 0.0
        %6711 = vmatprep.subr.mxu0 0.0
        %6712 = vmatpush1.msra.mxu0 0.0
        %6713 = vmatprep.subr.mxu0 0.0
        %6714 = vmatpush1.msra.mxu0 0.0
        %6715 = vmatprep.subr.mxu0 0.0
        %6716 = vmatpush1.msra.mxu0 0.0
        %6717 = vmatprep.subr.mxu0 0.0
        %6718 = vmatpush1.msra.mxu0 0.0
        %6719 = vmatprep.subr.mxu0 0.0
        %6720 = vmatpush1.msra.mxu0 0.0
        %6721 = vmatprep.subr.mxu0 0.0
        %6722 = vmatpush1.msra.mxu0 0.0
        %6723 = vmatprep.subr.mxu0 0.0
        %6724 = vmatpush1.msra.mxu0 0.0
        %6725 = vmatprep.subr.mxu0 0.0
        %6726 = vmatpush1.msra.mxu0 0.0
        %6727 = vmatprep.subr.mxu0 0.0
        %6728 = vmatpush1.msra.mxu0 0.0
        %6729 = vmatprep.subr.mxu0 0.0
        %6730 = vmatpush1.msra.mxu0 0.0
        %6731 = vmatprep.subr.mxu0 0.0
        %6732 = vmatpush1.msra.mxu0 0.0
        %6733 = vmatprep.subr.mxu0 0.0
        %6734 = vmatpush1.msra.mxu0 0.0
        %6735 = vmatprep.subr.mxu0 0.0
        %6736 = vmatpush1.msra.mxu0 0.0
        %6737 = vmatprep.subr.mxu0 0.0
        %6738 = vmatpush1.msra.mxu0 0.0
        %6739 = vmatprep.subr.mxu0 0.0
        %6740 = vmatpush1.msra.mxu0 0.0
        %6741 = vmatprep.subr.mxu0 0.0
        %6742 = vmatpush1.msra.mxu0 0.0
        %6743 = vmatprep.subr.mxu0 0.0
        %6744 = vmatpush1.msra.mxu0 0.0
        %6745 = vmatprep.subr.mxu0 0.0
        %6746 = vmatpush1.msra.mxu0 0.0
        %6747 = vmatprep.subr.mxu0 0.0
        %6748 = vmatpush1.msra.mxu0 0.0
        %6749 = vmatprep.subr.mxu0 0.0
        %6750 = vmatpush1.msra.mxu0 0.0
        %6751 = vmatprep.subr.mxu0 0.0
        %6752 = vmatpush1.msra.mxu0 0.0
        %6753 = vmatprep.subr.mxu0 0.0
        %6754 = vmatpush1.msra.mxu0 0.0
        %6755 = vmatprep.mubr.f32.mxu0 0.0
        %6756 = vmatmul.mubr.f32.gmra.mrb[0].mxu0 %v6689
        %v6757 = vpop.f32.mrb[0].mxu0
        %v6758 = vadd.f32 0.0, %v6757
        %v6759 = vpop.f32.mrb[0].mxu0
        %6760 = vdwg.mxu0
        %v6761 = vadd.f32 %v6602, %v6758
        %v6762 = vmul.f32 %v1520, %v1852
        %6763 = vmatprep.subr.mxu0 0.0
        %6764 = vmatpush1.xpose.msra.mxu0 %v6762
        %6765 = vmatprep.subr.mxu0 0.0
        %6766 = vmatpush1.xpose.msra.mxu0 0.0
        %6767 = vmatprep.subr.mxu0 0.0
        %6768 = vmatpush1.xpose.msra.mxu0 0.0
        %6769 = vmatprep.subr.mxu0 0.0
        %6770 = vmatpush1.xpose.msra.mxu0 0.0
        %6771 = vmatprep.subr.mxu0 0.0
        %6772 = vmatpush1.xpose.msra.mxu0 0.0
        %6773 = vmatprep.subr.mxu0 0.0
        %6774 = vmatpush1.xpose.msra.mxu0 0.0
        %6775 = vmatprep.subr.mxu0 0.0
        %6776 = vmatpush1.xpose.msra.mxu0 0.0
        %6777 = vmatprep.subr.mxu0 0.0
        %6778 = vmatpush1.xpose.msra.mxu0 0.0
        %6779 = vmatprep.subr.mxu0 0.0
        %6780 = vmatpush1.xpose.msra.mxu0 0.0
        %6781 = vmatprep.subr.mxu0 0.0
        %6782 = vmatpush1.xpose.msra.mxu0 0.0
        %6783 = vmatprep.subr.mxu0 0.0
        %6784 = vmatpush1.xpose.msra.mxu0 0.0
        %6785 = vmatprep.subr.mxu0 0.0
        %6786 = vmatpush1.xpose.msra.mxu0 0.0
        %6787 = vmatprep.subr.mxu0 0.0
        %6788 = vmatpush1.xpose.msra.mxu0 0.0
        %6789 = vmatprep.subr.mxu0 0.0
        %6790 = vmatpush1.xpose.msra.mxu0 0.0
        %6791 = vmatprep.subr.mxu0 0.0
        %6792 = vmatpush1.xpose.msra.mxu0 0.0
        %6793 = vmatprep.subr.mxu0 0.0
        %6794 = vmatpush1.xpose.msra.mxu0 0.0
        %6795 = vmatprep.subr.mxu0 0.0
        %6796 = vmatpush1.xpose.msra.mxu0 0.0
        %6797 = vmatprep.subr.mxu0 0.0
        %6798 = vmatpush1.xpose.msra.mxu0 0.0
        %6799 = vmatprep.subr.mxu0 0.0
        %6800 = vmatpush1.xpose.msra.mxu0 0.0
        %6801 = vmatprep.subr.mxu0 0.0
        %6802 = vmatpush1.xpose.msra.mxu0 0.0
        %6803 = vmatprep.subr.mxu0 0.0
        %6804 = vmatpush1.xpose.msra.mxu0 0.0
        %6805 = vmatprep.subr.mxu0 0.0
        %6806 = vmatpush1.xpose.msra.mxu0 0.0
        %6807 = vmatprep.subr.mxu0 0.0
        %6808 = vmatpush1.xpose.msra.mxu0 0.0
        %6809 = vmatprep.subr.mxu0 0.0
        %6810 = vmatpush1.xpose.msra.mxu0 0.0
        %6811 = vmatprep.subr.mxu0 0.0
        %6812 = vmatpush1.xpose.msra.mxu0 0.0
        %6813 = vmatprep.subr.mxu0 0.0
        %6814 = vmatpush1.xpose.msra.mxu0 0.0
        %6815 = vmatprep.subr.mxu0 0.0
        %6816 = vmatpush1.xpose.msra.mxu0 0.0
        %6817 = vmatprep.subr.mxu0 0.0
        %6818 = vmatpush1.xpose.msra.mxu0 0.0
        %6819 = vmatprep.subr.mxu0 0.0
        %6820 = vmatpush1.xpose.msra.mxu0 0.0
        %6821 = vmatprep.subr.mxu0 0.0
        %6822 = vmatpush1.xpose.msra.mxu0 0.0
        %6823 = vmatprep.subr.mxu0 0.0
        %6824 = vmatpush1.xpose.msra.mxu0 0.0
        %6825 = vmatprep.subr.mxu0 0.0
        %6826 = vmatpush1.xpose.msra.mxu0 0.0
        %6827 = vmatprep.mubr.f32.mxu0 0.0
        %6828 = vmatmul.mubr.f32.gmra.mrb[0].mxu0 %v1737
        %v6829 = vpop.f32.mrb[0].mxu0
        %v6830 = vadd.f32 0.0, %v6829
        %v6831 = vpop.f32.mrb[0].mxu0
        %6832 = vdwg.mxu0
        %v6833 = vmul.f32 %v6830, 0.25
        %v6834 = vadd.f32 %v6833, %v5880
        %v6835 = vsel %vm1954, %v6834, -inf
        %6836 = vmax.xlane.f32.xlu0 %v6835
        %v6837 = vpop.xlane.xlu0 %6836
        %v6838 = vsub.f32 %v6834, %v6837
        %v6839 = vmul.f32 %v6838, 1.442695
        %v6840 = vpow.pop %v6839
        %v6841 = vsel %vm1954, %v6840, 0.0
        %6842 = vadd.xlane.f32.xlu0 %v6841
        %v6843 = vpop.xlane.xlu0 %6842
        %v6844 = vrcp.pop %v6843
        %v6845 = vmul.f32 %v6840, %v6844
        %v6846 = vmul.f32 %v1594, %v1852
        %v6848 = vsel %vm1954, %v6845, 0
        %6850 = vmatprep.subr.mxu0 0.0
        %6851 = vmatpush1.msra.mxu0 %v6846
        %6852 = vmatprep.subr.mxu0 0.0
        %6853 = vmatpush1.msra.mxu0 0.0
        %6854 = vmatprep.subr.mxu0 0.0
        %6855 = vmatpush1.msra.mxu0 0.0
        %6856 = vmatprep.subr.mxu0 0.0
        %6857 = vmatpush1.msra.mxu0 0.0
        %6858 = vmatprep.subr.mxu0 0.0
        %6859 = vmatpush1.msra.mxu0 0.0
        %6860 = vmatprep.subr.mxu0 0.0
        %6861 = vmatpush1.msra.mxu0 0.0
        %6862 = vmatprep.subr.mxu0 0.0
        %6863 = vmatpush1.msra.mxu0 0.0
        %6864 = vmatprep.subr.mxu0 0.0
        %6865 = vmatpush1.msra.mxu0 0.0
        %6866 = vmatprep.subr.mxu0 0.0
        %6867 = vmatpush1.msra.mxu0 0.0
        %6868 = vmatprep.subr.mxu0 0.0
        %6869 = vmatpush1.msra.mxu0 0.0
        %6870 = vmatprep.subr.mxu0 0.0
        %6871 = vmatpush1.msra.mxu0 0.0
        %6872 = vmatprep.subr.mxu0 0.0
        %6873 = vmatpush1.msra.mxu0 0.0
        %6874 = vmatprep.subr.mxu0 0.0
        %6875 = vmatpush1.msra.mxu0 0.0
        %6876 = vmatprep.subr.mxu0 0.0
        %6877 = vmatpush1.msra.mxu0 0.0
        %6878 = vmatprep.subr.mxu0 0.0
        %6879 = vmatpush1.msra.mxu0 0.0
        %6880 = vmatprep.subr.mxu0 0.0
        %6881 = vmatpush1.msra.mxu0 0.0
        %6882 = vmatprep.subr.mxu0 0.0
        %6883 = vmatpush1.msra.mxu0 0.0
        %6884 = vmatprep.subr.mxu0 0.0
        %6885 = vmatpush1.msra.mxu0 0.0
        %6886 = vmatprep.subr.mxu0 0.0
        %6887 = vmatpush1.msra.mxu0 0.0
        %6888 = vmatprep.subr.mxu0 0.0
        %6889 = vmatpush1.msra.mxu0 0.0
        %6890 = vmatprep.subr.mxu0 0.0
        %6891 = vmatpush1.msra.mxu0 0.0
        %6892 = vmatprep.subr.mxu0 0.0
        %6893 = vmatpush1.msra.mxu0 0.0
        %6894 = vmatprep.subr.mxu0 0.0
        %6895 = vmatpush1.msra.mxu0 0.0
        %6896 = vmatprep.subr.mxu0 0.0
        %6897 = vmatpush1.msra.mxu0 0.0
        %6898 = vmatprep.subr.mxu0 0.0
        %6899 = vmatpush1.msra.mxu0 0.0
        %6900 = vmatprep.subr.mxu0 0.0
        %6901 = vmatpush1.msra.mxu0 0.0
        %6902 = vmatprep.subr.mxu0 0.0
        %6903 = vmatpush1.msra.mxu0 0.0
        %6904 = vmatprep.subr.mxu0 0.0
        %6905 = vmatpush1.msra.mxu0 0.0
        %6906 = vmatprep.subr.mxu0 0.0
        %6907 = vmatpush1.msra.mxu0 0.0
        %6908 = vmatprep.subr.mxu0 0.0
        %6909 = vmatpush1.msra.mxu0 0.0
        %6910 = vmatprep.subr.mxu0 0.0
        %6911 = vmatpush1.msra.mxu0 0.0
        %6912 = vmatprep.subr.mxu0 0.0
        %6913 = vmatpush1.msra.mxu0 0.0
        %6914 = vmatprep.mubr.f32.mxu0 0.0
        %6915 = vmatmul.mubr.f32.gmra.mrb[0].mxu0 %v6848
        %v6916 = vpop.f32.mrb[0].mxu0
        %v6917 = vadd.f32 0.0, %v6916
        %v6918 = vpop.f32.mrb[0].mxu0
        %6919 = vdwg.mxu0
        %v6920 = vadd.f32 %v6761, %v6917
        %v6921 = vmul.f32 %v1520, %v1857
        %6922 = vmatprep.subr.mxu0 0.0
        %6923 = vmatpush1.xpose.msra.mxu0 %v6921
        %6924 = vmatprep.subr.mxu0 0.0
        %6925 = vmatpush1.xpose.msra.mxu0 0.0
        %6926 = vmatprep.subr.mxu0 0.0
        %6927 = vmatpush1.xpose.msra.mxu0 0.0
        %6928 = vmatprep.subr.mxu0 0.0
        %6929 = vmatpush1.xpose.msra.mxu0 0.0
        %6930 = vmatprep.subr.mxu0 0.0
        %6931 = vmatpush1.xpose.msra.mxu0 0.0
        %6932 = vmatprep.subr.mxu0 0.0
        %6933 = vmatpush1.xpose.msra.mxu0 0.0
        %6934 = vmatprep.subr.mxu0 0.0
        %6935 = vmatpush1.xpose.msra.mxu0 0.0
        %6936 = vmatprep.subr.mxu0 0.0
        %6937 = vmatpush1.xpose.msra.mxu0 0.0
        %6938 = vmatprep.subr.mxu0 0.0
        %6939 = vmatpush1.xpose.msra.mxu0 0.0
        %6940 = vmatprep.subr.mxu0 0.0
        %6941 = vmatpush1.xpose.msra.mxu0 0.0
        %6942 = vmatprep.subr.mxu0 0.0
        %6943 = vmatpush1.xpose.msra.mxu0 0.0
        %6944 = vmatprep.subr.mxu0 0.0
        %6945 = vmatpush1.xpose.msra.mxu0 0.0
        %6946 = vmatprep.subr.mxu0 0.0
        %6947 = vmatpush1.xpose.msra.mxu0 0.0
        %6948 = vmatprep.subr.mxu0 0.0
        %6949 = vmatpush1.xpose.msra.mxu0 0.0
        %6950 = vmatprep.subr.mxu0 0.0
        %6951 = vmatpush1.xpose.msra.mxu0 0.0
        %6952 = vmatprep.subr.mxu0 0.0
        %6953 = vmatpush1.xpose.msra.mxu0 0.0
        %6954 = vmatprep.subr.mxu0 0.0
        %6955 = vmatpush1.xpose.msra.mxu0 0.0
        %6956 = vmatprep.subr.mxu0 0.0
        %6957 = vmatpush1.xpose.msra.mxu0 0.0
        %6958 = vmatprep.subr.mxu0 0.0
        %6959 = vmatpush1.xpose.msra.mxu0 0.0
        %6960 = vmatprep.subr.mxu0 0.0
        %6961 = vmatpush1.xpose.msra.mxu0 0.0
        %6962 = vmatprep.subr.mxu0 0.0
        %6963 = vmatpush1.xpose.msra.mxu0 0.0
        %6964 = vmatprep.subr.mxu0 0.0
        %6965 = vmatpush1.xpose.msra.mxu0 0.0
        %6966 = vmatprep.subr.mxu0 0.0
        %6967 = vmatpush1.xpose.msra.mxu0 0.0
        %6968 = vmatprep.subr.mxu0 0.0
        %6969 = vmatpush1.xpose.msra.mxu0 0.0
        %6970 = vmatprep.subr.mxu0 0.0
        %6971 = vmatpush1.xpose.msra.mxu0 0.0
        %6972 = vmatprep.subr.mxu0 0.0
        %6973 = vmatpush1.xpose.msra.mxu0 0.0
        %6974 = vmatprep.subr.mxu0 0.0
        %6975 = vmatpush1.xpose.msra.mxu0 0.0
        %6976 = vmatprep.subr.mxu0 0.0
        %6977 = vmatpush1.xpose.msra.mxu0 0.0
        %6978 = vmatprep.subr.mxu0 0.0
        %6979 = vmatpush1.xpose.msra.mxu0 0.0
        %6980 = vmatprep.subr.mxu0 0.0
        %6981 = vmatpush1.xpose.msra.mxu0 0.0
        %6982 = vmatprep.subr.mxu0 0.0
        %6983 = vmatpush1.xpose.msra.mxu0 0.0
        %6984 = vmatprep.subr.mxu0 0.0
        %6985 = vmatpush1.xpose.msra.mxu0 0.0
        %6986 = vmatprep.mubr.f32.mxu0 0.0
        %6987 = vmatmul.mubr.f32.gmra.mrb[0].mxu0 %v1737
        %v6988 = vpop.f32.mrb[0].mxu0
        %v6989 = vadd.f32 0.0, %v6988
        %v6990 = vpop.f32.mrb[0].mxu0
        %6991 = vdwg.mxu0
        %v6992 = vmul.f32 %v6989, 0.25
        %v6993 = vadd.f32 %v6992, %v5880
        %v6994 = vsel %vm1954, %v6993, -inf
        %6995 = vmax.xlane.f32.xlu0 %v6994
        %v6996 = vpop.xlane.xlu0 %6995
        %v6997 = vsub.f32 %v6993, %v6996
        %v6998 = vmul.f32 %v6997, 1.442695
        %v6999 = vpow.pop %v6998
        %v7000 = vsel %vm1954, %v6999, 0.0
        %7001 = vadd.xlane.f32.xlu0 %v7000
        %v7002 = vpop.xlane.xlu0 %7001
        %v7003 = vrcp.pop %v7002
        %v7004 = vmul.f32 %v6999, %v7003
        %v7005 = vmul.f32 %v1594, %v1857
        %v7007 = vsel %vm1954, %v7004, 0
        %7009 = vmatprep.subr.mxu0 0.0
        %7010 = vmatpush1.msra.mxu0 %v7005
        %7011 = vmatprep.subr.mxu0 0.0
        %7012 = vmatpush1.msra.mxu0 0.0
        %7013 = vmatprep.subr.mxu0 0.0
        %7014 = vmatpush1.msra.mxu0 0.0
        %7015 = vmatprep.subr.mxu0 0.0
        %7016 = vmatpush1.msra.mxu0 0.0
        %7017 = vmatprep.subr.mxu0 0.0
        %7018 = vmatpush1.msra.mxu0 0.0
        %7019 = vmatprep.subr.mxu0 0.0
        %7020 = vmatpush1.msra.mxu0 0.0
        %7021 = vmatprep.subr.mxu0 0.0
        %7022 = vmatpush1.msra.mxu0 0.0
        %7023 = vmatprep.subr.mxu0 0.0
        %7024 = vmatpush1.msra.mxu0 0.0
        %7025 = vmatprep.subr.mxu0 0.0
        %7026 = vmatpush1.msra.mxu0 0.0
        %7027 = vmatprep.subr.mxu0 0.0
        %7028 = vmatpush1.msra.mxu0 0.0
        %7029 = vmatprep.subr.mxu0 0.0
        %7030 = vmatpush1.msra.mxu0 0.0
        %7031 = vmatprep.subr.mxu0 0.0
        %7032 = vmatpush1.msra.mxu0 0.0
        %7033 = vmatprep.subr.mxu0 0.0
        %7034 = vmatpush1.msra.mxu0 0.0
        %7035 = vmatprep.subr.mxu0 0.0
        %7036 = vmatpush1.msra.mxu0 0.0
        %7037 = vmatprep.subr.mxu0 0.0
        %7038 = vmatpush1.msra.mxu0 0.0
        %7039 = vmatprep.subr.mxu0 0.0
        %7040 = vmatpush1.msra.mxu0 0.0
        %7041 = vmatprep.subr.mxu0 0.0
        %7042 = vmatpush1.msra.mxu0 0.0
        %7043 = vmatprep.subr.mxu0 0.0
        %7044 = vmatpush1.msra.mxu0 0.0
        %7045 = vmatprep.subr.mxu0 0.0
        %7046 = vmatpush1.msra.mxu0 0.0
        %7047 = vmatprep.subr.mxu0 0.0
        %7048 = vmatpush1.msra.mxu0 0.0
        %7049 = vmatprep.subr.mxu0 0.0
        %7050 = vmatpush1.msra.mxu0 0.0
        %7051 = vmatprep.subr.mxu0 0.0
        %7052 = vmatpush1.msra.mxu0 0.0
        %7053 = vmatprep.subr.mxu0 0.0
        %7054 = vmatpush1.msra.mxu0 0.0
        %7055 = vmatprep.subr.mxu0 0.0
        %7056 = vmatpush1.msra.mxu0 0.0
        %7057 = vmatprep.subr.mxu0 0.0
        %7058 = vmatpush1.msra.mxu0 0.0
        %7059 = vmatprep.subr.mxu0 0.0
        %7060 = vmatpush1.msra.mxu0 0.0
        %7061 = vmatprep.subr.mxu0 0.0
        %7062 = vmatpush1.msra.mxu0 0.0
        %7063 = vmatprep.subr.mxu0 0.0
        %7064 = vmatpush1.msra.mxu0 0.0
        %7065 = vmatprep.subr.mxu0 0.0
        %7066 = vmatpush1.msra.mxu0 0.0
        %7067 = vmatprep.subr.mxu0 0.0
        %7068 = vmatpush1.msra.mxu0 0.0
        %7069 = vmatprep.subr.mxu0 0.0
        %7070 = vmatpush1.msra.mxu0 0.0
        %7071 = vmatprep.subr.mxu0 0.0
        %7072 = vmatpush1.msra.mxu0 0.0
        %7073 = vmatprep.mubr.f32.mxu0 0.0
        %7074 = vmatmul.mubr.f32.gmra.mrb[0].mxu0 %v7007
        %v7075 = vpop.f32.mrb[0].mxu0
        %v7076 = vadd.f32 0.0, %v7075
        %v7077 = vpop.f32.mrb[0].mxu0
        %7078 = vdwg.mxu0
        %v7079 = vadd.f32 %v6920, %v7076
        %v7081 = vlaneseq
        %v7082 = vshrl.u32 %v7081, 7
        %v7083 = vsub.s32 0, %v7082
        %v7084 = vrot.slane %v4527, %v7083
        %7086 = vmatprep.subr.mxu0 0.0
        %7087 = vmatpush1.msra.mxu0 %v4510
        %7088 = vmatprep.subr.mxu0 0.0
        %7089 = vmatpush1.msra.mxu0 %v4511
        %7090 = vmatprep.subr.mxu0 0.0
        %7091 = vmatpush1.msra.mxu0 %v4512
        %7092 = vmatprep.subr.mxu0 0.0
        %7093 = vmatpush1.msra.mxu0 %v4513
        %7094 = vmatprep.subr.mxu0 0.0
        %7095 = vmatpush1.msra.mxu0 %v4514
        %7096 = vmatprep.subr.mxu0 0.0
        %7097 = vmatpush1.msra.mxu0 %v4515
        %7098 = vmatprep.subr.mxu0 0.0
        %7099 = vmatpush1.msra.mxu0 %v4516
        %7100 = vmatprep.subr.mxu0 0.0
        %7101 = vmatpush1.msra.mxu0 %v4517
        %7102 = vmatprep.subr.mxu0 0.0
        %7103 = vmatpush1.msra.mxu0 %v4518
        %7104 = vmatprep.subr.mxu0 0.0
        %7105 = vmatpush1.msra.mxu0 %v4519
        %7106 = vmatprep.subr.mxu0 0.0
        %7107 = vmatpush1.msra.mxu0 %v4520
        %7108 = vmatprep.subr.mxu0 0.0
        %7109 = vmatpush1.msra.mxu0 %v4521
        %7110 = vmatprep.subr.mxu0 0.0
        %7111 = vmatpush1.msra.mxu0 %v4522
        %7112 = vmatprep.subr.mxu0 0.0
        %7113 = vmatpush1.msra.mxu0 %v4523
        %7114 = vmatprep.subr.mxu0 0.0
        %7115 = vmatpush1.msra.mxu0 %v4524
        %7116 = vmatprep.subr.mxu0 0.0
        %7117 = vmatpush1.msra.mxu0 %v4525
        %7118 = vmatprep.subr.mxu0 0.0
        %7119 = vmatpush1.msra.mxu0 0.0
        %7120 = vmatprep.subr.mxu0 0.0
        %7121 = vmatpush1.msra.mxu0 0.0
        %7122 = vmatprep.subr.mxu0 0.0
        %7123 = vmatpush1.msra.mxu0 0.0
        %7124 = vmatprep.subr.mxu0 0.0
        %7125 = vmatpush1.msra.mxu0 0.0
        %7126 = vmatprep.subr.mxu0 0.0
        %7127 = vmatpush1.msra.mxu0 0.0
        %7128 = vmatprep.subr.mxu0 0.0
        %7129 = vmatpush1.msra.mxu0 0.0
        %7130 = vmatprep.subr.mxu0 0.0
        %7131 = vmatpush1.msra.mxu0 0.0
        %7132 = vmatprep.subr.mxu0 0.0
        %7133 = vmatpush1.msra.mxu0 0.0
        %7134 = vmatprep.subr.mxu0 0.0
        %7135 = vmatpush1.msra.mxu0 0.0
        %7136 = vmatprep.subr.mxu0 0.0
        %7137 = vmatpush1.msra.mxu0 0.0
        %7138 = vmatprep.subr.mxu0 0.0
        %7139 = vmatpush1.msra.mxu0 0.0
        %7140 = vmatprep.subr.mxu0 0.0
        %7141 = vmatpush1.msra.mxu0 0.0
        %7142 = vmatprep.subr.mxu0 0.0
        %7143 = vmatpush1.msra.mxu0 0.0
        %7144 = vmatprep.subr.mxu0 0.0
        %7145 = vmatpush1.msra.mxu0 0.0
        %7146 = vmatprep.subr.mxu0 0.0
        %7147 = vmatpush1.msra.mxu0 0.0
        %7148 = vmatprep.subr.mxu0 0.0
        %7149 = vmatpush1.msra.mxu0 0.0
        %7150 = vmatprep.mubr.f32.mxu0 0.0
        %7151 = vmatmul.mubr.f32.gmra.mrb[0].mxu0 %v5803
        %v7152 = vpop.f32.mrb[0].mxu0
        %v7153 = vadd.f32 %v7084, %v7152
        %v7154 = vpop.f32.mrb[0].mxu0
        %7155 = vmatprep.mubr.f32.mxu0 0.0
        %7156 = vmatmul.mubr.f32.gmra.mrb[0].mxu0 %v7079
        %v7157 = vpop.f32.mrb[0].mxu0
        %v7158 = vadd.f32 %v7084, %v7157
        %v7159 = vpop.f32.mrb[0].mxu0
        %7160 = vdwg.mxu0
        %v7161 = vld [vmem:[%s902] sm:$0xff]
        %v7162 = vld [vmem:[%s902 + $0x8] sm:$0xff]
        %v7163 = vld [vmem:[%s902 + $0x10] sm:$0xff]
        %v7164 = vld [vmem:[%s902 + $0x18] sm:$0xff]
        %v7165 = vld [vmem:[%s902 + $0x20] sm:$0xff]
        %v7166 = vld [vmem:[%s902 + $0x28] sm:$0xff]
        %v7167 = vld [vmem:[%s902 + $0x30] sm:$0xff]
        %v7168 = vld [vmem:[%s902 + $0x38] sm:$0xff]
        %v7169 = vld [vmem:[%s902 + $0x40] sm:$0xff]
        %v7170 = vld [vmem:[%s902 + $0x48] sm:$0xff]
        %v7171 = vld [vmem:[%s902 + $0x50] sm:$0xff]
        %v7172 = vld [vmem:[%s902 + $0x58] sm:$0xff]
        %v7173 = vld [vmem:[%s902 + $0x60] sm:$0xff]
        %v7174 = vld [vmem:[%s902 + $0x68] sm:$0xff]
        %v7175 = vld [vmem:[%s902 + $0x70] sm:$0xff]
        %v7176 = vld [vmem:[%s902 + $0x78] sm:$0xff]
        %7177 = vmatprep.subr.mxu0 0.0
        %7178 = vmatpush1.msra.mxu0 %v7161
        %7179 = vmatprep.subr.mxu0 0.0
        %7180 = vmatpush1.msra.mxu0 %v7162
        %7181 = vmatprep.subr.mxu0 0.0
        %7182 = vmatpush1.msra.mxu0 %v7163
        %7183 = vmatprep.subr.mxu0 0.0
        %7184 = vmatpush1.msra.mxu0 %v7164
        %7185 = vmatprep.subr.mxu0 0.0
        %7186 = vmatpush1.msra.mxu0 %v7165
        %7187 = vmatprep.subr.mxu0 0.0
        %7188 = vmatpush1.msra.mxu0 %v7166
        %7189 = vmatprep.subr.mxu0 0.0
        %7190 = vmatpush1.msra.mxu0 %v7167
        %7191 = vmatprep.subr.mxu0 0.0
        %7192 = vmatpush1.msra.mxu0 %v7168
        %7193 = vmatprep.subr.mxu0 0.0
        %7194 = vmatpush1.msra.mxu0 %v7169
        %7195 = vmatprep.subr.mxu0 0.0
        %7196 = vmatpush1.msra.mxu0 %v7170
        %7197 = vmatprep.subr.mxu0 0.0
        %7198 = vmatpush1.msra.mxu0 %v7171
        %7199 = vmatprep.subr.mxu0 0.0
        %7200 = vmatpush1.msra.mxu0 %v7172
        %7201 = vmatprep.subr.mxu0 0.0
        %7202 = vmatpush1.msra.mxu0 %v7173
        %7203 = vmatprep.subr.mxu0 0.0
        %7204 = vmatpush1.msra.mxu0 %v7174
        %7205 = vmatprep.subr.mxu0 0.0
        %7206 = vmatpush1.msra.mxu0 %v7175
        %7207 = vmatprep.subr.mxu0 0.0
        %7208 = vmatpush1.msra.mxu0 %v7176
        %7209 = vmatprep.subr.mxu0 0.0
        %7210 = vmatpush1.msra.mxu0 0.0
        %7211 = vmatprep.subr.mxu0 0.0
        %7212 = vmatpush1.msra.mxu0 0.0
        %7213 = vmatprep.subr.mxu0 0.0
        %7214 = vmatpush1.msra.mxu0 0.0
        %7215 = vmatprep.subr.mxu0 0.0
        %7216 = vmatpush1.msra.mxu0 0.0
        %7217 = vmatprep.subr.mxu0 0.0
        %7218 = vmatpush1.msra.mxu0 0.0
        %7219 = vmatprep.subr.mxu0 0.0
        %7220 = vmatpush1.msra.mxu0 0.0
        %7221 = vmatprep.subr.mxu0 0.0
        %7222 = vmatpush1.msra.mxu0 0.0
        %7223 = vmatprep.subr.mxu0 0.0
        %7224 = vmatpush1.msra.mxu0 0.0
        %7225 = vmatprep.subr.mxu0 0.0
        %7226 = vmatpush1.msra.mxu0 0.0
        %7227 = vmatprep.subr.mxu0 0.0
        %7228 = vmatpush1.msra.mxu0 0.0
        %7229 = vmatprep.subr.mxu0 0.0
        %7230 = vmatpush1.msra.mxu0 0.0
        %7231 = vmatprep.subr.mxu0 0.0
        %7232 = vmatpush1.msra.mxu0 0.0
        %7233 = vmatprep.subr.mxu0 0.0
        %7234 = vmatpush1.msra.mxu0 0.0
        %7235 = vmatprep.subr.mxu0 0.0
        %7236 = vmatpush1.msra.mxu0 0.0
        %7237 = vmatprep.subr.mxu0 0.0
        %7238 = vmatpush1.msra.mxu0 0.0
        %7239 = vmatprep.subr.mxu0 0.0
        %7240 = vmatpush1.msra.mxu0 0.0
        %7241 = vmatprep.mubr.f32.mxu0 0.0
        %7242 = vmatmul.mubr.f32.gmra.mrb[0].mxu0 %v4501
        %v7243 = vpop.f32.mrb[0].mxu0
        %v7244 = vadd.f32 0.0, %v7243
        %v7245 = vpop.f32.mrb[0].mxu0
        %7246 = vmatprep.mubr.f32.mxu0 0.0
        %7247 = vmatmul.mubr.f32.gmra.mrb[0].mxu0 %v4506
        %v7248 = vpop.f32.mrb[0].mxu0
        %v7249 = vadd.f32 0.0, %v7248
        %v7250 = vpop.f32.mrb[0].mxu0
        %7251 = vdwg.mxu0
        %v7252 = vadd.f32 %v1372, %v7244
        %v7253 = vadd.f32 %v1373, %v7249
        %v7254 = vld [vmem:[%s1040] sm:$0x1]
        %v7256 = vlaneseq
        %v7257 = vshrl.u32 %v7256, 7
        %v7258 = vsub.s32 0, %v7257
        %v7259 = vrot.slane %v7254, %v7258
        %v7261 = vadd.f32 %v7252, %v7259
        %v7262 = vadd.f32 %v7253, %v7259
        %v7263 = vld [vmem:[%s1044] sm:$0x1]
        %v7264 = vld [vmem:[%s1048] sm:$0x1]
        %7265 = vadd.xlane.f32.xlu0 %v7261
        %v7266 = vpop.xlane.xlu0 %7265
        %7267 = vadd.xlane.f32.xlu0 %v7262
        %v7268 = vpop.xlane.xlu0 %7267
        %v7269 = vrcp.pop 128.0
        %v7270 = vmul.f32 %v7266, %v7269
        %v7271 = vmul.f32 %v7268, %v7269
        %v7272 = vsub.f32 %v7261, %v7270
        %v7273 = vsub.f32 %v7262, %v7271
        %v7274 = vmul.f32 %v7272, %v7272
        %v7275 = vmul.f32 %v7273, %v7273
        %7276 = vadd.xlane.f32.xlu0 %v7274
        %v7277 = vpop.xlane.xlu0 %7276
        %7278 = vadd.xlane.f32.xlu0 %v7275
        %v7279 = vpop.xlane.xlu0 %7278
        %v7280 = vmul.f32 %v7277, %v7269
        %v7281 = vmul.f32 %v7279, %v7269
        %v7282 = vadd.f32 %v7280, 1e-05
        %v7283 = vadd.f32 %v7281, 1e-05
        %v7284 = vrsqrt.pop %v7282
        %v7285 = vrsqrt.pop %v7283
        %v7286 = vmul.f32 %v7272, %v7284
        %v7287 = vmul.f32 %v7273, %v7285
        %v7289 = vlaneseq
        %v7290 = vshrl.u32 %v7289, 7
        %v7291 = vsub.s32 0, %v7290
        %v7292 = vrot.slane %v7263, %v7291
        %v7294 = vmul.f32 %v7286, %v7292
        %v7295 = vmul.f32 %v7287, %v7292
        %v7297 = vlaneseq
        %v7298 = vshrl.u32 %v7297, 7
        %v7299 = vsub.s32 0, %v7298
        %v7300 = vrot.slane %v7264, %v7299
        %v7302 = vadd.f32 %v7294, %v7300
        %v7303 = vadd.f32 %v7295, %v7300
        %v7304 = vld [vmem:[%s1053] sm:$0xff]
        %v7305 = vld [vmem:[%s1053 + $0x8] sm:$0xff]
        %v7306 = vld [vmem:[%s1053 + $0x10] sm:$0xff]
        %v7307 = vld [vmem:[%s1053 + $0x18] sm:$0xff]
        %v7308 = vld [vmem:[%s1053 + $0x20] sm:$0xff]
        %v7309 = vld [vmem:[%s1053 + $0x28] sm:$0xff]
        %v7310 = vld [vmem:[%s1053 + $0x30] sm:$0xff]
        %v7311 = vld [vmem:[%s1053 + $0x38] sm:$0xff]
        %v7312 = vld [vmem:[%s1053 + $0x40] sm:$0xff]
        %v7313 = vld [vmem:[%s1053 + $0x48] sm:$0xff]
        %v7314 = vld [vmem:[%s1053 + $0x50] sm:$0xff]
        %v7315 = vld [vmem:[%s1053 + $0x58] sm:$0xff]
        %v7316 = vld [vmem:[%s1053 + $0x60] sm:$0xff]
        %v7317 = vld [vmem:[%s1053 + $0x68] sm:$0xff]
        %v7318 = vld [vmem:[%s1053 + $0x70] sm:$0xff]
        %v7319 = vld [vmem:[%s1053 + $0x78] sm:$0xff]
        %v7320 = vld [vmem:[%s1053 + $0x80] sm:$0xff]
        %v7321 = vld [vmem:[%s1053 + $0x88] sm:$0xff]
        %v7322 = vld [vmem:[%s1053 + $0x90] sm:$0xff]
        %v7323 = vld [vmem:[%s1053 + $0x98] sm:$0xff]
        %v7324 = vld [vmem:[%s1053 + $0xa0] sm:$0xff]
        %v7325 = vld [vmem:[%s1053 + $0xa8] sm:$0xff]
        %v7326 = vld [vmem:[%s1053 + $0xb0] sm:$0xff]
        %v7327 = vld [vmem:[%s1053 + $0xb8] sm:$0xff]
        %v7328 = vld [vmem:[%s1053 + $0xc0] sm:$0xff]
        %v7329 = vld [vmem:[%s1053 + $0xc8] sm:$0xff]
        %v7330 = vld [vmem:[%s1053 + $0xd0] sm:$0xff]
        %v7331 = vld [vmem:[%s1053 + $0xd8] sm:$0xff]
        %v7332 = vld [vmem:[%s1053 + $0xe0] sm:$0xff]
        %v7333 = vld [vmem:[%s1053 + $0xe8] sm:$0xff]
        %v7334 = vld [vmem:[%s1053 + $0xf0] sm:$0xff]
        %v7335 = vld [vmem:[%s1053 + $0xf8] sm:$0xff]
        %v7336 = vld [vmem:[%s1057] sm:$0x3]
        %v7338 = vlaneseq
        %v7339 = vshrl.u32 %v7338, 7
        %v7340 = vsub.s32 0, %v7339
        %v7341 = vrot.slane %v7336, %v7340
        %v7342 = vlaneseq
        %v7343 = vshrl.u32 %v7342, 7
        %v7344 = vsub.s32 1, %v7343
        %v7345 = vrot.slane %v7336, %v7344
        %7348 = vmatprep.subr.mxu0 %v7305
        %7349 = vmatpush1.msra.mxu0 %v7304
        %7350 = vmatprep.subr.mxu0 %v7307
        %7351 = vmatpush1.msra.mxu0 %v7306
        %7352 = vmatprep.subr.mxu0 %v7309
        %7353 = vmatpush1.msra.mxu0 %v7308
        %7354 = vmatprep.subr.mxu0 %v7311
        %7355 = vmatpush1.msra.mxu0 %v7310
        %7356 = vmatprep.subr.mxu0 %v7313
        %7357 = vmatpush1.msra.mxu0 %v7312
        %7358 = vmatprep.subr.mxu0 %v7315
        %7359 = vmatpush1.msra.mxu0 %v7314
        %7360 = vmatprep.subr.mxu0 %v7317
        %7361 = vmatpush1.msra.mxu0 %v7316
        %7362 = vmatprep.subr.mxu0 %v7319
        %7363 = vmatpush1.msra.mxu0 %v7318
        %7364 = vmatprep.subr.mxu0 %v7321
        %7365 = vmatpush1.msra.mxu0 %v7320
        %7366 = vmatprep.subr.mxu0 %v7323
        %7367 = vmatpush1.msra.mxu0 %v7322
        %7368 = vmatprep.subr.mxu0 %v7325
        %7369 = vmatpush1.msra.mxu0 %v7324
        %7370 = vmatprep.subr.mxu0 %v7327
        %7371 = vmatpush1.msra.mxu0 %v7326
        %7372 = vmatprep.subr.mxu0 %v7329
        %7373 = vmatpush1.msra.mxu0 %v7328
        %7374 = vmatprep.subr.mxu0 %v7331
        %7375 = vmatpush1.msra.mxu0 %v7330
        %7376 = vmatprep.subr.mxu0 %v7333
        %7377 = vmatpush1.msra.mxu0 %v7332
        %7378 = vmatprep.subr.mxu0 %v7335
        %7379 = vmatpush1.msra.mxu0 %v7334
        %7380 = vmatprep.subr.mxu0 0.0
        %7381 = vmatpush1.msra.mxu0 0.0
        %7382 = vmatprep.subr.mxu0 0.0
        %7383 = vmatpush1.msra.mxu0 0.0
        %7384 = vmatprep.subr.mxu0 0.0
        %7385 = vmatpush1.msra.mxu0 0.0
        %7386 = vmatprep.subr.mxu0 0.0
        %7387 = vmatpush1.msra.mxu0 0.0
        %7388 = vmatprep.subr.mxu0 0.0
        %7389 = vmatpush1.msra.mxu0 0.0
        %7390 = vmatprep.subr.mxu0 0.0
        %7391 = vmatpush1.msra.mxu0 0.0
        %7392 = vmatprep.subr.mxu0 0.0
        %7393 = vmatpush1.msra.mxu0 0.0
        %7394 = vmatprep.subr.mxu0 0.0
        %7395 = vmatpush1.msra.mxu0 0.0
        %7396 = vmatprep.subr.mxu0 0.0
        %7397 = vmatpush1.msra.mxu0 0.0
        %7398 = vmatprep.subr.mxu0 0.0
        %7399 = vmatpush1.msra.mxu0 0.0
        %7400 = vmatprep.subr.mxu0 0.0
        %7401 = vmatpush1.msra.mxu0 0.0
        %7402 = vmatprep.subr.mxu0 0.0
        %7403 = vmatpush1.msra.mxu0 0.0
        %7404 = vmatprep.subr.mxu0 0.0
        %7405 = vmatpush1.msra.mxu0 0.0
        %7406 = vmatprep.subr.mxu0 0.0
        %7407 = vmatpush1.msra.mxu0 0.0
        %7408 = vmatprep.subr.mxu0 0.0
        %7409 = vmatpush1.msra.mxu0 0.0
        %7410 = vmatprep.subr.mxu0 0.0
        %7411 = vmatpush1.msra.mxu0 0.0
        %7412 = vmatprep.mubr.f32.mxu0 0.0
        %7413 = vmatmul.mubr.f32.gmra.mrb[0].mxu0 %v7302
        %v7414 = vpop.f32.mrb[0].mxu0
        %v7415 = vadd.f32 %v7341, %v7414
        %v7416 = vpop.f32.mrb[0].mxu0
        %v7417 = vadd.f32 %v7345, %v7416
        %7418 = vmatprep.mubr.f32.mxu0 0.0
        %7419 = vmatmul.mubr.f32.gmra.mrb[0].mxu0 %v7303
        %v7420 = vpop.f32.mrb[0].mxu0
        %v7421 = vadd.f32 %v7341, %v7420
        %v7422 = vpop.f32.mrb[0].mxu0
        %v7423 = vadd.f32 %v7345, %v7422
        %7424 = vdwg.mxu0
        %v7425 = vmul.f32 %v7415, 0.5
        %v7426 = vmul.f32 %v7417, 0.5
        %v7427 = vmul.f32 %v7421, 0.5
        %v7428 = vmul.f32 %v7423, 0.5
        %v7429 = vmul.f32 %v7415, 0.70710677
        %v7430 = vmul.f32 %v7417, 0.70710677
        %v7431 = vmul.f32 %v7421, 0.70710677
        %v7432 = vmul.f32 %v7423, 0.70710677
        %v7433 = verf.f32.pop %v7429
        %v7434 = verf.f32.pop %v7430
        %v7435 = verf.f32.pop %v7431
        %v7436 = verf.f32.pop %v7432
        %v7437 = vadd.f32 %v7433, 1.0
        %v7438 = vadd.f32 %v7434, 1.0
        %v7439 = vadd.f32 %v7435, 1.0
        %v7440 = vadd.f32 %v7436, 1.0
        %v7441 = vmul.f32 %v7425, %v7437
        %v7442 = vmul.f32 %v7426, %v7438
        %v7443 = vmul.f32 %v7427, %v7439
        %v7444 = vmul.f32 %v7428, %v7440
        %v7445 = vld [vmem:[%s911] sm:$0xff]
        %v7446 = vld [vmem:[%s911 + $0x8] sm:$0xff]
        %v7447 = vld [vmem:[%s911 + $0x10] sm:$0xff]
        %v7448 = vld [vmem:[%s911 + $0x18] sm:$0xff]
        %v7449 = vld [vmem:[%s911 + $0x20] sm:$0xff]
        %v7450 = vld [vmem:[%s911 + $0x28] sm:$0xff]
        %v7451 = vld [vmem:[%s911 + $0x30] sm:$0xff]
        %v7452 = vld [vmem:[%s911 + $0x38] sm:$0xff]
        %v7453 = vld [vmem:[%s911 + $0x40] sm:$0xff]
        %v7454 = vld [vmem:[%s911 + $0x48] sm:$0xff]
        %v7455 = vld [vmem:[%s911 + $0x50] sm:$0xff]
        %v7456 = vld [vmem:[%s911 + $0x58] sm:$0xff]
        %v7457 = vld [vmem:[%s911 + $0x60] sm:$0xff]
        %v7458 = vld [vmem:[%s911 + $0x68] sm:$0xff]
        %v7459 = vld [vmem:[%s911 + $0x70] sm:$0xff]
        %v7460 = vld [vmem:[%s911 + $0x78] sm:$0xff]
        %v7461 = vld [vmem:[%s911 + $0x80] sm:$0xff]
        %v7462 = vld [vmem:[%s911 + $0x88] sm:$0xff]
        %v7463 = vld [vmem:[%s911 + $0x90] sm:$0xff]
        %v7464 = vld [vmem:[%s911 + $0x98] sm:$0xff]
        %v7465 = vld [vmem:[%s911 + $0xa0] sm:$0xff]
        %v7466 = vld [vmem:[%s911 + $0xa8] sm:$0xff]
        %v7467 = vld [vmem:[%s911 + $0xb0] sm:$0xff]
        %v7468 = vld [vmem:[%s911 + $0xb8] sm:$0xff]
        %v7469 = vld [vmem:[%s911 + $0xc0] sm:$0xff]
        %v7470 = vld [vmem:[%s911 + $0xc8] sm:$0xff]
        %v7471 = vld [vmem:[%s911 + $0xd0] sm:$0xff]
        %v7472 = vld [vmem:[%s911 + $0xd8] sm:$0xff]
        %v7473 = vld [vmem:[%s911 + $0xe0] sm:$0xff]
        %v7474 = vld [vmem:[%s911 + $0xe8] sm:$0xff]
        %v7475 = vld [vmem:[%s911 + $0xf0] sm:$0xff]
        %v7476 = vld [vmem:[%s911 + $0xf8] sm:$0xff]
        %7477 = vmatprep.subr.mxu0 0.0
        %7478 = vmatpush1.msra.mxu0 %v7445
        %7479 = vmatprep.subr.mxu0 0.0
        %7480 = vmatpush1.msra.mxu0 %v7446
        %7481 = vmatprep.subr.mxu0 0.0
        %7482 = vmatpush1.msra.mxu0 %v7447
        %7483 = vmatprep.subr.mxu0 0.0
        %7484 = vmatpush1.msra.mxu0 %v7448
        %7485 = vmatprep.subr.mxu0 0.0
        %7486 = vmatpush1.msra.mxu0 %v7449
        %7487 = vmatprep.subr.mxu0 0.0
        %7488 = vmatpush1.msra.mxu0 %v7450
        %7489 = vmatprep.subr.mxu0 0.0
        %7490 = vmatpush1.msra.mxu0 %v7451
        %7491 = vmatprep.subr.mxu0 0.0
        %7492 = vmatpush1.msra.mxu0 %v7452
        %7493 = vmatprep.subr.mxu0 0.0
        %7494 = vmatpush1.msra.mxu0 %v7453
        %7495 = vmatprep.subr.mxu0 0.0
        %7496 = vmatpush1.msra.mxu0 %v7454
        %7497 = vmatprep.subr.mxu0 0.0
        %7498 = vmatpush1.msra.mxu0 %v7455
        %7499 = vmatprep.subr.mxu0 0.0
        %7500 = vmatpush1.msra.mxu0 %v7456
        %7501 = vmatprep.subr.mxu0 0.0
        %7502 = vmatpush1.msra.mxu0 %v7457
        %7503 = vmatprep.subr.mxu0 0.0
        %7504 = vmatpush1.msra.mxu0 %v7458
        %7505 = vmatprep.subr.mxu0 0.0
        %7506 = vmatpush1.msra.mxu0 %v7459
        %7507 = vmatprep.subr.mxu0 0.0
        %7508 = vmatpush1.msra.mxu0 %v7460
        %7509 = vmatprep.subr.mxu0 0.0
        %7510 = vmatpush1.msra.mxu0 %v7461
        %7511 = vmatprep.subr.mxu0 0.0
        %7512 = vmatpush1.msra.mxu0 %v7462
        %7513 = vmatprep.subr.mxu0 0.0
        %7514 = vmatpush1.msra.mxu0 %v7463
        %7515 = vmatprep.subr.mxu0 0.0
        %7516 = vmatpush1.msra.mxu0 %v7464
        %7517 = vmatprep.subr.mxu0 0.0
        %7518 = vmatpush1.msra.mxu0 %v7465
        %7519 = vmatprep.subr.mxu0 0.0
        %7520 = vmatpush1.msra.mxu0 %v7466
        %7521 = vmatprep.subr.mxu0 0.0
        %7522 = vmatpush1.msra.mxu0 %v7467
        %7523 = vmatprep.subr.mxu0 0.0
        %7524 = vmatpush1.msra.mxu0 %v7468
        %7525 = vmatprep.subr.mxu0 0.0
        %7526 = vmatpush1.msra.mxu0 %v7469
        %7527 = vmatprep.subr.mxu0 0.0
        %7528 = vmatpush1.msra.mxu0 %v7470
        %7529 = vmatprep.subr.mxu0 0.0
        %7530 = vmatpush1.msra.mxu0 %v7471
        %7531 = vmatprep.subr.mxu0 0.0
        %7532 = vmatpush1.msra.mxu0 %v7472
        %7533 = vmatprep.subr.mxu0 0.0
        %7534 = vmatpush1.msra.mxu0 %v7473
        %7535 = vmatprep.subr.mxu0 0.0
        %7536 = vmatpush1.msra.mxu0 %v7474
        %7537 = vmatprep.subr.mxu0 0.0
        %7538 = vmatpush1.msra.mxu0 %v7475
        %7539 = vmatprep.subr.mxu0 0.0
        %7540 = vmatpush1.msra.mxu0 %v7476
        %7541 = vmatprep.mubr.f32.mxu0 %v7442
        %7542 = vmatmul.mubr.f32.gmra.mrb[0].mxu0 %v7441
        %v7543 = vpop.f32.mrb[0].mxu0
        %v7544 = vadd.f32 0.0, %v7543
        %v7545 = vpop.f32.mrb[0].mxu0
        %7546 = vmatprep.mubr.f32.mxu0 %v7444
        %7547 = vmatmul.mubr.f32.gmra.mrb[0].mxu0 %v7443
        %v7548 = vpop.f32.mrb[0].mxu0
        %v7549 = vadd.f32 0.0, %v7548
        %v7550 = vpop.f32.mrb[0].mxu0
        %7551 = vdwg.mxu0
        %v7552 = vadd.f32 %v7302, %v7544
        %v7553 = vadd.f32 %v7303, %v7549
        %v7554 = vld [vmem:[%s1061] sm:$0x1]
        %v7556 = vlaneseq
        %v7557 = vshrl.u32 %v7556, 7
        %v7558 = vsub.s32 0, %v7557
        %v7559 = vrot.slane %v7554, %v7558
        %v7561 = vadd.f32 %v7552, %v7559
        %v7562 = vadd.f32 %v7553, %v7559
        %v7563 = vld [vmem:[%s1065] sm:$0x1]
        %v7564 = vld [vmem:[%s1069] sm:$0x1]
        %7565 = vadd.xlane.f32.xlu0 %v7561
        %v7566 = vpop.xlane.xlu0 %7565
        %7567 = vadd.xlane.f32.xlu0 %v7562
        %v7568 = vpop.xlane.xlu0 %7567
        %v7569 = vmul.f32 %v7566, %v7269
        %v7570 = vmul.f32 %v7568, %v7269
        %v7571 = vsub.f32 %v7561, %v7569
        %v7572 = vsub.f32 %v7562, %v7570
        %v7573 = vmul.f32 %v7571, %v7571
        %v7574 = vmul.f32 %v7572, %v7572
        %7575 = vadd.xlane.f32.xlu0 %v7573
        %v7576 = vpop.xlane.xlu0 %7575
        %7577 = vadd.xlane.f32.xlu0 %v7574
        %v7578 = vpop.xlane.xlu0 %7577
        %v7579 = vmul.f32 %v7576, %v7269
        %v7580 = vmul.f32 %v7578, %v7269
        %v7581 = vadd.f32 %v7579, 1e-05
        %v7582 = vadd.f32 %v7580, 1e-05
        %v7583 = vrsqrt.pop %v7581
        %v7584 = vrsqrt.pop %v7582
        %v7585 = vmul.f32 %v7571, %v7583
        %v7586 = vmul.f32 %v7572, %v7584
        %v7588 = vlaneseq
        %v7589 = vshrl.u32 %v7588, 7
        %v7590 = vsub.s32 0, %v7589
        %v7591 = vrot.slane %v7563, %v7590
        %v7593 = vmul.f32 %v7585, %v7591
        %v7594 = vmul.f32 %v7586, %v7591
        %v7596 = vlaneseq
        %v7597 = vshrl.u32 %v7596, 7
        %v7598 = vsub.s32 0, %v7597
        %v7599 = vrot.slane %v7564, %v7598
        %v7601 = vadd.f32 %v7593, %v7599
        %v7602 = vadd.f32 %v7594, %v7599
        %s7603 = scalar_lea.vmem %s902, 128 [#allocation9]
        %v7604 = vld [vmem:[%s7603] sm:$0xff]
        %v7605 = vld [vmem:[%s7603 + $0x8] sm:$0xff]
        %v7606 = vld [vmem:[%s7603 + $0x10] sm:$0xff]
        %v7607 = vld [vmem:[%s7603 + $0x18] sm:$0xff]
        %v7608 = vld [vmem:[%s7603 + $0x20] sm:$0xff]
        %v7609 = vld [vmem:[%s7603 + $0x28] sm:$0xff]
        %v7610 = vld [vmem:[%s7603 + $0x30] sm:$0xff]
        %v7611 = vld [vmem:[%s7603 + $0x38] sm:$0xff]
        %v7612 = vld [vmem:[%s7603 + $0x40] sm:$0xff]
        %v7613 = vld [vmem:[%s7603 + $0x48] sm:$0xff]
        %v7614 = vld [vmem:[%s7603 + $0x50] sm:$0xff]
        %v7615 = vld [vmem:[%s7603 + $0x58] sm:$0xff]
        %v7616 = vld [vmem:[%s7603 + $0x60] sm:$0xff]
        %v7617 = vld [vmem:[%s7603 + $0x68] sm:$0xff]
        %v7618 = vld [vmem:[%s7603 + $0x70] sm:$0xff]
        %v7619 = vld [vmem:[%s7603 + $0x78] sm:$0xff]
        %7620 = vmatprep.subr.mxu0 0.0
        %7621 = vmatpush1.msra.mxu0 %v7604
        %7622 = vmatprep.subr.mxu0 0.0
        %7623 = vmatpush1.msra.mxu0 %v7605
        %7624 = vmatprep.subr.mxu0 0.0
        %7625 = vmatpush1.msra.mxu0 %v7606
        %7626 = vmatprep.subr.mxu0 0.0
        %7627 = vmatpush1.msra.mxu0 %v7607
        %7628 = vmatprep.subr.mxu0 0.0
        %7629 = vmatpush1.msra.mxu0 %v7608
        %7630 = vmatprep.subr.mxu0 0.0
        %7631 = vmatpush1.msra.mxu0 %v7609
        %7632 = vmatprep.subr.mxu0 0.0
        %7633 = vmatpush1.msra.mxu0 %v7610
        %7634 = vmatprep.subr.mxu0 0.0
        %7635 = vmatpush1.msra.mxu0 %v7611
        %7636 = vmatprep.subr.mxu0 0.0
        %7637 = vmatpush1.msra.mxu0 %v7612
        %7638 = vmatprep.subr.mxu0 0.0
        %7639 = vmatpush1.msra.mxu0 %v7613
        %7640 = vmatprep.subr.mxu0 0.0
        %7641 = vmatpush1.msra.mxu0 %v7614
        %7642 = vmatprep.subr.mxu0 0.0
        %7643 = vmatpush1.msra.mxu0 %v7615
        %7644 = vmatprep.subr.mxu0 0.0
        %7645 = vmatpush1.msra.mxu0 %v7616
        %7646 = vmatprep.subr.mxu0 0.0
        %7647 = vmatpush1.msra.mxu0 %v7617
        %7648 = vmatprep.subr.mxu0 0.0
        %7649 = vmatpush1.msra.mxu0 %v7618
        %7650 = vmatprep.subr.mxu0 0.0
        %7651 = vmatpush1.msra.mxu0 %v7619
        %7652 = vmatprep.subr.mxu0 0.0
        %7653 = vmatpush1.msra.mxu0 0.0
        %7654 = vmatprep.subr.mxu0 0.0
        %7655 = vmatpush1.msra.mxu0 0.0
        %7656 = vmatprep.subr.mxu0 0.0
        %7657 = vmatpush1.msra.mxu0 0.0
        %7658 = vmatprep.subr.mxu0 0.0
        %7659 = vmatpush1.msra.mxu0 0.0
        %7660 = vmatprep.subr.mxu0 0.0
        %7661 = vmatpush1.msra.mxu0 0.0
        %7662 = vmatprep.subr.mxu0 0.0
        %7663 = vmatpush1.msra.mxu0 0.0
        %7664 = vmatprep.subr.mxu0 0.0
        %7665 = vmatpush1.msra.mxu0 0.0
        %7666 = vmatprep.subr.mxu0 0.0
        %7667 = vmatpush1.msra.mxu0 0.0
        %7668 = vmatprep.subr.mxu0 0.0
        %7669 = vmatpush1.msra.mxu0 0.0
        %7670 = vmatprep.subr.mxu0 0.0
        %7671 = vmatpush1.msra.mxu0 0.0
        %7672 = vmatprep.subr.mxu0 0.0
        %7673 = vmatpush1.msra.mxu0 0.0
        %7674 = vmatprep.subr.mxu0 0.0
        %7675 = vmatpush1.msra.mxu0 0.0
        %7676 = vmatprep.subr.mxu0 0.0
        %7677 = vmatpush1.msra.mxu0 0.0
        %7678 = vmatprep.subr.mxu0 0.0
        %7679 = vmatpush1.msra.mxu0 0.0
        %7680 = vmatprep.subr.mxu0 0.0
        %7681 = vmatpush1.msra.mxu0 0.0
        %7682 = vmatprep.subr.mxu0 0.0
        %7683 = vmatpush1.msra.mxu0 0.0
        %7684 = vmatprep.mubr.f32.mxu0 0.0
        %7685 = vmatmul.mubr.f32.gmra.mrb[0].mxu0 %v7153
        %v7686 = vpop.f32.mrb[0].mxu0
        %v7687 = vadd.f32 0.0, %v7686
        %v7688 = vpop.f32.mrb[0].mxu0
        %7689 = vmatprep.mubr.f32.mxu0 0.0
        %7690 = vmatmul.mubr.f32.gmra.mrb[0].mxu0 %v7158
        %v7691 = vpop.f32.mrb[0].mxu0
        %v7692 = vadd.f32 0.0, %v7691
        %v7693 = vpop.f32.mrb[0].mxu0
        %7694 = vdwg.mxu0
        %v7695 = vadd.f32 %v1374, %v7687
        %v7696 = vadd.f32 %v1375, %v7692
        %s7697 = scalar_lea.vmem %s1040, 1
        %v7698 = vld [vmem:[%s7697] sm:$0x1]
        %v7700 = vlaneseq
        %v7701 = vshrl.u32 %v7700, 7
        %v7702 = vsub.s32 0, %v7701
        %v7703 = vrot.slane %v7698, %v7702
        %v7705 = vadd.f32 %v7695, %v7703
        %v7706 = vadd.f32 %v7696, %v7703
        %s7707 = scalar_lea.vmem %s1044, 1
        %v7708 = vld [vmem:[%s7707] sm:$0x1]
        %s7709 = scalar_lea.vmem %s1048, 1
        %v7710 = vld [vmem:[%s7709] sm:$0x1]
        %7711 = vadd.xlane.f32.xlu0 %v7705
        %v7712 = vpop.xlane.xlu0 %7711
        %7713 = vadd.xlane.f32.xlu0 %v7706
        %v7714 = vpop.xlane.xlu0 %7713
        %v7715 = vmul.f32 %v7712, %v7269
        %v7716 = vmul.f32 %v7714, %v7269
        %v7717 = vsub.f32 %v7705, %v7715
        %v7718 = vsub.f32 %v7706, %v7716
        %v7719 = vmul.f32 %v7717, %v7717
        %v7720 = vmul.f32 %v7718, %v7718
        %7721 = vadd.xlane.f32.xlu0 %v7719
        %v7722 = vpop.xlane.xlu0 %7721
        %7723 = vadd.xlane.f32.xlu0 %v7720
        %v7724 = vpop.xlane.xlu0 %7723
        %v7725 = vmul.f32 %v7722, %v7269
        %v7726 = vmul.f32 %v7724, %v7269
        %v7727 = vadd.f32 %v7725, 1e-05
        %v7728 = vadd.f32 %v7726, 1e-05
        %v7729 = vrsqrt.pop %v7727
        %v7730 = vrsqrt.pop %v7728
        %v7731 = vmul.f32 %v7717, %v7729
        %v7732 = vmul.f32 %v7718, %v7730
        %v7734 = vlaneseq
        %v7735 = vshrl.u32 %v7734, 7
        %v7736 = vsub.s32 0, %v7735
        %v7737 = vrot.slane %v7708, %v7736
        %v7739 = vmul.f32 %v7731, %v7737
        %v7740 = vmul.f32 %v7732, %v7737
        %v7742 = vlaneseq
        %v7743 = vshrl.u32 %v7742, 7
        %v7744 = vsub.s32 0, %v7743
        %v7745 = vrot.slane %v7710, %v7744
        %v7747 = vadd.f32 %v7739, %v7745
        %v7748 = vadd.f32 %v7740, %v7745
        %s7749 = scalar_lea.vmem %s1053, 256
        %v7750 = vld [vmem:[%s7749] sm:$0xff]
        %v7751 = vld [vmem:[%s7749 + $0x8] sm:$0xff]
        %v7752 = vld [vmem:[%s7749 + $0x10] sm:$0xff]
        %v7753 = vld [vmem:[%s7749 + $0x18] sm:$0xff]
        %v7754 = vld [vmem:[%s7749 + $0x20] sm:$0xff]
        %v7755 = vld [vmem:[%s7749 + $0x28] sm:$0xff]
        %v7756 = vld [vmem:[%s7749 + $0x30] sm:$0xff]
        %v7757 = vld [vmem:[%s7749 + $0x38] sm:$0xff]
        %v7758 = vld [vmem:[%s7749 + $0x40] sm:$0xff]
        %v7759 = vld [vmem:[%s7749 + $0x48] sm:$0xff]
        %v7760 = vld [vmem:[%s7749 + $0x50] sm:$0xff]
        %v7761 = vld [vmem:[%s7749 + $0x58] sm:$0xff]
        %v7762 = vld [vmem:[%s7749 + $0x60] sm:$0xff]
        %v7763 = vld [vmem:[%s7749 + $0x68] sm:$0xff]
        %v7764 = vld [vmem:[%s7749 + $0x70] sm:$0xff]
        %v7765 = vld [vmem:[%s7749 + $0x78] sm:$0xff]
        %v7766 = vld [vmem:[%s7749 + $0x80] sm:$0xff]
        %v7767 = vld [vmem:[%s7749 + $0x88] sm:$0xff]
        %v7768 = vld [vmem:[%s7749 + $0x90] sm:$0xff]
        %v7769 = vld [vmem:[%s7749 + $0x98] sm:$0xff]
        %v7770 = vld [vmem:[%s7749 + $0xa0] sm:$0xff]
        %v7771 = vld [vmem:[%s7749 + $0xa8] sm:$0xff]
        %v7772 = vld [vmem:[%s7749 + $0xb0] sm:$0xff]
        %v7773 = vld [vmem:[%s7749 + $0xb8] sm:$0xff]
        %v7774 = vld [vmem:[%s7749 + $0xc0] sm:$0xff]
        %v7775 = vld [vmem:[%s7749 + $0xc8] sm:$0xff]
        %v7776 = vld [vmem:[%s7749 + $0xd0] sm:$0xff]
        %v7777 = vld [vmem:[%s7749 + $0xd8] sm:$0xff]
        %v7778 = vld [vmem:[%s7749 + $0xe0] sm:$0xff]
        %v7779 = vld [vmem:[%s7749 + $0xe8] sm:$0xff]
        %v7780 = vld [vmem:[%s7749 + $0xf0] sm:$0xff]
        %v7781 = vld [vmem:[%s7749 + $0xf8] sm:$0xff]
        %s7782 = scalar_lea.vmem %s1057, 2
        %v7783 = vld [vmem:[%s7782] sm:$0x3]
        %v7785 = vlaneseq
        %v7786 = vshrl.u32 %v7785, 7
        %v7787 = vsub.s32 0, %v7786
        %v7788 = vrot.slane %v7783, %v7787
        %v7789 = vlaneseq
        %v7790 = vshrl.u32 %v7789, 7
        %v7791 = vsub.s32 1, %v7790
        %v7792 = vrot.slane %v7783, %v7791
        %7795 = vmatprep.subr.mxu0 %v7751
        %7796 = vmatpush1.msra.mxu0 %v7750
        %7797 = vmatprep.subr.mxu0 %v7753
        %7798 = vmatpush1.msra.mxu0 %v7752
        %7799 = vmatprep.subr.mxu0 %v7755
        %7800 = vmatpush1.msra.mxu0 %v7754
        %7801 = vmatprep.subr.mxu0 %v7757
        %7802 = vmatpush1.msra.mxu0 %v7756
        %7803 = vmatprep.subr.mxu0 %v7759
        %7804 = vmatpush1.msra.mxu0 %v7758
        %7805 = vmatprep.subr.mxu0 %v7761
        %7806 = vmatpush1.msra.mxu0 %v7760
        %7807 = vmatprep.subr.mxu0 %v7763
        %7808 = vmatpush1.msra.mxu0 %v7762
        %7809 = vmatprep.subr.mxu0 %v7765
        %7810 = vmatpush1.msra.mxu0 %v7764
        %7811 = vmatprep.subr.mxu0 %v7767
        %7812 = vmatpush1.msra.mxu0 %v7766
        %7813 = vmatprep.subr.mxu0 %v7769
        %7814 = vmatpush1.msra.mxu0 %v7768
        %7815 = vmatprep.subr.mxu0 %v7771
        %7816 = vmatpush1.msra.mxu0 %v7770
        %7817 = vmatprep.subr.mxu0 %v7773
        %7818 = vmatpush1.msra.mxu0 %v7772
        %7819 = vmatprep.subr.mxu0 %v7775
        %7820 = vmatpush1.msra.mxu0 %v7774
        %7821 = vmatprep.subr.mxu0 %v7777
        %7822 = vmatpush1.msra.mxu0 %v7776
        %7823 = vmatprep.subr.mxu0 %v7779
        %7824 = vmatpush1.msra.mxu0 %v7778
        %7825 = vmatprep.subr.mxu0 %v7781
        %7826 = vmatpush1.msra.mxu0 %v7780
        %7827 = vmatprep.subr.mxu0 0.0
        %7828 = vmatpush1.msra.mxu0 0.0
        %7829 = vmatprep.subr.mxu0 0.0
        %7830 = vmatpush1.msra.mxu0 0.0
        %7831 = vmatprep.subr.mxu0 0.0
        %7832 = vmatpush1.msra.mxu0 0.0
        %7833 = vmatprep.subr.mxu0 0.0
        %7834 = vmatpush1.msra.mxu0 0.0
        %7835 = vmatprep.subr.mxu0 0.0
        %7836 = vmatpush1.msra.mxu0 0.0
        %7837 = vmatprep.subr.mxu0 0.0
        %7838 = vmatpush1.msra.mxu0 0.0
        %7839 = vmatprep.subr.mxu0 0.0
        %7840 = vmatpush1.msra.mxu0 0.0
        %7841 = vmatprep.subr.mxu0 0.0
        %7842 = vmatpush1.msra.mxu0 0.0
        %7843 = vmatprep.subr.mxu0 0.0
        %7844 = vmatpush1.msra.mxu0 0.0
        %7845 = vmatprep.subr.mxu0 0.0
        %7846 = vmatpush1.msra.mxu0 0.0
        %7847 = vmatprep.subr.mxu0 0.0
        %7848 = vmatpush1.msra.mxu0 0.0
        %7849 = vmatprep.subr.mxu0 0.0
        %7850 = vmatpush1.msra.mxu0 0.0
        %7851 = vmatprep.subr.mxu0 0.0
        %7852 = vmatpush1.msra.mxu0 0.0
        %7853 = vmatprep.subr.mxu0 0.0
        %7854 = vmatpush1.msra.mxu0 0.0
        %7855 = vmatprep.subr.mxu0 0.0
        %7856 = vmatpush1.msra.mxu0 0.0
        %7857 = vmatprep.subr.mxu0 0.0
        %7858 = vmatpush1.msra.mxu0 0.0
        %7859 = vmatprep.mubr.f32.mxu0 0.0
        %7860 = vmatmul.mubr.f32.gmra.mrb[0].mxu0 %v7747
        %v7861 = vpop.f32.mrb[0].mxu0
        %v7862 = vadd.f32 %v7788, %v7861
        %v7863 = vpop.f32.mrb[0].mxu0
        %v7864 = vadd.f32 %v7792, %v7863
        %7865 = vmatprep.mubr.f32.mxu0 0.0
        %7866 = vmatmul.mubr.f32.gmra.mrb[0].mxu0 %v7748
        %v7867 = vpop.f32.mrb[0].mxu0
        %v7868 = vadd.f32 %v7788, %v7867
        %v7869 = vpop.f32.mrb[0].mxu0
        %v7870 = vadd.f32 %v7792, %v7869
        %7871 = vdwg.mxu0
        %v7872 = vmul.f32 %v7862, 0.5
        %v7873 = vmul.f32 %v7864, 0.5
        %v7874 = vmul.f32 %v7868, 0.5
        %v7875 = vmul.f32 %v7870, 0.5
        %v7876 = vmul.f32 %v7862, 0.70710677
        %v7877 = vmul.f32 %v7864, 0.70710677
        %v7878 = vmul.f32 %v7868, 0.70710677
        %v7879 = vmul.f32 %v7870, 0.70710677
        %v7880 = verf.f32.pop %v7876
        %v7881 = verf.f32.pop %v7877
        %v7882 = verf.f32.pop %v7878
        %v7883 = verf.f32.pop %v7879
        %v7884 = vadd.f32 %v7880, 1.0
        %v7885 = vadd.f32 %v7881, 1.0
        %v7886 = vadd.f32 %v7882, 1.0
        %v7887 = vadd.f32 %v7883, 1.0
        %v7888 = vmul.f32 %v7872, %v7884
        %v7889 = vmul.f32 %v7873, %v7885
        %v7890 = vmul.f32 %v7874, %v7886
        %v7891 = vmul.f32 %v7875, %v7887
        %s7892 = scalar_lea.vmem %s911, 256 [#allocation11]
        %v7893 = vld [vmem:[%s7892] sm:$0xff]
        %v7894 = vld [vmem:[%s7892 + $0x8] sm:$0xff]
        %v7895 = vld [vmem:[%s7892 + $0x10] sm:$0xff]
        %v7896 = vld [vmem:[%s7892 + $0x18] sm:$0xff]
        %v7897 = vld [vmem:[%s7892 + $0x20] sm:$0xff]
        %v7898 = vld [vmem:[%s7892 + $0x28] sm:$0xff]
        %v7899 = vld [vmem:[%s7892 + $0x30] sm:$0xff]
        %v7900 = vld [vmem:[%s7892 + $0x38] sm:$0xff]
        %v7901 = vld [vmem:[%s7892 + $0x40] sm:$0xff]
        %v7902 = vld [vmem:[%s7892 + $0x48] sm:$0xff]
        %v7903 = vld [vmem:[%s7892 + $0x50] sm:$0xff]
        %v7904 = vld [vmem:[%s7892 + $0x58] sm:$0xff]
        %v7905 = vld [vmem:[%s7892 + $0x60] sm:$0xff]
        %v7906 = vld [vmem:[%s7892 + $0x68] sm:$0xff]
        %v7907 = vld [vmem:[%s7892 + $0x70] sm:$0xff]
        %v7908 = vld [vmem:[%s7892 + $0x78] sm:$0xff]
        %v7909 = vld [vmem:[%s7892 + $0x80] sm:$0xff]
        %v7910 = vld [vmem:[%s7892 + $0x88] sm:$0xff]
        %v7911 = vld [vmem:[%s7892 + $0x90] sm:$0xff]
        %v7912 = vld [vmem:[%s7892 + $0x98] sm:$0xff]
        %v7913 = vld [vmem:[%s7892 + $0xa0] sm:$0xff]
        %v7914 = vld [vmem:[%s7892 + $0xa8] sm:$0xff]
        %v7915 = vld [vmem:[%s7892 + $0xb0] sm:$0xff]
        %v7916 = vld [vmem:[%s7892 + $0xb8] sm:$0xff]
        %v7917 = vld [vmem:[%s7892 + $0xc0] sm:$0xff]
        %v7918 = vld [vmem:[%s7892 + $0xc8] sm:$0xff]
        %v7919 = vld [vmem:[%s7892 + $0xd0] sm:$0xff]
        %v7920 = vld [vmem:[%s7892 + $0xd8] sm:$0xff]
        %v7921 = vld [vmem:[%s7892 + $0xe0] sm:$0xff]
        %v7922 = vld [vmem:[%s7892 + $0xe8] sm:$0xff]
        %v7923 = vld [vmem:[%s7892 + $0xf0] sm:$0xff]
        %v7924 = vld [vmem:[%s7892 + $0xf8] sm:$0xff]
        %7925 = vmatprep.subr.mxu0 0.0
        %7926 = vmatpush1.msra.mxu0 %v7893
        %7927 = vmatprep.subr.mxu0 0.0
        %7928 = vmatpush1.msra.mxu0 %v7894
        %7929 = vmatprep.subr.mxu0 0.0
        %7930 = vmatpush1.msra.mxu0 %v7895
        %7931 = vmatprep.subr.mxu0 0.0
        %7932 = vmatpush1.msra.mxu0 %v7896
        %7933 = vmatprep.subr.mxu0 0.0
        %7934 = vmatpush1.msra.mxu0 %v7897
        %7935 = vmatprep.subr.mxu0 0.0
        %7936 = vmatpush1.msra.mxu0 %v7898
        %7937 = vmatprep.subr.mxu0 0.0
        %7938 = vmatpush1.msra.mxu0 %v7899
        %7939 = vmatprep.subr.mxu0 0.0
        %7940 = vmatpush1.msra.mxu0 %v7900
        %7941 = vmatprep.subr.mxu0 0.0
        %7942 = vmatpush1.msra.mxu0 %v7901
        %7943 = vmatprep.subr.mxu0 0.0
        %7944 = vmatpush1.msra.mxu0 %v7902
        %7945 = vmatprep.subr.mxu0 0.0
        %7946 = vmatpush1.msra.mxu0 %v7903
        %7947 = vmatprep.subr.mxu0 0.0
        %7948 = vmatpush1.msra.mxu0 %v7904
        %7949 = vmatprep.subr.mxu0 0.0
        %7950 = vmatpush1.msra.mxu0 %v7905
        %7951 = vmatprep.subr.mxu0 0.0
        %7952 = vmatpush1.msra.mxu0 %v7906
        %7953 = vmatprep.subr.mxu0 0.0
        %7954 = vmatpush1.msra.mxu0 %v7907
        %7955 = vmatprep.subr.mxu0 0.0
        %7956 = vmatpush1.msra.mxu0 %v7908
        %7957 = vmatprep.subr.mxu0 0.0
        %7958 = vmatpush1.msra.mxu0 %v7909
        %7959 = vmatprep.subr.mxu0 0.0
        %7960 = vmatpush1.msra.mxu0 %v7910
        %7961 = vmatprep.subr.mxu0 0.0
        %7962 = vmatpush1.msra.mxu0 %v7911
        %7963 = vmatprep.subr.mxu0 0.0
        %7964 = vmatpush1.msra.mxu0 %v7912
        %7965 = vmatprep.subr.mxu0 0.0
        %7966 = vmatpush1.msra.mxu0 %v7913
        %7967 = vmatprep.subr.mxu0 0.0
        %7968 = vmatpush1.msra.mxu0 %v7914
        %7969 = vmatprep.subr.mxu0 0.0
        %7970 = vmatpush1.msra.mxu0 %v7915
        %7971 = vmatprep.subr.mxu0 0.0
        %7972 = vmatpush1.msra.mxu0 %v7916
        %7973 = vmatprep.subr.mxu0 0.0
        %7974 = vmatpush1.msra.mxu0 %v7917
        %7975 = vmatprep.subr.mxu0 0.0
        %7976 = vmatpush1.msra.mxu0 %v7918
        %7977 = vmatprep.subr.mxu0 0.0
        %7978 = vmatpush1.msra.mxu0 %v7919
        %7979 = vmatprep.subr.mxu0 0.0
        %7980 = vmatpush1.msra.mxu0 %v7920
        %7981 = vmatprep.subr.mxu0 0.0
        %7982 = vmatpush1.msra.mxu0 %v7921
        %7983 = vmatprep.subr.mxu0 0.0
        %7984 = vmatpush1.msra.mxu0 %v7922
        %7985 = vmatprep.subr.mxu0 0.0
        %7986 = vmatpush1.msra.mxu0 %v7923
        %7987 = vmatprep.subr.mxu0 0.0
        %7988 = vmatpush1.msra.mxu0 %v7924
        %7989 = vmatprep.mubr.f32.mxu0 %v7889
        %7990 = vmatmul.mubr.f32.gmra.mrb[0].mxu0 %v7888
        %v7991 = vpop.f32.mrb[0].mxu0
        %v7992 = vadd.f32 0.0, %v7991
        %v7993 = vpop.f32.mrb[0].mxu0
        %7994 = vmatprep.mubr.f32.mxu0 %v7891
        %7995 = vmatmul.mubr.f32.gmra.mrb[0].mxu0 %v7890
        %v7996 = vpop.f32.mrb[0].mxu0
        %v7997 = vadd.f32 0.0, %v7996
        %v7998 = vpop.f32.mrb[0].mxu0
        %7999 = vdwg.mxu0
        %v8000 = vadd.f32 %v7747, %v7992
        %v8001 = vadd.f32 %v7748, %v7997
        %s8002 = scalar_lea.vmem %s1061, 1
        %v8003 = vld [vmem:[%s8002] sm:$0x1]
        %v8005 = vlaneseq
        %v8006 = vshrl.u32 %v8005, 7
        %v8007 = vsub.s32 0, %v8006
        %v8008 = vrot.slane %v8003, %v8007
        %v8010 = vadd.f32 %v8000, %v8008
        %v8011 = vadd.f32 %v8001, %v8008
        %s8012 = scalar_lea.vmem %s1065, 1
        %v8013 = vld [vmem:[%s8012] sm:$0x1]
        %s8014 = scalar_lea.vmem %s1069, 1
        %v8015 = vld [vmem:[%s8014] sm:$0x1]
        %8016 = vadd.xlane.f32.xlu0 %v8010
        %v8017 = vpop.xlane.xlu0 %8016
        %8018 = vadd.xlane.f32.xlu0 %v8011
        %v8019 = vpop.xlane.xlu0 %8018
        %v8020 = vmul.f32 %v8017, %v7269
        %v8021 = vmul.f32 %v8019, %v7269
        %v8022 = vsub.f32 %v8010, %v8020
        %v8023 = vsub.f32 %v8011, %v8021
        %v8024 = vmul.f32 %v8022, %v8022
        %v8025 = vmul.f32 %v8023, %v8023
        %8026 = vadd.xlane.f32.xlu0 %v8024
        %v8027 = vpop.xlane.xlu0 %8026
        %8028 = vadd.xlane.f32.xlu0 %v8025
        %v8029 = vpop.xlane.xlu0 %8028
        %v8030 = vmul.f32 %v8027, %v7269
        %v8031 = vmul.f32 %v8029, %v7269
        %v8032 = vadd.f32 %v8030, 1e-05
        %v8033 = vadd.f32 %v8031, 1e-05
        %v8034 = vrsqrt.pop %v8032
        %v8035 = vrsqrt.pop %v8033
        %v8036 = vmul.f32 %v8022, %v8034
        %v8037 = vmul.f32 %v8023, %v8035
        %v8039 = vlaneseq
        %v8040 = vshrl.u32 %v8039, 7
        %v8041 = vsub.s32 0, %v8040
        %v8042 = vrot.slane %v8013, %v8041
        %v8044 = vmul.f32 %v8036, %v8042
        %v8045 = vmul.f32 %v8037, %v8042
        %v8047 = vlaneseq
        %v8048 = vshrl.u32 %v8047, 7
        %v8049 = vsub.s32 0, %v8048
        %v8050 = vrot.slane %v8015, %v8049
        %v8052 = vadd.f32 %v8044, %v8050
        %v8053 = vadd.f32 %v8045, %v8050
        %8054 = vst [vmem:[#allocation2] sm:$0xff] %v7601
        %8055 = vst [vmem:[#allocation2 + $0x8] sm:$0xff] %v7602
        %8056 = vst [vmem:[#allocation3] sm:$0xff] %v8052
        %8057 = vst [vmem:[#allocation3 + $0x8] sm:$0xff] %v8053
        %p8058 = scmp.eq.s32.totalorder %s44, 1
        // Predicated region
        $region141: #{vilbert_forward.1} parent=115 // pred_check
          %p8059 = pneg %p8058
        $region142: #{vilbert_forward.1} parent=115 // pred_check_branch
          %8061 = sbr.rel (%p8059) target = $region144
        $region143: #{vilbert_forward.1} parent=115 // pred_region
          %8062 = vst [vmem:[%s24] sm:$0xff] %v7601
          %8063 = vst [vmem:[%s24 + $0x8] sm:$0xff] %v7602
          %8064 = vst [vmem:[%s25] sm:$0xff] %v8052
          %8065 = vst [vmem:[%s25 + $0x8] sm:$0xff] %v8053
        $region144: #{vilbert_forward.1} parent=115 // pred_fallthru
          _
        // Predicated region
        $region145: #{vilbert_forward.1} parent=115 // pred_check
          %p8066 = pneg %p631
        $region146: #{vilbert_forward.1} parent=115 // pred_check_branch
          %8068 = sbr.rel (%p8066) target = $region148
        $region147: #{vilbert_forward.1} parent=115 // pred_region
          _
        $region148: #{vilbert_forward.1} parent=115 // pred_fallthru
          _
        // Predicated region
        $region149: #{vilbert_forward.1} parent=115 // pred_check
          %p8069 = pneg %p652
        $region150: #{vilbert_forward.1} parent=115 // pred_check_branch
          %8071 = sbr.rel (%p8069) target = $region152
        $region151: #{vilbert_forward.1} parent=115 // pred_region
          _
        $region152: #{vilbert_forward.1} parent=115 // pred_fallthru
          _
        // Predicated region
        $region153: #{vilbert_forward.1} parent=115 // pred_check
          %p8072 = pneg %p631
        $region154: #{vilbert_forward.1} parent=115 // pred_check_branch
          %8074 = sbr.rel (%p8072) target = $region156
        $region155: #{vilbert_forward.1} parent=115 // pred_region
          _
        $region156: #{vilbert_forward.1} parent=115 // pred_fallthru
          _
        // Predicated region
        $region157: #{vilbert_forward.1} parent=115 // pred_check
          %p8075 = pneg %p652
        $region158: #{vilbert_forward.1} parent=115 // pred_check_branch
          %8077 = sbr.rel (%p8075) target = $region160
        $region159: #{vilbert_forward.1} parent=115 // pred_region
          _
        $region160: #{vilbert_forward.1} parent=115 // pred_fallthru
          _
      $region116: #{vilbert_forward.1} parent=5 // pred_fallthru
        _
      %p8078 = scmp.le.s32.totalorder 2, %s39
      // Predicated region
      $region161: #{vilbert_forward.1} parent=5 // pred_check
        %p8079 = pneg %p8078
      $region162: #{vilbert_forward.1} parent=5 // pred_check_branch
        %8081 = sbr.rel (%p8079) target = $region164
      $region163: #{vilbert_forward.1} parent=5 // pred_region
        %s8082 = ssub.s32 %s39, 2
      $region164: #{vilbert_forward.1} parent=5 // pred_fallthru
        _
    $region6: #{vilbert_forward.1} parent=1 // loop_footer
      %s43 = sadd.s32 1, %s39
    $region7: #{vilbert_forward.1} parent=1 // loop_footer_branch
      %38 = sbr.rel target = $region3
    $region8: #{vilbert_forward.1} parent=1 // loop_exit
      _
    %8083 = vsyncpa [#allocation5], 1
    %s8084 = scalar_lea.sflag [#allocation5], 1
    %8085 = vsyncpa %s8084, 1
    %8086 = vsyncpa [#allocation7], 1
    %s8087 = scalar_lea.sflag [#allocation7], 1
    %8088 = vsyncpa %s8087, 1
    %8089 = vsyncpa [#allocation10], 1
    %s8090 = scalar_lea.sflag [#allocation10], 1
    %8091 = vsyncpa %s8090, 1

</llo_original>
